<compile_context>
chip_gen: v7x
topology: tpu7x:2x2x1
jax: 0.10.0
libtpu: 0.0.40
codegen_flags: <defaults>
</compile_context>

<pallas_src>
import functools

import jax
import jax.numpy as jnp
from jax.experimental import pallas as pl
from jax.experimental.pallas import tpu as pltpu

EMB = 768          # shared embedding size (text / visual / fused)
TCN_EMB = 64       # tcn_emb_size

VMEM_SPEC = pl.BlockSpec(memory_space=pltpu.MemorySpace.VMEM)
CPARAMS = pltpu.CompilerParams(vmem_limit_bytes=32 * 1024 * 1024)


# ----------------------------------------------------------------------------
# Single fused kernel: TCN encoder + text/visual pool-proj + LinearFusion +
# prototype cross-attention (with residual).
# ----------------------------------------------------------------------------
def mobtep_kernel(ts_ref, text_ref, patch_ref,
                  tcn_w_ref, tcn_b_ref,
                  text_w_ref, text_b_ref,
                  vis_w_ref, vis_b_ref,
                  fw_n_ref, fw_v_ref, fw_t_ref, fuse_b_ref,
                  wq_ref, kp_ref, vp_ref, wo_ref,
                  o_ref, *, inv_t, inv_l, inv_np, scale):
    f32 = jnp.float32
    bf16 = jnp.bfloat16

    # --- ts_encoder (TCN): im2col'd causal conv = ONE matmul, ReLU, avg pool ---
    h = jax.lax.dot_general(
        ts_ref[...].astype(bf16), tcn_w_ref[...],
        dimension_numbers=(((2,), (0,)), ((), ())),
        preferred_element_type=f32)                              # (B, T, 64)
    h = jnp.maximum(h + tcn_b_ref[...], 0.0)
    numeric = (jnp.sum(h, axis=1) * inv_t).astype(bf16)          # (B, 64)

    # --- text_encoder (SentenceBERT stand-in: mean pool tokens + dense + tanh) ---
    tpool = (jnp.sum(text_ref[...], axis=1) * inv_l).astype(bf16)            # (B, 768)
    text_emb = jnp.tanh(
        jnp.dot(tpool, text_w_ref[...], preferred_element_type=f32)
        + text_b_ref[...]).astype(bf16)                                      # (B, 768)

    # --- visual_encoder (ViT stand-in: mean pool patches + dense) ---
    vpool = (jnp.sum(patch_ref[...], axis=1) * inv_np).astype(bf16)          # (B, 768)
    vis_emb = (jnp.dot(vpool, vis_w_ref[...], preferred_element_type=f32)
               + vis_b_ref[...]).astype(bf16)                                # (B, 768)

    # --- fusion_module: concat-free -> three accumulated matmuls (64/768/768 rows) ---
    fused = (jnp.dot(numeric, fw_n_ref[...], preferred_element_type=f32)
             + jnp.dot(vis_emb, fw_v_ref[...], preferred_element_type=f32)
             + jnp.dot(text_emb, fw_t_ref[...], preferred_element_type=f32)
             + fuse_b_ref[...])                                              # (B, 768) f32

    # --- prototype cross-attention (K/V of constant prototypes precomputed) ---
    q = jnp.dot(fused.astype(bf16), wq_ref[...], preferred_element_type=f32)  # (B, 768)
    s = jax.lax.dot_general(q.astype(bf16), kp_ref[...],
                            dimension_numbers=(((1,), (1,)), ((), ())),
                            preferred_element_type=f32) * scale               # (B, P)
    m = jnp.max(s, axis=-1, keepdims=True)
    e = jnp.exp(s - m)
    probs = e * pl.reciprocal(jnp.sum(e, axis=-1, keepdims=True), approx=True)
    attn = jnp.dot(probs.astype(bf16), vp_ref[...],
                   preferred_element_type=f32)                                # (B, 768)
    o_ref[...] = fused + jnp.dot(attn.astype(bf16), wo_ref[...],
                                 preferred_element_type=f32)                  # residual


# ----------------------------------------------------------------------------
# Parameter construction (deterministic, in-script)
# ----------------------------------------------------------------------------
def xavier(key, shape):
    fan_in, fan_out = shape[-2], shape[-1]
    limit = (6.0 / (fan_in + fan_out)) ** 0.5
    return jax.random.uniform(key, shape, jnp.float32, -limit, limit)


def make_params(key, *, c_ts, K, patch_dim, n_protos):
    ks = jax.random.split(key, 10)
    bf16 = jnp.bfloat16
    fuse_w = xavier(ks[3], (TCN_EMB + EMB + EMB, EMB))   # rows: [numeric | visual | text]
    protos = jax.random.normal(ks[4], (n_protos, EMB), jnp.float32) * 0.02
    wk = xavier(ks[6], (EMB, EMB))
    wv = xavier(ks[7], (EMB, EMB))
    # Prototypes and K/V projections are constants -> project once here (host side).
    k_proto = jnp.dot(protos, wk)
    v_proto = jnp.dot(protos, wv)
    return dict(
        tcn_w=xavier(ks[0], (K * c_ts, TCN_EMB)).astype(bf16),   # im2col conv weight
        tcn_b=jnp.zeros((1, TCN_EMB), jnp.float32),
        text_w=xavier(ks[1], (EMB, EMB)).astype(bf16),
        text_b=jnp.zeros((1, EMB), jnp.float32),
        vis_w=xavier(ks[2], (patch_dim, EMB)).astype(bf16),
        vis_b=jnp.zeros((1, EMB), jnp.float32),
        fuse_w_n=fuse_w[:TCN_EMB].astype(bf16),
        fuse_w_v=fuse_w[TCN_EMB:TCN_EMB + EMB].astype(bf16),
        fuse_w_t=fuse_w[TCN_EMB + EMB:].astype(bf16),
        fuse_b=jnp.zeros((1, EMB), jnp.float32),
        wq=xavier(ks[5], (EMB, EMB)).astype(bf16),
        k_proto=k_proto.astype(bf16),
        v_proto=v_proto.astype(bf16),
        wo=xavier(ks[8], (EMB, EMB)).astype(bf16),
    )


# ----------------------------------------------------------------------------
# Mobtep forward (thin glue in JAX, whole hot path in ONE Pallas kernel)
# ----------------------------------------------------------------------------
def mobtep_forward(params, ts_input, text_input, visual_input, *, K, patch):
    B, _, T = ts_input.shape

    # causal im2col for the TCN: (B, T, K*C_ts)
    x = jnp.transpose(ts_input, (0, 2, 1))                      # NCT -> (B, T, C)
    x = jnp.pad(x, ((0, 0), (K - 1, 0), (0, 0)))                # causal left pad
    ts_cols = jnp.concatenate([x[:, k:k + T, :] for k in range(K)], axis=-1)

    # patchify visual NCHW -> (B, Np, C*ph*pw)
    Bv, C, H, W = visual_input.shape
    nph, npw = H // patch, W // patch
    patches = visual_input.reshape(Bv, C, nph, patch, npw, patch)
    patches = jnp.transpose(patches, (0, 2, 4, 1, 3, 5)).reshape(
        Bv, nph * npw, C * patch * patch)

    L = text_input.shape[1]
    Np = nph * npw
    scale = 1.0 / (EMB ** 0.5)

    kern = functools.partial(mobtep_kernel,
                             inv_t=1.0 / T, inv_l=1.0 / L,
                             inv_np=1.0 / Np, scale=scale)
    out = pl.pallas_call(
        kern,
        out_shape=jax.ShapeDtypeStruct((B, EMB), jnp.float32),
        in_specs=[VMEM_SPEC] * 17,
        out_specs=VMEM_SPEC,
        compiler_params=CPARAMS,
    )(ts_cols, text_input, patches,
      params["tcn_w"], params["tcn_b"],
      params["text_w"], params["text_b"],
      params["vis_w"], params["vis_b"],
      params["fuse_w_n"], params["fuse_w_v"], params["fuse_w_t"], params["fuse_b"],
      params["wq"], params["k_proto"], params["v_proto"], params["wo"])

    # TODO(synk): use_linear_proj=False (module default) -> no linear_proj branch.
    # TODO(synk): GPT-2 caption generation (output_text=True) has no Pallas equivalent.
    return out[:, None, :]                                      # (B, 1, 768)


# ----------------------------------------------------------------------------
if __name__ == "__main__":
    B = 2
    C_TS, T_TS, K = 4, 16, 3
    L_TOK = 8
    IMG_C, IMG_H, IMG_W, PATCH = 3, 32, 32, 16
    PATCH_DIM = IMG_C * PATCH * PATCH                           # 768
    prototype_words = ["increase", "decrease", "spike", "dip",
                       "plateau", "oscillation", "trend", "anomaly"]
    P = len(prototype_words)

    key = jax.random.PRNGKey(0)
    k_ts, k_txt, k_img, k_par = jax.random.split(key, 4)

    ts_input = jax.random.normal(k_ts, (B, C_TS, T_TS), jnp.float32)      # NCT
    text_input = jax.random.normal(k_txt, (B, L_TOK, EMB), jnp.float32)   # token feats
    visual_input = jax.random.normal(k_img, (B, IMG_C, IMG_H, IMG_W), jnp.float32)  # NCHW

    params = make_params(k_par, c_ts=C_TS, K=K, patch_dim=PATCH_DIM, n_protos=P)

    out = mobtep_forward(params, ts_input, text_input, visual_input,
                         K=K, patch=PATCH)
    out = jax.block_until_ready(out)
    assert out.shape == (B, 1, EMB), out.shape
    print("KERNEL_OK")
</pallas_src>

<mosaic_0001>
module attributes {stable_mosaic.version = 11 : i64} {
  func.func @mobtep_kernel(%arg0: memref<2x16x12xf32, #tpu.memory_space<vmem>>, %arg1: memref<2x8x768xf32, #tpu.memory_space<vmem>>, %arg2: memref<2x4x768xf32, #tpu.memory_space<vmem>>, %arg3: memref<12x64xbf16, #tpu.memory_space<vmem>>, %arg4: memref<1x64xf32, #tpu.memory_space<vmem>>, %arg5: memref<768x768xbf16, #tpu.memory_space<vmem>>, %arg6: memref<1x768xf32, #tpu.memory_space<vmem>>, %arg7: memref<768x768xbf16, #tpu.memory_space<vmem>>, %arg8: memref<1x768xf32, #tpu.memory_space<vmem>>, %arg9: memref<64x768xbf16, #tpu.memory_space<vmem>>, %arg10: memref<768x768xbf16, #tpu.memory_space<vmem>>, %arg11: memref<768x768xbf16, #tpu.memory_space<vmem>>, %arg12: memref<1x768xf32, #tpu.memory_space<vmem>>, %arg13: memref<768x768xbf16, #tpu.memory_space<vmem>>, %arg14: memref<8x768xbf16, #tpu.memory_space<vmem>>, %arg15: memref<8x768xbf16, #tpu.memory_space<vmem>>, %arg16: memref<768x768xbf16, #tpu.memory_space<vmem>>, %arg17: memref<2x768xf32, #tpu.memory_space<vmem>>) attributes {dimension_semantics = [], scalar_prefetch = 0 : i64, scratch_operands = 0 : i64, tpu.core_type = #tpu.core_type<tc>} {
    %c0 = arith.constant 0 : index
    %c0_0 = arith.constant 0 : index
    %c0_1 = arith.constant 0 : index
    %0 = vector.load %arg0[%c0, %c0_0, %c0_1] : memref<2x16x12xf32, #tpu.memory_space<vmem>>, vector<2x16x12xf32>
    %1 = arith.truncf %0 : vector<2x16x12xf32> to vector<2x16x12xbf16>
    %c0_2 = arith.constant 0 : index
    %c0_3 = arith.constant 0 : index
    %2 = vector.load %arg3[%c0_2, %c0_3] : memref<12x64xbf16, #tpu.memory_space<vmem>>, vector<12x64xbf16>
    %cst = arith.constant dense<0.000000e+00> : vector<2x16x64xf32>
    %3 = tpu.matmul %1, %2, %cst {dimension_numbers = #tpu.dot_dimension_numbers<[2], [0], [0, 1], [1], [0, 0, 0, 1, 1, 1], [], []>} : vector<2x16x12xbf16>, vector<12x64xbf16>, vector<2x16x64xf32> -> vector<2x16x64xf32>
    %c0_4 = arith.constant 0 : index
    %c0_5 = arith.constant 0 : index
    %4 = vector.load %arg4[%c0_4, %c0_5] : memref<1x64xf32, #tpu.memory_space<vmem>>, vector<1x64xf32>
    %5 = vector.shape_cast %4 : vector<1x64xf32> to vector<1x1x64xf32>
    %6 = vector.broadcast %5 : vector<1x1x64xf32> to vector<2x16x64xf32>
    %7 = arith.addf %3, %6 : vector<2x16x64xf32>
    %cst_6 = arith.constant 0.000000e+00 : f32
    %8 = vector.broadcast %cst_6 : f32 to vector<2x16x64xf32>
    %9 = arith.maximumf %7, %8 : vector<2x16x64xf32>
    %cst_7 = arith.constant dense<0.000000e+00> : vector<2x64xf32>
    %10 = vector.multi_reduction <add>, %9, %cst_7 [1] : vector<2x16x64xf32> to vector<2x64xf32>
    %cst_8 = arith.constant 6.250000e-02 : f32
    %11 = vector.broadcast %cst_8 : f32 to vector<2x64xf32>
    %12 = arith.mulf %10, %11 : vector<2x64xf32>
    %13 = arith.truncf %12 : vector<2x64xf32> to vector<2x64xbf16>
    %c0_9 = arith.constant 0 : index
    %c0_10 = arith.constant 0 : index
    %c0_11 = arith.constant 0 : index
    %14 = vector.load %arg1[%c0_9, %c0_10, %c0_11] : memref<2x8x768xf32, #tpu.memory_space<vmem>>, vector<2x8x768xf32>
    %cst_12 = arith.constant dense<0.000000e+00> : vector<2x768xf32>
    %15 = vector.multi_reduction <add>, %14, %cst_12 [1] : vector<2x8x768xf32> to vector<2x768xf32>
    %cst_13 = arith.constant 1.250000e-01 : f32
    %16 = vector.broadcast %cst_13 : f32 to vector<2x768xf32>
    %17 = arith.mulf %15, %16 : vector<2x768xf32>
    %18 = arith.truncf %17 : vector<2x768xf32> to vector<2x768xbf16>
    %c0_14 = arith.constant 0 : index
    %c0_15 = arith.constant 0 : index
    %19 = vector.load %arg5[%c0_14, %c0_15] : memref<768x768xbf16, #tpu.memory_space<vmem>>, vector<768x768xbf16>
    %cst_16 = arith.constant dense<0.000000e+00> : vector<2x768xf32>
    %20 = tpu.matmul %18, %19, %cst_16 {dimension_numbers = #tpu.dot_dimension_numbers<[1], [0], [0], [1], [0, 0, 1, 1], [], []>} : vector<2x768xbf16>, vector<768x768xbf16>, vector<2x768xf32> -> vector<2x768xf32>
    %c0_17 = arith.constant 0 : index
    %c0_18 = arith.constant 0 : index
    %21 = vector.load %arg6[%c0_17, %c0_18] : memref<1x768xf32, #tpu.memory_space<vmem>>, vector<1x768xf32>
    %22 = vector.broadcast %21 : vector<1x768xf32> to vector<2x768xf32>
    %23 = arith.addf %20, %22 : vector<2x768xf32>
    %24 = math.tanh %23 : vector<2x768xf32>
    %25 = arith.truncf %24 : vector<2x768xf32> to vector<2x768xbf16>
    %c0_19 = arith.constant 0 : index
    %c0_20 = arith.constant 0 : index
    %c0_21 = arith.constant 0 : index
    %26 = vector.load %arg2[%c0_19, %c0_20, %c0_21] : memref<2x4x768xf32, #tpu.memory_space<vmem>>, vector<2x4x768xf32>
    %cst_22 = arith.constant dense<0.000000e+00> : vector<2x768xf32>
    %27 = vector.multi_reduction <add>, %26, %cst_22 [1] : vector<2x4x768xf32> to vector<2x768xf32>
    %cst_23 = arith.constant 2.500000e-01 : f32
    %28 = vector.broadcast %cst_23 : f32 to vector<2x768xf32>
    %29 = arith.mulf %27, %28 : vector<2x768xf32>
    %30 = arith.truncf %29 : vector<2x768xf32> to vector<2x768xbf16>
    %c0_24 = arith.constant 0 : index
    %c0_25 = arith.constant 0 : index
    %31 = vector.load %arg7[%c0_24, %c0_25] : memref<768x768xbf16, #tpu.memory_space<vmem>>, vector<768x768xbf16>
    %cst_26 = arith.constant dense<0.000000e+00> : vector<2x768xf32>
    %32 = tpu.matmul %30, %31, %cst_26 {dimension_numbers = #tpu.dot_dimension_numbers<[1], [0], [0], [1], [0, 0, 1, 1], [], []>} : vector<2x768xbf16>, vector<768x768xbf16>, vector<2x768xf32> -> vector<2x768xf32>
    %c0_27 = arith.constant 0 : index
    %c0_28 = arith.constant 0 : index
    %33 = vector.load %arg8[%c0_27, %c0_28] : memref<1x768xf32, #tpu.memory_space<vmem>>, vector<1x768xf32>
    %34 = vector.broadcast %33 : vector<1x768xf32> to vector<2x768xf32>
    %35 = arith.addf %32, %34 : vector<2x768xf32>
    %36 = arith.truncf %35 : vector<2x768xf32> to vector<2x768xbf16>
    %c0_29 = arith.constant 0 : index
    %c0_30 = arith.constant 0 : index
    %37 = vector.load %arg9[%c0_29, %c0_30] : memref<64x768xbf16, #tpu.memory_space<vmem>>, vector<64x768xbf16>
    %cst_31 = arith.constant dense<0.000000e+00> : vector<2x768xf32>
    %38 = tpu.matmul %13, %37, %cst_31 {dimension_numbers = #tpu.dot_dimension_numbers<[1], [0], [0], [1], [0, 0, 1, 1], [], []>} : vector<2x64xbf16>, vector<64x768xbf16>, vector<2x768xf32> -> vector<2x768xf32>
    %c0_32 = arith.constant 0 : index
    %c0_33 = arith.constant 0 : index
    %39 = vector.load %arg10[%c0_32, %c0_33] : memref<768x768xbf16, #tpu.memory_space<vmem>>, vector<768x768xbf16>
    %cst_34 = arith.constant dense<0.000000e+00> : vector<2x768xf32>
    %40 = tpu.matmul %36, %39, %cst_34 {dimension_numbers = #tpu.dot_dimension_numbers<[1], [0], [0], [1], [0, 0, 1, 1], [], []>} : vector<2x768xbf16>, vector<768x768xbf16>, vector<2x768xf32> -> vector<2x768xf32>
    %41 = arith.addf %38, %40 : vector<2x768xf32>
    %c0_35 = arith.constant 0 : index
    %c0_36 = arith.constant 0 : index
    %42 = vector.load %arg11[%c0_35, %c0_36] : memref<768x768xbf16, #tpu.memory_space<vmem>>, vector<768x768xbf16>
    %cst_37 = arith.constant dense<0.000000e+00> : vector<2x768xf32>
    %43 = tpu.matmul %25, %42, %cst_37 {dimension_numbers = #tpu.dot_dimension_numbers<[1], [0], [0], [1], [0, 0, 1, 1], [], []>} : vector<2x768xbf16>, vector<768x768xbf16>, vector<2x768xf32> -> vector<2x768xf32>
    %44 = arith.addf %41, %43 : vector<2x768xf32>
    %c0_38 = arith.constant 0 : index
    %c0_39 = arith.constant 0 : index
    %45 = vector.load %arg12[%c0_38, %c0_39] : memref<1x768xf32, #tpu.memory_space<vmem>>, vector<1x768xf32>
    %46 = vector.broadcast %45 : vector<1x768xf32> to vector<2x768xf32>
    %47 = arith.addf %44, %46 : vector<2x768xf32>
    %48 = arith.truncf %47 : vector<2x768xf32> to vector<2x768xbf16>
    %c0_40 = arith.constant 0 : index
    %c0_41 = arith.constant 0 : index
    %49 = vector.load %arg13[%c0_40, %c0_41] : memref<768x768xbf16, #tpu.memory_space<vmem>>, vector<768x768xbf16>
    %cst_42 = arith.constant dense<0.000000e+00> : vector<2x768xf32>
    %50 = tpu.matmul %48, %49, %cst_42 {dimension_numbers = #tpu.dot_dimension_numbers<[1], [0], [0], [1], [0, 0, 1, 1], [], []>} : vector<2x768xbf16>, vector<768x768xbf16>, vector<2x768xf32> -> vector<2x768xf32>
    %51 = arith.truncf %50 : vector<2x768xf32> to vector<2x768xbf16>
    %c0_43 = arith.constant 0 : index
    %c0_44 = arith.constant 0 : index
    %52 = vector.load %arg14[%c0_43, %c0_44] : memref<8x768xbf16, #tpu.memory_space<vmem>>, vector<8x768xbf16>
    %cst_45 = arith.constant dense<0.000000e+00> : vector<2x8xf32>
    %53 = tpu.matmul %51, %52, %cst_45 {dimension_numbers = #tpu.dot_dimension_numbers<[1], [1], [0], [0], [0, 0, 1, 0], [], []>} : vector<2x768xbf16>, vector<8x768xbf16>, vector<2x8xf32> -> vector<2x8xf32>
    %cst_46 = arith.constant 0.0360843912 : f32
    %54 = vector.broadcast %cst_46 : f32 to vector<2x8xf32>
    %55 = arith.mulf %53, %54 : vector<2x8xf32>
    %cst_47 = arith.constant dense<0xFF800000> : vector<2xf32>
    %56 = vector.multi_reduction <maximumf>, %55, %cst_47 [1] : vector<2x8xf32> to vector<2xf32>
    %57 = vector.shape_cast %56 : vector<2xf32> to vector<2x1xf32>
    %58 = vector.broadcast %57 : vector<2x1xf32> to vector<2x8xf32>
    %59 = arith.subf %55, %58 : vector<2x8xf32>
    %60 = math.exp %59 : vector<2x8xf32>
    %cst_48 = arith.constant dense<0.000000e+00> : vector<2xf32>
    %61 = vector.multi_reduction <add>, %60, %cst_48 [1] : vector<2x8xf32> to vector<2xf32>
    %62 = vector.shape_cast %61 : vector<2xf32> to vector<2x1xf32>
    %63 = tpu.reciprocal %62 {approx = true} : vector<2x1xf32> -> vector<2x1xf32>
    %64 = vector.broadcast %63 : vector<2x1xf32> to vector<2x8xf32>
    %65 = arith.mulf %60, %64 : vector<2x8xf32>
    %66 = arith.truncf %65 : vector<2x8xf32> to vector<2x8xbf16>
    %c0_49 = arith.constant 0 : index
    %c0_50 = arith.constant 0 : index
    %67 = vector.load %arg15[%c0_49, %c0_50] : memref<8x768xbf16, #tpu.memory_space<vmem>>, vector<8x768xbf16>
    %cst_51 = arith.constant dense<0.000000e+00> : vector<2x768xf32>
    %68 = tpu.matmul %66, %67, %cst_51 {dimension_numbers = #tpu.dot_dimension_numbers<[1], [0], [0], [1], [0, 0, 1, 1], [], []>} : vector<2x8xbf16>, vector<8x768xbf16>, vector<2x768xf32> -> vector<2x768xf32>
    %69 = arith.truncf %68 : vector<2x768xf32> to vector<2x768xbf16>
    %c0_52 = arith.constant 0 : index
    %c0_53 = arith.constant 0 : index
    %70 = vector.load %arg16[%c0_52, %c0_53] : memref<768x768xbf16, #tpu.memory_space<vmem>>, vector<768x768xbf16>
    %cst_54 = arith.constant dense<0.000000e+00> : vector<2x768xf32>
    %71 = tpu.matmul %69, %70, %cst_54 {dimension_numbers = #tpu.dot_dimension_numbers<[1], [0], [0], [1], [0, 0, 1, 1], [], []>} : vector<2x768xbf16>, vector<768x768xbf16>, vector<2x768xf32> -> vector<2x768xf32>
    %72 = arith.addf %47, %71 : vector<2x768xf32>
    %c0_55 = arith.constant 0 : index
    %c0_56 = arith.constant 0 : index
    %73 = vector.load %arg17[%c0_55, %c0_56] : memref<2x768xf32, #tpu.memory_space<vmem>>, vector<2x768xf32>
    tpu.vector_store %arg17[%c0_55, %c0_56], %72 {strides = array<i32>} : memref<2x768xf32, #tpu.memory_space<vmem>>, vector<2x768xf32>,
    return
  }
}

</mosaic_0001>

<llo_original>
// kernel: tpu_custom_call.1
$region0: #{tpu_custom_call.1}
  #allocation0 [shape = 'u32[]', space=smem, size = 0x4, offset = 0x4, fixed_abs, tag = 'smem constant byte address 0x4 - core index']
  #allocation1 [shape = 'u32[144,128]{1,0:T(1,128)}', space=vmem, size = 0x12000, scoped, tag = 'internal scratch']
  %s0 = inlined_call_operand.vmem [shape: f32[2,16,12], index: 0, kind: input, shape index: {}]
  %s1 = inlined_call_operand.hbm [shape: f32[2,8,768], index: 1, kind: input, shape index: {}]
  %s2 = inlined_call_operand.hbm [shape: f32[2,4,768], index: 2, kind: input, shape index: {}]
  %s3 = inlined_call_operand.hbm [shape: bf16[12,64], index: 3, kind: input, shape index: {}]
  %s4 = inlined_call_operand.hbm [shape: f32[1,64], index: 4, kind: input, shape index: {}]
  %s5 = inlined_call_operand.hbm [shape: bf16[768,768], index: 5, kind: input, shape index: {}]
  %s6 = inlined_call_operand.hbm [shape: f32[1,768], index: 6, kind: input, shape index: {}]
  %s7 = inlined_call_operand.hbm [shape: bf16[768,768], index: 7, kind: input, shape index: {}]
  %s8 = inlined_call_operand.hbm [shape: f32[1,768], index: 8, kind: input, shape index: {}]
  %s9 = inlined_call_operand.hbm [shape: bf16[64,768], index: 9, kind: input, shape index: {}]
  %s10 = inlined_call_operand.hbm [shape: bf16[768,768], index: 10, kind: input, shape index: {}]
  %s11 = inlined_call_operand.hbm [shape: bf16[768,768], index: 11, kind: input, shape index: {}]
  %s12 = inlined_call_operand.hbm [shape: f32[1,768], index: 12, kind: input, shape index: {}]
  %s13 = inlined_call_operand.hbm [shape: bf16[768,768], index: 13, kind: input, shape index: {}]
  %s14 = inlined_call_operand.hbm [shape: bf16[8,768], index: 14, kind: input, shape index: {}]
  %s15 = inlined_call_operand.hbm [shape: bf16[8,768], index: 15, kind: input, shape index: {}]
  %s16 = inlined_call_operand.hbm [shape: bf16[768,768], index: 16, kind: input, shape index: {}]
  %s17 = inlined_call_operand.hbm [shape: f32[2,768], index: 17, kind: output, shape index: {}]
  %s18 = sld [smem:[#allocation0]]
  $region142: #{tpu_custom_call.1} parent=0
    _
  %s20 = ssub.s32 1, %s18
  %s21 = scalar_select 0, %s20, %s18
  $region1: #{tpu_custom_call.1} parent=0
    #allocation2 [shape = 'u8[49152]{0}', space=vmem, size = 0xc000, scoped, tag = 'input window, operand 1, single buffered']
    #allocation3 [shape = 's32[1]{0}', space=sflag, size = 0x4, scoped, tag = 'scoped memory for tpu_custom_call.1']
    #allocation4 [shape = 's32[1]{0}', space=sflag, size = 0x4, scoped, tag = 'scoped memory for tpu_custom_call.1']
    #allocation5 [shape = 'u8[24576]{0}', space=vmem, size = 0x6000, scoped, tag = 'input window, operand 2, single buffered']
    #allocation6 [shape = 's32[1]{0}', space=sflag, size = 0x4, scoped, tag = 'scoped memory for tpu_custom_call.1']
    #allocation7 [shape = 'u8[4096]{0}', space=vmem, size = 0x1000, scoped, tag = 'input window, operand 3, single buffered']
    #allocation8 [shape = 'u8[512]{0}', space=vmem, size = 0x400, scoped, tag = 'input window, operand 4, single buffered']
    #allocation9 [shape = 's32[1]{0}', space=sflag, size = 0x4, scoped, tag = 'scoped memory for tpu_custom_call.1']
    #allocation10 [shape = 'u8[1179648]{0}', space=vmem, size = 0x120000, scoped, tag = 'input window, operand 5, single buffered']
    #allocation11 [shape = 'u8[3072]{0}', space=vmem, size = 0xc00, scoped, tag = 'input window, operand 6, single buffered']
    #allocation12 [shape = 's32[1]{0}', space=sflag, size = 0x4, scoped, tag = 'scoped memory for tpu_custom_call.1']
    #allocation13 [shape = 'u8[1179648]{0}', space=vmem, size = 0x120000, scoped, tag = 'input window, operand 7, single buffered']
    #allocation14 [shape = 'u8[3072]{0}', space=vmem, size = 0xc00, scoped, tag = 'input window, operand 8, single buffered']
    #allocation15 [shape = 's32[1]{0}', space=sflag, size = 0x4, scoped, tag = 'scoped memory for tpu_custom_call.1']
    #allocation16 [shape = 'u8[98304]{0}', space=vmem, size = 0x18000, scoped, tag = 'input window, operand 9, single buffered']
    #allocation17 [shape = 'u8[1179648]{0}', space=vmem, size = 0x120000, scoped, tag = 'input window, operand 10, single buffered']
    #allocation18 [shape = 's32[1]{0}', space=sflag, size = 0x4, scoped, tag = 'scoped memory for tpu_custom_call.1']
    #allocation19 [shape = 'u8[1179648]{0}', space=vmem, size = 0x120000, scoped, tag = 'input window, operand 11, single buffered']
    #allocation20 [shape = 'u8[3072]{0}', space=vmem, size = 0xc00, scoped, tag = 'input window, operand 12, single buffered']
    #allocation21 [shape = 's32[1]{0}', space=sflag, size = 0x4, scoped, tag = 'scoped memory for tpu_custom_call.1']
    #allocation22 [shape = 'u8[1179648]{0}', space=vmem, size = 0x120000, scoped, tag = 'input window, operand 13, single buffered']
    #allocation23 [shape = 'u8[12288]{0}', space=vmem, size = 0x3000, scoped, tag = 'input window, operand 14, single buffered']
    #allocation24 [shape = 's32[1]{0}', space=sflag, size = 0x4, scoped, tag = 'scoped memory for tpu_custom_call.1']
    #allocation25 [shape = 'u8[12288]{0}', space=vmem, size = 0x3000, scoped, tag = 'input window, operand 15, single buffered']
    #allocation26 [shape = 'u8[1179648]{0}', space=vmem, size = 0x120000, scoped, tag = 'input window, operand 16, single buffered']
    #allocation27 [shape = 's32[1]{0}', space=sflag, size = 0x4, scoped, tag = 'scoped memory for tpu_custom_call.1']
    #allocation28 [shape = 'u8[6144]{0}', space=vmem, size = 0x1800, scoped, tag = 'output window, operand 0, single buffered']
    %22 = vsyncpa [#allocation3], 0
    %23 = vsyncpa [#allocation6], 0
    %24 = vsyncpa [#allocation9], 0
    %25 = vsyncpa [#allocation12], 0
    %26 = vsyncpa [#allocation15], 0
    %27 = vsyncpa [#allocation18], 0
    %28 = vsyncpa [#allocation21], 0
    %29 = vsyncpa [#allocation24], 0
    %30 = vsyncpa [#allocation27], 0
    %31 = vsyncpa [#allocation4], 0
    // Predicated region
    $region2: #{tpu_custom_call.1} parent=1 // pred_check
      _
    $region3: #{tpu_custom_call.1} parent=1 // pred_check_branch
      %33 = sbr.rel (0) target = $region5
    $region4: #{tpu_custom_call.1} parent=1 // pred_region
      _
    $region5: #{tpu_custom_call.1} parent=1 // pred_fallthru
      _
    // Predicated region
    $region6: #{tpu_custom_call.1} parent=1 // pred_check
      _
    $region7: #{tpu_custom_call.1} parent=1 // pred_check_branch
      %35 = sbr.rel (0) target = $region9
    $region8: #{tpu_custom_call.1} parent=1 // pred_region
      %s37 = ssub.s32 1536, 1536
      %38 = vsyncadd [#allocation3], %s37
      %s39 = sshll.u32 [#allocation2], 4
      %s40 = int_to_ptr.vmem [resolvable:$true] %s39
      %45 = dma.hbm_to_vmem [thread:$0]  %s1, 1536, %s40, [#allocation3], 768, 768, 48
    $region9: #{tpu_custom_call.1} parent=1 // pred_fallthru
      _
    // Predicated region
    $region10: #{tpu_custom_call.1} parent=1 // pred_check
      _
    $region11: #{tpu_custom_call.1} parent=1 // pred_check_branch
      %47 = sbr.rel (0) target = $region13
    $region12: #{tpu_custom_call.1} parent=1 // pred_region
      %s49 = ssub.s32 768, 768
      %50 = vsyncadd [#allocation6], %s49
      %s51 = sshll.u32 [#allocation5], 4
      %s52 = int_to_ptr.vmem [resolvable:$true] %s51
      %57 = dma.hbm_to_vmem [thread:$0]  %s2, 768, %s52, [#allocation6], 384, 384, 24
    $region13: #{tpu_custom_call.1} parent=1 // pred_fallthru
      _
    // Predicated region
    $region14: #{tpu_custom_call.1} parent=1 // pred_check
      _
    $region15: #{tpu_custom_call.1} parent=1 // pred_check_branch
      %59 = sbr.rel (0) target = $region17
    $region16: #{tpu_custom_call.1} parent=1 // pred_region
      %s61 = ssub.s32 128, 128
      %62 = vsyncadd [#allocation6], %s61
      %s63 = sshll.u32 [#allocation7], 4
      %s64 = int_to_ptr.vmem [resolvable:$true] %s63
      %69 = dma.hbm_to_vmem [thread:$0]  %s3, 128, %s64, [#allocation6], 64, 64, 4
    $region17: #{tpu_custom_call.1} parent=1 // pred_fallthru
      _
    // Predicated region
    $region18: #{tpu_custom_call.1} parent=1 // pred_check
      _
    $region19: #{tpu_custom_call.1} parent=1 // pred_check_branch
      %71 = sbr.rel (0) target = $region21
    $region20: #{tpu_custom_call.1} parent=1 // pred_region
      %s73 = ssub.s32 16, 16
      %74 = vsyncadd [#allocation9], %s73
      %s76 = sshll.u32 [#allocation8], 4
      %s77 = int_to_ptr.vmem [resolvable:$true] %s76
      %79 = dma.hbm_to_vmem [thread:$0]  %s4, 16, %s77, [#allocation9]
    $region21: #{tpu_custom_call.1} parent=1 // pred_fallthru
      _
    // Predicated region
    $region22: #{tpu_custom_call.1} parent=1 // pred_check
      _
    $region23: #{tpu_custom_call.1} parent=1 // pred_check_branch
      %81 = sbr.rel (0) target = $region25
    $region24: #{tpu_custom_call.1} parent=1 // pred_region
      %s83 = ssub.s32 36864, 36864
      %84 = vsyncadd [#allocation9], %s83
      %s85 = sshll.u32 [#allocation10], 4
      %s86 = int_to_ptr.vmem [resolvable:$true] %s85
      %91 = dma.hbm_to_vmem [thread:$0]  %s5, 36864, %s86, [#allocation9], 384, 384, 24
    $region25: #{tpu_custom_call.1} parent=1 // pred_fallthru
      _
    // Predicated region
    $region26: #{tpu_custom_call.1} parent=1 // pred_check
      _
    $region27: #{tpu_custom_call.1} parent=1 // pred_check_branch
      %93 = sbr.rel (0) target = $region29
    $region28: #{tpu_custom_call.1} parent=1 // pred_region
      %s95 = ssub.s32 96, 96
      %96 = vsyncadd [#allocation12], %s95
      %s98 = sshll.u32 [#allocation11], 4
      %s99 = int_to_ptr.vmem [resolvable:$true] %s98
      %101 = dma.hbm_to_vmem [thread:$0]  %s6, 96, %s99, [#allocation12]
    $region29: #{tpu_custom_call.1} parent=1 // pred_fallthru
      _
    // Predicated region
    $region30: #{tpu_custom_call.1} parent=1 // pred_check
      _
    $region31: #{tpu_custom_call.1} parent=1 // pred_check_branch
      %103 = sbr.rel (0) target = $region33
    $region32: #{tpu_custom_call.1} parent=1 // pred_region
      %s105 = ssub.s32 36864, 36864
      %106 = vsyncadd [#allocation12], %s105
      %s107 = sshll.u32 [#allocation13], 4
      %s108 = int_to_ptr.vmem [resolvable:$true] %s107
      %113 = dma.hbm_to_vmem [thread:$0]  %s7, 36864, %s108, [#allocation12], 384, 384, 24
    $region33: #{tpu_custom_call.1} parent=1 // pred_fallthru
      _
    // Predicated region
    $region34: #{tpu_custom_call.1} parent=1 // pred_check
      _
    $region35: #{tpu_custom_call.1} parent=1 // pred_check_branch
      %115 = sbr.rel (0) target = $region37
    $region36: #{tpu_custom_call.1} parent=1 // pred_region
      %s117 = ssub.s32 96, 96
      %118 = vsyncadd [#allocation15], %s117
      %s120 = sshll.u32 [#allocation14], 4
      %s121 = int_to_ptr.vmem [resolvable:$true] %s120
      %123 = dma.hbm_to_vmem [thread:$0]  %s8, 96, %s121, [#allocation15]
    $region37: #{tpu_custom_call.1} parent=1 // pred_fallthru
      _
    // Predicated region
    $region38: #{tpu_custom_call.1} parent=1 // pred_check
      _
    $region39: #{tpu_custom_call.1} parent=1 // pred_check_branch
      %125 = sbr.rel (0) target = $region41
    $region40: #{tpu_custom_call.1} parent=1 // pred_region
      %s127 = ssub.s32 3072, 3072
      %128 = vsyncadd [#allocation15], %s127
      %s129 = sshll.u32 [#allocation16], 4
      %s130 = int_to_ptr.vmem [resolvable:$true] %s129
      %135 = dma.hbm_to_vmem [thread:$0]  %s9, 3072, %s130, [#allocation15], 384, 384, 24
    $region41: #{tpu_custom_call.1} parent=1 // pred_fallthru
      _
    // Predicated region
    $region42: #{tpu_custom_call.1} parent=1 // pred_check
      _
    $region43: #{tpu_custom_call.1} parent=1 // pred_check_branch
      %137 = sbr.rel (0) target = $region45
    $region44: #{tpu_custom_call.1} parent=1 // pred_region
      %s139 = ssub.s32 36864, 36864
      %140 = vsyncadd [#allocation18], %s139
      %s141 = sshll.u32 [#allocation17], 4
      %s142 = int_to_ptr.vmem [resolvable:$true] %s141
      %147 = dma.hbm_to_vmem [thread:$0]  %s10, 36864, %s142, [#allocation18], 384, 384, 24
    $region45: #{tpu_custom_call.1} parent=1 // pred_fallthru
      _
    // Predicated region
    $region46: #{tpu_custom_call.1} parent=1 // pred_check
      _
    $region47: #{tpu_custom_call.1} parent=1 // pred_check_branch
      %149 = sbr.rel (0) target = $region49
    $region48: #{tpu_custom_call.1} parent=1 // pred_region
      %s151 = ssub.s32 36864, 36864
      %152 = vsyncadd [#allocation18], %s151
      %s153 = sshll.u32 [#allocation19], 4
      %s154 = int_to_ptr.vmem [resolvable:$true] %s153
      %159 = dma.hbm_to_vmem [thread:$0]  %s11, 36864, %s154, [#allocation18], 384, 384, 24
    $region49: #{tpu_custom_call.1} parent=1 // pred_fallthru
      _
    // Predicated region
    $region50: #{tpu_custom_call.1} parent=1 // pred_check
      _
    $region51: #{tpu_custom_call.1} parent=1 // pred_check_branch
      %161 = sbr.rel (0) target = $region53
    $region52: #{tpu_custom_call.1} parent=1 // pred_region
      %s163 = ssub.s32 96, 96
      %164 = vsyncadd [#allocation21], %s163
      %s166 = sshll.u32 [#allocation20], 4
      %s167 = int_to_ptr.vmem [resolvable:$true] %s166
      %169 = dma.hbm_to_vmem [thread:$0]  %s12, 96, %s167, [#allocation21]
    $region53: #{tpu_custom_call.1} parent=1 // pred_fallthru
      _
    // Predicated region
    $region54: #{tpu_custom_call.1} parent=1 // pred_check
      _
    $region55: #{tpu_custom_call.1} parent=1 // pred_check_branch
      %171 = sbr.rel (0) target = $region57
    $region56: #{tpu_custom_call.1} parent=1 // pred_region
      %s173 = ssub.s32 36864, 36864
      %174 = vsyncadd [#allocation21], %s173
      %s175 = sshll.u32 [#allocation22], 4
      %s176 = int_to_ptr.vmem [resolvable:$true] %s175
      %181 = dma.hbm_to_vmem [thread:$0]  %s13, 36864, %s176, [#allocation21], 384, 384, 24
    $region57: #{tpu_custom_call.1} parent=1 // pred_fallthru
      _
    // Predicated region
    $region58: #{tpu_custom_call.1} parent=1 // pred_check
      _
    $region59: #{tpu_custom_call.1} parent=1 // pred_check_branch
      %183 = sbr.rel (0) target = $region61
    $region60: #{tpu_custom_call.1} parent=1 // pred_region
      %s185 = ssub.s32 384, 384
      %186 = vsyncadd [#allocation24], %s185
      %s188 = sshll.u32 [#allocation23], 4
      %s189 = int_to_ptr.vmem [resolvable:$true] %s188
      %191 = dma.hbm_to_vmem [thread:$0]  %s14, 384, %s189, [#allocation24]
    $region61: #{tpu_custom_call.1} parent=1 // pred_fallthru
      _
    // Predicated region
    $region62: #{tpu_custom_call.1} parent=1 // pred_check
      _
    $region63: #{tpu_custom_call.1} parent=1 // pred_check_branch
      %193 = sbr.rel (0) target = $region65
    $region64: #{tpu_custom_call.1} parent=1 // pred_region
      %s195 = ssub.s32 384, 384
      %196 = vsyncadd [#allocation24], %s195
      %s198 = sshll.u32 [#allocation25], 4
      %s199 = int_to_ptr.vmem [resolvable:$true] %s198
      %201 = dma.hbm_to_vmem [thread:$0]  %s15, 384, %s199, [#allocation24]
    $region65: #{tpu_custom_call.1} parent=1 // pred_fallthru
      _
    // Predicated region
    $region66: #{tpu_custom_call.1} parent=1 // pred_check
      _
    $region67: #{tpu_custom_call.1} parent=1 // pred_check_branch
      %203 = sbr.rel (0) target = $region69
    $region68: #{tpu_custom_call.1} parent=1 // pred_region
      %s205 = ssub.s32 36864, 36864
      %206 = vsyncadd [#allocation27], %s205
      %s207 = sshll.u32 [#allocation26], 4
      %s208 = int_to_ptr.vmem [resolvable:$true] %s207
      %213 = dma.hbm_to_vmem [thread:$0]  %s16, 36864, %s208, [#allocation27], 384, 384, 24
    $region69: #{tpu_custom_call.1} parent=1 // pred_fallthru
      _
    // Predicated region
    $region70: #{tpu_custom_call.1} parent=1 // pred_check
      _
    $region71: #{tpu_custom_call.1} parent=1 // pred_check_branch
      %215 = sbr.rel (0) target = $region73
    $region72: #{tpu_custom_call.1} parent=1 // pred_region
      %216 = dma.done [#allocation3], 1536
    $region73: #{tpu_custom_call.1} parent=1 // pred_fallthru
      _
    // Predicated region
    $region74: #{tpu_custom_call.1} parent=1 // pred_check
      _
    $region75: #{tpu_custom_call.1} parent=1 // pred_check_branch
      %218 = sbr.rel (0) target = $region77
    $region76: #{tpu_custom_call.1} parent=1 // pred_region
      %219 = dma.done [#allocation6], 768
    $region77: #{tpu_custom_call.1} parent=1 // pred_fallthru
      _
    // Predicated region
    $region78: #{tpu_custom_call.1} parent=1 // pred_check
      _
    $region79: #{tpu_custom_call.1} parent=1 // pred_check_branch
      %221 = sbr.rel (0) target = $region81
    $region80: #{tpu_custom_call.1} parent=1 // pred_region
      %222 = dma.done [#allocation6], 128
    $region81: #{tpu_custom_call.1} parent=1 // pred_fallthru
      _
    // Predicated region
    $region82: #{tpu_custom_call.1} parent=1 // pred_check
      _
    $region83: #{tpu_custom_call.1} parent=1 // pred_check_branch
      %224 = sbr.rel (0) target = $region85
    $region84: #{tpu_custom_call.1} parent=1 // pred_region
      %225 = dma.done [#allocation9], 16
    $region85: #{tpu_custom_call.1} parent=1 // pred_fallthru
      _
    // Predicated region
    $region86: #{tpu_custom_call.1} parent=1 // pred_check
      _
    $region87: #{tpu_custom_call.1} parent=1 // pred_check_branch
      %227 = sbr.rel (0) target = $region89
    $region88: #{tpu_custom_call.1} parent=1 // pred_region
      %228 = dma.done [#allocation9], 36864
    $region89: #{tpu_custom_call.1} parent=1 // pred_fallthru
      _
    // Predicated region
    $region90: #{tpu_custom_call.1} parent=1 // pred_check
      _
    $region91: #{tpu_custom_call.1} parent=1 // pred_check_branch
      %230 = sbr.rel (0) target = $region93
    $region92: #{tpu_custom_call.1} parent=1 // pred_region
      %231 = dma.done [#allocation12], 96
    $region93: #{tpu_custom_call.1} parent=1 // pred_fallthru
      _
    // Predicated region
    $region94: #{tpu_custom_call.1} parent=1 // pred_check
      _
    $region95: #{tpu_custom_call.1} parent=1 // pred_check_branch
      %233 = sbr.rel (0) target = $region97
    $region96: #{tpu_custom_call.1} parent=1 // pred_region
      %234 = dma.done [#allocation12], 36864
    $region97: #{tpu_custom_call.1} parent=1 // pred_fallthru
      _
    // Predicated region
    $region98: #{tpu_custom_call.1} parent=1 // pred_check
      _
    $region99: #{tpu_custom_call.1} parent=1 // pred_check_branch
      %236 = sbr.rel (0) target = $region101
    $region100: #{tpu_custom_call.1} parent=1 // pred_region
      %237 = dma.done [#allocation15], 96
    $region101: #{tpu_custom_call.1} parent=1 // pred_fallthru
      _
    // Predicated region
    $region102: #{tpu_custom_call.1} parent=1 // pred_check
      _
    $region103: #{tpu_custom_call.1} parent=1 // pred_check_branch
      %239 = sbr.rel (0) target = $region105
    $region104: #{tpu_custom_call.1} parent=1 // pred_region
      %240 = dma.done [#allocation15], 3072
    $region105: #{tpu_custom_call.1} parent=1 // pred_fallthru
      _
    // Predicated region
    $region106: #{tpu_custom_call.1} parent=1 // pred_check
      _
    $region107: #{tpu_custom_call.1} parent=1 // pred_check_branch
      %242 = sbr.rel (0) target = $region109
    $region108: #{tpu_custom_call.1} parent=1 // pred_region
      %243 = dma.done [#allocation18], 36864
    $region109: #{tpu_custom_call.1} parent=1 // pred_fallthru
      _
    // Predicated region
    $region110: #{tpu_custom_call.1} parent=1 // pred_check
      _
    $region111: #{tpu_custom_call.1} parent=1 // pred_check_branch
      %245 = sbr.rel (0) target = $region113
    $region112: #{tpu_custom_call.1} parent=1 // pred_region
      %246 = dma.done [#allocation18], 36864
    $region113: #{tpu_custom_call.1} parent=1 // pred_fallthru
      _
    // Predicated region
    $region114: #{tpu_custom_call.1} parent=1 // pred_check
      _
    $region115: #{tpu_custom_call.1} parent=1 // pred_check_branch
      %248 = sbr.rel (0) target = $region117
    $region116: #{tpu_custom_call.1} parent=1 // pred_region
      %249 = dma.done [#allocation21], 96
    $region117: #{tpu_custom_call.1} parent=1 // pred_fallthru
      _
    // Predicated region
    $region118: #{tpu_custom_call.1} parent=1 // pred_check
      _
    $region119: #{tpu_custom_call.1} parent=1 // pred_check_branch
      %251 = sbr.rel (0) target = $region121
    $region120: #{tpu_custom_call.1} parent=1 // pred_region
      %252 = dma.done [#allocation21], 36864
    $region121: #{tpu_custom_call.1} parent=1 // pred_fallthru
      _
    // Predicated region
    $region122: #{tpu_custom_call.1} parent=1 // pred_check
      _
    $region123: #{tpu_custom_call.1} parent=1 // pred_check_branch
      %254 = sbr.rel (0) target = $region125
    $region124: #{tpu_custom_call.1} parent=1 // pred_region
      %255 = dma.done [#allocation24], 384
    $region125: #{tpu_custom_call.1} parent=1 // pred_fallthru
      _
    // Predicated region
    $region126: #{tpu_custom_call.1} parent=1 // pred_check
      _
    $region127: #{tpu_custom_call.1} parent=1 // pred_check_branch
      %257 = sbr.rel (0) target = $region129
    $region128: #{tpu_custom_call.1} parent=1 // pred_region
      %258 = dma.done [#allocation24], 384
    $region129: #{tpu_custom_call.1} parent=1 // pred_fallthru
      _
    // Predicated region
    $region130: #{tpu_custom_call.1} parent=1 // pred_check
      _
    $region131: #{tpu_custom_call.1} parent=1 // pred_check_branch
      %260 = sbr.rel (0) target = $region133
    $region132: #{tpu_custom_call.1} parent=1 // pred_region
      %261 = dma.done [#allocation27], 36864
    $region133: #{tpu_custom_call.1} parent=1 // pred_fallthru
      _
    %v263 = vld [vmem:[%s0] sm:$0xff]
    %v264 = vld [vmem:[%s0 + $0x8] sm:$0xff]
    %v265 = vld [vmem:[%s0 + $0x10] sm:$0xff]
    %v266 = vld [vmem:[%s0 + $0x18] sm:$0xff]
    %v267 = vpack.c.bf16 %v264, %v263
    %v268 = vpack.c.bf16 %v266, %v265
    %v269 = vld [vmem:[#allocation7] sm:$0xf]
    %v270 = vld [vmem:[#allocation7 + $0x4] sm:$0x3]
    %v271 = vld [vmem:[#allocation8] sm:$0x1]
    %v273 = vlaneseq
    %v274 = vshrl.u32 %v273, 7
    %v275 = vsub.s32 0, %v274
    %v276 = vrot.slane %v271, %v275
    %v280 = vunpack.c.l.b16 %v269
    %v281 = vunpack.c.l.b16 %v270
    %v282 = vpack.c.b16 %v281, %v280
    %vm283 = vcmask 97280
    %v285 = vsel %vm283, %v267, 0
    %v288 = vsel %vm283, %v268, 0
    %vm290 = vcmask 1045504
    %v292 = vsel %vm290, %v282, 0
    %294 = vmatprep.subr.bf16.mxu0 0
    %295 = vmatpush1.bf16.msra.mxu0 %v292
    %296 = vmatprep.subr.bf16.mxu0 0
    %297 = vmatpush1.bf16.msra.mxu0 0
    %298 = vmatprep.subr.bf16.mxu0 0
    %299 = vmatpush1.bf16.msra.mxu0 0
    %300 = vmatprep.subr.bf16.mxu0 0
    %301 = vmatpush1.bf16.msra.mxu0 0
    %302 = vmatprep.subr.bf16.mxu0 0
    %303 = vmatpush1.bf16.msra.mxu0 0
    %304 = vmatprep.subr.bf16.mxu0 0
    %305 = vmatpush1.bf16.msra.mxu0 0
    %306 = vmatprep.subr.bf16.mxu0 0
    %307 = vmatpush1.bf16.msra.mxu0 0
    %308 = vmatprep.subr.bf16.mxu0 0
    %309 = vmatpush1.bf16.msra.mxu0 0
    %310 = vmatprep.subr.bf16.mxu0 0
    %311 = vmatpush1.bf16.msra.mxu0 0
    %312 = vmatprep.subr.bf16.mxu0 0
    %313 = vmatpush1.bf16.msra.mxu0 0
    %314 = vmatprep.subr.bf16.mxu0 0
    %315 = vmatpush1.bf16.msra.mxu0 0
    %316 = vmatprep.subr.bf16.mxu0 0
    %317 = vmatpush1.bf16.msra.mxu0 0
    %318 = vmatprep.subr.bf16.mxu0 0
    %319 = vmatpush1.bf16.msra.mxu0 0
    %320 = vmatprep.subr.bf16.mxu0 0
    %321 = vmatpush1.bf16.msra.mxu0 0
    %322 = vmatprep.subr.bf16.mxu0 0
    %323 = vmatpush1.bf16.msra.mxu0 0
    %324 = vmatprep.subr.bf16.mxu0 0
    %325 = vmatpush1.bf16.msra.mxu0 0
    %326 = vmatprep.mubr.bf16.mxu0 0
    %327 = vmatmul.mubr.bf16.gmra.mrb[0].mxu0 %v285
    %v328 = vpop.f32.mrb[0].mxu0
    %v329 = vadd.f32 %v276, %v328
    %v330 = vpop.f32.mrb[0].mxu0
    %v331 = vpop.f32.mrb[0].mxu0
    %v332 = vadd.f32 %v276, %v331
    %v333 = vpop.f32.mrb[0].mxu0
    %334 = vmatprep.mubr.bf16.mxu0 0
    %335 = vmatmul.mubr.bf16.gmra.mrb[0].mxu0 %v288
    %v336 = vpop.f32.mrb[0].mxu0
    %v337 = vadd.f32 %v276, %v336
    %v338 = vpop.f32.mrb[0].mxu0
    %v339 = vpop.f32.mrb[0].mxu0
    %v340 = vadd.f32 %v276, %v339
    %v341 = vpop.f32.mrb[0].mxu0
    %342 = vdwg.mxu0
    %v343 = vmax.f32 %v329, 0.0
    %v344 = vmax.f32 %v332, 0.0
    %v345 = vmax.f32 %v337, 0.0
    %v346 = vmax.f32 %v340, 0.0
    %vm347 = vcmask 523264
    %v348 = vsel %vm347, %v343, 0.0
    %v349 = vsel %vm347, %v344, 0.0
    %v350 = vadd.f32 %v348, %v349
    %v351 = vrot.slane %v350, 4
    %v352 = vadd.f32 %v350, %v351
    %v353 = vrot.slane %v352, 2
    %v354 = vadd.f32 %v352, %v353
    %v355 = vrot.slane %v354, 1
    %v356 = vadd.f32 %v354, %v355
    %v357 = vsel %vm347, %v345, 0.0
    %v358 = vsel %vm347, %v346, 0.0
    %v359 = vadd.f32 %v357, %v358
    %v360 = vrot.slane %v359, 4
    %v361 = vadd.f32 %v359, %v360
    %v362 = vrot.slane %v361, 2
    %v363 = vadd.f32 %v361, %v362
    %v364 = vrot.slane %v363, 1
    %v365 = vadd.f32 %v363, %v364
    %v366 = vmul.f32 %v356, 0.0625
    %v367 = vmul.f32 %v365, 0.0625
    %v368 = vpack.c.bf16 %v366, %v366
    %v369 = vpack.c.bf16 %v367, %v367
    %v370 = vld [vmem:[#allocation2] sm:$0xff]
    %v371 = vld [vmem:[#allocation2 + $0x8] sm:$0xff]
    %v372 = vld [vmem:[#allocation2 + $0x10] sm:$0xff]
    %v373 = vld [vmem:[#allocation2 + $0x18] sm:$0xff]
    %v374 = vld [vmem:[#allocation2 + $0x20] sm:$0xff]
    %v375 = vld [vmem:[#allocation2 + $0x28] sm:$0xff]
    %v376 = vld [vmem:[#allocation2 + $0x30] sm:$0xff]
    %v377 = vld [vmem:[#allocation2 + $0x38] sm:$0xff]
    %v378 = vld [vmem:[#allocation2 + $0x40] sm:$0xff]
    %v379 = vld [vmem:[#allocation2 + $0x48] sm:$0xff]
    %v380 = vld [vmem:[#allocation2 + $0x50] sm:$0xff]
    %v381 = vld [vmem:[#allocation2 + $0x58] sm:$0xff]
    %v382 = vrot.slane %v370, 4
    %v383 = vadd.f32 %v370, %v382
    %v384 = vrot.slane %v383, 2
    %v385 = vadd.f32 %v383, %v384
    %v386 = vrot.slane %v385, 1
    %v387 = vadd.f32 %v385, %v386
    %v388 = vrot.slane %v371, 4
    %v389 = vadd.f32 %v371, %v388
    %v390 = vrot.slane %v389, 2
    %v391 = vadd.f32 %v389, %v390
    %v392 = vrot.slane %v391, 1
    %v393 = vadd.f32 %v391, %v392
    %v394 = vrot.slane %v372, 4
    %v395 = vadd.f32 %v372, %v394
    %v396 = vrot.slane %v395, 2
    %v397 = vadd.f32 %v395, %v396
    %v398 = vrot.slane %v397, 1
    %v399 = vadd.f32 %v397, %v398
    %v400 = vrot.slane %v373, 4
    %v401 = vadd.f32 %v373, %v400
    %v402 = vrot.slane %v401, 2
    %v403 = vadd.f32 %v401, %v402
    %v404 = vrot.slane %v403, 1
    %v405 = vadd.f32 %v403, %v404
    %v406 = vrot.slane %v374, 4
    %v407 = vadd.f32 %v374, %v406
    %v408 = vrot.slane %v407, 2
    %v409 = vadd.f32 %v407, %v408
    %v410 = vrot.slane %v409, 1
    %v411 = vadd.f32 %v409, %v410
    %v412 = vrot.slane %v375, 4
    %v413 = vadd.f32 %v375, %v412
    %v414 = vrot.slane %v413, 2
    %v415 = vadd.f32 %v413, %v414
    %v416 = vrot.slane %v415, 1
    %v417 = vadd.f32 %v415, %v416
    %v418 = vrot.slane %v376, 4
    %v419 = vadd.f32 %v376, %v418
    %v420 = vrot.slane %v419, 2
    %v421 = vadd.f32 %v419, %v420
    %v422 = vrot.slane %v421, 1
    %v423 = vadd.f32 %v421, %v422
    %v424 = vrot.slane %v377, 4
    %v425 = vadd.f32 %v377, %v424
    %v426 = vrot.slane %v425, 2
    %v427 = vadd.f32 %v425, %v426
    %v428 = vrot.slane %v427, 1
    %v429 = vadd.f32 %v427, %v428
    %v430 = vrot.slane %v378, 4
    %v431 = vadd.f32 %v378, %v430
    %v432 = vrot.slane %v431, 2
    %v433 = vadd.f32 %v431, %v432
    %v434 = vrot.slane %v433, 1
    %v435 = vadd.f32 %v433, %v434
    %v436 = vrot.slane %v379, 4
    %v437 = vadd.f32 %v379, %v436
    %v438 = vrot.slane %v437, 2
    %v439 = vadd.f32 %v437, %v438
    %v440 = vrot.slane %v439, 1
    %v441 = vadd.f32 %v439, %v440
    %v442 = vrot.slane %v380, 4
    %v443 = vadd.f32 %v380, %v442
    %v444 = vrot.slane %v443, 2
    %v445 = vadd.f32 %v443, %v444
    %v446 = vrot.slane %v445, 1
    %v447 = vadd.f32 %v445, %v446
    %v448 = vrot.slane %v381, 4
    %v449 = vadd.f32 %v381, %v448
    %v450 = vrot.slane %v449, 2
    %v451 = vadd.f32 %v449, %v450
    %v452 = vrot.slane %v451, 1
    %v453 = vadd.f32 %v451, %v452
    %v454 = vmul.f32 %v387, 0.125
    %v455 = vmul.f32 %v393, 0.125
    %v456 = vmul.f32 %v399, 0.125
    %v457 = vmul.f32 %v405, 0.125
    %v458 = vmul.f32 %v411, 0.125
    %v459 = vmul.f32 %v417, 0.125
    %v460 = vmul.f32 %v423, 0.125
    %v461 = vmul.f32 %v429, 0.125
    %v462 = vmul.f32 %v435, 0.125
    %v463 = vmul.f32 %v441, 0.125
    %v464 = vmul.f32 %v447, 0.125
    %v465 = vmul.f32 %v453, 0.125
    %v466 = vpack.c.bf16 %v454, %v454
    %v467 = vpack.c.bf16 %v455, %v455
    %v468 = vpack.c.bf16 %v456, %v456
    %v469 = vpack.c.bf16 %v457, %v457
    %v470 = vpack.c.bf16 %v458, %v458
    %v471 = vpack.c.bf16 %v459, %v459
    %v472 = vpack.c.bf16 %v460, %v460
    %v473 = vpack.c.bf16 %v461, %v461
    %v474 = vpack.c.bf16 %v462, %v462
    %v475 = vpack.c.bf16 %v463, %v463
    %v476 = vpack.c.bf16 %v464, %v464
    %v477 = vpack.c.bf16 %v465, %v465
    %v478 = vld [vmem:[#allocation10] sm:$0xff]
    %v479 = vld [vmem:[#allocation10 + $0x8] sm:$0xff]
    %v480 = vld [vmem:[#allocation10 + $0x10] sm:$0xff]
    %v481 = vld [vmem:[#allocation10 + $0x18] sm:$0xff]
    %v482 = vld [vmem:[#allocation10 + $0x20] sm:$0xff]
    %v483 = vld [vmem:[#allocation10 + $0x28] sm:$0xff]
    %v484 = vld [vmem:[#allocation10 + $0x30] sm:$0xff]
    %v485 = vld [vmem:[#allocation10 + $0x38] sm:$0xff]
    %v486 = vld [vmem:[#allocation10 + $0x40] sm:$0xff]
    %v487 = vld [vmem:[#allocation10 + $0x48] sm:$0xff]
    %v488 = vld [vmem:[#allocation10 + $0x50] sm:$0xff]
    %v489 = vld [vmem:[#allocation10 + $0x58] sm:$0xff]
    %v490 = vld [vmem:[#allocation10 + $0x60] sm:$0xff]
    %v491 = vld [vmem:[#allocation10 + $0x68] sm:$0xff]
    %v492 = vld [vmem:[#allocation10 + $0x70] sm:$0xff]
    %v493 = vld [vmem:[#allocation10 + $0x78] sm:$0xff]
    %v494 = vld [vmem:[#allocation10 + $0x80] sm:$0xff]
    %v495 = vld [vmem:[#allocation10 + $0x88] sm:$0xff]
    %v496 = vld [vmem:[#allocation10 + $0x90] sm:$0xff]
    %v497 = vld [vmem:[#allocation10 + $0x98] sm:$0xff]
    %v498 = vld [vmem:[#allocation10 + $0xa0] sm:$0xff]
    %v499 = vld [vmem:[#allocation10 + $0xa8] sm:$0xff]
    %v500 = vld [vmem:[#allocation10 + $0xb0] sm:$0xff]
    %v501 = vld [vmem:[#allocation10 + $0xb8] sm:$0xff]
    %v502 = vld [vmem:[#allocation10 + $0xc0] sm:$0xff]
    %v503 = vld [vmem:[#allocation10 + $0xc8] sm:$0xff]
    %v504 = vld [vmem:[#allocation10 + $0xd0] sm:$0xff]
    %v505 = vld [vmem:[#allocation10 + $0xd8] sm:$0xff]
    %v506 = vld [vmem:[#allocation10 + $0xe0] sm:$0xff]
    %v507 = vld [vmem:[#allocation10 + $0xe8] sm:$0xff]
    %v508 = vld [vmem:[#allocation10 + $0xf0] sm:$0xff]
    %v509 = vld [vmem:[#allocation10 + $0xf8] sm:$0xff]
    %v510 = vld [vmem:[#allocation10 + $0x100] sm:$0xff]
    %v511 = vld [vmem:[#allocation10 + $0x108] sm:$0xff]
    %v512 = vld [vmem:[#allocation10 + $0x110] sm:$0xff]
    %v513 = vld [vmem:[#allocation10 + $0x118] sm:$0xff]
    %v514 = vld [vmem:[#allocation10 + $0x120] sm:$0xff]
    %v515 = vld [vmem:[#allocation10 + $0x128] sm:$0xff]
    %v516 = vld [vmem:[#allocation10 + $0x130] sm:$0xff]
    %v517 = vld [vmem:[#allocation10 + $0x138] sm:$0xff]
    %v518 = vld [vmem:[#allocation10 + $0x140] sm:$0xff]
    %v519 = vld [vmem:[#allocation10 + $0x148] sm:$0xff]
    %v520 = vld [vmem:[#allocation10 + $0x150] sm:$0xff]
    %v521 = vld [vmem:[#allocation10 + $0x158] sm:$0xff]
    %v522 = vld [vmem:[#allocation10 + $0x160] sm:$0xff]
    %v523 = vld [vmem:[#allocation10 + $0x168] sm:$0xff]
    %v524 = vld [vmem:[#allocation10 + $0x170] sm:$0xff]
    %v525 = vld [vmem:[#allocation10 + $0x178] sm:$0xff]
    %v526 = vld [vmem:[#allocation10 + $0x180] sm:$0xff]
    %v527 = vld [vmem:[#allocation10 + $0x188] sm:$0xff]
    %v528 = vld [vmem:[#allocation10 + $0x190] sm:$0xff]
    %v529 = vld [vmem:[#allocation10 + $0x198] sm:$0xff]
    %v530 = vld [vmem:[#allocation10 + $0x1a0] sm:$0xff]
    %v531 = vld [vmem:[#allocation10 + $0x1a8] sm:$0xff]
    %v532 = vld [vmem:[#allocation10 + $0x1b0] sm:$0xff]
    %v533 = vld [vmem:[#allocation10 + $0x1b8] sm:$0xff]
    %v534 = vld [vmem:[#allocation10 + $0x1c0] sm:$0xff]
    %v535 = vld [vmem:[#allocation10 + $0x1c8] sm:$0xff]
    %v536 = vld [vmem:[#allocation10 + $0x1d0] sm:$0xff]
    %v537 = vld [vmem:[#allocation10 + $0x1d8] sm:$0xff]
    %v538 = vld [vmem:[#allocation10 + $0x1e0] sm:$0xff]
    %v539 = vld [vmem:[#allocation10 + $0x1e8] sm:$0xff]
    %v540 = vld [vmem:[#allocation10 + $0x1f0] sm:$0xff]
    %v541 = vld [vmem:[#allocation10 + $0x1f8] sm:$0xff]
    %v542 = vld [vmem:[#allocation10 + $0x200] sm:$0xff]
    %v543 = vld [vmem:[#allocation10 + $0x208] sm:$0xff]
    %v544 = vld [vmem:[#allocation10 + $0x210] sm:$0xff]
    %v545 = vld [vmem:[#allocation10 + $0x218] sm:$0xff]
    %v546 = vld [vmem:[#allocation10 + $0x220] sm:$0xff]
    %v547 = vld [vmem:[#allocation10 + $0x228] sm:$0xff]
    %v548 = vld [vmem:[#allocation10 + $0x230] sm:$0xff]
    %v549 = vld [vmem:[#allocation10 + $0x238] sm:$0xff]
    %v550 = vld [vmem:[#allocation10 + $0x240] sm:$0xff]
    %v551 = vld [vmem:[#allocation10 + $0x248] sm:$0xff]
    %v552 = vld [vmem:[#allocation10 + $0x250] sm:$0xff]
    %v553 = vld [vmem:[#allocation10 + $0x258] sm:$0xff]
    %v554 = vld [vmem:[#allocation10 + $0x260] sm:$0xff]
    %v555 = vld [vmem:[#allocation10 + $0x268] sm:$0xff]
    %v556 = vld [vmem:[#allocation10 + $0x270] sm:$0xff]
    %v557 = vld [vmem:[#allocation10 + $0x278] sm:$0xff]
    %v558 = vld [vmem:[#allocation10 + $0x280] sm:$0xff]
    %v559 = vld [vmem:[#allocation10 + $0x288] sm:$0xff]
    %v560 = vld [vmem:[#allocation10 + $0x290] sm:$0xff]
    %v561 = vld [vmem:[#allocation10 + $0x298] sm:$0xff]
    %v562 = vld [vmem:[#allocation10 + $0x2a0] sm:$0xff]
    %v563 = vld [vmem:[#allocation10 + $0x2a8] sm:$0xff]
    %v564 = vld [vmem:[#allocation10 + $0x2b0] sm:$0xff]
    %v565 = vld [vmem:[#allocation10 + $0x2b8] sm:$0xff]
    %v566 = vld [vmem:[#allocation10 + $0x2c0] sm:$0xff]
    %v567 = vld [vmem:[#allocation10 + $0x2c8] sm:$0xff]
    %v568 = vld [vmem:[#allocation10 + $0x2d0] sm:$0xff]
    %v569 = vld [vmem:[#allocation10 + $0x2d8] sm:$0xff]
    %v570 = vld [vmem:[#allocation10 + $0x2e0] sm:$0xff]
    %v571 = vld [vmem:[#allocation10 + $0x2e8] sm:$0xff]
    %v572 = vld [vmem:[#allocation10 + $0x2f0] sm:$0xff]
    %v573 = vld [vmem:[#allocation10 + $0x2f8] sm:$0xff]
    %v574 = vld [vmem:[#allocation10 + $0x300] sm:$0xff]
    %v575 = vld [vmem:[#allocation10 + $0x308] sm:$0xff]
    %v576 = vld [vmem:[#allocation10 + $0x310] sm:$0xff]
    %v577 = vld [vmem:[#allocation10 + $0x318] sm:$0xff]
    %v578 = vld [vmem:[#allocation10 + $0x320] sm:$0xff]
    %v579 = vld [vmem:[#allocation10 + $0x328] sm:$0xff]
    %v580 = vld [vmem:[#allocation10 + $0x330] sm:$0xff]
    %v581 = vld [vmem:[#allocation10 + $0x338] sm:$0xff]
    %v582 = vld [vmem:[#allocation10 + $0x340] sm:$0xff]
    %v583 = vld [vmem:[#allocation10 + $0x348] sm:$0xff]
    %v584 = vld [vmem:[#allocation10 + $0x350] sm:$0xff]
    %v585 = vld [vmem:[#allocation10 + $0x358] sm:$0xff]
    %v586 = vld [vmem:[#allocation10 + $0x360] sm:$0xff]
    %v587 = vld [vmem:[#allocation10 + $0x368] sm:$0xff]
    %v588 = vld [vmem:[#allocation10 + $0x370] sm:$0xff]
    %v589 = vld [vmem:[#allocation10 + $0x378] sm:$0xff]
    %v590 = vld [vmem:[#allocation10 + $0x380] sm:$0xff]
    %v591 = vld [vmem:[#allocation10 + $0x388] sm:$0xff]
    %v592 = vld [vmem:[#allocation10 + $0x390] sm:$0xff]
    %v593 = vld [vmem:[#allocation10 + $0x398] sm:$0xff]
    %v594 = vld [vmem:[#allocation10 + $0x3a0] sm:$0xff]
    %v595 = vld [vmem:[#allocation10 + $0x3a8] sm:$0xff]
    %v596 = vld [vmem:[#allocation10 + $0x3b0] sm:$0xff]
    %v597 = vld [vmem:[#allocation10 + $0x3b8] sm:$0xff]
    %v598 = vld [vmem:[#allocation10 + $0x3c0] sm:$0xff]
    %v599 = vld [vmem:[#allocation10 + $0x3c8] sm:$0xff]
    %v600 = vld [vmem:[#allocation10 + $0x3d0] sm:$0xff]
    %v601 = vld [vmem:[#allocation10 + $0x3d8] sm:$0xff]
    %v602 = vld [vmem:[#allocation10 + $0x3e0] sm:$0xff]
    %v603 = vld [vmem:[#allocation10 + $0x3e8] sm:$0xff]
    %v604 = vld [vmem:[#allocation10 + $0x3f0] sm:$0xff]
    %v605 = vld [vmem:[#allocation10 + $0x3f8] sm:$0xff]
    %v606 = vld [vmem:[#allocation10 + $0x400] sm:$0xff]
    %v607 = vld [vmem:[#allocation10 + $0x408] sm:$0xff]
    %v608 = vld [vmem:[#allocation10 + $0x410] sm:$0xff]
    %v609 = vld [vmem:[#allocation10 + $0x418] sm:$0xff]
    %v610 = vld [vmem:[#allocation10 + $0x420] sm:$0xff]
    %v611 = vld [vmem:[#allocation10 + $0x428] sm:$0xff]
    %v612 = vld [vmem:[#allocation10 + $0x430] sm:$0xff]
    %v613 = vld [vmem:[#allocation10 + $0x438] sm:$0xff]
    %v614 = vld [vmem:[#allocation10 + $0x440] sm:$0xff]
    %v615 = vld [vmem:[#allocation10 + $0x448] sm:$0xff]
    %v616 = vld [vmem:[#allocation10 + $0x450] sm:$0xff]
    %v617 = vld [vmem:[#allocation10 + $0x458] sm:$0xff]
    %v618 = vld [vmem:[#allocation10 + $0x460] sm:$0xff]
    %v619 = vld [vmem:[#allocation10 + $0x468] sm:$0xff]
    %v620 = vld [vmem:[#allocation10 + $0x470] sm:$0xff]
    %v621 = vld [vmem:[#allocation10 + $0x478] sm:$0xff]
    %v622 = vld [vmem:[#allocation10 + $0x480] sm:$0xff]
    %v623 = vld [vmem:[#allocation10 + $0x488] sm:$0xff]
    %v624 = vld [vmem:[#allocation10 + $0x490] sm:$0xff]
    %v625 = vld [vmem:[#allocation10 + $0x498] sm:$0xff]
    %v626 = vld [vmem:[#allocation10 + $0x4a0] sm:$0xff]
    %v627 = vld [vmem:[#allocation10 + $0x4a8] sm:$0xff]
    %v628 = vld [vmem:[#allocation10 + $0x4b0] sm:$0xff]
    %v629 = vld [vmem:[#allocation10 + $0x4b8] sm:$0xff]
    %v630 = vld [vmem:[#allocation10 + $0x4c0] sm:$0xff]
    %v631 = vld [vmem:[#allocation10 + $0x4c8] sm:$0xff]
    %v632 = vld [vmem:[#allocation10 + $0x4d0] sm:$0xff]
    %v633 = vld [vmem:[#allocation10 + $0x4d8] sm:$0xff]
    %v634 = vld [vmem:[#allocation10 + $0x4e0] sm:$0xff]
    %v635 = vld [vmem:[#allocation10 + $0x4e8] sm:$0xff]
    %v636 = vld [vmem:[#allocation10 + $0x4f0] sm:$0xff]
    %v637 = vld [vmem:[#allocation10 + $0x4f8] sm:$0xff]
    %v638 = vld [vmem:[#allocation10 + $0x500] sm:$0xff]
    %v639 = vld [vmem:[#allocation10 + $0x508] sm:$0xff]
    %v640 = vld [vmem:[#allocation10 + $0x510] sm:$0xff]
    %v641 = vld [vmem:[#allocation10 + $0x518] sm:$0xff]
    %v642 = vld [vmem:[#allocation10 + $0x520] sm:$0xff]
    %v643 = vld [vmem:[#allocation10 + $0x528] sm:$0xff]
    %v644 = vld [vmem:[#allocation10 + $0x530] sm:$0xff]
    %v645 = vld [vmem:[#allocation10 + $0x538] sm:$0xff]
    %v646 = vld [vmem:[#allocation10 + $0x540] sm:$0xff]
    %v647 = vld [vmem:[#allocation10 + $0x548] sm:$0xff]
    %v648 = vld [vmem:[#allocation10 + $0x550] sm:$0xff]
    %v649 = vld [vmem:[#allocation10 + $0x558] sm:$0xff]
    %v650 = vld [vmem:[#allocation10 + $0x560] sm:$0xff]
    %v651 = vld [vmem:[#allocation10 + $0x568] sm:$0xff]
    %v652 = vld [vmem:[#allocation10 + $0x570] sm:$0xff]
    %v653 = vld [vmem:[#allocation10 + $0x578] sm:$0xff]
    %v654 = vld [vmem:[#allocation10 + $0x580] sm:$0xff]
    %v655 = vld [vmem:[#allocation10 + $0x588] sm:$0xff]
    %v656 = vld [vmem:[#allocation10 + $0x590] sm:$0xff]
    %v657 = vld [vmem:[#allocation10 + $0x598] sm:$0xff]
    %v658 = vld [vmem:[#allocation10 + $0x5a0] sm:$0xff]
    %v659 = vld [vmem:[#allocation10 + $0x5a8] sm:$0xff]
    %v660 = vld [vmem:[#allocation10 + $0x5b0] sm:$0xff]
    %v661 = vld [vmem:[#allocation10 + $0x5b8] sm:$0xff]
    %v662 = vld [vmem:[#allocation10 + $0x5c0] sm:$0xff]
    %v663 = vld [vmem:[#allocation10 + $0x5c8] sm:$0xff]
    %v664 = vld [vmem:[#allocation10 + $0x5d0] sm:$0xff]
    %v665 = vld [vmem:[#allocation10 + $0x5d8] sm:$0xff]
    %v666 = vld [vmem:[#allocation10 + $0x5e0] sm:$0xff]
    %v667 = vld [vmem:[#allocation10 + $0x5e8] sm:$0xff]
    %v668 = vld [vmem:[#allocation10 + $0x5f0] sm:$0xff]
    %v669 = vld [vmem:[#allocation10 + $0x5f8] sm:$0xff]
    %v670 = vld [vmem:[#allocation10 + $0x600] sm:$0xff]
    %v671 = vld [vmem:[#allocation10 + $0x608] sm:$0xff]
    %v672 = vld [vmem:[#allocation10 + $0x610] sm:$0xff]
    %v673 = vld [vmem:[#allocation10 + $0x618] sm:$0xff]
    %v674 = vld [vmem:[#allocation10 + $0x620] sm:$0xff]
    %v675 = vld [vmem:[#allocation10 + $0x628] sm:$0xff]
    %v676 = vld [vmem:[#allocation10 + $0x630] sm:$0xff]
    %v677 = vld [vmem:[#allocation10 + $0x638] sm:$0xff]
    %v678 = vld [vmem:[#allocation10 + $0x640] sm:$0xff]
    %v679 = vld [vmem:[#allocation10 + $0x648] sm:$0xff]
    %v680 = vld [vmem:[#allocation10 + $0x650] sm:$0xff]
    %v681 = vld [vmem:[#allocation10 + $0x658] sm:$0xff]
    %v682 = vld [vmem:[#allocation10 + $0x660] sm:$0xff]
    %v683 = vld [vmem:[#allocation10 + $0x668] sm:$0xff]
    %v684 = vld [vmem:[#allocation10 + $0x670] sm:$0xff]
    %v685 = vld [vmem:[#allocation10 + $0x678] sm:$0xff]
    %v686 = vld [vmem:[#allocation10 + $0x680] sm:$0xff]
    %v687 = vld [vmem:[#allocation10 + $0x688] sm:$0xff]
    %v688 = vld [vmem:[#allocation10 + $0x690] sm:$0xff]
    %v689 = vld [vmem:[#allocation10 + $0x698] sm:$0xff]
    %v690 = vld [vmem:[#allocation10 + $0x6a0] sm:$0xff]
    %v691 = vld [vmem:[#allocation10 + $0x6a8] sm:$0xff]
    %v692 = vld [vmem:[#allocation10 + $0x6b0] sm:$0xff]
    %v693 = vld [vmem:[#allocation10 + $0x6b8] sm:$0xff]
    %v694 = vld [vmem:[#allocation10 + $0x6c0] sm:$0xff]
    %v695 = vld [vmem:[#allocation10 + $0x6c8] sm:$0xff]
    %v696 = vld [vmem:[#allocation10 + $0x6d0] sm:$0xff]
    %v697 = vld [vmem:[#allocation10 + $0x6d8] sm:$0xff]
    %v698 = vld [vmem:[#allocation10 + $0x6e0] sm:$0xff]
    %v699 = vld [vmem:[#allocation10 + $0x6e8] sm:$0xff]
    %v700 = vld [vmem:[#allocation10 + $0x6f0] sm:$0xff]
    %v701 = vld [vmem:[#allocation10 + $0x6f8] sm:$0xff]
    %v702 = vld [vmem:[#allocation10 + $0x700] sm:$0xff]
    %v703 = vld [vmem:[#allocation10 + $0x708] sm:$0xff]
    %v704 = vld [vmem:[#allocation10 + $0x710] sm:$0xff]
    %v705 = vld [vmem:[#allocation10 + $0x718] sm:$0xff]
    %v706 = vld [vmem:[#allocation10 + $0x720] sm:$0xff]
    %v707 = vld [vmem:[#allocation10 + $0x728] sm:$0xff]
    %v708 = vld [vmem:[#allocation10 + $0x730] sm:$0xff]
    %v709 = vld [vmem:[#allocation10 + $0x738] sm:$0xff]
    %v710 = vld [vmem:[#allocation10 + $0x740] sm:$0xff]
    %v711 = vld [vmem:[#allocation10 + $0x748] sm:$0xff]
    %v712 = vld [vmem:[#allocation10 + $0x750] sm:$0xff]
    %v713 = vld [vmem:[#allocation10 + $0x758] sm:$0xff]
    %v714 = vld [vmem:[#allocation10 + $0x760] sm:$0xff]
    %v715 = vld [vmem:[#allocation10 + $0x768] sm:$0xff]
    %v716 = vld [vmem:[#allocation10 + $0x770] sm:$0xff]
    %v717 = vld [vmem:[#allocation10 + $0x778] sm:$0xff]
    %v718 = vld [vmem:[#allocation10 + $0x780] sm:$0xff]
    %v719 = vld [vmem:[#allocation10 + $0x788] sm:$0xff]
    %v720 = vld [vmem:[#allocation10 + $0x790] sm:$0xff]
    %v721 = vld [vmem:[#allocation10 + $0x798] sm:$0xff]
    %v722 = vld [vmem:[#allocation10 + $0x7a0] sm:$0xff]
    %v723 = vld [vmem:[#allocation10 + $0x7a8] sm:$0xff]
    %v724 = vld [vmem:[#allocation10 + $0x7b0] sm:$0xff]
    %v725 = vld [vmem:[#allocation10 + $0x7b8] sm:$0xff]
    %v726 = vld [vmem:[#allocation10 + $0x7c0] sm:$0xff]
    %v727 = vld [vmem:[#allocation10 + $0x7c8] sm:$0xff]
    %v728 = vld [vmem:[#allocation10 + $0x7d0] sm:$0xff]
    %v729 = vld [vmem:[#allocation10 + $0x7d8] sm:$0xff]
    %v730 = vld [vmem:[#allocation10 + $0x7e0] sm:$0xff]
    %v731 = vld [vmem:[#allocation10 + $0x7e8] sm:$0xff]
    %v732 = vld [vmem:[#allocation10 + $0x7f0] sm:$0xff]
    %v733 = vld [vmem:[#allocation10 + $0x7f8] sm:$0xff]
    %v734 = vld [vmem:[#allocation10 + $0x800] sm:$0xff]
    %v735 = vld [vmem:[#allocation10 + $0x808] sm:$0xff]
    %v736 = vld [vmem:[#allocation10 + $0x810] sm:$0xff]
    %v737 = vld [vmem:[#allocation10 + $0x818] sm:$0xff]
    %v738 = vld [vmem:[#allocation10 + $0x820] sm:$0xff]
    %v739 = vld [vmem:[#allocation10 + $0x828] sm:$0xff]
    %v740 = vld [vmem:[#allocation10 + $0x830] sm:$0xff]
    %v741 = vld [vmem:[#allocation10 + $0x838] sm:$0xff]
    %v742 = vld [vmem:[#allocation10 + $0x840] sm:$0xff]
    %v743 = vld [vmem:[#allocation10 + $0x848] sm:$0xff]
    %v744 = vld [vmem:[#allocation10 + $0x850] sm:$0xff]
    %v745 = vld [vmem:[#allocation10 + $0x858] sm:$0xff]
    %v746 = vld [vmem:[#allocation10 + $0x860] sm:$0xff]
    %v747 = vld [vmem:[#allocation10 + $0x868] sm:$0xff]
    %v748 = vld [vmem:[#allocation10 + $0x870] sm:$0xff]
    %v749 = vld [vmem:[#allocation10 + $0x878] sm:$0xff]
    %v750 = vld [vmem:[#allocation10 + $0x880] sm:$0xff]
    %v751 = vld [vmem:[#allocation10 + $0x888] sm:$0xff]
    %v752 = vld [vmem:[#allocation10 + $0x890] sm:$0xff]
    %v753 = vld [vmem:[#allocation10 + $0x898] sm:$0xff]
    %v754 = vld [vmem:[#allocation10 + $0x8a0] sm:$0xff]
    %v755 = vld [vmem:[#allocation10 + $0x8a8] sm:$0xff]
    %v756 = vld [vmem:[#allocation10 + $0x8b0] sm:$0xff]
    %v757 = vld [vmem:[#allocation10 + $0x8b8] sm:$0xff]
    %v758 = vld [vmem:[#allocation10 + $0x8c0] sm:$0xff]
    %v759 = vld [vmem:[#allocation10 + $0x8c8] sm:$0xff]
    %v760 = vld [vmem:[#allocation10 + $0x8d0] sm:$0xff]
    %v761 = vld [vmem:[#allocation10 + $0x8d8] sm:$0xff]
    %v762 = vld [vmem:[#allocation10 + $0x8e0] sm:$0xff]
    %v763 = vld [vmem:[#allocation10 + $0x8e8] sm:$0xff]
    %v764 = vld [vmem:[#allocation10 + $0x8f0] sm:$0xff]
    %v765 = vld [vmem:[#allocation10 + $0x8f8] sm:$0xff]
    %v766 = vld [vmem:[#allocation11] sm:$0x3f]
    %v768 = vlaneseq
    %v769 = vshrl.u32 %v768, 7
    %v770 = vsub.s32 0, %v769
    %v771 = vrot.slane %v766, %v770
    %v772 = vlaneseq
    %v773 = vshrl.u32 %v772, 7
    %v774 = vsub.s32 1, %v773
    %v775 = vrot.slane %v766, %v774
    %v776 = vlaneseq
    %v777 = vshrl.u32 %v776, 7
    %v778 = vsub.s32 2, %v777
    %v779 = vrot.slane %v766, %v778
    %v780 = vlaneseq
    %v781 = vshrl.u32 %v780, 7
    %v782 = vsub.s32 3, %v781
    %v783 = vrot.slane %v766, %v782
    %v784 = vlaneseq
    %v785 = vshrl.u32 %v784, 7
    %v786 = vsub.s32 4, %v785
    %v787 = vrot.slane %v766, %v786
    %v788 = vlaneseq
    %v789 = vshrl.u32 %v788, 7
    %v790 = vsub.s32 5, %v789
    %v791 = vrot.slane %v766, %v790
    %v810 = vunpack.c.l.b16 %v466
    %v811 = vunpack.c.l.b16 %v467
    %v812 = vunpack.c.l.b16 %v468
    %v813 = vunpack.c.l.b16 %v469
    %v814 = vunpack.c.l.b16 %v470
    %v815 = vunpack.c.l.b16 %v471
    %v816 = vunpack.c.l.b16 %v472
    %v817 = vunpack.c.l.b16 %v473
    %v818 = vunpack.c.l.b16 %v474
    %v819 = vunpack.c.l.b16 %v475
    %v820 = vunpack.c.l.b16 %v476
    %v821 = vunpack.c.l.b16 %v477
    %vm822 = vcmask 1041409
    %v823 = vsel %vm822, %v816, %v810
    %v824 = vsel %vm822, %v817, %v811
    %v825 = vsel %vm822, %v818, %v812
    %v826 = vsel %vm822, %v819, %v813
    %v827 = vsel %vm822, %v820, %v814
    %v828 = vsel %vm822, %v821, %v815
    %v829 = vpack.c.b16 %v823, %v823
    %v830 = vpack.c.b16 %v824, %v824
    %v831 = vpack.c.b16 %v825, %v825
    %v832 = vpack.c.b16 %v826, %v826
    %v833 = vpack.c.b16 %v827, %v827
    %v834 = vpack.c.b16 %v828, %v828
    %v1129 = vunpack.c.l.b16 %v478
    %v1130 = vunpack.c.h.b16 %v478
    %v1131 = vunpack.c.l.b16 %v479
    %v1132 = vunpack.c.h.b16 %v479
    %v1133 = vunpack.c.l.b16 %v480
    %v1134 = vunpack.c.h.b16 %v480
    %v1135 = vunpack.c.l.b16 %v481
    %v1136 = vunpack.c.h.b16 %v481
    %v1137 = vunpack.c.l.b16 %v482
    %v1138 = vunpack.c.h.b16 %v482
    %v1139 = vunpack.c.l.b16 %v483
    %v1140 = vunpack.c.h.b16 %v483
    %v1141 = vunpack.c.l.b16 %v484
    %v1142 = vunpack.c.h.b16 %v484
    %v1143 = vunpack.c.l.b16 %v485
    %v1144 = vunpack.c.h.b16 %v485
    %v1145 = vunpack.c.l.b16 %v486
    %v1146 = vunpack.c.h.b16 %v486
    %v1147 = vunpack.c.l.b16 %v487
    %v1148 = vunpack.c.h.b16 %v487
    %v1149 = vunpack.c.l.b16 %v488
    %v1150 = vunpack.c.h.b16 %v488
    %v1151 = vunpack.c.l.b16 %v489
    %v1152 = vunpack.c.h.b16 %v489
    %v1153 = vunpack.c.l.b16 %v490
    %v1154 = vunpack.c.h.b16 %v490
    %v1155 = vunpack.c.l.b16 %v491
    %v1156 = vunpack.c.h.b16 %v491
    %v1157 = vunpack.c.l.b16 %v492
    %v1158 = vunpack.c.h.b16 %v492
    %v1159 = vunpack.c.l.b16 %v493
    %v1160 = vunpack.c.h.b16 %v493
    %v1161 = vunpack.c.l.b16 %v494
    %v1162 = vunpack.c.h.b16 %v494
    %v1163 = vunpack.c.l.b16 %v495
    %v1164 = vunpack.c.h.b16 %v495
    %v1165 = vunpack.c.l.b16 %v496
    %v1166 = vunpack.c.h.b16 %v496
    %v1167 = vunpack.c.l.b16 %v497
    %v1168 = vunpack.c.h.b16 %v497
    %v1169 = vunpack.c.l.b16 %v498
    %v1170 = vunpack.c.h.b16 %v498
    %v1171 = vunpack.c.l.b16 %v499
    %v1172 = vunpack.c.h.b16 %v499
    %v1173 = vunpack.c.l.b16 %v500
    %v1174 = vunpack.c.h.b16 %v500
    %v1175 = vunpack.c.l.b16 %v501
    %v1176 = vunpack.c.h.b16 %v501
    %v1177 = vunpack.c.l.b16 %v502
    %v1178 = vunpack.c.h.b16 %v502
    %v1179 = vunpack.c.l.b16 %v503
    %v1180 = vunpack.c.h.b16 %v503
    %v1181 = vunpack.c.l.b16 %v504
    %v1182 = vunpack.c.h.b16 %v504
    %v1183 = vunpack.c.l.b16 %v505
    %v1184 = vunpack.c.h.b16 %v505
    %v1185 = vunpack.c.l.b16 %v506
    %v1186 = vunpack.c.h.b16 %v506
    %v1187 = vunpack.c.l.b16 %v507
    %v1188 = vunpack.c.h.b16 %v507
    %v1189 = vunpack.c.l.b16 %v508
    %v1190 = vunpack.c.h.b16 %v508
    %v1191 = vunpack.c.l.b16 %v509
    %v1192 = vunpack.c.h.b16 %v509
    %v1193 = vunpack.c.l.b16 %v510
    %v1194 = vunpack.c.h.b16 %v510
    %v1195 = vunpack.c.l.b16 %v511
    %v1196 = vunpack.c.h.b16 %v511
    %v1197 = vunpack.c.l.b16 %v512
    %v1198 = vunpack.c.h.b16 %v512
    %v1199 = vunpack.c.l.b16 %v513
    %v1200 = vunpack.c.h.b16 %v513
    %v1201 = vunpack.c.l.b16 %v514
    %v1202 = vunpack.c.h.b16 %v514
    %v1203 = vunpack.c.l.b16 %v515
    %v1204 = vunpack.c.h.b16 %v515
    %v1205 = vunpack.c.l.b16 %v516
    %v1206 = vunpack.c.h.b16 %v516
    %v1207 = vunpack.c.l.b16 %v517
    %v1208 = vunpack.c.h.b16 %v517
    %v1209 = vunpack.c.l.b16 %v518
    %v1210 = vunpack.c.h.b16 %v518
    %v1211 = vunpack.c.l.b16 %v519
    %v1212 = vunpack.c.h.b16 %v519
    %v1213 = vunpack.c.l.b16 %v520
    %v1214 = vunpack.c.h.b16 %v520
    %v1215 = vunpack.c.l.b16 %v521
    %v1216 = vunpack.c.h.b16 %v521
    %v1217 = vunpack.c.l.b16 %v522
    %v1218 = vunpack.c.h.b16 %v522
    %v1219 = vunpack.c.l.b16 %v523
    %v1220 = vunpack.c.h.b16 %v523
    %v1221 = vunpack.c.l.b16 %v524
    %v1222 = vunpack.c.h.b16 %v524
    %v1223 = vunpack.c.l.b16 %v525
    %v1224 = vunpack.c.h.b16 %v525
    %v1225 = vunpack.c.l.b16 %v526
    %v1226 = vunpack.c.h.b16 %v526
    %v1227 = vunpack.c.l.b16 %v527
    %v1228 = vunpack.c.h.b16 %v527
    %v1229 = vunpack.c.l.b16 %v528
    %v1230 = vunpack.c.h.b16 %v528
    %v1231 = vunpack.c.l.b16 %v529
    %v1232 = vunpack.c.h.b16 %v529
    %v1233 = vunpack.c.l.b16 %v530
    %v1234 = vunpack.c.h.b16 %v530
    %v1235 = vunpack.c.l.b16 %v531
    %v1236 = vunpack.c.h.b16 %v531
    %v1237 = vunpack.c.l.b16 %v532
    %v1238 = vunpack.c.h.b16 %v532
    %v1239 = vunpack.c.l.b16 %v533
    %v1240 = vunpack.c.h.b16 %v533
    %v1241 = vunpack.c.l.b16 %v534
    %v1242 = vunpack.c.h.b16 %v534
    %v1243 = vunpack.c.l.b16 %v535
    %v1244 = vunpack.c.h.b16 %v535
    %v1245 = vunpack.c.l.b16 %v536
    %v1246 = vunpack.c.h.b16 %v536
    %v1247 = vunpack.c.l.b16 %v537
    %v1248 = vunpack.c.h.b16 %v537
    %v1249 = vunpack.c.l.b16 %v538
    %v1250 = vunpack.c.h.b16 %v538
    %v1251 = vunpack.c.l.b16 %v539
    %v1252 = vunpack.c.h.b16 %v539
    %v1253 = vunpack.c.l.b16 %v540
    %v1254 = vunpack.c.h.b16 %v540
    %v1255 = vunpack.c.l.b16 %v541
    %v1256 = vunpack.c.h.b16 %v541
    %v1257 = vunpack.c.l.b16 %v542
    %v1258 = vunpack.c.h.b16 %v542
    %v1259 = vunpack.c.l.b16 %v543
    %v1260 = vunpack.c.h.b16 %v543
    %v1261 = vunpack.c.l.b16 %v544
    %v1262 = vunpack.c.h.b16 %v544
    %v1263 = vunpack.c.l.b16 %v545
    %v1264 = vunpack.c.h.b16 %v545
    %v1265 = vunpack.c.l.b16 %v546
    %v1266 = vunpack.c.h.b16 %v546
    %v1267 = vunpack.c.l.b16 %v547
    %v1268 = vunpack.c.h.b16 %v547
    %v1269 = vunpack.c.l.b16 %v548
    %v1270 = vunpack.c.h.b16 %v548
    %v1271 = vunpack.c.l.b16 %v549
    %v1272 = vunpack.c.h.b16 %v549
    %v1273 = vunpack.c.l.b16 %v550
    %v1274 = vunpack.c.h.b16 %v550
    %v1275 = vunpack.c.l.b16 %v551
    %v1276 = vunpack.c.h.b16 %v551
    %v1277 = vunpack.c.l.b16 %v552
    %v1278 = vunpack.c.h.b16 %v552
    %v1279 = vunpack.c.l.b16 %v553
    %v1280 = vunpack.c.h.b16 %v553
    %v1281 = vunpack.c.l.b16 %v554
    %v1282 = vunpack.c.h.b16 %v554
    %v1283 = vunpack.c.l.b16 %v555
    %v1284 = vunpack.c.h.b16 %v555
    %v1285 = vunpack.c.l.b16 %v556
    %v1286 = vunpack.c.h.b16 %v556
    %v1287 = vunpack.c.l.b16 %v557
    %v1288 = vunpack.c.h.b16 %v557
    %v1289 = vunpack.c.l.b16 %v558
    %v1290 = vunpack.c.h.b16 %v558
    %v1291 = vunpack.c.l.b16 %v559
    %v1292 = vunpack.c.h.b16 %v559
    %v1293 = vunpack.c.l.b16 %v560
    %v1294 = vunpack.c.h.b16 %v560
    %v1295 = vunpack.c.l.b16 %v561
    %v1296 = vunpack.c.h.b16 %v561
    %v1297 = vunpack.c.l.b16 %v562
    %v1298 = vunpack.c.h.b16 %v562
    %v1299 = vunpack.c.l.b16 %v563
    %v1300 = vunpack.c.h.b16 %v563
    %v1301 = vunpack.c.l.b16 %v564
    %v1302 = vunpack.c.h.b16 %v564
    %v1303 = vunpack.c.l.b16 %v565
    %v1304 = vunpack.c.h.b16 %v565
    %v1305 = vunpack.c.l.b16 %v566
    %v1306 = vunpack.c.h.b16 %v566
    %v1307 = vunpack.c.l.b16 %v567
    %v1308 = vunpack.c.h.b16 %v567
    %v1309 = vunpack.c.l.b16 %v568
    %v1310 = vunpack.c.h.b16 %v568
    %v1311 = vunpack.c.l.b16 %v569
    %v1312 = vunpack.c.h.b16 %v569
    %v1313 = vunpack.c.l.b16 %v570
    %v1314 = vunpack.c.h.b16 %v570
    %v1315 = vunpack.c.l.b16 %v571
    %v1316 = vunpack.c.h.b16 %v571
    %v1317 = vunpack.c.l.b16 %v572
    %v1318 = vunpack.c.h.b16 %v572
    %v1319 = vunpack.c.l.b16 %v573
    %v1320 = vunpack.c.h.b16 %v573
    %v1321 = vunpack.c.l.b16 %v574
    %v1322 = vunpack.c.h.b16 %v574
    %v1323 = vunpack.c.l.b16 %v575
    %v1324 = vunpack.c.h.b16 %v575
    %v1325 = vunpack.c.l.b16 %v576
    %v1326 = vunpack.c.h.b16 %v576
    %v1327 = vunpack.c.l.b16 %v577
    %v1328 = vunpack.c.h.b16 %v577
    %v1329 = vunpack.c.l.b16 %v578
    %v1330 = vunpack.c.h.b16 %v578
    %v1331 = vunpack.c.l.b16 %v579
    %v1332 = vunpack.c.h.b16 %v579
    %v1333 = vunpack.c.l.b16 %v580
    %v1334 = vunpack.c.h.b16 %v580
    %v1335 = vunpack.c.l.b16 %v581
    %v1336 = vunpack.c.h.b16 %v581
    %v1337 = vunpack.c.l.b16 %v582
    %v1338 = vunpack.c.h.b16 %v582
    %v1339 = vunpack.c.l.b16 %v583
    %v1340 = vunpack.c.h.b16 %v583
    %v1341 = vunpack.c.l.b16 %v584
    %v1342 = vunpack.c.h.b16 %v584
    %v1343 = vunpack.c.l.b16 %v585
    %v1344 = vunpack.c.h.b16 %v585
    %v1345 = vunpack.c.l.b16 %v586
    %v1346 = vunpack.c.h.b16 %v586
    %v1347 = vunpack.c.l.b16 %v587
    %v1348 = vunpack.c.h.b16 %v587
    %v1349 = vunpack.c.l.b16 %v588
    %v1350 = vunpack.c.h.b16 %v588
    %v1351 = vunpack.c.l.b16 %v589
    %v1352 = vunpack.c.h.b16 %v589
    %v1353 = vunpack.c.l.b16 %v590
    %v1354 = vunpack.c.h.b16 %v590
    %v1355 = vunpack.c.l.b16 %v591
    %v1356 = vunpack.c.h.b16 %v591
    %v1357 = vunpack.c.l.b16 %v592
    %v1358 = vunpack.c.h.b16 %v592
    %v1359 = vunpack.c.l.b16 %v593
    %v1360 = vunpack.c.h.b16 %v593
    %v1361 = vunpack.c.l.b16 %v594
    %v1362 = vunpack.c.h.b16 %v594
    %v1363 = vunpack.c.l.b16 %v595
    %v1364 = vunpack.c.h.b16 %v595
    %v1365 = vunpack.c.l.b16 %v596
    %v1366 = vunpack.c.h.b16 %v596
    %v1367 = vunpack.c.l.b16 %v597
    %v1368 = vunpack.c.h.b16 %v597
    %v1369 = vunpack.c.l.b16 %v598
    %v1370 = vunpack.c.h.b16 %v598
    %v1371 = vunpack.c.l.b16 %v599
    %v1372 = vunpack.c.h.b16 %v599
    %v1373 = vunpack.c.l.b16 %v600
    %v1374 = vunpack.c.h.b16 %v600
    %v1375 = vunpack.c.l.b16 %v601
    %v1376 = vunpack.c.h.b16 %v601
    %v1377 = vunpack.c.l.b16 %v602
    %v1378 = vunpack.c.h.b16 %v602
    %v1379 = vunpack.c.l.b16 %v603
    %v1380 = vunpack.c.h.b16 %v603
    %v1381 = vunpack.c.l.b16 %v604
    %v1382 = vunpack.c.h.b16 %v604
    %v1383 = vunpack.c.l.b16 %v605
    %v1384 = vunpack.c.h.b16 %v605
    %v1385 = vunpack.c.l.b16 %v606
    %v1386 = vunpack.c.h.b16 %v606
    %v1387 = vunpack.c.l.b16 %v607
    %v1388 = vunpack.c.h.b16 %v607
    %v1389 = vunpack.c.l.b16 %v608
    %v1390 = vunpack.c.h.b16 %v608
    %v1391 = vunpack.c.l.b16 %v609
    %v1392 = vunpack.c.h.b16 %v609
    %v1393 = vunpack.c.l.b16 %v610
    %v1394 = vunpack.c.h.b16 %v610
    %v1395 = vunpack.c.l.b16 %v611
    %v1396 = vunpack.c.h.b16 %v611
    %v1397 = vunpack.c.l.b16 %v612
    %v1398 = vunpack.c.h.b16 %v612
    %v1399 = vunpack.c.l.b16 %v613
    %v1400 = vunpack.c.h.b16 %v613
    %v1401 = vunpack.c.l.b16 %v614
    %v1402 = vunpack.c.h.b16 %v614
    %v1403 = vunpack.c.l.b16 %v615
    %v1404 = vunpack.c.h.b16 %v615
    %v1405 = vunpack.c.l.b16 %v616
    %v1406 = vunpack.c.h.b16 %v616
    %v1407 = vunpack.c.l.b16 %v617
    %v1408 = vunpack.c.h.b16 %v617
    %v1409 = vunpack.c.l.b16 %v618
    %v1410 = vunpack.c.h.b16 %v618
    %v1411 = vunpack.c.l.b16 %v619
    %v1412 = vunpack.c.h.b16 %v619
    %v1413 = vunpack.c.l.b16 %v620
    %v1414 = vunpack.c.h.b16 %v620
    %v1415 = vunpack.c.l.b16 %v621
    %v1416 = vunpack.c.h.b16 %v621
    %v1417 = vunpack.c.l.b16 %v622
    %v1418 = vunpack.c.h.b16 %v622
    %v1419 = vunpack.c.l.b16 %v623
    %v1420 = vunpack.c.h.b16 %v623
    %v1421 = vunpack.c.l.b16 %v624
    %v1422 = vunpack.c.h.b16 %v624
    %v1423 = vunpack.c.l.b16 %v625
    %v1424 = vunpack.c.h.b16 %v625
    %v1425 = vunpack.c.l.b16 %v626
    %v1426 = vunpack.c.h.b16 %v626
    %v1427 = vunpack.c.l.b16 %v627
    %v1428 = vunpack.c.h.b16 %v627
    %v1429 = vunpack.c.l.b16 %v628
    %v1430 = vunpack.c.h.b16 %v628
    %v1431 = vunpack.c.l.b16 %v629
    %v1432 = vunpack.c.h.b16 %v629
    %v1433 = vunpack.c.l.b16 %v630
    %v1434 = vunpack.c.h.b16 %v630
    %v1435 = vunpack.c.l.b16 %v631
    %v1436 = vunpack.c.h.b16 %v631
    %v1437 = vunpack.c.l.b16 %v632
    %v1438 = vunpack.c.h.b16 %v632
    %v1439 = vunpack.c.l.b16 %v633
    %v1440 = vunpack.c.h.b16 %v633
    %v1441 = vunpack.c.l.b16 %v634
    %v1442 = vunpack.c.h.b16 %v634
    %v1443 = vunpack.c.l.b16 %v635
    %v1444 = vunpack.c.h.b16 %v635
    %v1445 = vunpack.c.l.b16 %v636
    %v1446 = vunpack.c.h.b16 %v636
    %v1447 = vunpack.c.l.b16 %v637
    %v1448 = vunpack.c.h.b16 %v637
    %v1449 = vunpack.c.l.b16 %v638
    %v1450 = vunpack.c.h.b16 %v638
    %v1451 = vunpack.c.l.b16 %v639
    %v1452 = vunpack.c.h.b16 %v639
    %v1453 = vunpack.c.l.b16 %v640
    %v1454 = vunpack.c.h.b16 %v640
    %v1455 = vunpack.c.l.b16 %v641
    %v1456 = vunpack.c.h.b16 %v641
    %v1457 = vunpack.c.l.b16 %v642
    %v1458 = vunpack.c.h.b16 %v642
    %v1459 = vunpack.c.l.b16 %v643
    %v1460 = vunpack.c.h.b16 %v643
    %v1461 = vunpack.c.l.b16 %v644
    %v1462 = vunpack.c.h.b16 %v644
    %v1463 = vunpack.c.l.b16 %v645
    %v1464 = vunpack.c.h.b16 %v645
    %v1465 = vunpack.c.l.b16 %v646
    %v1466 = vunpack.c.h.b16 %v646
    %v1467 = vunpack.c.l.b16 %v647
    %v1468 = vunpack.c.h.b16 %v647
    %v1469 = vunpack.c.l.b16 %v648
    %v1470 = vunpack.c.h.b16 %v648
    %v1471 = vunpack.c.l.b16 %v649
    %v1472 = vunpack.c.h.b16 %v649
    %v1473 = vunpack.c.l.b16 %v650
    %v1474 = vunpack.c.h.b16 %v650
    %v1475 = vunpack.c.l.b16 %v651
    %v1476 = vunpack.c.h.b16 %v651
    %v1477 = vunpack.c.l.b16 %v652
    %v1478 = vunpack.c.h.b16 %v652
    %v1479 = vunpack.c.l.b16 %v653
    %v1480 = vunpack.c.h.b16 %v653
    %v1481 = vunpack.c.l.b16 %v654
    %v1482 = vunpack.c.h.b16 %v654
    %v1483 = vunpack.c.l.b16 %v655
    %v1484 = vunpack.c.h.b16 %v655
    %v1485 = vunpack.c.l.b16 %v656
    %v1486 = vunpack.c.h.b16 %v656
    %v1487 = vunpack.c.l.b16 %v657
    %v1488 = vunpack.c.h.b16 %v657
    %v1489 = vunpack.c.l.b16 %v658
    %v1490 = vunpack.c.h.b16 %v658
    %v1491 = vunpack.c.l.b16 %v659
    %v1492 = vunpack.c.h.b16 %v659
    %v1493 = vunpack.c.l.b16 %v660
    %v1494 = vunpack.c.h.b16 %v660
    %v1495 = vunpack.c.l.b16 %v661
    %v1496 = vunpack.c.h.b16 %v661
    %v1497 = vunpack.c.l.b16 %v662
    %v1498 = vunpack.c.h.b16 %v662
    %v1499 = vunpack.c.l.b16 %v663
    %v1500 = vunpack.c.h.b16 %v663
    %v1501 = vunpack.c.l.b16 %v664
    %v1502 = vunpack.c.h.b16 %v664
    %v1503 = vunpack.c.l.b16 %v665
    %v1504 = vunpack.c.h.b16 %v665
    %v1505 = vunpack.c.l.b16 %v666
    %v1506 = vunpack.c.h.b16 %v666
    %v1507 = vunpack.c.l.b16 %v667
    %v1508 = vunpack.c.h.b16 %v667
    %v1509 = vunpack.c.l.b16 %v668
    %v1510 = vunpack.c.h.b16 %v668
    %v1511 = vunpack.c.l.b16 %v669
    %v1512 = vunpack.c.h.b16 %v669
    %v1513 = vunpack.c.l.b16 %v670
    %v1514 = vunpack.c.h.b16 %v670
    %v1515 = vunpack.c.l.b16 %v671
    %v1516 = vunpack.c.h.b16 %v671
    %v1517 = vunpack.c.l.b16 %v672
    %v1518 = vunpack.c.h.b16 %v672
    %v1519 = vunpack.c.l.b16 %v673
    %v1520 = vunpack.c.h.b16 %v673
    %v1521 = vunpack.c.l.b16 %v674
    %v1522 = vunpack.c.h.b16 %v674
    %v1523 = vunpack.c.l.b16 %v675
    %v1524 = vunpack.c.h.b16 %v675
    %v1525 = vunpack.c.l.b16 %v676
    %v1526 = vunpack.c.h.b16 %v676
    %v1527 = vunpack.c.l.b16 %v677
    %v1528 = vunpack.c.h.b16 %v677
    %v1529 = vunpack.c.l.b16 %v678
    %v1530 = vunpack.c.h.b16 %v678
    %v1531 = vunpack.c.l.b16 %v679
    %v1532 = vunpack.c.h.b16 %v679
    %v1533 = vunpack.c.l.b16 %v680
    %v1534 = vunpack.c.h.b16 %v680
    %v1535 = vunpack.c.l.b16 %v681
    %v1536 = vunpack.c.h.b16 %v681
    %v1537 = vunpack.c.l.b16 %v682
    %v1538 = vunpack.c.h.b16 %v682
    %v1539 = vunpack.c.l.b16 %v683
    %v1540 = vunpack.c.h.b16 %v683
    %v1541 = vunpack.c.l.b16 %v684
    %v1542 = vunpack.c.h.b16 %v684
    %v1543 = vunpack.c.l.b16 %v685
    %v1544 = vunpack.c.h.b16 %v685
    %v1545 = vunpack.c.l.b16 %v686
    %v1546 = vunpack.c.h.b16 %v686
    %v1547 = vunpack.c.l.b16 %v687
    %v1548 = vunpack.c.h.b16 %v687
    %v1549 = vunpack.c.l.b16 %v688
    %v1550 = vunpack.c.h.b16 %v688
    %v1551 = vunpack.c.l.b16 %v689
    %v1552 = vunpack.c.h.b16 %v689
    %v1553 = vunpack.c.l.b16 %v690
    %v1554 = vunpack.c.h.b16 %v690
    %v1555 = vunpack.c.l.b16 %v691
    %v1556 = vunpack.c.h.b16 %v691
    %v1557 = vunpack.c.l.b16 %v692
    %v1558 = vunpack.c.h.b16 %v692
    %v1559 = vunpack.c.l.b16 %v693
    %v1560 = vunpack.c.h.b16 %v693
    %v1561 = vunpack.c.l.b16 %v694
    %v1562 = vunpack.c.h.b16 %v694
    %v1563 = vunpack.c.l.b16 %v695
    %v1564 = vunpack.c.h.b16 %v695
    %v1565 = vunpack.c.l.b16 %v696
    %v1566 = vunpack.c.h.b16 %v696
    %v1567 = vunpack.c.l.b16 %v697
    %v1568 = vunpack.c.h.b16 %v697
    %v1569 = vunpack.c.l.b16 %v698
    %v1570 = vunpack.c.h.b16 %v698
    %v1571 = vunpack.c.l.b16 %v699
    %v1572 = vunpack.c.h.b16 %v699
    %v1573 = vunpack.c.l.b16 %v700
    %v1574 = vunpack.c.h.b16 %v700
    %v1575 = vunpack.c.l.b16 %v701
    %v1576 = vunpack.c.h.b16 %v701
    %v1577 = vunpack.c.l.b16 %v702
    %v1578 = vunpack.c.h.b16 %v702
    %v1579 = vunpack.c.l.b16 %v703
    %v1580 = vunpack.c.h.b16 %v703
    %v1581 = vunpack.c.l.b16 %v704
    %v1582 = vunpack.c.h.b16 %v704
    %v1583 = vunpack.c.l.b16 %v705
    %v1584 = vunpack.c.h.b16 %v705
    %v1585 = vunpack.c.l.b16 %v706
    %v1586 = vunpack.c.h.b16 %v706
    %v1587 = vunpack.c.l.b16 %v707
    %v1588 = vunpack.c.h.b16 %v707
    %v1589 = vunpack.c.l.b16 %v708
    %v1590 = vunpack.c.h.b16 %v708
    %v1591 = vunpack.c.l.b16 %v709
    %v1592 = vunpack.c.h.b16 %v709
    %v1593 = vunpack.c.l.b16 %v710
    %v1594 = vunpack.c.h.b16 %v710
    %v1595 = vunpack.c.l.b16 %v711
    %v1596 = vunpack.c.h.b16 %v711
    %v1597 = vunpack.c.l.b16 %v712
    %v1598 = vunpack.c.h.b16 %v712
    %v1599 = vunpack.c.l.b16 %v713
    %v1600 = vunpack.c.h.b16 %v713
    %v1601 = vunpack.c.l.b16 %v714
    %v1602 = vunpack.c.h.b16 %v714
    %v1603 = vunpack.c.l.b16 %v715
    %v1604 = vunpack.c.h.b16 %v715
    %v1605 = vunpack.c.l.b16 %v716
    %v1606 = vunpack.c.h.b16 %v716
    %v1607 = vunpack.c.l.b16 %v717
    %v1608 = vunpack.c.h.b16 %v717
    %v1609 = vunpack.c.l.b16 %v718
    %v1610 = vunpack.c.h.b16 %v718
    %v1611 = vunpack.c.l.b16 %v719
    %v1612 = vunpack.c.h.b16 %v719
    %v1613 = vunpack.c.l.b16 %v720
    %v1614 = vunpack.c.h.b16 %v720
    %v1615 = vunpack.c.l.b16 %v721
    %v1616 = vunpack.c.h.b16 %v721
    %v1617 = vunpack.c.l.b16 %v722
    %v1618 = vunpack.c.h.b16 %v722
    %v1619 = vunpack.c.l.b16 %v723
    %v1620 = vunpack.c.h.b16 %v723
    %v1621 = vunpack.c.l.b16 %v724
    %v1622 = vunpack.c.h.b16 %v724
    %v1623 = vunpack.c.l.b16 %v725
    %v1624 = vunpack.c.h.b16 %v725
    %v1625 = vunpack.c.l.b16 %v726
    %v1626 = vunpack.c.h.b16 %v726
    %v1627 = vunpack.c.l.b16 %v727
    %v1628 = vunpack.c.h.b16 %v727
    %v1629 = vunpack.c.l.b16 %v728
    %v1630 = vunpack.c.h.b16 %v728
    %v1631 = vunpack.c.l.b16 %v729
    %v1632 = vunpack.c.h.b16 %v729
    %v1633 = vunpack.c.l.b16 %v730
    %v1634 = vunpack.c.h.b16 %v730
    %v1635 = vunpack.c.l.b16 %v731
    %v1636 = vunpack.c.h.b16 %v731
    %v1637 = vunpack.c.l.b16 %v732
    %v1638 = vunpack.c.h.b16 %v732
    %v1639 = vunpack.c.l.b16 %v733
    %v1640 = vunpack.c.h.b16 %v733
    %v1641 = vunpack.c.l.b16 %v734
    %v1642 = vunpack.c.h.b16 %v734
    %v1643 = vunpack.c.l.b16 %v735
    %v1644 = vunpack.c.h.b16 %v735
    %v1645 = vunpack.c.l.b16 %v736
    %v1646 = vunpack.c.h.b16 %v736
    %v1647 = vunpack.c.l.b16 %v737
    %v1648 = vunpack.c.h.b16 %v737
    %v1649 = vunpack.c.l.b16 %v738
    %v1650 = vunpack.c.h.b16 %v738
    %v1651 = vunpack.c.l.b16 %v739
    %v1652 = vunpack.c.h.b16 %v739
    %v1653 = vunpack.c.l.b16 %v740
    %v1654 = vunpack.c.h.b16 %v740
    %v1655 = vunpack.c.l.b16 %v741
    %v1656 = vunpack.c.h.b16 %v741
    %v1657 = vunpack.c.l.b16 %v742
    %v1658 = vunpack.c.h.b16 %v742
    %v1659 = vunpack.c.l.b16 %v743
    %v1660 = vunpack.c.h.b16 %v743
    %v1661 = vunpack.c.l.b16 %v744
    %v1662 = vunpack.c.h.b16 %v744
    %v1663 = vunpack.c.l.b16 %v745
    %v1664 = vunpack.c.h.b16 %v745
    %v1665 = vunpack.c.l.b16 %v746
    %v1666 = vunpack.c.h.b16 %v746
    %v1667 = vunpack.c.l.b16 %v747
    %v1668 = vunpack.c.h.b16 %v747
    %v1669 = vunpack.c.l.b16 %v748
    %v1670 = vunpack.c.h.b16 %v748
    %v1671 = vunpack.c.l.b16 %v749
    %v1672 = vunpack.c.h.b16 %v749
    %v1673 = vunpack.c.l.b16 %v750
    %v1674 = vunpack.c.h.b16 %v750
    %v1675 = vunpack.c.l.b16 %v751
    %v1676 = vunpack.c.h.b16 %v751
    %v1677 = vunpack.c.l.b16 %v752
    %v1678 = vunpack.c.h.b16 %v752
    %v1679 = vunpack.c.l.b16 %v753
    %v1680 = vunpack.c.h.b16 %v753
    %v1681 = vunpack.c.l.b16 %v754
    %v1682 = vunpack.c.h.b16 %v754
    %v1683 = vunpack.c.l.b16 %v755
    %v1684 = vunpack.c.h.b16 %v755
    %v1685 = vunpack.c.l.b16 %v756
    %v1686 = vunpack.c.h.b16 %v756
    %v1687 = vunpack.c.l.b16 %v757
    %v1688 = vunpack.c.h.b16 %v757
    %v1689 = vunpack.c.l.b16 %v758
    %v1690 = vunpack.c.h.b16 %v758
    %v1691 = vunpack.c.l.b16 %v759
    %v1692 = vunpack.c.h.b16 %v759
    %v1693 = vunpack.c.l.b16 %v760
    %v1694 = vunpack.c.h.b16 %v760
    %v1695 = vunpack.c.l.b16 %v761
    %v1696 = vunpack.c.h.b16 %v761
    %v1697 = vunpack.c.l.b16 %v762
    %v1698 = vunpack.c.h.b16 %v762
    %v1699 = vunpack.c.l.b16 %v763
    %v1700 = vunpack.c.h.b16 %v763
    %v1701 = vunpack.c.l.b16 %v764
    %v1702 = vunpack.c.h.b16 %v764
    %v1703 = vunpack.c.l.b16 %v765
    %v1704 = vunpack.c.h.b16 %v765
    %v1705 = vpack.c.b16 %v1135, %v1129
    %v1706 = vpack.c.b16 %v1136, %v1130
    %v1707 = vpack.c.b16 %v1137, %v1131
    %v1708 = vpack.c.b16 %v1138, %v1132
    %v1709 = vpack.c.b16 %v1139, %v1133
    %v1710 = vpack.c.b16 %v1140, %v1134
    %v1711 = vpack.c.b16 %v1147, %v1141
    %v1712 = vpack.c.b16 %v1148, %v1142
    %v1713 = vpack.c.b16 %v1149, %v1143
    %v1714 = vpack.c.b16 %v1150, %v1144
    %v1715 = vpack.c.b16 %v1151, %v1145
    %v1716 = vpack.c.b16 %v1152, %v1146
    %v1717 = vpack.c.b16 %v1159, %v1153
    %v1718 = vpack.c.b16 %v1160, %v1154
    %v1719 = vpack.c.b16 %v1161, %v1155
    %v1720 = vpack.c.b16 %v1162, %v1156
    %v1721 = vpack.c.b16 %v1163, %v1157
    %v1722 = vpack.c.b16 %v1164, %v1158
    %v1723 = vpack.c.b16 %v1171, %v1165
    %v1724 = vpack.c.b16 %v1172, %v1166
    %v1725 = vpack.c.b16 %v1173, %v1167
    %v1726 = vpack.c.b16 %v1174, %v1168
    %v1727 = vpack.c.b16 %v1175, %v1169
    %v1728 = vpack.c.b16 %v1176, %v1170
    %v1729 = vpack.c.b16 %v1183, %v1177
    %v1730 = vpack.c.b16 %v1184, %v1178
    %v1731 = vpack.c.b16 %v1185, %v1179
    %v1732 = vpack.c.b16 %v1186, %v1180
    %v1733 = vpack.c.b16 %v1187, %v1181
    %v1734 = vpack.c.b16 %v1188, %v1182
    %v1735 = vpack.c.b16 %v1195, %v1189
    %v1736 = vpack.c.b16 %v1196, %v1190
    %v1737 = vpack.c.b16 %v1197, %v1191
    %v1738 = vpack.c.b16 %v1198, %v1192
    %v1739 = vpack.c.b16 %v1199, %v1193
    %v1740 = vpack.c.b16 %v1200, %v1194
    %v1741 = vpack.c.b16 %v1207, %v1201
    %v1742 = vpack.c.b16 %v1208, %v1202
    %v1743 = vpack.c.b16 %v1209, %v1203
    %v1744 = vpack.c.b16 %v1210, %v1204
    %v1745 = vpack.c.b16 %v1211, %v1205
    %v1746 = vpack.c.b16 %v1212, %v1206
    %v1747 = vpack.c.b16 %v1219, %v1213
    %v1748 = vpack.c.b16 %v1220, %v1214
    %v1749 = vpack.c.b16 %v1221, %v1215
    %v1750 = vpack.c.b16 %v1222, %v1216
    %v1751 = vpack.c.b16 %v1223, %v1217
    %v1752 = vpack.c.b16 %v1224, %v1218
    %v1753 = vpack.c.b16 %v1231, %v1225
    %v1754 = vpack.c.b16 %v1232, %v1226
    %v1755 = vpack.c.b16 %v1233, %v1227
    %v1756 = vpack.c.b16 %v1234, %v1228
    %v1757 = vpack.c.b16 %v1235, %v1229
    %v1758 = vpack.c.b16 %v1236, %v1230
    %v1759 = vpack.c.b16 %v1243, %v1237
    %v1760 = vpack.c.b16 %v1244, %v1238
    %v1761 = vpack.c.b16 %v1245, %v1239
    %v1762 = vpack.c.b16 %v1246, %v1240
    %v1763 = vpack.c.b16 %v1247, %v1241
    %v1764 = vpack.c.b16 %v1248, %v1242
    %v1765 = vpack.c.b16 %v1255, %v1249
    %v1766 = vpack.c.b16 %v1256, %v1250
    %v1767 = vpack.c.b16 %v1257, %v1251
    %v1768 = vpack.c.b16 %v1258, %v1252
    %v1769 = vpack.c.b16 %v1259, %v1253
    %v1770 = vpack.c.b16 %v1260, %v1254
    %v1771 = vpack.c.b16 %v1267, %v1261
    %v1772 = vpack.c.b16 %v1268, %v1262
    %v1773 = vpack.c.b16 %v1269, %v1263
    %v1774 = vpack.c.b16 %v1270, %v1264
    %v1775 = vpack.c.b16 %v1271, %v1265
    %v1776 = vpack.c.b16 %v1272, %v1266
    %v1777 = vpack.c.b16 %v1279, %v1273
    %v1778 = vpack.c.b16 %v1280, %v1274
    %v1779 = vpack.c.b16 %v1281, %v1275
    %v1780 = vpack.c.b16 %v1282, %v1276
    %v1781 = vpack.c.b16 %v1283, %v1277
    %v1782 = vpack.c.b16 %v1284, %v1278
    %v1783 = vpack.c.b16 %v1291, %v1285
    %v1784 = vpack.c.b16 %v1292, %v1286
    %v1785 = vpack.c.b16 %v1293, %v1287
    %v1786 = vpack.c.b16 %v1294, %v1288
    %v1787 = vpack.c.b16 %v1295, %v1289
    %v1788 = vpack.c.b16 %v1296, %v1290
    %v1789 = vpack.c.b16 %v1303, %v1297
    %v1790 = vpack.c.b16 %v1304, %v1298
    %v1791 = vpack.c.b16 %v1305, %v1299
    %v1792 = vpack.c.b16 %v1306, %v1300
    %v1793 = vpack.c.b16 %v1307, %v1301
    %v1794 = vpack.c.b16 %v1308, %v1302
    %v1795 = vpack.c.b16 %v1315, %v1309
    %v1796 = vpack.c.b16 %v1316, %v1310
    %v1797 = vpack.c.b16 %v1317, %v1311
    %v1798 = vpack.c.b16 %v1318, %v1312
    %v1799 = vpack.c.b16 %v1319, %v1313
    %v1800 = vpack.c.b16 %v1320, %v1314
    %v1801 = vpack.c.b16 %v1327, %v1321
    %v1802 = vpack.c.b16 %v1328, %v1322
    %v1803 = vpack.c.b16 %v1329, %v1323
    %v1804 = vpack.c.b16 %v1330, %v1324
    %v1805 = vpack.c.b16 %v1331, %v1325
    %v1806 = vpack.c.b16 %v1332, %v1326
    %v1807 = vpack.c.b16 %v1339, %v1333
    %v1808 = vpack.c.b16 %v1340, %v1334
    %v1809 = vpack.c.b16 %v1341, %v1335
    %v1810 = vpack.c.b16 %v1342, %v1336
    %v1811 = vpack.c.b16 %v1343, %v1337
    %v1812 = vpack.c.b16 %v1344, %v1338
    %v1813 = vpack.c.b16 %v1351, %v1345
    %v1814 = vpack.c.b16 %v1352, %v1346
    %v1815 = vpack.c.b16 %v1353, %v1347
    %v1816 = vpack.c.b16 %v1354, %v1348
    %v1817 = vpack.c.b16 %v1355, %v1349
    %v1818 = vpack.c.b16 %v1356, %v1350
    %v1819 = vpack.c.b16 %v1363, %v1357
    %v1820 = vpack.c.b16 %v1364, %v1358
    %v1821 = vpack.c.b16 %v1365, %v1359
    %v1822 = vpack.c.b16 %v1366, %v1360
    %v1823 = vpack.c.b16 %v1367, %v1361
    %v1824 = vpack.c.b16 %v1368, %v1362
    %v1825 = vpack.c.b16 %v1375, %v1369
    %v1826 = vpack.c.b16 %v1376, %v1370
    %v1827 = vpack.c.b16 %v1377, %v1371
    %v1828 = vpack.c.b16 %v1378, %v1372
    %v1829 = vpack.c.b16 %v1379, %v1373
    %v1830 = vpack.c.b16 %v1380, %v1374
    %v1831 = vpack.c.b16 %v1387, %v1381
    %v1832 = vpack.c.b16 %v1388, %v1382
    %v1833 = vpack.c.b16 %v1389, %v1383
    %v1834 = vpack.c.b16 %v1390, %v1384
    %v1835 = vpack.c.b16 %v1391, %v1385
    %v1836 = vpack.c.b16 %v1392, %v1386
    %v1837 = vpack.c.b16 %v1399, %v1393
    %v1838 = vpack.c.b16 %v1400, %v1394
    %v1839 = vpack.c.b16 %v1401, %v1395
    %v1840 = vpack.c.b16 %v1402, %v1396
    %v1841 = vpack.c.b16 %v1403, %v1397
    %v1842 = vpack.c.b16 %v1404, %v1398
    %v1843 = vpack.c.b16 %v1411, %v1405
    %v1844 = vpack.c.b16 %v1412, %v1406
    %v1845 = vpack.c.b16 %v1413, %v1407
    %v1846 = vpack.c.b16 %v1414, %v1408
    %v1847 = vpack.c.b16 %v1415, %v1409
    %v1848 = vpack.c.b16 %v1416, %v1410
    %v1849 = vpack.c.b16 %v1423, %v1417
    %v1850 = vpack.c.b16 %v1424, %v1418
    %v1851 = vpack.c.b16 %v1425, %v1419
    %v1852 = vpack.c.b16 %v1426, %v1420
    %v1853 = vpack.c.b16 %v1427, %v1421
    %v1854 = vpack.c.b16 %v1428, %v1422
    %v1855 = vpack.c.b16 %v1435, %v1429
    %v1856 = vpack.c.b16 %v1436, %v1430
    %v1857 = vpack.c.b16 %v1437, %v1431
    %v1858 = vpack.c.b16 %v1438, %v1432
    %v1859 = vpack.c.b16 %v1439, %v1433
    %v1860 = vpack.c.b16 %v1440, %v1434
    %v1861 = vpack.c.b16 %v1447, %v1441
    %v1862 = vpack.c.b16 %v1448, %v1442
    %v1863 = vpack.c.b16 %v1449, %v1443
    %v1864 = vpack.c.b16 %v1450, %v1444
    %v1865 = vpack.c.b16 %v1451, %v1445
    %v1866 = vpack.c.b16 %v1452, %v1446
    %v1867 = vpack.c.b16 %v1459, %v1453
    %v1868 = vpack.c.b16 %v1460, %v1454
    %v1869 = vpack.c.b16 %v1461, %v1455
    %v1870 = vpack.c.b16 %v1462, %v1456
    %v1871 = vpack.c.b16 %v1463, %v1457
    %v1872 = vpack.c.b16 %v1464, %v1458
    %v1873 = vpack.c.b16 %v1471, %v1465
    %v1874 = vpack.c.b16 %v1472, %v1466
    %v1875 = vpack.c.b16 %v1473, %v1467
    %v1876 = vpack.c.b16 %v1474, %v1468
    %v1877 = vpack.c.b16 %v1475, %v1469
    %v1878 = vpack.c.b16 %v1476, %v1470
    %v1879 = vpack.c.b16 %v1483, %v1477
    %v1880 = vpack.c.b16 %v1484, %v1478
    %v1881 = vpack.c.b16 %v1485, %v1479
    %v1882 = vpack.c.b16 %v1486, %v1480
    %v1883 = vpack.c.b16 %v1487, %v1481
    %v1884 = vpack.c.b16 %v1488, %v1482
    %v1885 = vpack.c.b16 %v1495, %v1489
    %v1886 = vpack.c.b16 %v1496, %v1490
    %v1887 = vpack.c.b16 %v1497, %v1491
    %v1888 = vpack.c.b16 %v1498, %v1492
    %v1889 = vpack.c.b16 %v1499, %v1493
    %v1890 = vpack.c.b16 %v1500, %v1494
    %v1891 = vpack.c.b16 %v1507, %v1501
    %v1892 = vpack.c.b16 %v1508, %v1502
    %v1893 = vpack.c.b16 %v1509, %v1503
    %v1894 = vpack.c.b16 %v1510, %v1504
    %v1895 = vpack.c.b16 %v1511, %v1505
    %v1896 = vpack.c.b16 %v1512, %v1506
    %v1897 = vpack.c.b16 %v1519, %v1513
    %v1898 = vpack.c.b16 %v1520, %v1514
    %v1899 = vpack.c.b16 %v1521, %v1515
    %v1900 = vpack.c.b16 %v1522, %v1516
    %v1901 = vpack.c.b16 %v1523, %v1517
    %v1902 = vpack.c.b16 %v1524, %v1518
    %v1903 = vpack.c.b16 %v1531, %v1525
    %v1904 = vpack.c.b16 %v1532, %v1526
    %v1905 = vpack.c.b16 %v1533, %v1527
    %v1906 = vpack.c.b16 %v1534, %v1528
    %v1907 = vpack.c.b16 %v1535, %v1529
    %v1908 = vpack.c.b16 %v1536, %v1530
    %v1909 = vpack.c.b16 %v1543, %v1537
    %v1910 = vpack.c.b16 %v1544, %v1538
    %v1911 = vpack.c.b16 %v1545, %v1539
    %v1912 = vpack.c.b16 %v1546, %v1540
    %v1913 = vpack.c.b16 %v1547, %v1541
    %v1914 = vpack.c.b16 %v1548, %v1542
    %v1915 = vpack.c.b16 %v1555, %v1549
    %v1916 = vpack.c.b16 %v1556, %v1550
    %v1917 = vpack.c.b16 %v1557, %v1551
    %v1918 = vpack.c.b16 %v1558, %v1552
    %v1919 = vpack.c.b16 %v1559, %v1553
    %v1920 = vpack.c.b16 %v1560, %v1554
    %v1921 = vpack.c.b16 %v1567, %v1561
    %v1922 = vpack.c.b16 %v1568, %v1562
    %v1923 = vpack.c.b16 %v1569, %v1563
    %v1924 = vpack.c.b16 %v1570, %v1564
    %v1925 = vpack.c.b16 %v1571, %v1565
    %v1926 = vpack.c.b16 %v1572, %v1566
    %v1927 = vpack.c.b16 %v1579, %v1573
    %v1928 = vpack.c.b16 %v1580, %v1574
    %v1929 = vpack.c.b16 %v1581, %v1575
    %v1930 = vpack.c.b16 %v1582, %v1576
    %v1931 = vpack.c.b16 %v1583, %v1577
    %v1932 = vpack.c.b16 %v1584, %v1578
    %v1933 = vpack.c.b16 %v1591, %v1585
    %v1934 = vpack.c.b16 %v1592, %v1586
    %v1935 = vpack.c.b16 %v1593, %v1587
    %v1936 = vpack.c.b16 %v1594, %v1588
    %v1937 = vpack.c.b16 %v1595, %v1589
    %v1938 = vpack.c.b16 %v1596, %v1590
    %v1939 = vpack.c.b16 %v1603, %v1597
    %v1940 = vpack.c.b16 %v1604, %v1598
    %v1941 = vpack.c.b16 %v1605, %v1599
    %v1942 = vpack.c.b16 %v1606, %v1600
    %v1943 = vpack.c.b16 %v1607, %v1601
    %v1944 = vpack.c.b16 %v1608, %v1602
    %v1945 = vpack.c.b16 %v1615, %v1609
    %v1946 = vpack.c.b16 %v1616, %v1610
    %v1947 = vpack.c.b16 %v1617, %v1611
    %v1948 = vpack.c.b16 %v1618, %v1612
    %v1949 = vpack.c.b16 %v1619, %v1613
    %v1950 = vpack.c.b16 %v1620, %v1614
    %v1951 = vpack.c.b16 %v1627, %v1621
    %v1952 = vpack.c.b16 %v1628, %v1622
    %v1953 = vpack.c.b16 %v1629, %v1623
    %v1954 = vpack.c.b16 %v1630, %v1624
    %v1955 = vpack.c.b16 %v1631, %v1625
    %v1956 = vpack.c.b16 %v1632, %v1626
    %v1957 = vpack.c.b16 %v1639, %v1633
    %v1958 = vpack.c.b16 %v1640, %v1634
    %v1959 = vpack.c.b16 %v1641, %v1635
    %v1960 = vpack.c.b16 %v1642, %v1636
    %v1961 = vpack.c.b16 %v1643, %v1637
    %v1962 = vpack.c.b16 %v1644, %v1638
    %v1963 = vpack.c.b16 %v1651, %v1645
    %v1964 = vpack.c.b16 %v1652, %v1646
    %v1965 = vpack.c.b16 %v1653, %v1647
    %v1966 = vpack.c.b16 %v1654, %v1648
    %v1967 = vpack.c.b16 %v1655, %v1649
    %v1968 = vpack.c.b16 %v1656, %v1650
    %v1969 = vpack.c.b16 %v1663, %v1657
    %v1970 = vpack.c.b16 %v1664, %v1658
    %v1971 = vpack.c.b16 %v1665, %v1659
    %v1972 = vpack.c.b16 %v1666, %v1660
    %v1973 = vpack.c.b16 %v1667, %v1661
    %v1974 = vpack.c.b16 %v1668, %v1662
    %v1975 = vpack.c.b16 %v1675, %v1669
    %v1976 = vpack.c.b16 %v1676, %v1670
    %v1977 = vpack.c.b16 %v1677, %v1671
    %v1978 = vpack.c.b16 %v1678, %v1672
    %v1979 = vpack.c.b16 %v1679, %v1673
    %v1980 = vpack.c.b16 %v1680, %v1674
    %v1981 = vpack.c.b16 %v1687, %v1681
    %v1982 = vpack.c.b16 %v1688, %v1682
    %v1983 = vpack.c.b16 %v1689, %v1683
    %v1984 = vpack.c.b16 %v1690, %v1684
    %v1985 = vpack.c.b16 %v1691, %v1685
    %v1986 = vpack.c.b16 %v1692, %v1686
    %v1987 = vpack.c.b16 %v1699, %v1693
    %v1988 = vpack.c.b16 %v1700, %v1694
    %v1989 = vpack.c.b16 %v1701, %v1695
    %v1990 = vpack.c.b16 %v1702, %v1696
    %v1991 = vpack.c.b16 %v1703, %v1697
    %v1992 = vpack.c.b16 %v1704, %v1698
    %2281 = vmatprep.subr.bf16.mxu0 %v1706
    %2282 = vmatpush1.bf16.msra.mxu0 %v1705
    %2283 = vmatprep.subr.bf16.mxu0 %v1712
    %2284 = vmatpush1.bf16.msra.mxu0 %v1711
    %2285 = vmatprep.subr.bf16.mxu0 %v1718
    %2286 = vmatpush1.bf16.msra.mxu0 %v1717
    %2287 = vmatprep.subr.bf16.mxu0 %v1724
    %2288 = vmatpush1.bf16.msra.mxu0 %v1723
    %2289 = vmatprep.subr.bf16.mxu0 %v1730
    %2290 = vmatpush1.bf16.msra.mxu0 %v1729
    %2291 = vmatprep.subr.bf16.mxu0 %v1736
    %2292 = vmatpush1.bf16.msra.mxu0 %v1735
    %2293 = vmatprep.subr.bf16.mxu0 %v1742
    %2294 = vmatpush1.bf16.msra.mxu0 %v1741
    %2295 = vmatprep.subr.bf16.mxu0 %v1748
    %2296 = vmatpush1.bf16.msra.mxu0 %v1747
    %2297 = vmatprep.subr.bf16.mxu0 %v1754
    %2298 = vmatpush1.bf16.msra.mxu0 %v1753
    %2299 = vmatprep.subr.bf16.mxu0 %v1760
    %2300 = vmatpush1.bf16.msra.mxu0 %v1759
    %2301 = vmatprep.subr.bf16.mxu0 %v1766
    %2302 = vmatpush1.bf16.msra.mxu0 %v1765
    %2303 = vmatprep.subr.bf16.mxu0 %v1772
    %2304 = vmatpush1.bf16.msra.mxu0 %v1771
    %2305 = vmatprep.subr.bf16.mxu0 %v1778
    %2306 = vmatpush1.bf16.msra.mxu0 %v1777
    %2307 = vmatprep.subr.bf16.mxu0 %v1784
    %2308 = vmatpush1.bf16.msra.mxu0 %v1783
    %2309 = vmatprep.subr.bf16.mxu0 %v1790
    %2310 = vmatpush1.bf16.msra.mxu0 %v1789
    %2311 = vmatprep.subr.bf16.mxu0 %v1796
    %2312 = vmatpush1.bf16.msra.mxu0 %v1795
    %2313 = vmatprep.mubr.bf16.mxu0 %v830
    %2314 = vmatmul.mubr.bf16.gmra.mrb[0].mxu0 %v829
    %v2315 = vpop.f32.mrb[0].mxu0
    %v2316 = vadd.f32 %v771, %v2315
    %v2317 = vpop.f32.mrb[0].mxu0
    %v2318 = vadd.f32 %v775, %v2317
    %v2319 = vpop.f32.mrb[0].mxu0
    %v2320 = vpop.f32.mrb[0].mxu0
    %2321 = vdwg.mxu0
    %2322 = vmatprep.subr.bf16.mxu0 %v1802
    %2323 = vmatpush1.bf16.msra.mxu0 %v1801
    %2324 = vmatprep.subr.bf16.mxu0 %v1808
    %2325 = vmatpush1.bf16.msra.mxu0 %v1807
    %2326 = vmatprep.subr.bf16.mxu0 %v1814
    %2327 = vmatpush1.bf16.msra.mxu0 %v1813
    %2328 = vmatprep.subr.bf16.mxu0 %v1820
    %2329 = vmatpush1.bf16.msra.mxu0 %v1819
    %2330 = vmatprep.subr.bf16.mxu0 %v1826
    %2331 = vmatpush1.bf16.msra.mxu0 %v1825
    %2332 = vmatprep.subr.bf16.mxu0 %v1832
    %2333 = vmatpush1.bf16.msra.mxu0 %v1831
    %2334 = vmatprep.subr.bf16.mxu0 %v1838
    %2335 = vmatpush1.bf16.msra.mxu0 %v1837
    %2336 = vmatprep.subr.bf16.mxu0 %v1844
    %2337 = vmatpush1.bf16.msra.mxu0 %v1843
    %2338 = vmatprep.subr.bf16.mxu0 %v1850
    %2339 = vmatpush1.bf16.msra.mxu0 %v1849
    %2340 = vmatprep.subr.bf16.mxu0 %v1856
    %2341 = vmatpush1.bf16.msra.mxu0 %v1855
    %2342 = vmatprep.subr.bf16.mxu0 %v1862
    %2343 = vmatpush1.bf16.msra.mxu0 %v1861
    %2344 = vmatprep.subr.bf16.mxu0 %v1868
    %2345 = vmatpush1.bf16.msra.mxu0 %v1867
    %2346 = vmatprep.subr.bf16.mxu0 %v1874
    %2347 = vmatpush1.bf16.msra.mxu0 %v1873
    %2348 = vmatprep.subr.bf16.mxu0 %v1880
    %2349 = vmatpush1.bf16.msra.mxu0 %v1879
    %2350 = vmatprep.subr.bf16.mxu0 %v1886
    %2351 = vmatpush1.bf16.msra.mxu0 %v1885
    %2352 = vmatprep.subr.bf16.mxu0 %v1892
    %2353 = vmatpush1.bf16.msra.mxu0 %v1891
    %2354 = vmatprep.mubr.bf16.mxu0 %v832
    %2355 = vmatmul.mubr.bf16.gmra.mrb[0].mxu0 %v831
    %v2356 = vpop.f32.mrb[0].mxu0
    %v2357 = vadd.f32 %v2316, %v2356
    %v2358 = vpop.f32.mrb[0].mxu0
    %v2359 = vadd.f32 %v2318, %v2358
    %v2360 = vpop.f32.mrb[0].mxu0
    %v2361 = vpop.f32.mrb[0].mxu0
    %2362 = vdwg.mxu0
    %2363 = vmatprep.subr.bf16.mxu0 %v1898
    %2364 = vmatpush1.bf16.msra.mxu0 %v1897
    %2365 = vmatprep.subr.bf16.mxu0 %v1904
    %2366 = vmatpush1.bf16.msra.mxu0 %v1903
    %2367 = vmatprep.subr.bf16.mxu0 %v1910
    %2368 = vmatpush1.bf16.msra.mxu0 %v1909
    %2369 = vmatprep.subr.bf16.mxu0 %v1916
    %2370 = vmatpush1.bf16.msra.mxu0 %v1915
    %2371 = vmatprep.subr.bf16.mxu0 %v1922
    %2372 = vmatpush1.bf16.msra.mxu0 %v1921
    %2373 = vmatprep.subr.bf16.mxu0 %v1928
    %2374 = vmatpush1.bf16.msra.mxu0 %v1927
    %2375 = vmatprep.subr.bf16.mxu0 %v1934
    %2376 = vmatpush1.bf16.msra.mxu0 %v1933
    %2377 = vmatprep.subr.bf16.mxu0 %v1940
    %2378 = vmatpush1.bf16.msra.mxu0 %v1939
    %2379 = vmatprep.subr.bf16.mxu0 %v1946
    %2380 = vmatpush1.bf16.msra.mxu0 %v1945
    %2381 = vmatprep.subr.bf16.mxu0 %v1952
    %2382 = vmatpush1.bf16.msra.mxu0 %v1951
    %2383 = vmatprep.subr.bf16.mxu0 %v1958
    %2384 = vmatpush1.bf16.msra.mxu0 %v1957
    %2385 = vmatprep.subr.bf16.mxu0 %v1964
    %2386 = vmatpush1.bf16.msra.mxu0 %v1963
    %2387 = vmatprep.subr.bf16.mxu0 %v1970
    %2388 = vmatpush1.bf16.msra.mxu0 %v1969
    %2389 = vmatprep.subr.bf16.mxu0 %v1976
    %2390 = vmatpush1.bf16.msra.mxu0 %v1975
    %2391 = vmatprep.subr.bf16.mxu0 %v1982
    %2392 = vmatpush1.bf16.msra.mxu0 %v1981
    %2393 = vmatprep.subr.bf16.mxu0 %v1988
    %2394 = vmatpush1.bf16.msra.mxu0 %v1987
    %2395 = vmatprep.mubr.bf16.mxu0 %v834
    %2396 = vmatmul.mubr.bf16.gmra.mrb[0].mxu0 %v833
    %v2397 = vpop.f32.mrb[0].mxu0
    %v2398 = vadd.f32 %v2357, %v2397
    %v2399 = vpop.f32.mrb[0].mxu0
    %v2400 = vadd.f32 %v2359, %v2399
    %v2401 = vpop.f32.mrb[0].mxu0
    %v2402 = vpop.f32.mrb[0].mxu0
    %2403 = vdwg.mxu0
    %2404 = vmatprep.subr.bf16.mxu0 %v1708
    %2405 = vmatpush1.bf16.msra.mxu0 %v1707
    %2406 = vmatprep.subr.bf16.mxu0 %v1714
    %2407 = vmatpush1.bf16.msra.mxu0 %v1713
    %2408 = vmatprep.subr.bf16.mxu0 %v1720
    %2409 = vmatpush1.bf16.msra.mxu0 %v1719
    %2410 = vmatprep.subr.bf16.mxu0 %v1726
    %2411 = vmatpush1.bf16.msra.mxu0 %v1725
    %2412 = vmatprep.subr.bf16.mxu0 %v1732
    %2413 = vmatpush1.bf16.msra.mxu0 %v1731
    %2414 = vmatprep.subr.bf16.mxu0 %v1738
    %2415 = vmatpush1.bf16.msra.mxu0 %v1737
    %2416 = vmatprep.subr.bf16.mxu0 %v1744
    %2417 = vmatpush1.bf16.msra.mxu0 %v1743
    %2418 = vmatprep.subr.bf16.mxu0 %v1750
    %2419 = vmatpush1.bf16.msra.mxu0 %v1749
    %2420 = vmatprep.subr.bf16.mxu0 %v1756
    %2421 = vmatpush1.bf16.msra.mxu0 %v1755
    %2422 = vmatprep.subr.bf16.mxu0 %v1762
    %2423 = vmatpush1.bf16.msra.mxu0 %v1761
    %2424 = vmatprep.subr.bf16.mxu0 %v1768
    %2425 = vmatpush1.bf16.msra.mxu0 %v1767
    %2426 = vmatprep.subr.bf16.mxu0 %v1774
    %2427 = vmatpush1.bf16.msra.mxu0 %v1773
    %2428 = vmatprep.subr.bf16.mxu0 %v1780
    %2429 = vmatpush1.bf16.msra.mxu0 %v1779
    %2430 = vmatprep.subr.bf16.mxu0 %v1786
    %2431 = vmatpush1.bf16.msra.mxu0 %v1785
    %2432 = vmatprep.subr.bf16.mxu0 %v1792
    %2433 = vmatpush1.bf16.msra.mxu0 %v1791
    %2434 = vmatprep.subr.bf16.mxu0 %v1798
    %2435 = vmatpush1.bf16.msra.mxu0 %v1797
    %2436 = vmatprep.mubr.bf16.mxu0 %v830
    %2437 = vmatmul.mubr.bf16.gmra.mrb[0].mxu0 %v829
    %v2438 = vpop.f32.mrb[0].mxu0
    %v2439 = vadd.f32 %v779, %v2438
    %v2440 = vpop.f32.mrb[0].mxu0
    %v2441 = vadd.f32 %v783, %v2440
    %v2442 = vpop.f32.mrb[0].mxu0
    %v2443 = vpop.f32.mrb[0].mxu0
    %2444 = vdwg.mxu0
    %2445 = vmatprep.subr.bf16.mxu0 %v1804
    %2446 = vmatpush1.bf16.msra.mxu0 %v1803
    %2447 = vmatprep.subr.bf16.mxu0 %v1810
    %2448 = vmatpush1.bf16.msra.mxu0 %v1809
    %2449 = vmatprep.subr.bf16.mxu0 %v1816
    %2450 = vmatpush1.bf16.msra.mxu0 %v1815
    %2451 = vmatprep.subr.bf16.mxu0 %v1822
    %2452 = vmatpush1.bf16.msra.mxu0 %v1821
    %2453 = vmatprep.subr.bf16.mxu0 %v1828
    %2454 = vmatpush1.bf16.msra.mxu0 %v1827
    %2455 = vmatprep.subr.bf16.mxu0 %v1834
    %2456 = vmatpush1.bf16.msra.mxu0 %v1833
    %2457 = vmatprep.subr.bf16.mxu0 %v1840
    %2458 = vmatpush1.bf16.msra.mxu0 %v1839
    %2459 = vmatprep.subr.bf16.mxu0 %v1846
    %2460 = vmatpush1.bf16.msra.mxu0 %v1845
    %2461 = vmatprep.subr.bf16.mxu0 %v1852
    %2462 = vmatpush1.bf16.msra.mxu0 %v1851
    %2463 = vmatprep.subr.bf16.mxu0 %v1858
    %2464 = vmatpush1.bf16.msra.mxu0 %v1857
    %2465 = vmatprep.subr.bf16.mxu0 %v1864
    %2466 = vmatpush1.bf16.msra.mxu0 %v1863
    %2467 = vmatprep.subr.bf16.mxu0 %v1870
    %2468 = vmatpush1.bf16.msra.mxu0 %v1869
    %2469 = vmatprep.subr.bf16.mxu0 %v1876
    %2470 = vmatpush1.bf16.msra.mxu0 %v1875
    %2471 = vmatprep.subr.bf16.mxu0 %v1882
    %2472 = vmatpush1.bf16.msra.mxu0 %v1881
    %2473 = vmatprep.subr.bf16.mxu0 %v1888
    %2474 = vmatpush1.bf16.msra.mxu0 %v1887
    %2475 = vmatprep.subr.bf16.mxu0 %v1894
    %2476 = vmatpush1.bf16.msra.mxu0 %v1893
    %2477 = vmatprep.mubr.bf16.mxu0 %v832
    %2478 = vmatmul.mubr.bf16.gmra.mrb[0].mxu0 %v831
    %v2479 = vpop.f32.mrb[0].mxu0
    %v2480 = vadd.f32 %v2439, %v2479
    %v2481 = vpop.f32.mrb[0].mxu0
    %v2482 = vadd.f32 %v2441, %v2481
    %v2483 = vpop.f32.mrb[0].mxu0
    %v2484 = vpop.f32.mrb[0].mxu0
    %2485 = vdwg.mxu0
    %2486 = vmatprep.subr.bf16.mxu0 %v1900
    %2487 = vmatpush1.bf16.msra.mxu0 %v1899
    %2488 = vmatprep.subr.bf16.mxu0 %v1906
    %2489 = vmatpush1.bf16.msra.mxu0 %v1905
    %2490 = vmatprep.subr.bf16.mxu0 %v1912
    %2491 = vmatpush1.bf16.msra.mxu0 %v1911
    %2492 = vmatprep.subr.bf16.mxu0 %v1918
    %2493 = vmatpush1.bf16.msra.mxu0 %v1917
    %2494 = vmatprep.subr.bf16.mxu0 %v1924
    %2495 = vmatpush1.bf16.msra.mxu0 %v1923
    %2496 = vmatprep.subr.bf16.mxu0 %v1930
    %2497 = vmatpush1.bf16.msra.mxu0 %v1929
    %2498 = vmatprep.subr.bf16.mxu0 %v1936
    %2499 = vmatpush1.bf16.msra.mxu0 %v1935
    %2500 = vmatprep.subr.bf16.mxu0 %v1942
    %2501 = vmatpush1.bf16.msra.mxu0 %v1941
    %2502 = vmatprep.subr.bf16.mxu0 %v1948
    %2503 = vmatpush1.bf16.msra.mxu0 %v1947
    %2504 = vmatprep.subr.bf16.mxu0 %v1954
    %2505 = vmatpush1.bf16.msra.mxu0 %v1953
    %2506 = vmatprep.subr.bf16.mxu0 %v1960
    %2507 = vmatpush1.bf16.msra.mxu0 %v1959
    %2508 = vmatprep.subr.bf16.mxu0 %v1966
    %2509 = vmatpush1.bf16.msra.mxu0 %v1965
    %2510 = vmatprep.subr.bf16.mxu0 %v1972
    %2511 = vmatpush1.bf16.msra.mxu0 %v1971
    %2512 = vmatprep.subr.bf16.mxu0 %v1978
    %2513 = vmatpush1.bf16.msra.mxu0 %v1977
    %2514 = vmatprep.subr.bf16.mxu0 %v1984
    %2515 = vmatpush1.bf16.msra.mxu0 %v1983
    %2516 = vmatprep.subr.bf16.mxu0 %v1990
    %2517 = vmatpush1.bf16.msra.mxu0 %v1989
    %2518 = vmatprep.mubr.bf16.mxu0 %v834
    %2519 = vmatmul.mubr.bf16.gmra.mrb[0].mxu0 %v833
    %v2520 = vpop.f32.mrb[0].mxu0
    %v2521 = vadd.f32 %v2480, %v2520
    %v2522 = vpop.f32.mrb[0].mxu0
    %v2523 = vadd.f32 %v2482, %v2522
    %v2524 = vpop.f32.mrb[0].mxu0
    %v2525 = vpop.f32.mrb[0].mxu0
    %2526 = vdwg.mxu0
    %2527 = vmatprep.subr.bf16.mxu0 %v1710
    %2528 = vmatpush1.bf16.msra.mxu0 %v1709
    %2529 = vmatprep.subr.bf16.mxu0 %v1716
    %2530 = vmatpush1.bf16.msra.mxu0 %v1715
    %2531 = vmatprep.subr.bf16.mxu0 %v1722
    %2532 = vmatpush1.bf16.msra.mxu0 %v1721
    %2533 = vmatprep.subr.bf16.mxu0 %v1728
    %2534 = vmatpush1.bf16.msra.mxu0 %v1727
    %2535 = vmatprep.subr.bf16.mxu0 %v1734
    %2536 = vmatpush1.bf16.msra.mxu0 %v1733
    %2537 = vmatprep.subr.bf16.mxu0 %v1740
    %2538 = vmatpush1.bf16.msra.mxu0 %v1739
    %2539 = vmatprep.subr.bf16.mxu0 %v1746
    %2540 = vmatpush1.bf16.msra.mxu0 %v1745
    %2541 = vmatprep.subr.bf16.mxu0 %v1752
    %2542 = vmatpush1.bf16.msra.mxu0 %v1751
    %2543 = vmatprep.subr.bf16.mxu0 %v1758
    %2544 = vmatpush1.bf16.msra.mxu0 %v1757
    %2545 = vmatprep.subr.bf16.mxu0 %v1764
    %2546 = vmatpush1.bf16.msra.mxu0 %v1763
    %2547 = vmatprep.subr.bf16.mxu0 %v1770
    %2548 = vmatpush1.bf16.msra.mxu0 %v1769
    %2549 = vmatprep.subr.bf16.mxu0 %v1776
    %2550 = vmatpush1.bf16.msra.mxu0 %v1775
    %2551 = vmatprep.subr.bf16.mxu0 %v1782
    %2552 = vmatpush1.bf16.msra.mxu0 %v1781
    %2553 = vmatprep.subr.bf16.mxu0 %v1788
    %2554 = vmatpush1.bf16.msra.mxu0 %v1787
    %2555 = vmatprep.subr.bf16.mxu0 %v1794
    %2556 = vmatpush1.bf16.msra.mxu0 %v1793
    %2557 = vmatprep.subr.bf16.mxu0 %v1800
    %2558 = vmatpush1.bf16.msra.mxu0 %v1799
    %2559 = vmatprep.mubr.bf16.mxu0 %v830
    %2560 = vmatmul.mubr.bf16.gmra.mrb[0].mxu0 %v829
    %v2561 = vpop.f32.mrb[0].mxu0
    %v2562 = vadd.f32 %v787, %v2561
    %v2563 = vpop.f32.mrb[0].mxu0
    %v2564 = vadd.f32 %v791, %v2563
    %v2565 = vpop.f32.mrb[0].mxu0
    %v2566 = vpop.f32.mrb[0].mxu0
    %2567 = vdwg.mxu0
    %2568 = vmatprep.subr.bf16.mxu0 %v1806
    %2569 = vmatpush1.bf16.msra.mxu0 %v1805
    %2570 = vmatprep.subr.bf16.mxu0 %v1812
    %2571 = vmatpush1.bf16.msra.mxu0 %v1811
    %2572 = vmatprep.subr.bf16.mxu0 %v1818
    %2573 = vmatpush1.bf16.msra.mxu0 %v1817
    %2574 = vmatprep.subr.bf16.mxu0 %v1824
    %2575 = vmatpush1.bf16.msra.mxu0 %v1823
    %2576 = vmatprep.subr.bf16.mxu0 %v1830
    %2577 = vmatpush1.bf16.msra.mxu0 %v1829
    %2578 = vmatprep.subr.bf16.mxu0 %v1836
    %2579 = vmatpush1.bf16.msra.mxu0 %v1835
    %2580 = vmatprep.subr.bf16.mxu0 %v1842
    %2581 = vmatpush1.bf16.msra.mxu0 %v1841
    %2582 = vmatprep.subr.bf16.mxu0 %v1848
    %2583 = vmatpush1.bf16.msra.mxu0 %v1847
    %2584 = vmatprep.subr.bf16.mxu0 %v1854
    %2585 = vmatpush1.bf16.msra.mxu0 %v1853
    %2586 = vmatprep.subr.bf16.mxu0 %v1860
    %2587 = vmatpush1.bf16.msra.mxu0 %v1859
    %2588 = vmatprep.subr.bf16.mxu0 %v1866
    %2589 = vmatpush1.bf16.msra.mxu0 %v1865
    %2590 = vmatprep.subr.bf16.mxu0 %v1872
    %2591 = vmatpush1.bf16.msra.mxu0 %v1871
    %2592 = vmatprep.subr.bf16.mxu0 %v1878
    %2593 = vmatpush1.bf16.msra.mxu0 %v1877
    %2594 = vmatprep.subr.bf16.mxu0 %v1884
    %2595 = vmatpush1.bf16.msra.mxu0 %v1883
    %2596 = vmatprep.subr.bf16.mxu0 %v1890
    %2597 = vmatpush1.bf16.msra.mxu0 %v1889
    %2598 = vmatprep.subr.bf16.mxu0 %v1896
    %2599 = vmatpush1.bf16.msra.mxu0 %v1895
    %2600 = vmatprep.mubr.bf16.mxu0 %v832
    %2601 = vmatmul.mubr.bf16.gmra.mrb[0].mxu0 %v831
    %v2602 = vpop.f32.mrb[0].mxu0
    %v2603 = vadd.f32 %v2562, %v2602
    %v2604 = vpop.f32.mrb[0].mxu0
    %v2605 = vadd.f32 %v2564, %v2604
    %v2606 = vpop.f32.mrb[0].mxu0
    %v2607 = vpop.f32.mrb[0].mxu0
    %2608 = vdwg.mxu0
    %2609 = vmatprep.subr.bf16.mxu0 %v1902
    %2610 = vmatpush1.bf16.msra.mxu0 %v1901
    %2611 = vmatprep.subr.bf16.mxu0 %v1908
    %2612 = vmatpush1.bf16.msra.mxu0 %v1907
    %2613 = vmatprep.subr.bf16.mxu0 %v1914
    %2614 = vmatpush1.bf16.msra.mxu0 %v1913
    %2615 = vmatprep.subr.bf16.mxu0 %v1920
    %2616 = vmatpush1.bf16.msra.mxu0 %v1919
    %2617 = vmatprep.subr.bf16.mxu0 %v1926
    %2618 = vmatpush1.bf16.msra.mxu0 %v1925
    %2619 = vmatprep.subr.bf16.mxu0 %v1932
    %2620 = vmatpush1.bf16.msra.mxu0 %v1931
    %2621 = vmatprep.subr.bf16.mxu0 %v1938
    %2622 = vmatpush1.bf16.msra.mxu0 %v1937
    %2623 = vmatprep.subr.bf16.mxu0 %v1944
    %2624 = vmatpush1.bf16.msra.mxu0 %v1943
    %2625 = vmatprep.subr.bf16.mxu0 %v1950
    %2626 = vmatpush1.bf16.msra.mxu0 %v1949
    %2627 = vmatprep.subr.bf16.mxu0 %v1956
    %2628 = vmatpush1.bf16.msra.mxu0 %v1955
    %2629 = vmatprep.subr.bf16.mxu0 %v1962
    %2630 = vmatpush1.bf16.msra.mxu0 %v1961
    %2631 = vmatprep.subr.bf16.mxu0 %v1968
    %2632 = vmatpush1.bf16.msra.mxu0 %v1967
    %2633 = vmatprep.subr.bf16.mxu0 %v1974
    %2634 = vmatpush1.bf16.msra.mxu0 %v1973
    %2635 = vmatprep.subr.bf16.mxu0 %v1980
    %2636 = vmatpush1.bf16.msra.mxu0 %v1979
    %2637 = vmatprep.subr.bf16.mxu0 %v1986
    %2638 = vmatpush1.bf16.msra.mxu0 %v1985
    %2639 = vmatprep.subr.bf16.mxu0 %v1992
    %2640 = vmatpush1.bf16.msra.mxu0 %v1991
    %2641 = vmatprep.mubr.bf16.mxu0 %v834
    %2642 = vmatmul.mubr.bf16.gmra.mrb[0].mxu0 %v833
    %v2643 = vpop.f32.mrb[0].mxu0
    %v2644 = vadd.f32 %v2603, %v2643
    %v2645 = vpop.f32.mrb[0].mxu0
    %v2646 = vadd.f32 %v2605, %v2645
    %v2647 = vpop.f32.mrb[0].mxu0
    %v2648 = vpop.f32.mrb[0].mxu0
    %2649 = vdwg.mxu0
    %v2650 = vtanh.pop %v2398
    %v2651 = vtanh.pop %v2400
    %v2652 = vtanh.pop %v2521
    %v2653 = vtanh.pop %v2523
    %v2654 = vtanh.pop %v2644
    %v2655 = vtanh.pop %v2646
    %v2656 = vpack.c.bf16 %v2650, %v2650
    %v2657 = vpack.c.bf16 %v2651, %v2651
    %v2658 = vpack.c.bf16 %v2652, %v2652
    %v2659 = vpack.c.bf16 %v2653, %v2653
    %v2660 = vpack.c.bf16 %v2654, %v2654
    %v2661 = vpack.c.bf16 %v2655, %v2655
    %v2662 = vld [vmem:[#allocation5] sm:$0xff]
    %v2663 = vld [vmem:[#allocation5 + $0x8] sm:$0xff]
    %v2664 = vld [vmem:[#allocation5 + $0x10] sm:$0xff]
    %v2665 = vld [vmem:[#allocation5 + $0x18] sm:$0xff]
    %v2666 = vld [vmem:[#allocation5 + $0x20] sm:$0xff]
    %v2667 = vld [vmem:[#allocation5 + $0x28] sm:$0xff]
    %v2674 = vcombine.high %v2662, %v2662
    %v2675 = vcombine.high %v2663, %v2663
    %v2676 = vcombine.high %v2664, %v2664
    %v2677 = vcombine.high %v2665, %v2665
    %v2678 = vcombine.high %v2666, %v2666
    %v2679 = vcombine.high %v2667, %v2667
    %vm2686 = vcmask 1043456
    %v2687 = vsel %vm2686, %v2662, 0.0
    %v2688 = vrot.slane %v2687, 4
    %v2689 = vadd.f32 %v2687, %v2688
    %v2690 = vrot.slane %v2689, 2
    %v2691 = vadd.f32 %v2689, %v2690
    %v2692 = vrot.slane %v2691, 1
    %v2693 = vadd.f32 %v2691, %v2692
    %v2694 = vsel %vm2686, %v2674, 0.0
    %v2695 = vrot.slane %v2694, 4
    %v2696 = vadd.f32 %v2694, %v2695
    %v2697 = vrot.slane %v2696, 2
    %v2698 = vadd.f32 %v2696, %v2697
    %v2699 = vrot.slane %v2698, 1
    %v2700 = vadd.f32 %v2698, %v2699
    %v2701 = vsel %vm2686, %v2663, 0.0
    %v2702 = vrot.slane %v2701, 4
    %v2703 = vadd.f32 %v2701, %v2702
    %v2704 = vrot.slane %v2703, 2
    %v2705 = vadd.f32 %v2703, %v2704
    %v2706 = vrot.slane %v2705, 1
    %v2707 = vadd.f32 %v2705, %v2706
    %v2708 = vsel %vm2686, %v2675, 0.0
    %v2709 = vrot.slane %v2708, 4
    %v2710 = vadd.f32 %v2708, %v2709
    %v2711 = vrot.slane %v2710, 2
    %v2712 = vadd.f32 %v2710, %v2711
    %v2713 = vrot.slane %v2712, 1
    %v2714 = vadd.f32 %v2712, %v2713
    %v2715 = vsel %vm2686, %v2664, 0.0
    %v2716 = vrot.slane %v2715, 4
    %v2717 = vadd.f32 %v2715, %v2716
    %v2718 = vrot.slane %v2717, 2
    %v2719 = vadd.f32 %v2717, %v2718
    %v2720 = vrot.slane %v2719, 1
    %v2721 = vadd.f32 %v2719, %v2720
    %v2722 = vsel %vm2686, %v2676, 0.0
    %v2723 = vrot.slane %v2722, 4
    %v2724 = vadd.f32 %v2722, %v2723
    %v2725 = vrot.slane %v2724, 2
    %v2726 = vadd.f32 %v2724, %v2725
    %v2727 = vrot.slane %v2726, 1
    %v2728 = vadd.f32 %v2726, %v2727
    %v2729 = vsel %vm2686, %v2665, 0.0
    %v2730 = vrot.slane %v2729, 4
    %v2731 = vadd.f32 %v2729, %v2730
    %v2732 = vrot.slane %v2731, 2
    %v2733 = vadd.f32 %v2731, %v2732
    %v2734 = vrot.slane %v2733, 1
    %v2735 = vadd.f32 %v2733, %v2734
    %v2736 = vsel %vm2686, %v2677, 0.0
    %v2737 = vrot.slane %v2736, 4
    %v2738 = vadd.f32 %v2736, %v2737
    %v2739 = vrot.slane %v2738, 2
    %v2740 = vadd.f32 %v2738, %v2739
    %v2741 = vrot.slane %v2740, 1
    %v2742 = vadd.f32 %v2740, %v2741
    %v2743 = vsel %vm2686, %v2666, 0.0
    %v2744 = vrot.slane %v2743, 4
    %v2745 = vadd.f32 %v2743, %v2744
    %v2746 = vrot.slane %v2745, 2
    %v2747 = vadd.f32 %v2745, %v2746
    %v2748 = vrot.slane %v2747, 1
    %v2749 = vadd.f32 %v2747, %v2748
    %v2750 = vsel %vm2686, %v2678, 0.0
    %v2751 = vrot.slane %v2750, 4
    %v2752 = vadd.f32 %v2750, %v2751
    %v2753 = vrot.slane %v2752, 2
    %v2754 = vadd.f32 %v2752, %v2753
    %v2755 = vrot.slane %v2754, 1
    %v2756 = vadd.f32 %v2754, %v2755
    %v2757 = vsel %vm2686, %v2667, 0.0
    %v2758 = vrot.slane %v2757, 4
    %v2759 = vadd.f32 %v2757, %v2758
    %v2760 = vrot.slane %v2759, 2
    %v2761 = vadd.f32 %v2759, %v2760
    %v2762 = vrot.slane %v2761, 1
    %v2763 = vadd.f32 %v2761, %v2762
    %v2764 = vsel %vm2686, %v2679, 0.0
    %v2765 = vrot.slane %v2764, 4
    %v2766 = vadd.f32 %v2764, %v2765
    %v2767 = vrot.slane %v2766, 2
    %v2768 = vadd.f32 %v2766, %v2767
    %v2769 = vrot.slane %v2768, 1
    %v2770 = vadd.f32 %v2768, %v2769
    %v2771 = vmul.f32 %v2693, 0.25
    %v2772 = vmul.f32 %v2700, 0.25
    %v2773 = vmul.f32 %v2707, 0.25
    %v2774 = vmul.f32 %v2714, 0.25
    %v2775 = vmul.f32 %v2721, 0.25
    %v2776 = vmul.f32 %v2728, 0.25
    %v2777 = vmul.f32 %v2735, 0.25
    %v2778 = vmul.f32 %v2742, 0.25
    %v2779 = vmul.f32 %v2749, 0.25
    %v2780 = vmul.f32 %v2756, 0.25
    %v2781 = vmul.f32 %v2763, 0.25
    %v2782 = vmul.f32 %v2770, 0.25
    %v2783 = vpack.c.bf16 %v2771, %v2771
    %v2784 = vpack.c.bf16 %v2772, %v2772
    %v2785 = vpack.c.bf16 %v2773, %v2773
    %v2786 = vpack.c.bf16 %v2774, %v2774
    %v2787 = vpack.c.bf16 %v2775, %v2775
    %v2788 = vpack.c.bf16 %v2776, %v2776
    %v2789 = vpack.c.bf16 %v2777, %v2777
    %v2790 = vpack.c.bf16 %v2778, %v2778
    %v2791 = vpack.c.bf16 %v2779, %v2779
    %v2792 = vpack.c.bf16 %v2780, %v2780
    %v2793 = vpack.c.bf16 %v2781, %v2781
    %v2794 = vpack.c.bf16 %v2782, %v2782
    %v2795 = vld [vmem:[#allocation13] sm:$0xff]
    %v2796 = vld [vmem:[#allocation13 + $0x8] sm:$0xff]
    %v2797 = vld [vmem:[#allocation13 + $0x10] sm:$0xff]
    %v2798 = vld [vmem:[#allocation13 + $0x18] sm:$0xff]
    %v2799 = vld [vmem:[#allocation13 + $0x20] sm:$0xff]
    %v2800 = vld [vmem:[#allocation13 + $0x28] sm:$0xff]
    %v2801 = vld [vmem:[#allocation13 + $0x30] sm:$0xff]
    %v2802 = vld [vmem:[#allocation13 + $0x38] sm:$0xff]
    %v2803 = vld [vmem:[#allocation13 + $0x40] sm:$0xff]
    %v2804 = vld [vmem:[#allocation13 + $0x48] sm:$0xff]
    %v2805 = vld [vmem:[#allocation13 + $0x50] sm:$0xff]
    %v2806 = vld [vmem:[#allocation13 + $0x58] sm:$0xff]
    %v2807 = vld [vmem:[#allocation13 + $0x60] sm:$0xff]
    %v2808 = vld [vmem:[#allocation13 + $0x68] sm:$0xff]
    %v2809 = vld [vmem:[#allocation13 + $0x70] sm:$0xff]
    %v2810 = vld [vmem:[#allocation13 + $0x78] sm:$0xff]
    %v2811 = vld [vmem:[#allocation13 + $0x80] sm:$0xff]
    %v2812 = vld [vmem:[#allocation13 + $0x88] sm:$0xff]
    %v2813 = vld [vmem:[#allocation13 + $0x90] sm:$0xff]
    %v2814 = vld [vmem:[#allocation13 + $0x98] sm:$0xff]
    %v2815 = vld [vmem:[#allocation13 + $0xa0] sm:$0xff]
    %v2816 = vld [vmem:[#allocation13 + $0xa8] sm:$0xff]
    %v2817 = vld [vmem:[#allocation13 + $0xb0] sm:$0xff]
    %v2818 = vld [vmem:[#allocation13 + $0xb8] sm:$0xff]
    %v2819 = vld [vmem:[#allocation13 + $0xc0] sm:$0xff]
    %v2820 = vld [vmem:[#allocation13 + $0xc8] sm:$0xff]
    %v2821 = vld [vmem:[#allocation13 + $0xd0] sm:$0xff]
    %v2822 = vld [vmem:[#allocation13 + $0xd8] sm:$0xff]
    %v2823 = vld [vmem:[#allocation13 + $0xe0] sm:$0xff]
    %v2824 = vld [vmem:[#allocation13 + $0xe8] sm:$0xff]
    %v2825 = vld [vmem:[#allocation13 + $0xf0] sm:$0xff]
    %v2826 = vld [vmem:[#allocation13 + $0xf8] sm:$0xff]
    %v2827 = vld [vmem:[#allocation13 + $0x100] sm:$0xff]
    %v2828 = vld [vmem:[#allocation13 + $0x108] sm:$0xff]
    %v2829 = vld [vmem:[#allocation13 + $0x110] sm:$0xff]
    %v2830 = vld [vmem:[#allocation13 + $0x118] sm:$0xff]
    %v2831 = vld [vmem:[#allocation13 + $0x120] sm:$0xff]
    %v2832 = vld [vmem:[#allocation13 + $0x128] sm:$0xff]
    %v2833 = vld [vmem:[#allocation13 + $0x130] sm:$0xff]
    %v2834 = vld [vmem:[#allocation13 + $0x138] sm:$0xff]
    %v2835 = vld [vmem:[#allocation13 + $0x140] sm:$0xff]
    %v2836 = vld [vmem:[#allocation13 + $0x148] sm:$0xff]
    %v2837 = vld [vmem:[#allocation13 + $0x150] sm:$0xff]
    %v2838 = vld [vmem:[#allocation13 + $0x158] sm:$0xff]
    %v2839 = vld [vmem:[#allocation13 + $0x160] sm:$0xff]
    %v2840 = vld [vmem:[#allocation13 + $0x168] sm:$0xff]
    %v2841 = vld [vmem:[#allocation13 + $0x170] sm:$0xff]
    %v2842 = vld [vmem:[#allocation13 + $0x178] sm:$0xff]
    %v2843 = vld [vmem:[#allocation13 + $0x180] sm:$0xff]
    %v2844 = vld [vmem:[#allocation13 + $0x188] sm:$0xff]
    %v2845 = vld [vmem:[#allocation13 + $0x190] sm:$0xff]
    %v2846 = vld [vmem:[#allocation13 + $0x198] sm:$0xff]
    %v2847 = vld [vmem:[#allocation13 + $0x1a0] sm:$0xff]
    %v2848 = vld [vmem:[#allocation13 + $0x1a8] sm:$0xff]
    %v2849 = vld [vmem:[#allocation13 + $0x1b0] sm:$0xff]
    %v2850 = vld [vmem:[#allocation13 + $0x1b8] sm:$0xff]
    %v2851 = vld [vmem:[#allocation13 + $0x1c0] sm:$0xff]
    %v2852 = vld [vmem:[#allocation13 + $0x1c8] sm:$0xff]
    %v2853 = vld [vmem:[#allocation13 + $0x1d0] sm:$0xff]
    %v2854 = vld [vmem:[#allocation13 + $0x1d8] sm:$0xff]
    %v2855 = vld [vmem:[#allocation13 + $0x1e0] sm:$0xff]
    %v2856 = vld [vmem:[#allocation13 + $0x1e8] sm:$0xff]
    %v2857 = vld [vmem:[#allocation13 + $0x1f0] sm:$0xff]
    %v2858 = vld [vmem:[#allocation13 + $0x1f8] sm:$0xff]
    %v2859 = vld [vmem:[#allocation13 + $0x200] sm:$0xff]
    %v2860 = vld [vmem:[#allocation13 + $0x208] sm:$0xff]
    %v2861 = vld [vmem:[#allocation13 + $0x210] sm:$0xff]
    %v2862 = vld [vmem:[#allocation13 + $0x218] sm:$0xff]
    %v2863 = vld [vmem:[#allocation13 + $0x220] sm:$0xff]
    %v2864 = vld [vmem:[#allocation13 + $0x228] sm:$0xff]
    %v2865 = vld [vmem:[#allocation13 + $0x230] sm:$0xff]
    %v2866 = vld [vmem:[#allocation13 + $0x238] sm:$0xff]
    %v2867 = vld [vmem:[#allocation13 + $0x240] sm:$0xff]
    %v2868 = vld [vmem:[#allocation13 + $0x248] sm:$0xff]
    %v2869 = vld [vmem:[#allocation13 + $0x250] sm:$0xff]
    %v2870 = vld [vmem:[#allocation13 + $0x258] sm:$0xff]
    %v2871 = vld [vmem:[#allocation13 + $0x260] sm:$0xff]
    %v2872 = vld [vmem:[#allocation13 + $0x268] sm:$0xff]
    %v2873 = vld [vmem:[#allocation13 + $0x270] sm:$0xff]
    %v2874 = vld [vmem:[#allocation13 + $0x278] sm:$0xff]
    %v2875 = vld [vmem:[#allocation13 + $0x280] sm:$0xff]
    %v2876 = vld [vmem:[#allocation13 + $0x288] sm:$0xff]
    %v2877 = vld [vmem:[#allocation13 + $0x290] sm:$0xff]
    %v2878 = vld [vmem:[#allocation13 + $0x298] sm:$0xff]
    %v2879 = vld [vmem:[#allocation13 + $0x2a0] sm:$0xff]
    %v2880 = vld [vmem:[#allocation13 + $0x2a8] sm:$0xff]
    %v2881 = vld [vmem:[#allocation13 + $0x2b0] sm:$0xff]
    %v2882 = vld [vmem:[#allocation13 + $0x2b8] sm:$0xff]
    %v2883 = vld [vmem:[#allocation13 + $0x2c0] sm:$0xff]
    %v2884 = vld [vmem:[#allocation13 + $0x2c8] sm:$0xff]
    %v2885 = vld [vmem:[#allocation13 + $0x2d0] sm:$0xff]
    %v2886 = vld [vmem:[#allocation13 + $0x2d8] sm:$0xff]
    %v2887 = vld [vmem:[#allocation13 + $0x2e0] sm:$0xff]
    %v2888 = vld [vmem:[#allocation13 + $0x2e8] sm:$0xff]
    %v2889 = vld [vmem:[#allocation13 + $0x2f0] sm:$0xff]
    %v2890 = vld [vmem:[#allocation13 + $0x2f8] sm:$0xff]
    %v2891 = vld [vmem:[#allocation13 + $0x300] sm:$0xff]
    %v2892 = vld [vmem:[#allocation13 + $0x308] sm:$0xff]
    %v2893 = vld [vmem:[#allocation13 + $0x310] sm:$0xff]
    %v2894 = vld [vmem:[#allocation13 + $0x318] sm:$0xff]
    %v2895 = vld [vmem:[#allocation13 + $0x320] sm:$0xff]
    %v2896 = vld [vmem:[#allocation13 + $0x328] sm:$0xff]
    %v2897 = vld [vmem:[#allocation13 + $0x330] sm:$0xff]
    %v2898 = vld [vmem:[#allocation13 + $0x338] sm:$0xff]
    %v2899 = vld [vmem:[#allocation13 + $0x340] sm:$0xff]
    %v2900 = vld [vmem:[#allocation13 + $0x348] sm:$0xff]
    %v2901 = vld [vmem:[#allocation13 + $0x350] sm:$0xff]
    %v2902 = vld [vmem:[#allocation13 + $0x358] sm:$0xff]
    %v2903 = vld [vmem:[#allocation13 + $0x360] sm:$0xff]
    %v2904 = vld [vmem:[#allocation13 + $0x368] sm:$0xff]
    %v2905 = vld [vmem:[#allocation13 + $0x370] sm:$0xff]
    %v2906 = vld [vmem:[#allocation13 + $0x378] sm:$0xff]
    %v2907 = vld [vmem:[#allocation13 + $0x380] sm:$0xff]
    %v2908 = vld [vmem:[#allocation13 + $0x388] sm:$0xff]
    %v2909 = vld [vmem:[#allocation13 + $0x390] sm:$0xff]
    %v2910 = vld [vmem:[#allocation13 + $0x398] sm:$0xff]
    %v2911 = vld [vmem:[#allocation13 + $0x3a0] sm:$0xff]
    %v2912 = vld [vmem:[#allocation13 + $0x3a8] sm:$0xff]
    %v2913 = vld [vmem:[#allocation13 + $0x3b0] sm:$0xff]
    %v2914 = vld [vmem:[#allocation13 + $0x3b8] sm:$0xff]
    %v2915 = vld [vmem:[#allocation13 + $0x3c0] sm:$0xff]
    %v2916 = vld [vmem:[#allocation13 + $0x3c8] sm:$0xff]
    %v2917 = vld [vmem:[#allocation13 + $0x3d0] sm:$0xff]
    %v2918 = vld [vmem:[#allocation13 + $0x3d8] sm:$0xff]
    %v2919 = vld [vmem:[#allocation13 + $0x3e0] sm:$0xff]
    %v2920 = vld [vmem:[#allocation13 + $0x3e8] sm:$0xff]
    %v2921 = vld [vmem:[#allocation13 + $0x3f0] sm:$0xff]
    %v2922 = vld [vmem:[#allocation13 + $0x3f8] sm:$0xff]
    %v2923 = vld [vmem:[#allocation13 + $0x400] sm:$0xff]
    %v2924 = vld [vmem:[#allocation13 + $0x408] sm:$0xff]
    %v2925 = vld [vmem:[#allocation13 + $0x410] sm:$0xff]
    %v2926 = vld [vmem:[#allocation13 + $0x418] sm:$0xff]
    %v2927 = vld [vmem:[#allocation13 + $0x420] sm:$0xff]
    %v2928 = vld [vmem:[#allocation13 + $0x428] sm:$0xff]
    %v2929 = vld [vmem:[#allocation13 + $0x430] sm:$0xff]
    %v2930 = vld [vmem:[#allocation13 + $0x438] sm:$0xff]
    %v2931 = vld [vmem:[#allocation13 + $0x440] sm:$0xff]
    %v2932 = vld [vmem:[#allocation13 + $0x448] sm:$0xff]
    %v2933 = vld [vmem:[#allocation13 + $0x450] sm:$0xff]
    %v2934 = vld [vmem:[#allocation13 + $0x458] sm:$0xff]
    %v2935 = vld [vmem:[#allocation13 + $0x460] sm:$0xff]
    %v2936 = vld [vmem:[#allocation13 + $0x468] sm:$0xff]
    %v2937 = vld [vmem:[#allocation13 + $0x470] sm:$0xff]
    %v2938 = vld [vmem:[#allocation13 + $0x478] sm:$0xff]
    %v2939 = vld [vmem:[#allocation13 + $0x480] sm:$0xff]
    %v2940 = vld [vmem:[#allocation13 + $0x488] sm:$0xff]
    %v2941 = vld [vmem:[#allocation13 + $0x490] sm:$0xff]
    %v2942 = vld [vmem:[#allocation13 + $0x498] sm:$0xff]
    %v2943 = vld [vmem:[#allocation13 + $0x4a0] sm:$0xff]
    %v2944 = vld [vmem:[#allocation13 + $0x4a8] sm:$0xff]
    %v2945 = vld [vmem:[#allocation13 + $0x4b0] sm:$0xff]
    %v2946 = vld [vmem:[#allocation13 + $0x4b8] sm:$0xff]
    %v2947 = vld [vmem:[#allocation13 + $0x4c0] sm:$0xff]
    %v2948 = vld [vmem:[#allocation13 + $0x4c8] sm:$0xff]
    %v2949 = vld [vmem:[#allocation13 + $0x4d0] sm:$0xff]
    %v2950 = vld [vmem:[#allocation13 + $0x4d8] sm:$0xff]
    %v2951 = vld [vmem:[#allocation13 + $0x4e0] sm:$0xff]
    %v2952 = vld [vmem:[#allocation13 + $0x4e8] sm:$0xff]
    %v2953 = vld [vmem:[#allocation13 + $0x4f0] sm:$0xff]
    %v2954 = vld [vmem:[#allocation13 + $0x4f8] sm:$0xff]
    %v2955 = vld [vmem:[#allocation13 + $0x500] sm:$0xff]
    %v2956 = vld [vmem:[#allocation13 + $0x508] sm:$0xff]
    %v2957 = vld [vmem:[#allocation13 + $0x510] sm:$0xff]
    %v2958 = vld [vmem:[#allocation13 + $0x518] sm:$0xff]
    %v2959 = vld [vmem:[#allocation13 + $0x520] sm:$0xff]
    %v2960 = vld [vmem:[#allocation13 + $0x528] sm:$0xff]
    %v2961 = vld [vmem:[#allocation13 + $0x530] sm:$0xff]
    %v2962 = vld [vmem:[#allocation13 + $0x538] sm:$0xff]
    %v2963 = vld [vmem:[#allocation13 + $0x540] sm:$0xff]
    %v2964 = vld [vmem:[#allocation13 + $0x548] sm:$0xff]
    %v2965 = vld [vmem:[#allocation13 + $0x550] sm:$0xff]
    %v2966 = vld [vmem:[#allocation13 + $0x558] sm:$0xff]
    %v2967 = vld [vmem:[#allocation13 + $0x560] sm:$0xff]
    %v2968 = vld [vmem:[#allocation13 + $0x568] sm:$0xff]
    %v2969 = vld [vmem:[#allocation13 + $0x570] sm:$0xff]
    %v2970 = vld [vmem:[#allocation13 + $0x578] sm:$0xff]
    %v2971 = vld [vmem:[#allocation13 + $0x580] sm:$0xff]
    %v2972 = vld [vmem:[#allocation13 + $0x588] sm:$0xff]
    %v2973 = vld [vmem:[#allocation13 + $0x590] sm:$0xff]
    %v2974 = vld [vmem:[#allocation13 + $0x598] sm:$0xff]
    %v2975 = vld [vmem:[#allocation13 + $0x5a0] sm:$0xff]
    %v2976 = vld [vmem:[#allocation13 + $0x5a8] sm:$0xff]
    %v2977 = vld [vmem:[#allocation13 + $0x5b0] sm:$0xff]
    %v2978 = vld [vmem:[#allocation13 + $0x5b8] sm:$0xff]
    %v2979 = vld [vmem:[#allocation13 + $0x5c0] sm:$0xff]
    %v2980 = vld [vmem:[#allocation13 + $0x5c8] sm:$0xff]
    %v2981 = vld [vmem:[#allocation13 + $0x5d0] sm:$0xff]
    %v2982 = vld [vmem:[#allocation13 + $0x5d8] sm:$0xff]
    %v2983 = vld [vmem:[#allocation13 + $0x5e0] sm:$0xff]
    %v2984 = vld [vmem:[#allocation13 + $0x5e8] sm:$0xff]
    %v2985 = vld [vmem:[#allocation13 + $0x5f0] sm:$0xff]
    %v2986 = vld [vmem:[#allocation13 + $0x5f8] sm:$0xff]
    %v2987 = vld [vmem:[#allocation13 + $0x600] sm:$0xff]
    %v2988 = vld [vmem:[#allocation13 + $0x608] sm:$0xff]
    %v2989 = vld [vmem:[#allocation13 + $0x610] sm:$0xff]
    %v2990 = vld [vmem:[#allocation13 + $0x618] sm:$0xff]
    %v2991 = vld [vmem:[#allocation13 + $0x620] sm:$0xff]
    %v2992 = vld [vmem:[#allocation13 + $0x628] sm:$0xff]
    %v2993 = vld [vmem:[#allocation13 + $0x630] sm:$0xff]
    %v2994 = vld [vmem:[#allocation13 + $0x638] sm:$0xff]
    %v2995 = vld [vmem:[#allocation13 + $0x640] sm:$0xff]
    %v2996 = vld [vmem:[#allocation13 + $0x648] sm:$0xff]
    %v2997 = vld [vmem:[#allocation13 + $0x650] sm:$0xff]
    %v2998 = vld [vmem:[#allocation13 + $0x658] sm:$0xff]
    %v2999 = vld [vmem:[#allocation13 + $0x660] sm:$0xff]
    %v3000 = vld [vmem:[#allocation13 + $0x668] sm:$0xff]
    %v3001 = vld [vmem:[#allocation13 + $0x670] sm:$0xff]
    %v3002 = vld [vmem:[#allocation13 + $0x678] sm:$0xff]
    %v3003 = vld [vmem:[#allocation13 + $0x680] sm:$0xff]
    %v3004 = vld [vmem:[#allocation13 + $0x688] sm:$0xff]
    %v3005 = vld [vmem:[#allocation13 + $0x690] sm:$0xff]
    %v3006 = vld [vmem:[#allocation13 + $0x698] sm:$0xff]
    %v3007 = vld [vmem:[#allocation13 + $0x6a0] sm:$0xff]
    %v3008 = vld [vmem:[#allocation13 + $0x6a8] sm:$0xff]
    %v3009 = vld [vmem:[#allocation13 + $0x6b0] sm:$0xff]
    %v3010 = vld [vmem:[#allocation13 + $0x6b8] sm:$0xff]
    %v3011 = vld [vmem:[#allocation13 + $0x6c0] sm:$0xff]
    %v3012 = vld [vmem:[#allocation13 + $0x6c8] sm:$0xff]
    %v3013 = vld [vmem:[#allocation13 + $0x6d0] sm:$0xff]
    %v3014 = vld [vmem:[#allocation13 + $0x6d8] sm:$0xff]
    %v3015 = vld [vmem:[#allocation13 + $0x6e0] sm:$0xff]
    %v3016 = vld [vmem:[#allocation13 + $0x6e8] sm:$0xff]
    %v3017 = vld [vmem:[#allocation13 + $0x6f0] sm:$0xff]
    %v3018 = vld [vmem:[#allocation13 + $0x6f8] sm:$0xff]
    %v3019 = vld [vmem:[#allocation13 + $0x700] sm:$0xff]
    %v3020 = vld [vmem:[#allocation13 + $0x708] sm:$0xff]
    %v3021 = vld [vmem:[#allocation13 + $0x710] sm:$0xff]
    %v3022 = vld [vmem:[#allocation13 + $0x718] sm:$0xff]
    %v3023 = vld [vmem:[#allocation13 + $0x720] sm:$0xff]
    %v3024 = vld [vmem:[#allocation13 + $0x728] sm:$0xff]
    %v3025 = vld [vmem:[#allocation13 + $0x730] sm:$0xff]
    %v3026 = vld [vmem:[#allocation13 + $0x738] sm:$0xff]
    %v3027 = vld [vmem:[#allocation13 + $0x740] sm:$0xff]
    %v3028 = vld [vmem:[#allocation13 + $0x748] sm:$0xff]
    %v3029 = vld [vmem:[#allocation13 + $0x750] sm:$0xff]
    %v3030 = vld [vmem:[#allocation13 + $0x758] sm:$0xff]
    %v3031 = vld [vmem:[#allocation13 + $0x760] sm:$0xff]
    %v3032 = vld [vmem:[#allocation13 + $0x768] sm:$0xff]
    %v3033 = vld [vmem:[#allocation13 + $0x770] sm:$0xff]
    %v3034 = vld [vmem:[#allocation13 + $0x778] sm:$0xff]
    %v3035 = vld [vmem:[#allocation13 + $0x780] sm:$0xff]
    %v3036 = vld [vmem:[#allocation13 + $0x788] sm:$0xff]
    %v3037 = vld [vmem:[#allocation13 + $0x790] sm:$0xff]
    %v3038 = vld [vmem:[#allocation13 + $0x798] sm:$0xff]
    %v3039 = vld [vmem:[#allocation13 + $0x7a0] sm:$0xff]
    %v3040 = vld [vmem:[#allocation13 + $0x7a8] sm:$0xff]
    %v3041 = vld [vmem:[#allocation13 + $0x7b0] sm:$0xff]
    %v3042 = vld [vmem:[#allocation13 + $0x7b8] sm:$0xff]
    %v3043 = vld [vmem:[#allocation13 + $0x7c0] sm:$0xff]
    %v3044 = vld [vmem:[#allocation13 + $0x7c8] sm:$0xff]
    %v3045 = vld [vmem:[#allocation13 + $0x7d0] sm:$0xff]
    %v3046 = vld [vmem:[#allocation13 + $0x7d8] sm:$0xff]
    %v3047 = vld [vmem:[#allocation13 + $0x7e0] sm:$0xff]
    %v3048 = vld [vmem:[#allocation13 + $0x7e8] sm:$0xff]
    %v3049 = vld [vmem:[#allocation13 + $0x7f0] sm:$0xff]
    %v3050 = vld [vmem:[#allocation13 + $0x7f8] sm:$0xff]
    %v3051 = vld [vmem:[#allocation13 + $0x800] sm:$0xff]
    %v3052 = vld [vmem:[#allocation13 + $0x808] sm:$0xff]
    %v3053 = vld [vmem:[#allocation13 + $0x810] sm:$0xff]
    %v3054 = vld [vmem:[#allocation13 + $0x818] sm:$0xff]
    %v3055 = vld [vmem:[#allocation13 + $0x820] sm:$0xff]
    %v3056 = vld [vmem:[#allocation13 + $0x828] sm:$0xff]
    %v3057 = vld [vmem:[#allocation13 + $0x830] sm:$0xff]
    %v3058 = vld [vmem:[#allocation13 + $0x838] sm:$0xff]
    %v3059 = vld [vmem:[#allocation13 + $0x840] sm:$0xff]
    %v3060 = vld [vmem:[#allocation13 + $0x848] sm:$0xff]
    %v3061 = vld [vmem:[#allocation13 + $0x850] sm:$0xff]
    %v3062 = vld [vmem:[#allocation13 + $0x858] sm:$0xff]
    %v3063 = vld [vmem:[#allocation13 + $0x860] sm:$0xff]
    %v3064 = vld [vmem:[#allocation13 + $0x868] sm:$0xff]
    %v3065 = vld [vmem:[#allocation13 + $0x870] sm:$0xff]
    %v3066 = vld [vmem:[#allocation13 + $0x878] sm:$0xff]
    %v3067 = vld [vmem:[#allocation13 + $0x880] sm:$0xff]
    %v3068 = vld [vmem:[#allocation13 + $0x888] sm:$0xff]
    %v3069 = vld [vmem:[#allocation13 + $0x890] sm:$0xff]
    %v3070 = vld [vmem:[#allocation13 + $0x898] sm:$0xff]
    %v3071 = vld [vmem:[#allocation13 + $0x8a0] sm:$0xff]
    %v3072 = vld [vmem:[#allocation13 + $0x8a8] sm:$0xff]
    %v3073 = vld [vmem:[#allocation13 + $0x8b0] sm:$0xff]
    %v3074 = vld [vmem:[#allocation13 + $0x8b8] sm:$0xff]
    %v3075 = vld [vmem:[#allocation13 + $0x8c0] sm:$0xff]
    %v3076 = vld [vmem:[#allocation13 + $0x8c8] sm:$0xff]
    %v3077 = vld [vmem:[#allocation13 + $0x8d0] sm:$0xff]
    %v3078 = vld [vmem:[#allocation13 + $0x8d8] sm:$0xff]
    %v3079 = vld [vmem:[#allocation13 + $0x8e0] sm:$0xff]
    %v3080 = vld [vmem:[#allocation13 + $0x8e8] sm:$0xff]
    %v3081 = vld [vmem:[#allocation13 + $0x8f0] sm:$0xff]
    %v3082 = vld [vmem:[#allocation13 + $0x8f8] sm:$0xff]
    %v3083 = vld [vmem:[#allocation14] sm:$0x3f]
    %v3085 = vlaneseq
    %v3086 = vshrl.u32 %v3085, 7
    %v3087 = vsub.s32 0, %v3086
    %v3088 = vrot.slane %v3083, %v3087
    %v3089 = vlaneseq
    %v3090 = vshrl.u32 %v3089, 7
    %v3091 = vsub.s32 1, %v3090
    %v3092 = vrot.slane %v3083, %v3091
    %v3093 = vlaneseq
    %v3094 = vshrl.u32 %v3093, 7
    %v3095 = vsub.s32 2, %v3094
    %v3096 = vrot.slane %v3083, %v3095
    %v3097 = vlaneseq
    %v3098 = vshrl.u32 %v3097, 7
    %v3099 = vsub.s32 3, %v3098
    %v3100 = vrot.slane %v3083, %v3099
    %v3101 = vlaneseq
    %v3102 = vshrl.u32 %v3101, 7
    %v3103 = vsub.s32 4, %v3102
    %v3104 = vrot.slane %v3083, %v3103
    %v3105 = vlaneseq
    %v3106 = vshrl.u32 %v3105, 7
    %v3107 = vsub.s32 5, %v3106
    %v3108 = vrot.slane %v3083, %v3107
    %v3127 = vunpack.c.l.b16 %v2783
    %v3128 = vunpack.c.l.b16 %v2784
    %v3129 = vunpack.c.l.b16 %v2785
    %v3130 = vunpack.c.l.b16 %v2786
    %v3131 = vunpack.c.l.b16 %v2787
    %v3132 = vunpack.c.l.b16 %v2788
    %v3133 = vunpack.c.l.b16 %v2789
    %v3134 = vunpack.c.l.b16 %v2790
    %v3135 = vunpack.c.l.b16 %v2791
    %v3136 = vunpack.c.l.b16 %v2792
    %v3137 = vunpack.c.l.b16 %v2793
    %v3138 = vunpack.c.l.b16 %v2794
    %v3139 = vsel %vm822, %v3133, %v3127
    %v3140 = vsel %vm822, %v3134, %v3128
    %v3141 = vsel %vm822, %v3135, %v3129
    %v3142 = vsel %vm822, %v3136, %v3130
    %v3143 = vsel %vm822, %v3137, %v3131
    %v3144 = vsel %vm822, %v3138, %v3132
    %v3145 = vpack.c.b16 %v3139, %v3139
    %v3146 = vpack.c.b16 %v3140, %v3140
    %v3147 = vpack.c.b16 %v3141, %v3141
    %v3148 = vpack.c.b16 %v3142, %v3142
    %v3149 = vpack.c.b16 %v3143, %v3143
    %v3150 = vpack.c.b16 %v3144, %v3144
    %v3445 = vunpack.c.l.b16 %v2795
    %v3446 = vunpack.c.h.b16 %v2795
    %v3447 = vunpack.c.l.b16 %v2796
    %v3448 = vunpack.c.h.b16 %v2796
    %v3449 = vunpack.c.l.b16 %v2797
    %v3450 = vunpack.c.h.b16 %v2797
    %v3451 = vunpack.c.l.b16 %v2798
    %v3452 = vunpack.c.h.b16 %v2798
    %v3453 = vunpack.c.l.b16 %v2799
    %v3454 = vunpack.c.h.b16 %v2799
    %v3455 = vunpack.c.l.b16 %v2800
    %v3456 = vunpack.c.h.b16 %v2800
    %v3457 = vunpack.c.l.b16 %v2801
    %v3458 = vunpack.c.h.b16 %v2801
    %v3459 = vunpack.c.l.b16 %v2802
    %v3460 = vunpack.c.h.b16 %v2802
    %v3461 = vunpack.c.l.b16 %v2803
    %v3462 = vunpack.c.h.b16 %v2803
    %v3463 = vunpack.c.l.b16 %v2804
    %v3464 = vunpack.c.h.b16 %v2804
    %v3465 = vunpack.c.l.b16 %v2805
    %v3466 = vunpack.c.h.b16 %v2805
    %v3467 = vunpack.c.l.b16 %v2806
    %v3468 = vunpack.c.h.b16 %v2806
    %v3469 = vunpack.c.l.b16 %v2807
    %v3470 = vunpack.c.h.b16 %v2807
    %v3471 = vunpack.c.l.b16 %v2808
    %v3472 = vunpack.c.h.b16 %v2808
    %v3473 = vunpack.c.l.b16 %v2809
    %v3474 = vunpack.c.h.b16 %v2809
    %v3475 = vunpack.c.l.b16 %v2810
    %v3476 = vunpack.c.h.b16 %v2810
    %v3477 = vunpack.c.l.b16 %v2811
    %v3478 = vunpack.c.h.b16 %v2811
    %v3479 = vunpack.c.l.b16 %v2812
    %v3480 = vunpack.c.h.b16 %v2812
    %v3481 = vunpack.c.l.b16 %v2813
    %v3482 = vunpack.c.h.b16 %v2813
    %v3483 = vunpack.c.l.b16 %v2814
    %v3484 = vunpack.c.h.b16 %v2814
    %v3485 = vunpack.c.l.b16 %v2815
    %v3486 = vunpack.c.h.b16 %v2815
    %v3487 = vunpack.c.l.b16 %v2816
    %v3488 = vunpack.c.h.b16 %v2816
    %v3489 = vunpack.c.l.b16 %v2817
    %v3490 = vunpack.c.h.b16 %v2817
    %v3491 = vunpack.c.l.b16 %v2818
    %v3492 = vunpack.c.h.b16 %v2818
    %v3493 = vunpack.c.l.b16 %v2819
    %v3494 = vunpack.c.h.b16 %v2819
    %v3495 = vunpack.c.l.b16 %v2820
    %v3496 = vunpack.c.h.b16 %v2820
    %v3497 = vunpack.c.l.b16 %v2821
    %v3498 = vunpack.c.h.b16 %v2821
    %v3499 = vunpack.c.l.b16 %v2822
    %v3500 = vunpack.c.h.b16 %v2822
    %v3501 = vunpack.c.l.b16 %v2823
    %v3502 = vunpack.c.h.b16 %v2823
    %v3503 = vunpack.c.l.b16 %v2824
    %v3504 = vunpack.c.h.b16 %v2824
    %v3505 = vunpack.c.l.b16 %v2825
    %v3506 = vunpack.c.h.b16 %v2825
    %v3507 = vunpack.c.l.b16 %v2826
    %v3508 = vunpack.c.h.b16 %v2826
    %v3509 = vunpack.c.l.b16 %v2827
    %v3510 = vunpack.c.h.b16 %v2827
    %v3511 = vunpack.c.l.b16 %v2828
    %v3512 = vunpack.c.h.b16 %v2828
    %v3513 = vunpack.c.l.b16 %v2829
    %v3514 = vunpack.c.h.b16 %v2829
    %v3515 = vunpack.c.l.b16 %v2830
    %v3516 = vunpack.c.h.b16 %v2830
    %v3517 = vunpack.c.l.b16 %v2831
    %v3518 = vunpack.c.h.b16 %v2831
    %v3519 = vunpack.c.l.b16 %v2832
    %v3520 = vunpack.c.h.b16 %v2832
    %v3521 = vunpack.c.l.b16 %v2833
    %v3522 = vunpack.c.h.b16 %v2833
    %v3523 = vunpack.c.l.b16 %v2834
    %v3524 = vunpack.c.h.b16 %v2834
    %v3525 = vunpack.c.l.b16 %v2835
    %v3526 = vunpack.c.h.b16 %v2835
    %v3527 = vunpack.c.l.b16 %v2836
    %v3528 = vunpack.c.h.b16 %v2836
    %v3529 = vunpack.c.l.b16 %v2837
    %v3530 = vunpack.c.h.b16 %v2837
    %v3531 = vunpack.c.l.b16 %v2838
    %v3532 = vunpack.c.h.b16 %v2838
    %v3533 = vunpack.c.l.b16 %v2839
    %v3534 = vunpack.c.h.b16 %v2839
    %v3535 = vunpack.c.l.b16 %v2840
    %v3536 = vunpack.c.h.b16 %v2840
    %v3537 = vunpack.c.l.b16 %v2841
    %v3538 = vunpack.c.h.b16 %v2841
    %v3539 = vunpack.c.l.b16 %v2842
    %v3540 = vunpack.c.h.b16 %v2842
    %v3541 = vunpack.c.l.b16 %v2843
    %v3542 = vunpack.c.h.b16 %v2843
    %v3543 = vunpack.c.l.b16 %v2844
    %v3544 = vunpack.c.h.b16 %v2844
    %v3545 = vunpack.c.l.b16 %v2845
    %v3546 = vunpack.c.h.b16 %v2845
    %v3547 = vunpack.c.l.b16 %v2846
    %v3548 = vunpack.c.h.b16 %v2846
    %v3549 = vunpack.c.l.b16 %v2847
    %v3550 = vunpack.c.h.b16 %v2847
    %v3551 = vunpack.c.l.b16 %v2848
    %v3552 = vunpack.c.h.b16 %v2848
    %v3553 = vunpack.c.l.b16 %v2849
    %v3554 = vunpack.c.h.b16 %v2849
    %v3555 = vunpack.c.l.b16 %v2850
    %v3556 = vunpack.c.h.b16 %v2850
    %v3557 = vunpack.c.l.b16 %v2851
    %v3558 = vunpack.c.h.b16 %v2851
    %v3559 = vunpack.c.l.b16 %v2852
    %v3560 = vunpack.c.h.b16 %v2852
    %v3561 = vunpack.c.l.b16 %v2853
    %v3562 = vunpack.c.h.b16 %v2853
    %v3563 = vunpack.c.l.b16 %v2854
    %v3564 = vunpack.c.h.b16 %v2854
    %v3565 = vunpack.c.l.b16 %v2855
    %v3566 = vunpack.c.h.b16 %v2855
    %v3567 = vunpack.c.l.b16 %v2856
    %v3568 = vunpack.c.h.b16 %v2856
    %v3569 = vunpack.c.l.b16 %v2857
    %v3570 = vunpack.c.h.b16 %v2857
    %v3571 = vunpack.c.l.b16 %v2858
    %v3572 = vunpack.c.h.b16 %v2858
    %v3573 = vunpack.c.l.b16 %v2859
    %v3574 = vunpack.c.h.b16 %v2859
    %v3575 = vunpack.c.l.b16 %v2860
    %v3576 = vunpack.c.h.b16 %v2860
    %v3577 = vunpack.c.l.b16 %v2861
    %v3578 = vunpack.c.h.b16 %v2861
    %v3579 = vunpack.c.l.b16 %v2862
    %v3580 = vunpack.c.h.b16 %v2862
    %v3581 = vunpack.c.l.b16 %v2863
    %v3582 = vunpack.c.h.b16 %v2863
    %v3583 = vunpack.c.l.b16 %v2864
    %v3584 = vunpack.c.h.b16 %v2864
    %v3585 = vunpack.c.l.b16 %v2865
    %v3586 = vunpack.c.h.b16 %v2865
    %v3587 = vunpack.c.l.b16 %v2866
    %v3588 = vunpack.c.h.b16 %v2866
    %v3589 = vunpack.c.l.b16 %v2867
    %v3590 = vunpack.c.h.b16 %v2867
    %v3591 = vunpack.c.l.b16 %v2868
    %v3592 = vunpack.c.h.b16 %v2868
    %v3593 = vunpack.c.l.b16 %v2869
    %v3594 = vunpack.c.h.b16 %v2869
    %v3595 = vunpack.c.l.b16 %v2870
    %v3596 = vunpack.c.h.b16 %v2870
    %v3597 = vunpack.c.l.b16 %v2871
    %v3598 = vunpack.c.h.b16 %v2871
    %v3599 = vunpack.c.l.b16 %v2872
    %v3600 = vunpack.c.h.b16 %v2872
    %v3601 = vunpack.c.l.b16 %v2873
    %v3602 = vunpack.c.h.b16 %v2873
    %v3603 = vunpack.c.l.b16 %v2874
    %v3604 = vunpack.c.h.b16 %v2874
    %v3605 = vunpack.c.l.b16 %v2875
    %v3606 = vunpack.c.h.b16 %v2875
    %v3607 = vunpack.c.l.b16 %v2876
    %v3608 = vunpack.c.h.b16 %v2876
    %v3609 = vunpack.c.l.b16 %v2877
    %v3610 = vunpack.c.h.b16 %v2877
    %v3611 = vunpack.c.l.b16 %v2878
    %v3612 = vunpack.c.h.b16 %v2878
    %v3613 = vunpack.c.l.b16 %v2879
    %v3614 = vunpack.c.h.b16 %v2879
    %v3615 = vunpack.c.l.b16 %v2880
    %v3616 = vunpack.c.h.b16 %v2880
    %v3617 = vunpack.c.l.b16 %v2881
    %v3618 = vunpack.c.h.b16 %v2881
    %v3619 = vunpack.c.l.b16 %v2882
    %v3620 = vunpack.c.h.b16 %v2882
    %v3621 = vunpack.c.l.b16 %v2883
    %v3622 = vunpack.c.h.b16 %v2883
    %v3623 = vunpack.c.l.b16 %v2884
    %v3624 = vunpack.c.h.b16 %v2884
    %v3625 = vunpack.c.l.b16 %v2885
    %v3626 = vunpack.c.h.b16 %v2885
    %v3627 = vunpack.c.l.b16 %v2886
    %v3628 = vunpack.c.h.b16 %v2886
    %v3629 = vunpack.c.l.b16 %v2887
    %v3630 = vunpack.c.h.b16 %v2887
    %v3631 = vunpack.c.l.b16 %v2888
    %v3632 = vunpack.c.h.b16 %v2888
    %v3633 = vunpack.c.l.b16 %v2889
    %v3634 = vunpack.c.h.b16 %v2889
    %v3635 = vunpack.c.l.b16 %v2890
    %v3636 = vunpack.c.h.b16 %v2890
    %v3637 = vunpack.c.l.b16 %v2891
    %v3638 = vunpack.c.h.b16 %v2891
    %v3639 = vunpack.c.l.b16 %v2892
    %v3640 = vunpack.c.h.b16 %v2892
    %v3641 = vunpack.c.l.b16 %v2893
    %v3642 = vunpack.c.h.b16 %v2893
    %v3643 = vunpack.c.l.b16 %v2894
    %v3644 = vunpack.c.h.b16 %v2894
    %v3645 = vunpack.c.l.b16 %v2895
    %v3646 = vunpack.c.h.b16 %v2895
    %v3647 = vunpack.c.l.b16 %v2896
    %v3648 = vunpack.c.h.b16 %v2896
    %v3649 = vunpack.c.l.b16 %v2897
    %v3650 = vunpack.c.h.b16 %v2897
    %v3651 = vunpack.c.l.b16 %v2898
    %v3652 = vunpack.c.h.b16 %v2898
    %v3653 = vunpack.c.l.b16 %v2899
    %v3654 = vunpack.c.h.b16 %v2899
    %v3655 = vunpack.c.l.b16 %v2900
    %v3656 = vunpack.c.h.b16 %v2900
    %v3657 = vunpack.c.l.b16 %v2901
    %v3658 = vunpack.c.h.b16 %v2901
    %v3659 = vunpack.c.l.b16 %v2902
    %v3660 = vunpack.c.h.b16 %v2902
    %v3661 = vunpack.c.l.b16 %v2903
    %v3662 = vunpack.c.h.b16 %v2903
    %v3663 = vunpack.c.l.b16 %v2904
    %v3664 = vunpack.c.h.b16 %v2904
    %v3665 = vunpack.c.l.b16 %v2905
    %v3666 = vunpack.c.h.b16 %v2905
    %v3667 = vunpack.c.l.b16 %v2906
    %v3668 = vunpack.c.h.b16 %v2906
    %v3669 = vunpack.c.l.b16 %v2907
    %v3670 = vunpack.c.h.b16 %v2907
    %v3671 = vunpack.c.l.b16 %v2908
    %v3672 = vunpack.c.h.b16 %v2908
    %v3673 = vunpack.c.l.b16 %v2909
    %v3674 = vunpack.c.h.b16 %v2909
    %v3675 = vunpack.c.l.b16 %v2910
    %v3676 = vunpack.c.h.b16 %v2910
    %v3677 = vunpack.c.l.b16 %v2911
    %v3678 = vunpack.c.h.b16 %v2911
    %v3679 = vunpack.c.l.b16 %v2912
    %v3680 = vunpack.c.h.b16 %v2912
    %v3681 = vunpack.c.l.b16 %v2913
    %v3682 = vunpack.c.h.b16 %v2913
    %v3683 = vunpack.c.l.b16 %v2914
    %v3684 = vunpack.c.h.b16 %v2914
    %v3685 = vunpack.c.l.b16 %v2915
    %v3686 = vunpack.c.h.b16 %v2915
    %v3687 = vunpack.c.l.b16 %v2916
    %v3688 = vunpack.c.h.b16 %v2916
    %v3689 = vunpack.c.l.b16 %v2917
    %v3690 = vunpack.c.h.b16 %v2917
    %v3691 = vunpack.c.l.b16 %v2918
    %v3692 = vunpack.c.h.b16 %v2918
    %v3693 = vunpack.c.l.b16 %v2919
    %v3694 = vunpack.c.h.b16 %v2919
    %v3695 = vunpack.c.l.b16 %v2920
    %v3696 = vunpack.c.h.b16 %v2920
    %v3697 = vunpack.c.l.b16 %v2921
    %v3698 = vunpack.c.h.b16 %v2921
    %v3699 = vunpack.c.l.b16 %v2922
    %v3700 = vunpack.c.h.b16 %v2922
    %v3701 = vunpack.c.l.b16 %v2923
    %v3702 = vunpack.c.h.b16 %v2923
    %v3703 = vunpack.c.l.b16 %v2924
    %v3704 = vunpack.c.h.b16 %v2924
    %v3705 = vunpack.c.l.b16 %v2925
    %v3706 = vunpack.c.h.b16 %v2925
    %v3707 = vunpack.c.l.b16 %v2926
    %v3708 = vunpack.c.h.b16 %v2926
    %v3709 = vunpack.c.l.b16 %v2927
    %v3710 = vunpack.c.h.b16 %v2927
    %v3711 = vunpack.c.l.b16 %v2928
    %v3712 = vunpack.c.h.b16 %v2928
    %v3713 = vunpack.c.l.b16 %v2929
    %v3714 = vunpack.c.h.b16 %v2929
    %v3715 = vunpack.c.l.b16 %v2930
    %v3716 = vunpack.c.h.b16 %v2930
    %v3717 = vunpack.c.l.b16 %v2931
    %v3718 = vunpack.c.h.b16 %v2931
    %v3719 = vunpack.c.l.b16 %v2932
    %v3720 = vunpack.c.h.b16 %v2932
    %v3721 = vunpack.c.l.b16 %v2933
    %v3722 = vunpack.c.h.b16 %v2933
    %v3723 = vunpack.c.l.b16 %v2934
    %v3724 = vunpack.c.h.b16 %v2934
    %v3725 = vunpack.c.l.b16 %v2935
    %v3726 = vunpack.c.h.b16 %v2935
    %v3727 = vunpack.c.l.b16 %v2936
    %v3728 = vunpack.c.h.b16 %v2936
    %v3729 = vunpack.c.l.b16 %v2937
    %v3730 = vunpack.c.h.b16 %v2937
    %v3731 = vunpack.c.l.b16 %v2938
    %v3732 = vunpack.c.h.b16 %v2938
    %v3733 = vunpack.c.l.b16 %v2939
    %v3734 = vunpack.c.h.b16 %v2939
    %v3735 = vunpack.c.l.b16 %v2940
    %v3736 = vunpack.c.h.b16 %v2940
    %v3737 = vunpack.c.l.b16 %v2941
    %v3738 = vunpack.c.h.b16 %v2941
    %v3739 = vunpack.c.l.b16 %v2942
    %v3740 = vunpack.c.h.b16 %v2942
    %v3741 = vunpack.c.l.b16 %v2943
    %v3742 = vunpack.c.h.b16 %v2943
    %v3743 = vunpack.c.l.b16 %v2944
    %v3744 = vunpack.c.h.b16 %v2944
    %v3745 = vunpack.c.l.b16 %v2945
    %v3746 = vunpack.c.h.b16 %v2945
    %v3747 = vunpack.c.l.b16 %v2946
    %v3748 = vunpack.c.h.b16 %v2946
    %v3749 = vunpack.c.l.b16 %v2947
    %v3750 = vunpack.c.h.b16 %v2947
    %v3751 = vunpack.c.l.b16 %v2948
    %v3752 = vunpack.c.h.b16 %v2948
    %v3753 = vunpack.c.l.b16 %v2949
    %v3754 = vunpack.c.h.b16 %v2949
    %v3755 = vunpack.c.l.b16 %v2950
    %v3756 = vunpack.c.h.b16 %v2950
    %v3757 = vunpack.c.l.b16 %v2951
    %v3758 = vunpack.c.h.b16 %v2951
    %v3759 = vunpack.c.l.b16 %v2952
    %v3760 = vunpack.c.h.b16 %v2952
    %v3761 = vunpack.c.l.b16 %v2953
    %v3762 = vunpack.c.h.b16 %v2953
    %v3763 = vunpack.c.l.b16 %v2954
    %v3764 = vunpack.c.h.b16 %v2954
    %v3765 = vunpack.c.l.b16 %v2955
    %v3766 = vunpack.c.h.b16 %v2955
    %v3767 = vunpack.c.l.b16 %v2956
    %v3768 = vunpack.c.h.b16 %v2956
    %v3769 = vunpack.c.l.b16 %v2957
    %v3770 = vunpack.c.h.b16 %v2957
    %v3771 = vunpack.c.l.b16 %v2958
    %v3772 = vunpack.c.h.b16 %v2958
    %v3773 = vunpack.c.l.b16 %v2959
    %v3774 = vunpack.c.h.b16 %v2959
    %v3775 = vunpack.c.l.b16 %v2960
    %v3776 = vunpack.c.h.b16 %v2960
    %v3777 = vunpack.c.l.b16 %v2961
    %v3778 = vunpack.c.h.b16 %v2961
    %v3779 = vunpack.c.l.b16 %v2962
    %v3780 = vunpack.c.h.b16 %v2962
    %v3781 = vunpack.c.l.b16 %v2963
    %v3782 = vunpack.c.h.b16 %v2963
    %v3783 = vunpack.c.l.b16 %v2964
    %v3784 = vunpack.c.h.b16 %v2964
    %v3785 = vunpack.c.l.b16 %v2965
    %v3786 = vunpack.c.h.b16 %v2965
    %v3787 = vunpack.c.l.b16 %v2966
    %v3788 = vunpack.c.h.b16 %v2966
    %v3789 = vunpack.c.l.b16 %v2967
    %v3790 = vunpack.c.h.b16 %v2967
    %v3791 = vunpack.c.l.b16 %v2968
    %v3792 = vunpack.c.h.b16 %v2968
    %v3793 = vunpack.c.l.b16 %v2969
    %v3794 = vunpack.c.h.b16 %v2969
    %v3795 = vunpack.c.l.b16 %v2970
    %v3796 = vunpack.c.h.b16 %v2970
    %v3797 = vunpack.c.l.b16 %v2971
    %v3798 = vunpack.c.h.b16 %v2971
    %v3799 = vunpack.c.l.b16 %v2972
    %v3800 = vunpack.c.h.b16 %v2972
    %v3801 = vunpack.c.l.b16 %v2973
    %v3802 = vunpack.c.h.b16 %v2973
    %v3803 = vunpack.c.l.b16 %v2974
    %v3804 = vunpack.c.h.b16 %v2974
    %v3805 = vunpack.c.l.b16 %v2975
    %v3806 = vunpack.c.h.b16 %v2975
    %v3807 = vunpack.c.l.b16 %v2976
    %v3808 = vunpack.c.h.b16 %v2976
    %v3809 = vunpack.c.l.b16 %v2977
    %v3810 = vunpack.c.h.b16 %v2977
    %v3811 = vunpack.c.l.b16 %v2978
    %v3812 = vunpack.c.h.b16 %v2978
    %v3813 = vunpack.c.l.b16 %v2979
    %v3814 = vunpack.c.h.b16 %v2979
    %v3815 = vunpack.c.l.b16 %v2980
    %v3816 = vunpack.c.h.b16 %v2980
    %v3817 = vunpack.c.l.b16 %v2981
    %v3818 = vunpack.c.h.b16 %v2981
    %v3819 = vunpack.c.l.b16 %v2982
    %v3820 = vunpack.c.h.b16 %v2982
    %v3821 = vunpack.c.l.b16 %v2983
    %v3822 = vunpack.c.h.b16 %v2983
    %v3823 = vunpack.c.l.b16 %v2984
    %v3824 = vunpack.c.h.b16 %v2984
    %v3825 = vunpack.c.l.b16 %v2985
    %v3826 = vunpack.c.h.b16 %v2985
    %v3827 = vunpack.c.l.b16 %v2986
    %v3828 = vunpack.c.h.b16 %v2986
    %v3829 = vunpack.c.l.b16 %v2987
    %v3830 = vunpack.c.h.b16 %v2987
    %v3831 = vunpack.c.l.b16 %v2988
    %v3832 = vunpack.c.h.b16 %v2988
    %v3833 = vunpack.c.l.b16 %v2989
    %v3834 = vunpack.c.h.b16 %v2989
    %v3835 = vunpack.c.l.b16 %v2990
    %v3836 = vunpack.c.h.b16 %v2990
    %v3837 = vunpack.c.l.b16 %v2991
    %v3838 = vunpack.c.h.b16 %v2991
    %v3839 = vunpack.c.l.b16 %v2992
    %v3840 = vunpack.c.h.b16 %v2992
    %v3841 = vunpack.c.l.b16 %v2993
    %v3842 = vunpack.c.h.b16 %v2993
    %v3843 = vunpack.c.l.b16 %v2994
    %v3844 = vunpack.c.h.b16 %v2994
    %v3845 = vunpack.c.l.b16 %v2995
    %v3846 = vunpack.c.h.b16 %v2995
    %v3847 = vunpack.c.l.b16 %v2996
    %v3848 = vunpack.c.h.b16 %v2996
    %v3849 = vunpack.c.l.b16 %v2997
    %v3850 = vunpack.c.h.b16 %v2997
    %v3851 = vunpack.c.l.b16 %v2998
    %v3852 = vunpack.c.h.b16 %v2998
    %v3853 = vunpack.c.l.b16 %v2999
    %v3854 = vunpack.c.h.b16 %v2999
    %v3855 = vunpack.c.l.b16 %v3000
    %v3856 = vunpack.c.h.b16 %v3000
    %v3857 = vunpack.c.l.b16 %v3001
    %v3858 = vunpack.c.h.b16 %v3001
    %v3859 = vunpack.c.l.b16 %v3002
    %v3860 = vunpack.c.h.b16 %v3002
    %v3861 = vunpack.c.l.b16 %v3003
    %v3862 = vunpack.c.h.b16 %v3003
    %v3863 = vunpack.c.l.b16 %v3004
    %v3864 = vunpack.c.h.b16 %v3004
    %v3865 = vunpack.c.l.b16 %v3005
    %v3866 = vunpack.c.h.b16 %v3005
    %v3867 = vunpack.c.l.b16 %v3006
    %v3868 = vunpack.c.h.b16 %v3006
    %v3869 = vunpack.c.l.b16 %v3007
    %v3870 = vunpack.c.h.b16 %v3007
    %v3871 = vunpack.c.l.b16 %v3008
    %v3872 = vunpack.c.h.b16 %v3008
    %v3873 = vunpack.c.l.b16 %v3009
    %v3874 = vunpack.c.h.b16 %v3009
    %v3875 = vunpack.c.l.b16 %v3010
    %v3876 = vunpack.c.h.b16 %v3010
    %v3877 = vunpack.c.l.b16 %v3011
    %v3878 = vunpack.c.h.b16 %v3011
    %v3879 = vunpack.c.l.b16 %v3012
    %v3880 = vunpack.c.h.b16 %v3012
    %v3881 = vunpack.c.l.b16 %v3013
    %v3882 = vunpack.c.h.b16 %v3013
    %v3883 = vunpack.c.l.b16 %v3014
    %v3884 = vunpack.c.h.b16 %v3014
    %v3885 = vunpack.c.l.b16 %v3015
    %v3886 = vunpack.c.h.b16 %v3015
    %v3887 = vunpack.c.l.b16 %v3016
    %v3888 = vunpack.c.h.b16 %v3016
    %v3889 = vunpack.c.l.b16 %v3017
    %v3890 = vunpack.c.h.b16 %v3017
    %v3891 = vunpack.c.l.b16 %v3018
    %v3892 = vunpack.c.h.b16 %v3018
    %v3893 = vunpack.c.l.b16 %v3019
    %v3894 = vunpack.c.h.b16 %v3019
    %v3895 = vunpack.c.l.b16 %v3020
    %v3896 = vunpack.c.h.b16 %v3020
    %v3897 = vunpack.c.l.b16 %v3021
    %v3898 = vunpack.c.h.b16 %v3021
    %v3899 = vunpack.c.l.b16 %v3022
    %v3900 = vunpack.c.h.b16 %v3022
    %v3901 = vunpack.c.l.b16 %v3023
    %v3902 = vunpack.c.h.b16 %v3023
    %v3903 = vunpack.c.l.b16 %v3024
    %v3904 = vunpack.c.h.b16 %v3024
    %v3905 = vunpack.c.l.b16 %v3025
    %v3906 = vunpack.c.h.b16 %v3025
    %v3907 = vunpack.c.l.b16 %v3026
    %v3908 = vunpack.c.h.b16 %v3026
    %v3909 = vunpack.c.l.b16 %v3027
    %v3910 = vunpack.c.h.b16 %v3027
    %v3911 = vunpack.c.l.b16 %v3028
    %v3912 = vunpack.c.h.b16 %v3028
    %v3913 = vunpack.c.l.b16 %v3029
    %v3914 = vunpack.c.h.b16 %v3029
    %v3915 = vunpack.c.l.b16 %v3030
    %v3916 = vunpack.c.h.b16 %v3030
    %v3917 = vunpack.c.l.b16 %v3031
    %v3918 = vunpack.c.h.b16 %v3031
    %v3919 = vunpack.c.l.b16 %v3032
    %v3920 = vunpack.c.h.b16 %v3032
    %v3921 = vunpack.c.l.b16 %v3033
    %v3922 = vunpack.c.h.b16 %v3033
    %v3923 = vunpack.c.l.b16 %v3034
    %v3924 = vunpack.c.h.b16 %v3034
    %v3925 = vunpack.c.l.b16 %v3035
    %v3926 = vunpack.c.h.b16 %v3035
    %v3927 = vunpack.c.l.b16 %v3036
    %v3928 = vunpack.c.h.b16 %v3036
    %v3929 = vunpack.c.l.b16 %v3037
    %v3930 = vunpack.c.h.b16 %v3037
    %v3931 = vunpack.c.l.b16 %v3038
    %v3932 = vunpack.c.h.b16 %v3038
    %v3933 = vunpack.c.l.b16 %v3039
    %v3934 = vunpack.c.h.b16 %v3039
    %v3935 = vunpack.c.l.b16 %v3040
    %v3936 = vunpack.c.h.b16 %v3040
    %v3937 = vunpack.c.l.b16 %v3041
    %v3938 = vunpack.c.h.b16 %v3041
    %v3939 = vunpack.c.l.b16 %v3042
    %v3940 = vunpack.c.h.b16 %v3042
    %v3941 = vunpack.c.l.b16 %v3043
    %v3942 = vunpack.c.h.b16 %v3043
    %v3943 = vunpack.c.l.b16 %v3044
    %v3944 = vunpack.c.h.b16 %v3044
    %v3945 = vunpack.c.l.b16 %v3045
    %v3946 = vunpack.c.h.b16 %v3045
    %v3947 = vunpack.c.l.b16 %v3046
    %v3948 = vunpack.c.h.b16 %v3046
    %v3949 = vunpack.c.l.b16 %v3047
    %v3950 = vunpack.c.h.b16 %v3047
    %v3951 = vunpack.c.l.b16 %v3048
    %v3952 = vunpack.c.h.b16 %v3048
    %v3953 = vunpack.c.l.b16 %v3049
    %v3954 = vunpack.c.h.b16 %v3049
    %v3955 = vunpack.c.l.b16 %v3050
    %v3956 = vunpack.c.h.b16 %v3050
    %v3957 = vunpack.c.l.b16 %v3051
    %v3958 = vunpack.c.h.b16 %v3051
    %v3959 = vunpack.c.l.b16 %v3052
    %v3960 = vunpack.c.h.b16 %v3052
    %v3961 = vunpack.c.l.b16 %v3053
    %v3962 = vunpack.c.h.b16 %v3053
    %v3963 = vunpack.c.l.b16 %v3054
    %v3964 = vunpack.c.h.b16 %v3054
    %v3965 = vunpack.c.l.b16 %v3055
    %v3966 = vunpack.c.h.b16 %v3055
    %v3967 = vunpack.c.l.b16 %v3056
    %v3968 = vunpack.c.h.b16 %v3056
    %v3969 = vunpack.c.l.b16 %v3057
    %v3970 = vunpack.c.h.b16 %v3057
    %v3971 = vunpack.c.l.b16 %v3058
    %v3972 = vunpack.c.h.b16 %v3058
    %v3973 = vunpack.c.l.b16 %v3059
    %v3974 = vunpack.c.h.b16 %v3059
    %v3975 = vunpack.c.l.b16 %v3060
    %v3976 = vunpack.c.h.b16 %v3060
    %v3977 = vunpack.c.l.b16 %v3061
    %v3978 = vunpack.c.h.b16 %v3061
    %v3979 = vunpack.c.l.b16 %v3062
    %v3980 = vunpack.c.h.b16 %v3062
    %v3981 = vunpack.c.l.b16 %v3063
    %v3982 = vunpack.c.h.b16 %v3063
    %v3983 = vunpack.c.l.b16 %v3064
    %v3984 = vunpack.c.h.b16 %v3064
    %v3985 = vunpack.c.l.b16 %v3065
    %v3986 = vunpack.c.h.b16 %v3065
    %v3987 = vunpack.c.l.b16 %v3066
    %v3988 = vunpack.c.h.b16 %v3066
    %v3989 = vunpack.c.l.b16 %v3067
    %v3990 = vunpack.c.h.b16 %v3067
    %v3991 = vunpack.c.l.b16 %v3068
    %v3992 = vunpack.c.h.b16 %v3068
    %v3993 = vunpack.c.l.b16 %v3069
    %v3994 = vunpack.c.h.b16 %v3069
    %v3995 = vunpack.c.l.b16 %v3070
    %v3996 = vunpack.c.h.b16 %v3070
    %v3997 = vunpack.c.l.b16 %v3071
    %v3998 = vunpack.c.h.b16 %v3071
    %v3999 = vunpack.c.l.b16 %v3072
    %v4000 = vunpack.c.h.b16 %v3072
    %v4001 = vunpack.c.l.b16 %v3073
    %v4002 = vunpack.c.h.b16 %v3073
    %v4003 = vunpack.c.l.b16 %v3074
    %v4004 = vunpack.c.h.b16 %v3074
    %v4005 = vunpack.c.l.b16 %v3075
    %v4006 = vunpack.c.h.b16 %v3075
    %v4007 = vunpack.c.l.b16 %v3076
    %v4008 = vunpack.c.h.b16 %v3076
    %v4009 = vunpack.c.l.b16 %v3077
    %v4010 = vunpack.c.h.b16 %v3077
    %v4011 = vunpack.c.l.b16 %v3078
    %v4012 = vunpack.c.h.b16 %v3078
    %v4013 = vunpack.c.l.b16 %v3079
    %v4014 = vunpack.c.h.b16 %v3079
    %v4015 = vunpack.c.l.b16 %v3080
    %v4016 = vunpack.c.h.b16 %v3080
    %v4017 = vunpack.c.l.b16 %v3081
    %v4018 = vunpack.c.h.b16 %v3081
    %v4019 = vunpack.c.l.b16 %v3082
    %v4020 = vunpack.c.h.b16 %v3082
    %v4021 = vpack.c.b16 %v3451, %v3445
    %v4022 = vpack.c.b16 %v3452, %v3446
    %v4023 = vpack.c.b16 %v3453, %v3447
    %v4024 = vpack.c.b16 %v3454, %v3448
    %v4025 = vpack.c.b16 %v3455, %v3449
    %v4026 = vpack.c.b16 %v3456, %v3450
    %v4027 = vpack.c.b16 %v3463, %v3457
    %v4028 = vpack.c.b16 %v3464, %v3458
    %v4029 = vpack.c.b16 %v3465, %v3459
    %v4030 = vpack.c.b16 %v3466, %v3460
    %v4031 = vpack.c.b16 %v3467, %v3461
    %v4032 = vpack.c.b16 %v3468, %v3462
    %v4033 = vpack.c.b16 %v3475, %v3469
    %v4034 = vpack.c.b16 %v3476, %v3470
    %v4035 = vpack.c.b16 %v3477, %v3471
    %v4036 = vpack.c.b16 %v3478, %v3472
    %v4037 = vpack.c.b16 %v3479, %v3473
    %v4038 = vpack.c.b16 %v3480, %v3474
    %v4039 = vpack.c.b16 %v3487, %v3481
    %v4040 = vpack.c.b16 %v3488, %v3482
    %v4041 = vpack.c.b16 %v3489, %v3483
    %v4042 = vpack.c.b16 %v3490, %v3484
    %v4043 = vpack.c.b16 %v3491, %v3485
    %v4044 = vpack.c.b16 %v3492, %v3486
    %v4045 = vpack.c.b16 %v3499, %v3493
    %v4046 = vpack.c.b16 %v3500, %v3494
    %v4047 = vpack.c.b16 %v3501, %v3495
    %v4048 = vpack.c.b16 %v3502, %v3496
    %v4049 = vpack.c.b16 %v3503, %v3497
    %v4050 = vpack.c.b16 %v3504, %v3498
    %v4051 = vpack.c.b16 %v3511, %v3505
    %v4052 = vpack.c.b16 %v3512, %v3506
    %v4053 = vpack.c.b16 %v3513, %v3507
    %v4054 = vpack.c.b16 %v3514, %v3508
    %v4055 = vpack.c.b16 %v3515, %v3509
    %v4056 = vpack.c.b16 %v3516, %v3510
    %v4057 = vpack.c.b16 %v3523, %v3517
    %v4058 = vpack.c.b16 %v3524, %v3518
    %v4059 = vpack.c.b16 %v3525, %v3519
    %v4060 = vpack.c.b16 %v3526, %v3520
    %v4061 = vpack.c.b16 %v3527, %v3521
    %v4062 = vpack.c.b16 %v3528, %v3522
    %v4063 = vpack.c.b16 %v3535, %v3529
    %v4064 = vpack.c.b16 %v3536, %v3530
    %v4065 = vpack.c.b16 %v3537, %v3531
    %v4066 = vpack.c.b16 %v3538, %v3532
    %v4067 = vpack.c.b16 %v3539, %v3533
    %v4068 = vpack.c.b16 %v3540, %v3534
    %v4069 = vpack.c.b16 %v3547, %v3541
    %v4070 = vpack.c.b16 %v3548, %v3542
    %v4071 = vpack.c.b16 %v3549, %v3543
    %v4072 = vpack.c.b16 %v3550, %v3544
    %v4073 = vpack.c.b16 %v3551, %v3545
    %v4074 = vpack.c.b16 %v3552, %v3546
    %v4075 = vpack.c.b16 %v3559, %v3553
    %v4076 = vpack.c.b16 %v3560, %v3554
    %v4077 = vpack.c.b16 %v3561, %v3555
    %v4078 = vpack.c.b16 %v3562, %v3556
    %v4079 = vpack.c.b16 %v3563, %v3557
    %v4080 = vpack.c.b16 %v3564, %v3558
    %v4081 = vpack.c.b16 %v3571, %v3565
    %v4082 = vpack.c.b16 %v3572, %v3566
    %v4083 = vpack.c.b16 %v3573, %v3567
    %v4084 = vpack.c.b16 %v3574, %v3568
    %v4085 = vpack.c.b16 %v3575, %v3569
    %v4086 = vpack.c.b16 %v3576, %v3570
    %v4087 = vpack.c.b16 %v3583, %v3577
    %v4088 = vpack.c.b16 %v3584, %v3578
    %v4089 = vpack.c.b16 %v3585, %v3579
    %v4090 = vpack.c.b16 %v3586, %v3580
    %v4091 = vpack.c.b16 %v3587, %v3581
    %v4092 = vpack.c.b16 %v3588, %v3582
    %v4093 = vpack.c.b16 %v3595, %v3589
    %v4094 = vpack.c.b16 %v3596, %v3590
    %v4095 = vpack.c.b16 %v3597, %v3591
    %v4096 = vpack.c.b16 %v3598, %v3592
    %v4097 = vpack.c.b16 %v3599, %v3593
    %v4098 = vpack.c.b16 %v3600, %v3594
    %v4099 = vpack.c.b16 %v3607, %v3601
    %v4100 = vpack.c.b16 %v3608, %v3602
    %v4101 = vpack.c.b16 %v3609, %v3603
    %v4102 = vpack.c.b16 %v3610, %v3604
    %v4103 = vpack.c.b16 %v3611, %v3605
    %v4104 = vpack.c.b16 %v3612, %v3606
    %v4105 = vpack.c.b16 %v3619, %v3613
    %v4106 = vpack.c.b16 %v3620, %v3614
    %v4107 = vpack.c.b16 %v3621, %v3615
    %v4108 = vpack.c.b16 %v3622, %v3616
    %v4109 = vpack.c.b16 %v3623, %v3617
    %v4110 = vpack.c.b16 %v3624, %v3618
    %v4111 = vpack.c.b16 %v3631, %v3625
    %v4112 = vpack.c.b16 %v3632, %v3626
    %v4113 = vpack.c.b16 %v3633, %v3627
    %v4114 = vpack.c.b16 %v3634, %v3628
    %v4115 = vpack.c.b16 %v3635, %v3629
    %v4116 = vpack.c.b16 %v3636, %v3630
    %v4117 = vpack.c.b16 %v3643, %v3637
    %v4118 = vpack.c.b16 %v3644, %v3638
    %v4119 = vpack.c.b16 %v3645, %v3639
    %v4120 = vpack.c.b16 %v3646, %v3640
    %v4121 = vpack.c.b16 %v3647, %v3641
    %v4122 = vpack.c.b16 %v3648, %v3642
    %v4123 = vpack.c.b16 %v3655, %v3649
    %v4124 = vpack.c.b16 %v3656, %v3650
    %v4125 = vpack.c.b16 %v3657, %v3651
    %v4126 = vpack.c.b16 %v3658, %v3652
    %v4127 = vpack.c.b16 %v3659, %v3653
    %v4128 = vpack.c.b16 %v3660, %v3654
    %v4129 = vpack.c.b16 %v3667, %v3661
    %v4130 = vpack.c.b16 %v3668, %v3662
    %v4131 = vpack.c.b16 %v3669, %v3663
    %v4132 = vpack.c.b16 %v3670, %v3664
    %v4133 = vpack.c.b16 %v3671, %v3665
    %v4134 = vpack.c.b16 %v3672, %v3666
    %v4135 = vpack.c.b16 %v3679, %v3673
    %v4136 = vpack.c.b16 %v3680, %v3674
    %v4137 = vpack.c.b16 %v3681, %v3675
    %v4138 = vpack.c.b16 %v3682, %v3676
    %v4139 = vpack.c.b16 %v3683, %v3677
    %v4140 = vpack.c.b16 %v3684, %v3678
    %v4141 = vpack.c.b16 %v3691, %v3685
    %v4142 = vpack.c.b16 %v3692, %v3686
    %v4143 = vpack.c.b16 %v3693, %v3687
    %v4144 = vpack.c.b16 %v3694, %v3688
    %v4145 = vpack.c.b16 %v3695, %v3689
    %v4146 = vpack.c.b16 %v3696, %v3690
    %v4147 = vpack.c.b16 %v3703, %v3697
    %v4148 = vpack.c.b16 %v3704, %v3698
    %v4149 = vpack.c.b16 %v3705, %v3699
    %v4150 = vpack.c.b16 %v3706, %v3700
    %v4151 = vpack.c.b16 %v3707, %v3701
    %v4152 = vpack.c.b16 %v3708, %v3702
    %v4153 = vpack.c.b16 %v3715, %v3709
    %v4154 = vpack.c.b16 %v3716, %v3710
    %v4155 = vpack.c.b16 %v3717, %v3711
    %v4156 = vpack.c.b16 %v3718, %v3712
    %v4157 = vpack.c.b16 %v3719, %v3713
    %v4158 = vpack.c.b16 %v3720, %v3714
    %v4159 = vpack.c.b16 %v3727, %v3721
    %v4160 = vpack.c.b16 %v3728, %v3722
    %v4161 = vpack.c.b16 %v3729, %v3723
    %v4162 = vpack.c.b16 %v3730, %v3724
    %v4163 = vpack.c.b16 %v3731, %v3725
    %v4164 = vpack.c.b16 %v3732, %v3726
    %v4165 = vpack.c.b16 %v3739, %v3733
    %v4166 = vpack.c.b16 %v3740, %v3734
    %v4167 = vpack.c.b16 %v3741, %v3735
    %v4168 = vpack.c.b16 %v3742, %v3736
    %v4169 = vpack.c.b16 %v3743, %v3737
    %v4170 = vpack.c.b16 %v3744, %v3738
    %v4171 = vpack.c.b16 %v3751, %v3745
    %v4172 = vpack.c.b16 %v3752, %v3746
    %v4173 = vpack.c.b16 %v3753, %v3747
    %v4174 = vpack.c.b16 %v3754, %v3748
    %v4175 = vpack.c.b16 %v3755, %v3749
    %v4176 = vpack.c.b16 %v3756, %v3750
    %v4177 = vpack.c.b16 %v3763, %v3757
    %v4178 = vpack.c.b16 %v3764, %v3758
    %v4179 = vpack.c.b16 %v3765, %v3759
    %v4180 = vpack.c.b16 %v3766, %v3760
    %v4181 = vpack.c.b16 %v3767, %v3761
    %v4182 = vpack.c.b16 %v3768, %v3762
    %v4183 = vpack.c.b16 %v3775, %v3769
    %v4184 = vpack.c.b16 %v3776, %v3770
    %v4185 = vpack.c.b16 %v3777, %v3771
    %v4186 = vpack.c.b16 %v3778, %v3772
    %v4187 = vpack.c.b16 %v3779, %v3773
    %v4188 = vpack.c.b16 %v3780, %v3774
    %v4189 = vpack.c.b16 %v3787, %v3781
    %v4190 = vpack.c.b16 %v3788, %v3782
    %v4191 = vpack.c.b16 %v3789, %v3783
    %v4192 = vpack.c.b16 %v3790, %v3784
    %v4193 = vpack.c.b16 %v3791, %v3785
    %v4194 = vpack.c.b16 %v3792, %v3786
    %v4195 = vpack.c.b16 %v3799, %v3793
    %v4196 = vpack.c.b16 %v3800, %v3794
    %v4197 = vpack.c.b16 %v3801, %v3795
    %v4198 = vpack.c.b16 %v3802, %v3796
    %v4199 = vpack.c.b16 %v3803, %v3797
    %v4200 = vpack.c.b16 %v3804, %v3798
    %v4201 = vpack.c.b16 %v3811, %v3805
    %v4202 = vpack.c.b16 %v3812, %v3806
    %v4203 = vpack.c.b16 %v3813, %v3807
    %v4204 = vpack.c.b16 %v3814, %v3808
    %v4205 = vpack.c.b16 %v3815, %v3809
    %v4206 = vpack.c.b16 %v3816, %v3810
    %v4207 = vpack.c.b16 %v3823, %v3817
    %v4208 = vpack.c.b16 %v3824, %v3818
    %v4209 = vpack.c.b16 %v3825, %v3819
    %v4210 = vpack.c.b16 %v3826, %v3820
    %v4211 = vpack.c.b16 %v3827, %v3821
    %v4212 = vpack.c.b16 %v3828, %v3822
    %v4213 = vpack.c.b16 %v3835, %v3829
    %v4214 = vpack.c.b16 %v3836, %v3830
    %v4215 = vpack.c.b16 %v3837, %v3831
    %v4216 = vpack.c.b16 %v3838, %v3832
    %v4217 = vpack.c.b16 %v3839, %v3833
    %v4218 = vpack.c.b16 %v3840, %v3834
    %v4219 = vpack.c.b16 %v3847, %v3841
    %v4220 = vpack.c.b16 %v3848, %v3842
    %v4221 = vpack.c.b16 %v3849, %v3843
    %v4222 = vpack.c.b16 %v3850, %v3844
    %v4223 = vpack.c.b16 %v3851, %v3845
    %v4224 = vpack.c.b16 %v3852, %v3846
    %v4225 = vpack.c.b16 %v3859, %v3853
    %v4226 = vpack.c.b16 %v3860, %v3854
    %v4227 = vpack.c.b16 %v3861, %v3855
    %v4228 = vpack.c.b16 %v3862, %v3856
    %v4229 = vpack.c.b16 %v3863, %v3857
    %v4230 = vpack.c.b16 %v3864, %v3858
    %v4231 = vpack.c.b16 %v3871, %v3865
    %v4232 = vpack.c.b16 %v3872, %v3866
    %v4233 = vpack.c.b16 %v3873, %v3867
    %v4234 = vpack.c.b16 %v3874, %v3868
    %v4235 = vpack.c.b16 %v3875, %v3869
    %v4236 = vpack.c.b16 %v3876, %v3870
    %v4237 = vpack.c.b16 %v3883, %v3877
    %v4238 = vpack.c.b16 %v3884, %v3878
    %v4239 = vpack.c.b16 %v3885, %v3879
    %v4240 = vpack.c.b16 %v3886, %v3880
    %v4241 = vpack.c.b16 %v3887, %v3881
    %v4242 = vpack.c.b16 %v3888, %v3882
    %v4243 = vpack.c.b16 %v3895, %v3889
    %v4244 = vpack.c.b16 %v3896, %v3890
    %v4245 = vpack.c.b16 %v3897, %v3891
    %v4246 = vpack.c.b16 %v3898, %v3892
    %v4247 = vpack.c.b16 %v3899, %v3893
    %v4248 = vpack.c.b16 %v3900, %v3894
    %v4249 = vpack.c.b16 %v3907, %v3901
    %v4250 = vpack.c.b16 %v3908, %v3902
    %v4251 = vpack.c.b16 %v3909, %v3903
    %v4252 = vpack.c.b16 %v3910, %v3904
    %v4253 = vpack.c.b16 %v3911, %v3905
    %v4254 = vpack.c.b16 %v3912, %v3906
    %v4255 = vpack.c.b16 %v3919, %v3913
    %v4256 = vpack.c.b16 %v3920, %v3914
    %v4257 = vpack.c.b16 %v3921, %v3915
    %v4258 = vpack.c.b16 %v3922, %v3916
    %v4259 = vpack.c.b16 %v3923, %v3917
    %v4260 = vpack.c.b16 %v3924, %v3918
    %v4261 = vpack.c.b16 %v3931, %v3925
    %v4262 = vpack.c.b16 %v3932, %v3926
    %v4263 = vpack.c.b16 %v3933, %v3927
    %v4264 = vpack.c.b16 %v3934, %v3928
    %v4265 = vpack.c.b16 %v3935, %v3929
    %v4266 = vpack.c.b16 %v3936, %v3930
    %v4267 = vpack.c.b16 %v3943, %v3937
    %v4268 = vpack.c.b16 %v3944, %v3938
    %v4269 = vpack.c.b16 %v3945, %v3939
    %v4270 = vpack.c.b16 %v3946, %v3940
    %v4271 = vpack.c.b16 %v3947, %v3941
    %v4272 = vpack.c.b16 %v3948, %v3942
    %v4273 = vpack.c.b16 %v3955, %v3949
    %v4274 = vpack.c.b16 %v3956, %v3950
    %v4275 = vpack.c.b16 %v3957, %v3951
    %v4276 = vpack.c.b16 %v3958, %v3952
    %v4277 = vpack.c.b16 %v3959, %v3953
    %v4278 = vpack.c.b16 %v3960, %v3954
    %v4279 = vpack.c.b16 %v3967, %v3961
    %v4280 = vpack.c.b16 %v3968, %v3962
    %v4281 = vpack.c.b16 %v3969, %v3963
    %v4282 = vpack.c.b16 %v3970, %v3964
    %v4283 = vpack.c.b16 %v3971, %v3965
    %v4284 = vpack.c.b16 %v3972, %v3966
    %v4285 = vpack.c.b16 %v3979, %v3973
    %v4286 = vpack.c.b16 %v3980, %v3974
    %v4287 = vpack.c.b16 %v3981, %v3975
    %v4288 = vpack.c.b16 %v3982, %v3976
    %v4289 = vpack.c.b16 %v3983, %v3977
    %v4290 = vpack.c.b16 %v3984, %v3978
    %v4291 = vpack.c.b16 %v3991, %v3985
    %v4292 = vpack.c.b16 %v3992, %v3986
    %v4293 = vpack.c.b16 %v3993, %v3987
    %v4294 = vpack.c.b16 %v3994, %v3988
    %v4295 = vpack.c.b16 %v3995, %v3989
    %v4296 = vpack.c.b16 %v3996, %v3990
    %v4297 = vpack.c.b16 %v4003, %v3997
    %v4298 = vpack.c.b16 %v4004, %v3998
    %v4299 = vpack.c.b16 %v4005, %v3999
    %v4300 = vpack.c.b16 %v4006, %v4000
    %v4301 = vpack.c.b16 %v4007, %v4001
    %v4302 = vpack.c.b16 %v4008, %v4002
    %v4303 = vpack.c.b16 %v4015, %v4009
    %v4304 = vpack.c.b16 %v4016, %v4010
    %v4305 = vpack.c.b16 %v4017, %v4011
    %v4306 = vpack.c.b16 %v4018, %v4012
    %v4307 = vpack.c.b16 %v4019, %v4013
    %v4308 = vpack.c.b16 %v4020, %v4014
    %4597 = vmatprep.subr.bf16.mxu0 %v4022
    %4598 = vmatpush1.bf16.msra.mxu0 %v4021
    %4599 = vmatprep.subr.bf16.mxu0 %v4028
    %4600 = vmatpush1.bf16.msra.mxu0 %v4027
    %4601 = vmatprep.subr.bf16.mxu0 %v4034
    %4602 = vmatpush1.bf16.msra.mxu0 %v4033
    %4603 = vmatprep.subr.bf16.mxu0 %v4040
    %4604 = vmatpush1.bf16.msra.mxu0 %v4039
    %4605 = vmatprep.subr.bf16.mxu0 %v4046
    %4606 = vmatpush1.bf16.msra.mxu0 %v4045
    %4607 = vmatprep.subr.bf16.mxu0 %v4052
    %4608 = vmatpush1.bf16.msra.mxu0 %v4051
    %4609 = vmatprep.subr.bf16.mxu0 %v4058
    %4610 = vmatpush1.bf16.msra.mxu0 %v4057
    %4611 = vmatprep.subr.bf16.mxu0 %v4064
    %4612 = vmatpush1.bf16.msra.mxu0 %v4063
    %4613 = vmatprep.subr.bf16.mxu0 %v4070
    %4614 = vmatpush1.bf16.msra.mxu0 %v4069
    %4615 = vmatprep.subr.bf16.mxu0 %v4076
    %4616 = vmatpush1.bf16.msra.mxu0 %v4075
    %4617 = vmatprep.subr.bf16.mxu0 %v4082
    %4618 = vmatpush1.bf16.msra.mxu0 %v4081
    %4619 = vmatprep.subr.bf16.mxu0 %v4088
    %4620 = vmatpush1.bf16.msra.mxu0 %v4087
    %4621 = vmatprep.subr.bf16.mxu0 %v4094
    %4622 = vmatpush1.bf16.msra.mxu0 %v4093
    %4623 = vmatprep.subr.bf16.mxu0 %v4100
    %4624 = vmatpush1.bf16.msra.mxu0 %v4099
    %4625 = vmatprep.subr.bf16.mxu0 %v4106
    %4626 = vmatpush1.bf16.msra.mxu0 %v4105
    %4627 = vmatprep.subr.bf16.mxu0 %v4112
    %4628 = vmatpush1.bf16.msra.mxu0 %v4111
    %4629 = vmatprep.mubr.bf16.mxu0 %v3146
    %4630 = vmatmul.mubr.bf16.gmra.mrb[0].mxu0 %v3145
    %v4631 = vpop.f32.mrb[0].mxu0
    %v4632 = vadd.f32 %v3088, %v4631
    %v4633 = vpop.f32.mrb[0].mxu0
    %v4634 = vadd.f32 %v3092, %v4633
    %v4635 = vpop.f32.mrb[0].mxu0
    %v4636 = vpop.f32.mrb[0].mxu0
    %4637 = vdwg.mxu0
    %4638 = vmatprep.subr.bf16.mxu0 %v4118
    %4639 = vmatpush1.bf16.msra.mxu0 %v4117
    %4640 = vmatprep.subr.bf16.mxu0 %v4124
    %4641 = vmatpush1.bf16.msra.mxu0 %v4123
    %4642 = vmatprep.subr.bf16.mxu0 %v4130
    %4643 = vmatpush1.bf16.msra.mxu0 %v4129
    %4644 = vmatprep.subr.bf16.mxu0 %v4136
    %4645 = vmatpush1.bf16.msra.mxu0 %v4135
    %4646 = vmatprep.subr.bf16.mxu0 %v4142
    %4647 = vmatpush1.bf16.msra.mxu0 %v4141
    %4648 = vmatprep.subr.bf16.mxu0 %v4148
    %4649 = vmatpush1.bf16.msra.mxu0 %v4147
    %4650 = vmatprep.subr.bf16.mxu0 %v4154
    %4651 = vmatpush1.bf16.msra.mxu0 %v4153
    %4652 = vmatprep.subr.bf16.mxu0 %v4160
    %4653 = vmatpush1.bf16.msra.mxu0 %v4159
    %4654 = vmatprep.subr.bf16.mxu0 %v4166
    %4655 = vmatpush1.bf16.msra.mxu0 %v4165
    %4656 = vmatprep.subr.bf16.mxu0 %v4172
    %4657 = vmatpush1.bf16.msra.mxu0 %v4171
    %4658 = vmatprep.subr.bf16.mxu0 %v4178
    %4659 = vmatpush1.bf16.msra.mxu0 %v4177
    %4660 = vmatprep.subr.bf16.mxu0 %v4184
    %4661 = vmatpush1.bf16.msra.mxu0 %v4183
    %4662 = vmatprep.subr.bf16.mxu0 %v4190
    %4663 = vmatpush1.bf16.msra.mxu0 %v4189
    %4664 = vmatprep.subr.bf16.mxu0 %v4196
    %4665 = vmatpush1.bf16.msra.mxu0 %v4195
    %4666 = vmatprep.subr.bf16.mxu0 %v4202
    %4667 = vmatpush1.bf16.msra.mxu0 %v4201
    %4668 = vmatprep.subr.bf16.mxu0 %v4208
    %4669 = vmatpush1.bf16.msra.mxu0 %v4207
    %4670 = vmatprep.mubr.bf16.mxu0 %v3148
    %4671 = vmatmul.mubr.bf16.gmra.mrb[0].mxu0 %v3147
    %v4672 = vpop.f32.mrb[0].mxu0
    %v4673 = vadd.f32 %v4632, %v4672
    %v4674 = vpop.f32.mrb[0].mxu0
    %v4675 = vadd.f32 %v4634, %v4674
    %v4676 = vpop.f32.mrb[0].mxu0
    %v4677 = vpop.f32.mrb[0].mxu0
    %4678 = vdwg.mxu0
    %4679 = vmatprep.subr.bf16.mxu0 %v4214
    %4680 = vmatpush1.bf16.msra.mxu0 %v4213
    %4681 = vmatprep.subr.bf16.mxu0 %v4220
    %4682 = vmatpush1.bf16.msra.mxu0 %v4219
    %4683 = vmatprep.subr.bf16.mxu0 %v4226
    %4684 = vmatpush1.bf16.msra.mxu0 %v4225
    %4685 = vmatprep.subr.bf16.mxu0 %v4232
    %4686 = vmatpush1.bf16.msra.mxu0 %v4231
    %4687 = vmatprep.subr.bf16.mxu0 %v4238
    %4688 = vmatpush1.bf16.msra.mxu0 %v4237
    %4689 = vmatprep.subr.bf16.mxu0 %v4244
    %4690 = vmatpush1.bf16.msra.mxu0 %v4243
    %4691 = vmatprep.subr.bf16.mxu0 %v4250
    %4692 = vmatpush1.bf16.msra.mxu0 %v4249
    %4693 = vmatprep.subr.bf16.mxu0 %v4256
    %4694 = vmatpush1.bf16.msra.mxu0 %v4255
    %4695 = vmatprep.subr.bf16.mxu0 %v4262
    %4696 = vmatpush1.bf16.msra.mxu0 %v4261
    %4697 = vmatprep.subr.bf16.mxu0 %v4268
    %4698 = vmatpush1.bf16.msra.mxu0 %v4267
    %4699 = vmatprep.subr.bf16.mxu0 %v4274
    %4700 = vmatpush1.bf16.msra.mxu0 %v4273
    %4701 = vmatprep.subr.bf16.mxu0 %v4280
    %4702 = vmatpush1.bf16.msra.mxu0 %v4279
    %4703 = vmatprep.subr.bf16.mxu0 %v4286
    %4704 = vmatpush1.bf16.msra.mxu0 %v4285
    %4705 = vmatprep.subr.bf16.mxu0 %v4292
    %4706 = vmatpush1.bf16.msra.mxu0 %v4291
    %4707 = vmatprep.subr.bf16.mxu0 %v4298
    %4708 = vmatpush1.bf16.msra.mxu0 %v4297
    %4709 = vmatprep.subr.bf16.mxu0 %v4304
    %4710 = vmatpush1.bf16.msra.mxu0 %v4303
    %4711 = vmatprep.mubr.bf16.mxu0 %v3150
    %4712 = vmatmul.mubr.bf16.gmra.mrb[0].mxu0 %v3149
    %v4713 = vpop.f32.mrb[0].mxu0
    %v4714 = vadd.f32 %v4673, %v4713
    %v4715 = vpop.f32.mrb[0].mxu0
    %v4716 = vadd.f32 %v4675, %v4715
    %v4717 = vpop.f32.mrb[0].mxu0
    %v4718 = vpop.f32.mrb[0].mxu0
    %4719 = vdwg.mxu0
    %4720 = vmatprep.subr.bf16.mxu0 %v4024
    %4721 = vmatpush1.bf16.msra.mxu0 %v4023
    %4722 = vmatprep.subr.bf16.mxu0 %v4030
    %4723 = vmatpush1.bf16.msra.mxu0 %v4029
    %4724 = vmatprep.subr.bf16.mxu0 %v4036
    %4725 = vmatpush1.bf16.msra.mxu0 %v4035
    %4726 = vmatprep.subr.bf16.mxu0 %v4042
    %4727 = vmatpush1.bf16.msra.mxu0 %v4041
    %4728 = vmatprep.subr.bf16.mxu0 %v4048
    %4729 = vmatpush1.bf16.msra.mxu0 %v4047
    %4730 = vmatprep.subr.bf16.mxu0 %v4054
    %4731 = vmatpush1.bf16.msra.mxu0 %v4053
    %4732 = vmatprep.subr.bf16.mxu0 %v4060
    %4733 = vmatpush1.bf16.msra.mxu0 %v4059
    %4734 = vmatprep.subr.bf16.mxu0 %v4066
    %4735 = vmatpush1.bf16.msra.mxu0 %v4065
    %4736 = vmatprep.subr.bf16.mxu0 %v4072
    %4737 = vmatpush1.bf16.msra.mxu0 %v4071
    %4738 = vmatprep.subr.bf16.mxu0 %v4078
    %4739 = vmatpush1.bf16.msra.mxu0 %v4077
    %4740 = vmatprep.subr.bf16.mxu0 %v4084
    %4741 = vmatpush1.bf16.msra.mxu0 %v4083
    %4742 = vmatprep.subr.bf16.mxu0 %v4090
    %4743 = vmatpush1.bf16.msra.mxu0 %v4089
    %4744 = vmatprep.subr.bf16.mxu0 %v4096
    %4745 = vmatpush1.bf16.msra.mxu0 %v4095
    %4746 = vmatprep.subr.bf16.mxu0 %v4102
    %4747 = vmatpush1.bf16.msra.mxu0 %v4101
    %4748 = vmatprep.subr.bf16.mxu0 %v4108
    %4749 = vmatpush1.bf16.msra.mxu0 %v4107
    %4750 = vmatprep.subr.bf16.mxu0 %v4114
    %4751 = vmatpush1.bf16.msra.mxu0 %v4113
    %4752 = vmatprep.mubr.bf16.mxu0 %v3146
    %4753 = vmatmul.mubr.bf16.gmra.mrb[0].mxu0 %v3145
    %v4754 = vpop.f32.mrb[0].mxu0
    %v4755 = vadd.f32 %v3096, %v4754
    %v4756 = vpop.f32.mrb[0].mxu0
    %v4757 = vadd.f32 %v3100, %v4756
    %v4758 = vpop.f32.mrb[0].mxu0
    %v4759 = vpop.f32.mrb[0].mxu0
    %4760 = vdwg.mxu0
    %4761 = vmatprep.subr.bf16.mxu0 %v4120
    %4762 = vmatpush1.bf16.msra.mxu0 %v4119
    %4763 = vmatprep.subr.bf16.mxu0 %v4126
    %4764 = vmatpush1.bf16.msra.mxu0 %v4125
    %4765 = vmatprep.subr.bf16.mxu0 %v4132
    %4766 = vmatpush1.bf16.msra.mxu0 %v4131
    %4767 = vmatprep.subr.bf16.mxu0 %v4138
    %4768 = vmatpush1.bf16.msra.mxu0 %v4137
    %4769 = vmatprep.subr.bf16.mxu0 %v4144
    %4770 = vmatpush1.bf16.msra.mxu0 %v4143
    %4771 = vmatprep.subr.bf16.mxu0 %v4150
    %4772 = vmatpush1.bf16.msra.mxu0 %v4149
    %4773 = vmatprep.subr.bf16.mxu0 %v4156
    %4774 = vmatpush1.bf16.msra.mxu0 %v4155
    %4775 = vmatprep.subr.bf16.mxu0 %v4162
    %4776 = vmatpush1.bf16.msra.mxu0 %v4161
    %4777 = vmatprep.subr.bf16.mxu0 %v4168
    %4778 = vmatpush1.bf16.msra.mxu0 %v4167
    %4779 = vmatprep.subr.bf16.mxu0 %v4174
    %4780 = vmatpush1.bf16.msra.mxu0 %v4173
    %4781 = vmatprep.subr.bf16.mxu0 %v4180
    %4782 = vmatpush1.bf16.msra.mxu0 %v4179
    %4783 = vmatprep.subr.bf16.mxu0 %v4186
    %4784 = vmatpush1.bf16.msra.mxu0 %v4185
    %4785 = vmatprep.subr.bf16.mxu0 %v4192
    %4786 = vmatpush1.bf16.msra.mxu0 %v4191
    %4787 = vmatprep.subr.bf16.mxu0 %v4198
    %4788 = vmatpush1.bf16.msra.mxu0 %v4197
    %4789 = vmatprep.subr.bf16.mxu0 %v4204
    %4790 = vmatpush1.bf16.msra.mxu0 %v4203
    %4791 = vmatprep.subr.bf16.mxu0 %v4210
    %4792 = vmatpush1.bf16.msra.mxu0 %v4209
    %4793 = vmatprep.mubr.bf16.mxu0 %v3148
    %4794 = vmatmul.mubr.bf16.gmra.mrb[0].mxu0 %v3147
    %v4795 = vpop.f32.mrb[0].mxu0
    %v4796 = vadd.f32 %v4755, %v4795
    %v4797 = vpop.f32.mrb[0].mxu0
    %v4798 = vadd.f32 %v4757, %v4797
    %v4799 = vpop.f32.mrb[0].mxu0
    %v4800 = vpop.f32.mrb[0].mxu0
    %4801 = vdwg.mxu0
    %4802 = vmatprep.subr.bf16.mxu0 %v4216
    %4803 = vmatpush1.bf16.msra.mxu0 %v4215
    %4804 = vmatprep.subr.bf16.mxu0 %v4222
    %4805 = vmatpush1.bf16.msra.mxu0 %v4221
    %4806 = vmatprep.subr.bf16.mxu0 %v4228
    %4807 = vmatpush1.bf16.msra.mxu0 %v4227
    %4808 = vmatprep.subr.bf16.mxu0 %v4234
    %4809 = vmatpush1.bf16.msra.mxu0 %v4233
    %4810 = vmatprep.subr.bf16.mxu0 %v4240
    %4811 = vmatpush1.bf16.msra.mxu0 %v4239
    %4812 = vmatprep.subr.bf16.mxu0 %v4246
    %4813 = vmatpush1.bf16.msra.mxu0 %v4245
    %4814 = vmatprep.subr.bf16.mxu0 %v4252
    %4815 = vmatpush1.bf16.msra.mxu0 %v4251
    %4816 = vmatprep.subr.bf16.mxu0 %v4258
    %4817 = vmatpush1.bf16.msra.mxu0 %v4257
    %4818 = vmatprep.subr.bf16.mxu0 %v4264
    %4819 = vmatpush1.bf16.msra.mxu0 %v4263
    %4820 = vmatprep.subr.bf16.mxu0 %v4270
    %4821 = vmatpush1.bf16.msra.mxu0 %v4269
    %4822 = vmatprep.subr.bf16.mxu0 %v4276
    %4823 = vmatpush1.bf16.msra.mxu0 %v4275
    %4824 = vmatprep.subr.bf16.mxu0 %v4282
    %4825 = vmatpush1.bf16.msra.mxu0 %v4281
    %4826 = vmatprep.subr.bf16.mxu0 %v4288
    %4827 = vmatpush1.bf16.msra.mxu0 %v4287
    %4828 = vmatprep.subr.bf16.mxu0 %v4294
    %4829 = vmatpush1.bf16.msra.mxu0 %v4293
    %4830 = vmatprep.subr.bf16.mxu0 %v4300
    %4831 = vmatpush1.bf16.msra.mxu0 %v4299
    %4832 = vmatprep.subr.bf16.mxu0 %v4306
    %4833 = vmatpush1.bf16.msra.mxu0 %v4305
    %4834 = vmatprep.mubr.bf16.mxu0 %v3150
    %4835 = vmatmul.mubr.bf16.gmra.mrb[0].mxu0 %v3149
    %v4836 = vpop.f32.mrb[0].mxu0
    %v4837 = vadd.f32 %v4796, %v4836
    %v4838 = vpop.f32.mrb[0].mxu0
    %v4839 = vadd.f32 %v4798, %v4838
    %v4840 = vpop.f32.mrb[0].mxu0
    %v4841 = vpop.f32.mrb[0].mxu0
    %4842 = vdwg.mxu0
    %4843 = vmatprep.subr.bf16.mxu0 %v4026
    %4844 = vmatpush1.bf16.msra.mxu0 %v4025
    %4845 = vmatprep.subr.bf16.mxu0 %v4032
    %4846 = vmatpush1.bf16.msra.mxu0 %v4031
    %4847 = vmatprep.subr.bf16.mxu0 %v4038
    %4848 = vmatpush1.bf16.msra.mxu0 %v4037
    %4849 = vmatprep.subr.bf16.mxu0 %v4044
    %4850 = vmatpush1.bf16.msra.mxu0 %v4043
    %4851 = vmatprep.subr.bf16.mxu0 %v4050
    %4852 = vmatpush1.bf16.msra.mxu0 %v4049
    %4853 = vmatprep.subr.bf16.mxu0 %v4056
    %4854 = vmatpush1.bf16.msra.mxu0 %v4055
    %4855 = vmatprep.subr.bf16.mxu0 %v4062
    %4856 = vmatpush1.bf16.msra.mxu0 %v4061
    %4857 = vmatprep.subr.bf16.mxu0 %v4068
    %4858 = vmatpush1.bf16.msra.mxu0 %v4067
    %4859 = vmatprep.subr.bf16.mxu0 %v4074
    %4860 = vmatpush1.bf16.msra.mxu0 %v4073
    %4861 = vmatprep.subr.bf16.mxu0 %v4080
    %4862 = vmatpush1.bf16.msra.mxu0 %v4079
    %4863 = vmatprep.subr.bf16.mxu0 %v4086
    %4864 = vmatpush1.bf16.msra.mxu0 %v4085
    %4865 = vmatprep.subr.bf16.mxu0 %v4092
    %4866 = vmatpush1.bf16.msra.mxu0 %v4091
    %4867 = vmatprep.subr.bf16.mxu0 %v4098
    %4868 = vmatpush1.bf16.msra.mxu0 %v4097
    %4869 = vmatprep.subr.bf16.mxu0 %v4104
    %4870 = vmatpush1.bf16.msra.mxu0 %v4103
    %4871 = vmatprep.subr.bf16.mxu0 %v4110
    %4872 = vmatpush1.bf16.msra.mxu0 %v4109
    %4873 = vmatprep.subr.bf16.mxu0 %v4116
    %4874 = vmatpush1.bf16.msra.mxu0 %v4115
    %4875 = vmatprep.mubr.bf16.mxu0 %v3146
    %4876 = vmatmul.mubr.bf16.gmra.mrb[0].mxu0 %v3145
    %v4877 = vpop.f32.mrb[0].mxu0
    %v4878 = vadd.f32 %v3104, %v4877
    %v4879 = vpop.f32.mrb[0].mxu0
    %v4880 = vadd.f32 %v3108, %v4879
    %v4881 = vpop.f32.mrb[0].mxu0
    %v4882 = vpop.f32.mrb[0].mxu0
    %4883 = vdwg.mxu0
    %4884 = vmatprep.subr.bf16.mxu0 %v4122
    %4885 = vmatpush1.bf16.msra.mxu0 %v4121
    %4886 = vmatprep.subr.bf16.mxu0 %v4128
    %4887 = vmatpush1.bf16.msra.mxu0 %v4127
    %4888 = vmatprep.subr.bf16.mxu0 %v4134
    %4889 = vmatpush1.bf16.msra.mxu0 %v4133
    %4890 = vmatprep.subr.bf16.mxu0 %v4140
    %4891 = vmatpush1.bf16.msra.mxu0 %v4139
    %4892 = vmatprep.subr.bf16.mxu0 %v4146
    %4893 = vmatpush1.bf16.msra.mxu0 %v4145
    %4894 = vmatprep.subr.bf16.mxu0 %v4152
    %4895 = vmatpush1.bf16.msra.mxu0 %v4151
    %4896 = vmatprep.subr.bf16.mxu0 %v4158
    %4897 = vmatpush1.bf16.msra.mxu0 %v4157
    %4898 = vmatprep.subr.bf16.mxu0 %v4164
    %4899 = vmatpush1.bf16.msra.mxu0 %v4163
    %4900 = vmatprep.subr.bf16.mxu0 %v4170
    %4901 = vmatpush1.bf16.msra.mxu0 %v4169
    %4902 = vmatprep.subr.bf16.mxu0 %v4176
    %4903 = vmatpush1.bf16.msra.mxu0 %v4175
    %4904 = vmatprep.subr.bf16.mxu0 %v4182
    %4905 = vmatpush1.bf16.msra.mxu0 %v4181
    %4906 = vmatprep.subr.bf16.mxu0 %v4188
    %4907 = vmatpush1.bf16.msra.mxu0 %v4187
    %4908 = vmatprep.subr.bf16.mxu0 %v4194
    %4909 = vmatpush1.bf16.msra.mxu0 %v4193
    %4910 = vmatprep.subr.bf16.mxu0 %v4200
    %4911 = vmatpush1.bf16.msra.mxu0 %v4199
    %4912 = vmatprep.subr.bf16.mxu0 %v4206
    %4913 = vmatpush1.bf16.msra.mxu0 %v4205
    %4914 = vmatprep.subr.bf16.mxu0 %v4212
    %4915 = vmatpush1.bf16.msra.mxu0 %v4211
    %4916 = vmatprep.mubr.bf16.mxu0 %v3148
    %4917 = vmatmul.mubr.bf16.gmra.mrb[0].mxu0 %v3147
    %v4918 = vpop.f32.mrb[0].mxu0
    %v4919 = vadd.f32 %v4878, %v4918
    %v4920 = vpop.f32.mrb[0].mxu0
    %v4921 = vadd.f32 %v4880, %v4920
    %v4922 = vpop.f32.mrb[0].mxu0
    %v4923 = vpop.f32.mrb[0].mxu0
    %4924 = vdwg.mxu0
    %4925 = vmatprep.subr.bf16.mxu0 %v4218
    %4926 = vmatpush1.bf16.msra.mxu0 %v4217
    %4927 = vmatprep.subr.bf16.mxu0 %v4224
    %4928 = vmatpush1.bf16.msra.mxu0 %v4223
    %4929 = vmatprep.subr.bf16.mxu0 %v4230
    %4930 = vmatpush1.bf16.msra.mxu0 %v4229
    %4931 = vmatprep.subr.bf16.mxu0 %v4236
    %4932 = vmatpush1.bf16.msra.mxu0 %v4235
    %4933 = vmatprep.subr.bf16.mxu0 %v4242
    %4934 = vmatpush1.bf16.msra.mxu0 %v4241
    %4935 = vmatprep.subr.bf16.mxu0 %v4248
    %4936 = vmatpush1.bf16.msra.mxu0 %v4247
    %4937 = vmatprep.subr.bf16.mxu0 %v4254
    %4938 = vmatpush1.bf16.msra.mxu0 %v4253
    %4939 = vmatprep.subr.bf16.mxu0 %v4260
    %4940 = vmatpush1.bf16.msra.mxu0 %v4259
    %4941 = vmatprep.subr.bf16.mxu0 %v4266
    %4942 = vmatpush1.bf16.msra.mxu0 %v4265
    %4943 = vmatprep.subr.bf16.mxu0 %v4272
    %4944 = vmatpush1.bf16.msra.mxu0 %v4271
    %4945 = vmatprep.subr.bf16.mxu0 %v4278
    %4946 = vmatpush1.bf16.msra.mxu0 %v4277
    %4947 = vmatprep.subr.bf16.mxu0 %v4284
    %4948 = vmatpush1.bf16.msra.mxu0 %v4283
    %4949 = vmatprep.subr.bf16.mxu0 %v4290
    %4950 = vmatpush1.bf16.msra.mxu0 %v4289
    %4951 = vmatprep.subr.bf16.mxu0 %v4296
    %4952 = vmatpush1.bf16.msra.mxu0 %v4295
    %4953 = vmatprep.subr.bf16.mxu0 %v4302
    %4954 = vmatpush1.bf16.msra.mxu0 %v4301
    %4955 = vmatprep.subr.bf16.mxu0 %v4308
    %4956 = vmatpush1.bf16.msra.mxu0 %v4307
    %4957 = vmatprep.mubr.bf16.mxu0 %v3150
    %4958 = vmatmul.mubr.bf16.gmra.mrb[0].mxu0 %v3149
    %v4959 = vpop.f32.mrb[0].mxu0
    %v4960 = vadd.f32 %v4919, %v4959
    %v4961 = vpop.f32.mrb[0].mxu0
    %v4962 = vadd.f32 %v4921, %v4961
    %v4963 = vpop.f32.mrb[0].mxu0
    %v4964 = vpop.f32.mrb[0].mxu0
    %4965 = vdwg.mxu0
    %v4966 = vpack.c.bf16 %v4714, %v4714
    %v4967 = vpack.c.bf16 %v4716, %v4716
    %v4968 = vpack.c.bf16 %v4837, %v4837
    %v4969 = vpack.c.bf16 %v4839, %v4839
    %v4970 = vpack.c.bf16 %v4960, %v4960
    %v4971 = vpack.c.bf16 %v4962, %v4962
    %v4972 = vld [vmem:[#allocation16] sm:$0xff]
    %v4973 = vld [vmem:[#allocation16 + $0x8] sm:$0xff]
    %v4974 = vld [vmem:[#allocation16 + $0x10] sm:$0xff]
    %v4975 = vld [vmem:[#allocation16 + $0x18] sm:$0xff]
    %v4976 = vld [vmem:[#allocation16 + $0x20] sm:$0xff]
    %v4977 = vld [vmem:[#allocation16 + $0x28] sm:$0xff]
    %v4978 = vld [vmem:[#allocation16 + $0x30] sm:$0xff]
    %v4979 = vld [vmem:[#allocation16 + $0x38] sm:$0xff]
    %v4980 = vld [vmem:[#allocation16 + $0x40] sm:$0xff]
    %v4981 = vld [vmem:[#allocation16 + $0x48] sm:$0xff]
    %v4982 = vld [vmem:[#allocation16 + $0x50] sm:$0xff]
    %v4983 = vld [vmem:[#allocation16 + $0x58] sm:$0xff]
    %v4984 = vld [vmem:[#allocation16 + $0x60] sm:$0xff]
    %v4985 = vld [vmem:[#allocation16 + $0x68] sm:$0xff]
    %v4986 = vld [vmem:[#allocation16 + $0x70] sm:$0xff]
    %v4987 = vld [vmem:[#allocation16 + $0x78] sm:$0xff]
    %v4988 = vld [vmem:[#allocation16 + $0x80] sm:$0xff]
    %v4989 = vld [vmem:[#allocation16 + $0x88] sm:$0xff]
    %v4990 = vld [vmem:[#allocation16 + $0x90] sm:$0xff]
    %v4991 = vld [vmem:[#allocation16 + $0x98] sm:$0xff]
    %v4992 = vld [vmem:[#allocation16 + $0xa0] sm:$0xff]
    %v4993 = vld [vmem:[#allocation16 + $0xa8] sm:$0xff]
    %v4994 = vld [vmem:[#allocation16 + $0xb0] sm:$0xff]
    %v4995 = vld [vmem:[#allocation16 + $0xb8] sm:$0xff]
    %v4996 = vld [vmem:[#allocation17] sm:$0xff]
    %v4997 = vld [vmem:[#allocation17 + $0x8] sm:$0xff]
    %v4998 = vld [vmem:[#allocation17 + $0x10] sm:$0xff]
    %v4999 = vld [vmem:[#allocation17 + $0x18] sm:$0xff]
    %v5000 = vld [vmem:[#allocation17 + $0x20] sm:$0xff]
    %v5001 = vld [vmem:[#allocation17 + $0x28] sm:$0xff]
    %v5002 = vld [vmem:[#allocation17 + $0x30] sm:$0xff]
    %v5003 = vld [vmem:[#allocation17 + $0x38] sm:$0xff]
    %v5004 = vld [vmem:[#allocation17 + $0x40] sm:$0xff]
    %v5005 = vld [vmem:[#allocation17 + $0x48] sm:$0xff]
    %v5006 = vld [vmem:[#allocation17 + $0x50] sm:$0xff]
    %v5007 = vld [vmem:[#allocation17 + $0x58] sm:$0xff]
    %v5008 = vld [vmem:[#allocation17 + $0x60] sm:$0xff]
    %v5009 = vld [vmem:[#allocation17 + $0x68] sm:$0xff]
    %v5010 = vld [vmem:[#allocation17 + $0x70] sm:$0xff]
    %v5011 = vld [vmem:[#allocation17 + $0x78] sm:$0xff]
    %v5012 = vld [vmem:[#allocation17 + $0x80] sm:$0xff]
    %v5013 = vld [vmem:[#allocation17 + $0x88] sm:$0xff]
    %v5014 = vld [vmem:[#allocation17 + $0x90] sm:$0xff]
    %v5015 = vld [vmem:[#allocation17 + $0x98] sm:$0xff]
    %v5016 = vld [vmem:[#allocation17 + $0xa0] sm:$0xff]
    %v5017 = vld [vmem:[#allocation17 + $0xa8] sm:$0xff]
    %v5018 = vld [vmem:[#allocation17 + $0xb0] sm:$0xff]
    %v5019 = vld [vmem:[#allocation17 + $0xb8] sm:$0xff]
    %v5020 = vld [vmem:[#allocation17 + $0xc0] sm:$0xff]
    %v5021 = vld [vmem:[#allocation17 + $0xc8] sm:$0xff]
    %v5022 = vld [vmem:[#allocation17 + $0xd0] sm:$0xff]
    %v5023 = vld [vmem:[#allocation17 + $0xd8] sm:$0xff]
    %v5024 = vld [vmem:[#allocation17 + $0xe0] sm:$0xff]
    %v5025 = vld [vmem:[#allocation17 + $0xe8] sm:$0xff]
    %v5026 = vld [vmem:[#allocation17 + $0xf0] sm:$0xff]
    %v5027 = vld [vmem:[#allocation17 + $0xf8] sm:$0xff]
    %v5028 = vld [vmem:[#allocation17 + $0x100] sm:$0xff]
    %v5029 = vld [vmem:[#allocation17 + $0x108] sm:$0xff]
    %v5030 = vld [vmem:[#allocation17 + $0x110] sm:$0xff]
    %v5031 = vld [vmem:[#allocation17 + $0x118] sm:$0xff]
    %v5032 = vld [vmem:[#allocation17 + $0x120] sm:$0xff]
    %v5033 = vld [vmem:[#allocation17 + $0x128] sm:$0xff]
    %v5034 = vld [vmem:[#allocation17 + $0x130] sm:$0xff]
    %v5035 = vld [vmem:[#allocation17 + $0x138] sm:$0xff]
    %v5036 = vld [vmem:[#allocation17 + $0x140] sm:$0xff]
    %v5037 = vld [vmem:[#allocation17 + $0x148] sm:$0xff]
    %v5038 = vld [vmem:[#allocation17 + $0x150] sm:$0xff]
    %v5039 = vld [vmem:[#allocation17 + $0x158] sm:$0xff]
    %v5040 = vld [vmem:[#allocation17 + $0x160] sm:$0xff]
    %v5041 = vld [vmem:[#allocation17 + $0x168] sm:$0xff]
    %v5042 = vld [vmem:[#allocation17 + $0x170] sm:$0xff]
    %v5043 = vld [vmem:[#allocation17 + $0x178] sm:$0xff]
    %v5044 = vld [vmem:[#allocation17 + $0x180] sm:$0xff]
    %v5045 = vld [vmem:[#allocation17 + $0x188] sm:$0xff]
    %v5046 = vld [vmem:[#allocation17 + $0x190] sm:$0xff]
    %v5047 = vld [vmem:[#allocation17 + $0x198] sm:$0xff]
    %v5048 = vld [vmem:[#allocation17 + $0x1a0] sm:$0xff]
    %v5049 = vld [vmem:[#allocation17 + $0x1a8] sm:$0xff]
    %v5050 = vld [vmem:[#allocation17 + $0x1b0] sm:$0xff]
    %v5051 = vld [vmem:[#allocation17 + $0x1b8] sm:$0xff]
    %v5052 = vld [vmem:[#allocation17 + $0x1c0] sm:$0xff]
    %v5053 = vld [vmem:[#allocation17 + $0x1c8] sm:$0xff]
    %v5054 = vld [vmem:[#allocation17 + $0x1d0] sm:$0xff]
    %v5055 = vld [vmem:[#allocation17 + $0x1d8] sm:$0xff]
    %v5056 = vld [vmem:[#allocation17 + $0x1e0] sm:$0xff]
    %v5057 = vld [vmem:[#allocation17 + $0x1e8] sm:$0xff]
    %v5058 = vld [vmem:[#allocation17 + $0x1f0] sm:$0xff]
    %v5059 = vld [vmem:[#allocation17 + $0x1f8] sm:$0xff]
    %v5060 = vld [vmem:[#allocation17 + $0x200] sm:$0xff]
    %v5061 = vld [vmem:[#allocation17 + $0x208] sm:$0xff]
    %v5062 = vld [vmem:[#allocation17 + $0x210] sm:$0xff]
    %v5063 = vld [vmem:[#allocation17 + $0x218] sm:$0xff]
    %v5064 = vld [vmem:[#allocation17 + $0x220] sm:$0xff]
    %v5065 = vld [vmem:[#allocation17 + $0x228] sm:$0xff]
    %v5066 = vld [vmem:[#allocation17 + $0x230] sm:$0xff]
    %v5067 = vld [vmem:[#allocation17 + $0x238] sm:$0xff]
    %v5068 = vld [vmem:[#allocation17 + $0x240] sm:$0xff]
    %v5069 = vld [vmem:[#allocation17 + $0x248] sm:$0xff]
    %v5070 = vld [vmem:[#allocation17 + $0x250] sm:$0xff]
    %v5071 = vld [vmem:[#allocation17 + $0x258] sm:$0xff]
    %v5072 = vld [vmem:[#allocation17 + $0x260] sm:$0xff]
    %v5073 = vld [vmem:[#allocation17 + $0x268] sm:$0xff]
    %v5074 = vld [vmem:[#allocation17 + $0x270] sm:$0xff]
    %v5075 = vld [vmem:[#allocation17 + $0x278] sm:$0xff]
    %v5076 = vld [vmem:[#allocation17 + $0x280] sm:$0xff]
    %v5077 = vld [vmem:[#allocation17 + $0x288] sm:$0xff]
    %v5078 = vld [vmem:[#allocation17 + $0x290] sm:$0xff]
    %v5079 = vld [vmem:[#allocation17 + $0x298] sm:$0xff]
    %v5080 = vld [vmem:[#allocation17 + $0x2a0] sm:$0xff]
    %v5081 = vld [vmem:[#allocation17 + $0x2a8] sm:$0xff]
    %v5082 = vld [vmem:[#allocation17 + $0x2b0] sm:$0xff]
    %v5083 = vld [vmem:[#allocation17 + $0x2b8] sm:$0xff]
    %v5084 = vld [vmem:[#allocation17 + $0x2c0] sm:$0xff]
    %v5085 = vld [vmem:[#allocation17 + $0x2c8] sm:$0xff]
    %v5086 = vld [vmem:[#allocation17 + $0x2d0] sm:$0xff]
    %v5087 = vld [vmem:[#allocation17 + $0x2d8] sm:$0xff]
    %v5088 = vld [vmem:[#allocation17 + $0x2e0] sm:$0xff]
    %v5089 = vld [vmem:[#allocation17 + $0x2e8] sm:$0xff]
    %v5090 = vld [vmem:[#allocation17 + $0x2f0] sm:$0xff]
    %v5091 = vld [vmem:[#allocation17 + $0x2f8] sm:$0xff]
    %v5092 = vld [vmem:[#allocation17 + $0x300] sm:$0xff]
    %v5093 = vld [vmem:[#allocation17 + $0x308] sm:$0xff]
    %v5094 = vld [vmem:[#allocation17 + $0x310] sm:$0xff]
    %v5095 = vld [vmem:[#allocation17 + $0x318] sm:$0xff]
    %v5096 = vld [vmem:[#allocation17 + $0x320] sm:$0xff]
    %v5097 = vld [vmem:[#allocation17 + $0x328] sm:$0xff]
    %v5098 = vld [vmem:[#allocation17 + $0x330] sm:$0xff]
    %v5099 = vld [vmem:[#allocation17 + $0x338] sm:$0xff]
    %v5100 = vld [vmem:[#allocation17 + $0x340] sm:$0xff]
    %v5101 = vld [vmem:[#allocation17 + $0x348] sm:$0xff]
    %v5102 = vld [vmem:[#allocation17 + $0x350] sm:$0xff]
    %v5103 = vld [vmem:[#allocation17 + $0x358] sm:$0xff]
    %v5104 = vld [vmem:[#allocation17 + $0x360] sm:$0xff]
    %v5105 = vld [vmem:[#allocation17 + $0x368] sm:$0xff]
    %v5106 = vld [vmem:[#allocation17 + $0x370] sm:$0xff]
    %v5107 = vld [vmem:[#allocation17 + $0x378] sm:$0xff]
    %v5108 = vld [vmem:[#allocation17 + $0x380] sm:$0xff]
    %v5109 = vld [vmem:[#allocation17 + $0x388] sm:$0xff]
    %v5110 = vld [vmem:[#allocation17 + $0x390] sm:$0xff]
    %v5111 = vld [vmem:[#allocation17 + $0x398] sm:$0xff]
    %v5112 = vld [vmem:[#allocation17 + $0x3a0] sm:$0xff]
    %v5113 = vld [vmem:[#allocation17 + $0x3a8] sm:$0xff]
    %v5114 = vld [vmem:[#allocation17 + $0x3b0] sm:$0xff]
    %v5115 = vld [vmem:[#allocation17 + $0x3b8] sm:$0xff]
    %v5116 = vld [vmem:[#allocation17 + $0x3c0] sm:$0xff]
    %v5117 = vld [vmem:[#allocation17 + $0x3c8] sm:$0xff]
    %v5118 = vld [vmem:[#allocation17 + $0x3d0] sm:$0xff]
    %v5119 = vld [vmem:[#allocation17 + $0x3d8] sm:$0xff]
    %v5120 = vld [vmem:[#allocation17 + $0x3e0] sm:$0xff]
    %v5121 = vld [vmem:[#allocation17 + $0x3e8] sm:$0xff]
    %v5122 = vld [vmem:[#allocation17 + $0x3f0] sm:$0xff]
    %v5123 = vld [vmem:[#allocation17 + $0x3f8] sm:$0xff]
    %v5124 = vld [vmem:[#allocation17 + $0x400] sm:$0xff]
    %v5125 = vld [vmem:[#allocation17 + $0x408] sm:$0xff]
    %v5126 = vld [vmem:[#allocation17 + $0x410] sm:$0xff]
    %v5127 = vld [vmem:[#allocation17 + $0x418] sm:$0xff]
    %v5128 = vld [vmem:[#allocation17 + $0x420] sm:$0xff]
    %v5129 = vld [vmem:[#allocation17 + $0x428] sm:$0xff]
    %v5130 = vld [vmem:[#allocation17 + $0x430] sm:$0xff]
    %v5131 = vld [vmem:[#allocation17 + $0x438] sm:$0xff]
    %v5132 = vld [vmem:[#allocation17 + $0x440] sm:$0xff]
    %v5133 = vld [vmem:[#allocation17 + $0x448] sm:$0xff]
    %v5134 = vld [vmem:[#allocation17 + $0x450] sm:$0xff]
    %v5135 = vld [vmem:[#allocation17 + $0x458] sm:$0xff]
    %v5136 = vld [vmem:[#allocation17 + $0x460] sm:$0xff]
    %v5137 = vld [vmem:[#allocation17 + $0x468] sm:$0xff]
    %v5138 = vld [vmem:[#allocation17 + $0x470] sm:$0xff]
    %v5139 = vld [vmem:[#allocation17 + $0x478] sm:$0xff]
    %v5140 = vld [vmem:[#allocation17 + $0x480] sm:$0xff]
    %v5141 = vld [vmem:[#allocation17 + $0x488] sm:$0xff]
    %v5142 = vld [vmem:[#allocation17 + $0x490] sm:$0xff]
    %v5143 = vld [vmem:[#allocation17 + $0x498] sm:$0xff]
    %v5144 = vld [vmem:[#allocation17 + $0x4a0] sm:$0xff]
    %v5145 = vld [vmem:[#allocation17 + $0x4a8] sm:$0xff]
    %v5146 = vld [vmem:[#allocation17 + $0x4b0] sm:$0xff]
    %v5147 = vld [vmem:[#allocation17 + $0x4b8] sm:$0xff]
    %v5148 = vld [vmem:[#allocation17 + $0x4c0] sm:$0xff]
    %v5149 = vld [vmem:[#allocation17 + $0x4c8] sm:$0xff]
    %v5150 = vld [vmem:[#allocation17 + $0x4d0] sm:$0xff]
    %v5151 = vld [vmem:[#allocation17 + $0x4d8] sm:$0xff]
    %v5152 = vld [vmem:[#allocation17 + $0x4e0] sm:$0xff]
    %v5153 = vld [vmem:[#allocation17 + $0x4e8] sm:$0xff]
    %v5154 = vld [vmem:[#allocation17 + $0x4f0] sm:$0xff]
    %v5155 = vld [vmem:[#allocation17 + $0x4f8] sm:$0xff]
    %v5156 = vld [vmem:[#allocation17 + $0x500] sm:$0xff]
    %v5157 = vld [vmem:[#allocation17 + $0x508] sm:$0xff]
    %v5158 = vld [vmem:[#allocation17 + $0x510] sm:$0xff]
    %v5159 = vld [vmem:[#allocation17 + $0x518] sm:$0xff]
    %v5160 = vld [vmem:[#allocation17 + $0x520] sm:$0xff]
    %v5161 = vld [vmem:[#allocation17 + $0x528] sm:$0xff]
    %v5162 = vld [vmem:[#allocation17 + $0x530] sm:$0xff]
    %v5163 = vld [vmem:[#allocation17 + $0x538] sm:$0xff]
    %v5164 = vld [vmem:[#allocation17 + $0x540] sm:$0xff]
    %v5165 = vld [vmem:[#allocation17 + $0x548] sm:$0xff]
    %v5166 = vld [vmem:[#allocation17 + $0x550] sm:$0xff]
    %v5167 = vld [vmem:[#allocation17 + $0x558] sm:$0xff]
    %v5168 = vld [vmem:[#allocation17 + $0x560] sm:$0xff]
    %v5169 = vld [vmem:[#allocation17 + $0x568] sm:$0xff]
    %v5170 = vld [vmem:[#allocation17 + $0x570] sm:$0xff]
    %v5171 = vld [vmem:[#allocation17 + $0x578] sm:$0xff]
    %v5172 = vld [vmem:[#allocation17 + $0x580] sm:$0xff]
    %v5173 = vld [vmem:[#allocation17 + $0x588] sm:$0xff]
    %v5174 = vld [vmem:[#allocation17 + $0x590] sm:$0xff]
    %v5175 = vld [vmem:[#allocation17 + $0x598] sm:$0xff]
    %v5176 = vld [vmem:[#allocation17 + $0x5a0] sm:$0xff]
    %v5177 = vld [vmem:[#allocation17 + $0x5a8] sm:$0xff]
    %v5178 = vld [vmem:[#allocation17 + $0x5b0] sm:$0xff]
    %v5179 = vld [vmem:[#allocation17 + $0x5b8] sm:$0xff]
    %v5180 = vld [vmem:[#allocation17 + $0x5c0] sm:$0xff]
    %v5181 = vld [vmem:[#allocation17 + $0x5c8] sm:$0xff]
    %v5182 = vld [vmem:[#allocation17 + $0x5d0] sm:$0xff]
    %v5183 = vld [vmem:[#allocation17 + $0x5d8] sm:$0xff]
    %v5184 = vld [vmem:[#allocation17 + $0x5e0] sm:$0xff]
    %v5185 = vld [vmem:[#allocation17 + $0x5e8] sm:$0xff]
    %v5186 = vld [vmem:[#allocation17 + $0x5f0] sm:$0xff]
    %v5187 = vld [vmem:[#allocation17 + $0x5f8] sm:$0xff]
    %v5188 = vld [vmem:[#allocation17 + $0x600] sm:$0xff]
    %v5189 = vld [vmem:[#allocation17 + $0x608] sm:$0xff]
    %v5190 = vld [vmem:[#allocation17 + $0x610] sm:$0xff]
    %v5191 = vld [vmem:[#allocation17 + $0x618] sm:$0xff]
    %v5192 = vld [vmem:[#allocation17 + $0x620] sm:$0xff]
    %v5193 = vld [vmem:[#allocation17 + $0x628] sm:$0xff]
    %v5194 = vld [vmem:[#allocation17 + $0x630] sm:$0xff]
    %v5195 = vld [vmem:[#allocation17 + $0x638] sm:$0xff]
    %v5196 = vld [vmem:[#allocation17 + $0x640] sm:$0xff]
    %v5197 = vld [vmem:[#allocation17 + $0x648] sm:$0xff]
    %v5198 = vld [vmem:[#allocation17 + $0x650] sm:$0xff]
    %v5199 = vld [vmem:[#allocation17 + $0x658] sm:$0xff]
    %v5200 = vld [vmem:[#allocation17 + $0x660] sm:$0xff]
    %v5201 = vld [vmem:[#allocation17 + $0x668] sm:$0xff]
    %v5202 = vld [vmem:[#allocation17 + $0x670] sm:$0xff]
    %v5203 = vld [vmem:[#allocation17 + $0x678] sm:$0xff]
    %v5204 = vld [vmem:[#allocation17 + $0x680] sm:$0xff]
    %v5205 = vld [vmem:[#allocation17 + $0x688] sm:$0xff]
    %v5206 = vld [vmem:[#allocation17 + $0x690] sm:$0xff]
    %v5207 = vld [vmem:[#allocation17 + $0x698] sm:$0xff]
    %v5208 = vld [vmem:[#allocation17 + $0x6a0] sm:$0xff]
    %v5209 = vld [vmem:[#allocation17 + $0x6a8] sm:$0xff]
    %v5210 = vld [vmem:[#allocation17 + $0x6b0] sm:$0xff]
    %v5211 = vld [vmem:[#allocation17 + $0x6b8] sm:$0xff]
    %v5212 = vld [vmem:[#allocation17 + $0x6c0] sm:$0xff]
    %v5213 = vld [vmem:[#allocation17 + $0x6c8] sm:$0xff]
    %v5214 = vld [vmem:[#allocation17 + $0x6d0] sm:$0xff]
    %v5215 = vld [vmem:[#allocation17 + $0x6d8] sm:$0xff]
    %v5216 = vld [vmem:[#allocation17 + $0x6e0] sm:$0xff]
    %v5217 = vld [vmem:[#allocation17 + $0x6e8] sm:$0xff]
    %v5218 = vld [vmem:[#allocation17 + $0x6f0] sm:$0xff]
    %v5219 = vld [vmem:[#allocation17 + $0x6f8] sm:$0xff]
    %v5220 = vld [vmem:[#allocation17 + $0x700] sm:$0xff]
    %v5221 = vld [vmem:[#allocation17 + $0x708] sm:$0xff]
    %v5222 = vld [vmem:[#allocation17 + $0x710] sm:$0xff]
    %v5223 = vld [vmem:[#allocation17 + $0x718] sm:$0xff]
    %v5224 = vld [vmem:[#allocation17 + $0x720] sm:$0xff]
    %v5225 = vld [vmem:[#allocation17 + $0x728] sm:$0xff]
    %v5226 = vld [vmem:[#allocation17 + $0x730] sm:$0xff]
    %v5227 = vld [vmem:[#allocation17 + $0x738] sm:$0xff]
    %v5228 = vld [vmem:[#allocation17 + $0x740] sm:$0xff]
    %v5229 = vld [vmem:[#allocation17 + $0x748] sm:$0xff]
    %v5230 = vld [vmem:[#allocation17 + $0x750] sm:$0xff]
    %v5231 = vld [vmem:[#allocation17 + $0x758] sm:$0xff]
    %v5232 = vld [vmem:[#allocation17 + $0x760] sm:$0xff]
    %v5233 = vld [vmem:[#allocation17 + $0x768] sm:$0xff]
    %v5234 = vld [vmem:[#allocation17 + $0x770] sm:$0xff]
    %v5235 = vld [vmem:[#allocation17 + $0x778] sm:$0xff]
    %v5236 = vld [vmem:[#allocation17 + $0x780] sm:$0xff]
    %v5237 = vld [vmem:[#allocation17 + $0x788] sm:$0xff]
    %v5238 = vld [vmem:[#allocation17 + $0x790] sm:$0xff]
    %v5239 = vld [vmem:[#allocation17 + $0x798] sm:$0xff]
    %v5240 = vld [vmem:[#allocation17 + $0x7a0] sm:$0xff]
    %v5241 = vld [vmem:[#allocation17 + $0x7a8] sm:$0xff]
    %v5242 = vld [vmem:[#allocation17 + $0x7b0] sm:$0xff]
    %v5243 = vld [vmem:[#allocation17 + $0x7b8] sm:$0xff]
    %v5244 = vld [vmem:[#allocation17 + $0x7c0] sm:$0xff]
    %v5245 = vld [vmem:[#allocation17 + $0x7c8] sm:$0xff]
    %v5246 = vld [vmem:[#allocation17 + $0x7d0] sm:$0xff]
    %v5247 = vld [vmem:[#allocation17 + $0x7d8] sm:$0xff]
    %v5248 = vld [vmem:[#allocation17 + $0x7e0] sm:$0xff]
    %v5249 = vld [vmem:[#allocation17 + $0x7e8] sm:$0xff]
    %v5250 = vld [vmem:[#allocation17 + $0x7f0] sm:$0xff]
    %v5251 = vld [vmem:[#allocation17 + $0x7f8] sm:$0xff]
    %v5252 = vld [vmem:[#allocation17 + $0x800] sm:$0xff]
    %v5253 = vld [vmem:[#allocation17 + $0x808] sm:$0xff]
    %v5254 = vld [vmem:[#allocation17 + $0x810] sm:$0xff]
    %v5255 = vld [vmem:[#allocation17 + $0x818] sm:$0xff]
    %v5256 = vld [vmem:[#allocation17 + $0x820] sm:$0xff]
    %v5257 = vld [vmem:[#allocation17 + $0x828] sm:$0xff]
    %v5258 = vld [vmem:[#allocation17 + $0x830] sm:$0xff]
    %v5259 = vld [vmem:[#allocation17 + $0x838] sm:$0xff]
    %v5260 = vld [vmem:[#allocation17 + $0x840] sm:$0xff]
    %v5261 = vld [vmem:[#allocation17 + $0x848] sm:$0xff]
    %v5262 = vld [vmem:[#allocation17 + $0x850] sm:$0xff]
    %v5263 = vld [vmem:[#allocation17 + $0x858] sm:$0xff]
    %v5264 = vld [vmem:[#allocation17 + $0x860] sm:$0xff]
    %v5265 = vld [vmem:[#allocation17 + $0x868] sm:$0xff]
    %v5266 = vld [vmem:[#allocation17 + $0x870] sm:$0xff]
    %v5267 = vld [vmem:[#allocation17 + $0x878] sm:$0xff]
    %v5268 = vld [vmem:[#allocation17 + $0x880] sm:$0xff]
    %v5269 = vld [vmem:[#allocation17 + $0x888] sm:$0xff]
    %v5270 = vld [vmem:[#allocation17 + $0x890] sm:$0xff]
    %v5271 = vld [vmem:[#allocation17 + $0x898] sm:$0xff]
    %v5272 = vld [vmem:[#allocation17 + $0x8a0] sm:$0xff]
    %v5273 = vld [vmem:[#allocation17 + $0x8a8] sm:$0xff]
    %v5274 = vld [vmem:[#allocation17 + $0x8b0] sm:$0xff]
    %v5275 = vld [vmem:[#allocation17 + $0x8b8] sm:$0xff]
    %v5276 = vld [vmem:[#allocation17 + $0x8c0] sm:$0xff]
    %v5277 = vld [vmem:[#allocation17 + $0x8c8] sm:$0xff]
    %v5278 = vld [vmem:[#allocation17 + $0x8d0] sm:$0xff]
    %v5279 = vld [vmem:[#allocation17 + $0x8d8] sm:$0xff]
    %v5280 = vld [vmem:[#allocation17 + $0x8e0] sm:$0xff]
    %v5281 = vld [vmem:[#allocation17 + $0x8e8] sm:$0xff]
    %v5282 = vld [vmem:[#allocation17 + $0x8f0] sm:$0xff]
    %v5283 = vld [vmem:[#allocation17 + $0x8f8] sm:$0xff]
    %v5572 = vunpack.c.l.b16 %v4996
    %v5573 = vunpack.c.h.b16 %v4996
    %v5574 = vunpack.c.l.b16 %v4997
    %v5575 = vunpack.c.h.b16 %v4997
    %v5576 = vunpack.c.l.b16 %v4998
    %v5577 = vunpack.c.h.b16 %v4998
    %v5578 = vunpack.c.l.b16 %v4999
    %v5579 = vunpack.c.h.b16 %v4999
    %v5580 = vunpack.c.l.b16 %v5000
    %v5581 = vunpack.c.h.b16 %v5000
    %v5582 = vunpack.c.l.b16 %v5001
    %v5583 = vunpack.c.h.b16 %v5001
    %v5584 = vunpack.c.l.b16 %v5002
    %v5585 = vunpack.c.h.b16 %v5002
    %v5586 = vunpack.c.l.b16 %v5003
    %v5587 = vunpack.c.h.b16 %v5003
    %v5588 = vunpack.c.l.b16 %v5004
    %v5589 = vunpack.c.h.b16 %v5004
    %v5590 = vunpack.c.l.b16 %v5005
    %v5591 = vunpack.c.h.b16 %v5005
    %v5592 = vunpack.c.l.b16 %v5006
    %v5593 = vunpack.c.h.b16 %v5006
    %v5594 = vunpack.c.l.b16 %v5007
    %v5595 = vunpack.c.h.b16 %v5007
    %v5596 = vunpack.c.l.b16 %v5008
    %v5597 = vunpack.c.h.b16 %v5008
    %v5598 = vunpack.c.l.b16 %v5009
    %v5599 = vunpack.c.h.b16 %v5009
    %v5600 = vunpack.c.l.b16 %v5010
    %v5601 = vunpack.c.h.b16 %v5010
    %v5602 = vunpack.c.l.b16 %v5011
    %v5603 = vunpack.c.h.b16 %v5011
    %v5604 = vunpack.c.l.b16 %v5012
    %v5605 = vunpack.c.h.b16 %v5012
    %v5606 = vunpack.c.l.b16 %v5013
    %v5607 = vunpack.c.h.b16 %v5013
    %v5608 = vunpack.c.l.b16 %v5014
    %v5609 = vunpack.c.h.b16 %v5014
    %v5610 = vunpack.c.l.b16 %v5015
    %v5611 = vunpack.c.h.b16 %v5015
    %v5612 = vunpack.c.l.b16 %v5016
    %v5613 = vunpack.c.h.b16 %v5016
    %v5614 = vunpack.c.l.b16 %v5017
    %v5615 = vunpack.c.h.b16 %v5017
    %v5616 = vunpack.c.l.b16 %v5018
    %v5617 = vunpack.c.h.b16 %v5018
    %v5618 = vunpack.c.l.b16 %v5019
    %v5619 = vunpack.c.h.b16 %v5019
    %v5620 = vunpack.c.l.b16 %v5020
    %v5621 = vunpack.c.h.b16 %v5020
    %v5622 = vunpack.c.l.b16 %v5021
    %v5623 = vunpack.c.h.b16 %v5021
    %v5624 = vunpack.c.l.b16 %v5022
    %v5625 = vunpack.c.h.b16 %v5022
    %v5626 = vunpack.c.l.b16 %v5023
    %v5627 = vunpack.c.h.b16 %v5023
    %v5628 = vunpack.c.l.b16 %v5024
    %v5629 = vunpack.c.h.b16 %v5024
    %v5630 = vunpack.c.l.b16 %v5025
    %v5631 = vunpack.c.h.b16 %v5025
    %v5632 = vunpack.c.l.b16 %v5026
    %v5633 = vunpack.c.h.b16 %v5026
    %v5634 = vunpack.c.l.b16 %v5027
    %v5635 = vunpack.c.h.b16 %v5027
    %v5636 = vunpack.c.l.b16 %v5028
    %v5637 = vunpack.c.h.b16 %v5028
    %v5638 = vunpack.c.l.b16 %v5029
    %v5639 = vunpack.c.h.b16 %v5029
    %v5640 = vunpack.c.l.b16 %v5030
    %v5641 = vunpack.c.h.b16 %v5030
    %v5642 = vunpack.c.l.b16 %v5031
    %v5643 = vunpack.c.h.b16 %v5031
    %v5644 = vunpack.c.l.b16 %v5032
    %v5645 = vunpack.c.h.b16 %v5032
    %v5646 = vunpack.c.l.b16 %v5033
    %v5647 = vunpack.c.h.b16 %v5033
    %v5648 = vunpack.c.l.b16 %v5034
    %v5649 = vunpack.c.h.b16 %v5034
    %v5650 = vunpack.c.l.b16 %v5035
    %v5651 = vunpack.c.h.b16 %v5035
    %v5652 = vunpack.c.l.b16 %v5036
    %v5653 = vunpack.c.h.b16 %v5036
    %v5654 = vunpack.c.l.b16 %v5037
    %v5655 = vunpack.c.h.b16 %v5037
    %v5656 = vunpack.c.l.b16 %v5038
    %v5657 = vunpack.c.h.b16 %v5038
    %v5658 = vunpack.c.l.b16 %v5039
    %v5659 = vunpack.c.h.b16 %v5039
    %v5660 = vunpack.c.l.b16 %v5040
    %v5661 = vunpack.c.h.b16 %v5040
    %v5662 = vunpack.c.l.b16 %v5041
    %v5663 = vunpack.c.h.b16 %v5041
    %v5664 = vunpack.c.l.b16 %v5042
    %v5665 = vunpack.c.h.b16 %v5042
    %v5666 = vunpack.c.l.b16 %v5043
    %v5667 = vunpack.c.h.b16 %v5043
    %v5668 = vunpack.c.l.b16 %v5044
    %v5669 = vunpack.c.h.b16 %v5044
    %v5670 = vunpack.c.l.b16 %v5045
    %v5671 = vunpack.c.h.b16 %v5045
    %v5672 = vunpack.c.l.b16 %v5046
    %v5673 = vunpack.c.h.b16 %v5046
    %v5674 = vunpack.c.l.b16 %v5047
    %v5675 = vunpack.c.h.b16 %v5047
    %v5676 = vunpack.c.l.b16 %v5048
    %v5677 = vunpack.c.h.b16 %v5048
    %v5678 = vunpack.c.l.b16 %v5049
    %v5679 = vunpack.c.h.b16 %v5049
    %v5680 = vunpack.c.l.b16 %v5050
    %v5681 = vunpack.c.h.b16 %v5050
    %v5682 = vunpack.c.l.b16 %v5051
    %v5683 = vunpack.c.h.b16 %v5051
    %v5684 = vunpack.c.l.b16 %v5052
    %v5685 = vunpack.c.h.b16 %v5052
    %v5686 = vunpack.c.l.b16 %v5053
    %v5687 = vunpack.c.h.b16 %v5053
    %v5688 = vunpack.c.l.b16 %v5054
    %v5689 = vunpack.c.h.b16 %v5054
    %v5690 = vunpack.c.l.b16 %v5055
    %v5691 = vunpack.c.h.b16 %v5055
    %v5692 = vunpack.c.l.b16 %v5056
    %v5693 = vunpack.c.h.b16 %v5056
    %v5694 = vunpack.c.l.b16 %v5057
    %v5695 = vunpack.c.h.b16 %v5057
    %v5696 = vunpack.c.l.b16 %v5058
    %v5697 = vunpack.c.h.b16 %v5058
    %v5698 = vunpack.c.l.b16 %v5059
    %v5699 = vunpack.c.h.b16 %v5059
    %v5700 = vunpack.c.l.b16 %v5060
    %v5701 = vunpack.c.h.b16 %v5060
    %v5702 = vunpack.c.l.b16 %v5061
    %v5703 = vunpack.c.h.b16 %v5061
    %v5704 = vunpack.c.l.b16 %v5062
    %v5705 = vunpack.c.h.b16 %v5062
    %v5706 = vunpack.c.l.b16 %v5063
    %v5707 = vunpack.c.h.b16 %v5063
    %v5708 = vunpack.c.l.b16 %v5064
    %v5709 = vunpack.c.h.b16 %v5064
    %v5710 = vunpack.c.l.b16 %v5065
    %v5711 = vunpack.c.h.b16 %v5065
    %v5712 = vunpack.c.l.b16 %v5066
    %v5713 = vunpack.c.h.b16 %v5066
    %v5714 = vunpack.c.l.b16 %v5067
    %v5715 = vunpack.c.h.b16 %v5067
    %v5716 = vunpack.c.l.b16 %v5068
    %v5717 = vunpack.c.h.b16 %v5068
    %v5718 = vunpack.c.l.b16 %v5069
    %v5719 = vunpack.c.h.b16 %v5069
    %v5720 = vunpack.c.l.b16 %v5070
    %v5721 = vunpack.c.h.b16 %v5070
    %v5722 = vunpack.c.l.b16 %v5071
    %v5723 = vunpack.c.h.b16 %v5071
    %v5724 = vunpack.c.l.b16 %v5072
    %v5725 = vunpack.c.h.b16 %v5072
    %v5726 = vunpack.c.l.b16 %v5073
    %v5727 = vunpack.c.h.b16 %v5073
    %v5728 = vunpack.c.l.b16 %v5074
    %v5729 = vunpack.c.h.b16 %v5074
    %v5730 = vunpack.c.l.b16 %v5075
    %v5731 = vunpack.c.h.b16 %v5075
    %v5732 = vunpack.c.l.b16 %v5076
    %v5733 = vunpack.c.h.b16 %v5076
    %v5734 = vunpack.c.l.b16 %v5077
    %v5735 = vunpack.c.h.b16 %v5077
    %v5736 = vunpack.c.l.b16 %v5078
    %v5737 = vunpack.c.h.b16 %v5078
    %v5738 = vunpack.c.l.b16 %v5079
    %v5739 = vunpack.c.h.b16 %v5079
    %v5740 = vunpack.c.l.b16 %v5080
    %v5741 = vunpack.c.h.b16 %v5080
    %v5742 = vunpack.c.l.b16 %v5081
    %v5743 = vunpack.c.h.b16 %v5081
    %v5744 = vunpack.c.l.b16 %v5082
    %v5745 = vunpack.c.h.b16 %v5082
    %v5746 = vunpack.c.l.b16 %v5083
    %v5747 = vunpack.c.h.b16 %v5083
    %v5748 = vunpack.c.l.b16 %v5084
    %v5749 = vunpack.c.h.b16 %v5084
    %v5750 = vunpack.c.l.b16 %v5085
    %v5751 = vunpack.c.h.b16 %v5085
    %v5752 = vunpack.c.l.b16 %v5086
    %v5753 = vunpack.c.h.b16 %v5086
    %v5754 = vunpack.c.l.b16 %v5087
    %v5755 = vunpack.c.h.b16 %v5087
    %v5756 = vunpack.c.l.b16 %v5088
    %v5757 = vunpack.c.h.b16 %v5088
    %v5758 = vunpack.c.l.b16 %v5089
    %v5759 = vunpack.c.h.b16 %v5089
    %v5760 = vunpack.c.l.b16 %v5090
    %v5761 = vunpack.c.h.b16 %v5090
    %v5762 = vunpack.c.l.b16 %v5091
    %v5763 = vunpack.c.h.b16 %v5091
    %v5764 = vunpack.c.l.b16 %v5092
    %v5765 = vunpack.c.h.b16 %v5092
    %v5766 = vunpack.c.l.b16 %v5093
    %v5767 = vunpack.c.h.b16 %v5093
    %v5768 = vunpack.c.l.b16 %v5094
    %v5769 = vunpack.c.h.b16 %v5094
    %v5770 = vunpack.c.l.b16 %v5095
    %v5771 = vunpack.c.h.b16 %v5095
    %v5772 = vunpack.c.l.b16 %v5096
    %v5773 = vunpack.c.h.b16 %v5096
    %v5774 = vunpack.c.l.b16 %v5097
    %v5775 = vunpack.c.h.b16 %v5097
    %v5776 = vunpack.c.l.b16 %v5098
    %v5777 = vunpack.c.h.b16 %v5098
    %v5778 = vunpack.c.l.b16 %v5099
    %v5779 = vunpack.c.h.b16 %v5099
    %v5780 = vunpack.c.l.b16 %v5100
    %v5781 = vunpack.c.h.b16 %v5100
    %v5782 = vunpack.c.l.b16 %v5101
    %v5783 = vunpack.c.h.b16 %v5101
    %v5784 = vunpack.c.l.b16 %v5102
    %v5785 = vunpack.c.h.b16 %v5102
    %v5786 = vunpack.c.l.b16 %v5103
    %v5787 = vunpack.c.h.b16 %v5103
    %v5788 = vunpack.c.l.b16 %v5104
    %v5789 = vunpack.c.h.b16 %v5104
    %v5790 = vunpack.c.l.b16 %v5105
    %v5791 = vunpack.c.h.b16 %v5105
    %v5792 = vunpack.c.l.b16 %v5106
    %v5793 = vunpack.c.h.b16 %v5106
    %v5794 = vunpack.c.l.b16 %v5107
    %v5795 = vunpack.c.h.b16 %v5107
    %v5796 = vunpack.c.l.b16 %v5108
    %v5797 = vunpack.c.h.b16 %v5108
    %v5798 = vunpack.c.l.b16 %v5109
    %v5799 = vunpack.c.h.b16 %v5109
    %v5800 = vunpack.c.l.b16 %v5110
    %v5801 = vunpack.c.h.b16 %v5110
    %v5802 = vunpack.c.l.b16 %v5111
    %v5803 = vunpack.c.h.b16 %v5111
    %v5804 = vunpack.c.l.b16 %v5112
    %v5805 = vunpack.c.h.b16 %v5112
    %v5806 = vunpack.c.l.b16 %v5113
    %v5807 = vunpack.c.h.b16 %v5113
    %v5808 = vunpack.c.l.b16 %v5114
    %v5809 = vunpack.c.h.b16 %v5114
    %v5810 = vunpack.c.l.b16 %v5115
    %v5811 = vunpack.c.h.b16 %v5115
    %v5812 = vunpack.c.l.b16 %v5116
    %v5813 = vunpack.c.h.b16 %v5116
    %v5814 = vunpack.c.l.b16 %v5117
    %v5815 = vunpack.c.h.b16 %v5117
    %v5816 = vunpack.c.l.b16 %v5118
    %v5817 = vunpack.c.h.b16 %v5118
    %v5818 = vunpack.c.l.b16 %v5119
    %v5819 = vunpack.c.h.b16 %v5119
    %v5820 = vunpack.c.l.b16 %v5120
    %v5821 = vunpack.c.h.b16 %v5120
    %v5822 = vunpack.c.l.b16 %v5121
    %v5823 = vunpack.c.h.b16 %v5121
    %v5824 = vunpack.c.l.b16 %v5122
    %v5825 = vunpack.c.h.b16 %v5122
    %v5826 = vunpack.c.l.b16 %v5123
    %v5827 = vunpack.c.h.b16 %v5123
    %v5828 = vunpack.c.l.b16 %v5124
    %v5829 = vunpack.c.h.b16 %v5124
    %v5830 = vunpack.c.l.b16 %v5125
    %v5831 = vunpack.c.h.b16 %v5125
    %v5832 = vunpack.c.l.b16 %v5126
    %v5833 = vunpack.c.h.b16 %v5126
    %v5834 = vunpack.c.l.b16 %v5127
    %v5835 = vunpack.c.h.b16 %v5127
    %v5836 = vunpack.c.l.b16 %v5128
    %v5837 = vunpack.c.h.b16 %v5128
    %v5838 = vunpack.c.l.b16 %v5129
    %v5839 = vunpack.c.h.b16 %v5129
    %v5840 = vunpack.c.l.b16 %v5130
    %v5841 = vunpack.c.h.b16 %v5130
    %v5842 = vunpack.c.l.b16 %v5131
    %v5843 = vunpack.c.h.b16 %v5131
    %v5844 = vunpack.c.l.b16 %v5132
    %v5845 = vunpack.c.h.b16 %v5132
    %v5846 = vunpack.c.l.b16 %v5133
    %v5847 = vunpack.c.h.b16 %v5133
    %v5848 = vunpack.c.l.b16 %v5134
    %v5849 = vunpack.c.h.b16 %v5134
    %v5850 = vunpack.c.l.b16 %v5135
    %v5851 = vunpack.c.h.b16 %v5135
    %v5852 = vunpack.c.l.b16 %v5136
    %v5853 = vunpack.c.h.b16 %v5136
    %v5854 = vunpack.c.l.b16 %v5137
    %v5855 = vunpack.c.h.b16 %v5137
    %v5856 = vunpack.c.l.b16 %v5138
    %v5857 = vunpack.c.h.b16 %v5138
    %v5858 = vunpack.c.l.b16 %v5139
    %v5859 = vunpack.c.h.b16 %v5139
    %v5860 = vunpack.c.l.b16 %v5140
    %v5861 = vunpack.c.h.b16 %v5140
    %v5862 = vunpack.c.l.b16 %v5141
    %v5863 = vunpack.c.h.b16 %v5141
    %v5864 = vunpack.c.l.b16 %v5142
    %v5865 = vunpack.c.h.b16 %v5142
    %v5866 = vunpack.c.l.b16 %v5143
    %v5867 = vunpack.c.h.b16 %v5143
    %v5868 = vunpack.c.l.b16 %v5144
    %v5869 = vunpack.c.h.b16 %v5144
    %v5870 = vunpack.c.l.b16 %v5145
    %v5871 = vunpack.c.h.b16 %v5145
    %v5872 = vunpack.c.l.b16 %v5146
    %v5873 = vunpack.c.h.b16 %v5146
    %v5874 = vunpack.c.l.b16 %v5147
    %v5875 = vunpack.c.h.b16 %v5147
    %v5876 = vunpack.c.l.b16 %v5148
    %v5877 = vunpack.c.h.b16 %v5148
    %v5878 = vunpack.c.l.b16 %v5149
    %v5879 = vunpack.c.h.b16 %v5149
    %v5880 = vunpack.c.l.b16 %v5150
    %v5881 = vunpack.c.h.b16 %v5150
    %v5882 = vunpack.c.l.b16 %v5151
    %v5883 = vunpack.c.h.b16 %v5151
    %v5884 = vunpack.c.l.b16 %v5152
    %v5885 = vunpack.c.h.b16 %v5152
    %v5886 = vunpack.c.l.b16 %v5153
    %v5887 = vunpack.c.h.b16 %v5153
    %v5888 = vunpack.c.l.b16 %v5154
    %v5889 = vunpack.c.h.b16 %v5154
    %v5890 = vunpack.c.l.b16 %v5155
    %v5891 = vunpack.c.h.b16 %v5155
    %v5892 = vunpack.c.l.b16 %v5156
    %v5893 = vunpack.c.h.b16 %v5156
    %v5894 = vunpack.c.l.b16 %v5157
    %v5895 = vunpack.c.h.b16 %v5157
    %v5896 = vunpack.c.l.b16 %v5158
    %v5897 = vunpack.c.h.b16 %v5158
    %v5898 = vunpack.c.l.b16 %v5159
    %v5899 = vunpack.c.h.b16 %v5159
    %v5900 = vunpack.c.l.b16 %v5160
    %v5901 = vunpack.c.h.b16 %v5160
    %v5902 = vunpack.c.l.b16 %v5161
    %v5903 = vunpack.c.h.b16 %v5161
    %v5904 = vunpack.c.l.b16 %v5162
    %v5905 = vunpack.c.h.b16 %v5162
    %v5906 = vunpack.c.l.b16 %v5163
    %v5907 = vunpack.c.h.b16 %v5163
    %v5908 = vunpack.c.l.b16 %v5164
    %v5909 = vunpack.c.h.b16 %v5164
    %v5910 = vunpack.c.l.b16 %v5165
    %v5911 = vunpack.c.h.b16 %v5165
    %v5912 = vunpack.c.l.b16 %v5166
    %v5913 = vunpack.c.h.b16 %v5166
    %v5914 = vunpack.c.l.b16 %v5167
    %v5915 = vunpack.c.h.b16 %v5167
    %v5916 = vunpack.c.l.b16 %v5168
    %v5917 = vunpack.c.h.b16 %v5168
    %v5918 = vunpack.c.l.b16 %v5169
    %v5919 = vunpack.c.h.b16 %v5169
    %v5920 = vunpack.c.l.b16 %v5170
    %v5921 = vunpack.c.h.b16 %v5170
    %v5922 = vunpack.c.l.b16 %v5171
    %v5923 = vunpack.c.h.b16 %v5171
    %v5924 = vunpack.c.l.b16 %v5172
    %v5925 = vunpack.c.h.b16 %v5172
    %v5926 = vunpack.c.l.b16 %v5173
    %v5927 = vunpack.c.h.b16 %v5173
    %v5928 = vunpack.c.l.b16 %v5174
    %v5929 = vunpack.c.h.b16 %v5174
    %v5930 = vunpack.c.l.b16 %v5175
    %v5931 = vunpack.c.h.b16 %v5175
    %v5932 = vunpack.c.l.b16 %v5176
    %v5933 = vunpack.c.h.b16 %v5176
    %v5934 = vunpack.c.l.b16 %v5177
    %v5935 = vunpack.c.h.b16 %v5177
    %v5936 = vunpack.c.l.b16 %v5178
    %v5937 = vunpack.c.h.b16 %v5178
    %v5938 = vunpack.c.l.b16 %v5179
    %v5939 = vunpack.c.h.b16 %v5179
    %v5940 = vunpack.c.l.b16 %v5180
    %v5941 = vunpack.c.h.b16 %v5180
    %v5942 = vunpack.c.l.b16 %v5181
    %v5943 = vunpack.c.h.b16 %v5181
    %v5944 = vunpack.c.l.b16 %v5182
    %v5945 = vunpack.c.h.b16 %v5182
    %v5946 = vunpack.c.l.b16 %v5183
    %v5947 = vunpack.c.h.b16 %v5183
    %v5948 = vunpack.c.l.b16 %v5184
    %v5949 = vunpack.c.h.b16 %v5184
    %v5950 = vunpack.c.l.b16 %v5185
    %v5951 = vunpack.c.h.b16 %v5185
    %v5952 = vunpack.c.l.b16 %v5186
    %v5953 = vunpack.c.h.b16 %v5186
    %v5954 = vunpack.c.l.b16 %v5187
    %v5955 = vunpack.c.h.b16 %v5187
    %v5956 = vunpack.c.l.b16 %v5188
    %v5957 = vunpack.c.h.b16 %v5188
    %v5958 = vunpack.c.l.b16 %v5189
    %v5959 = vunpack.c.h.b16 %v5189
    %v5960 = vunpack.c.l.b16 %v5190
    %v5961 = vunpack.c.h.b16 %v5190
    %v5962 = vunpack.c.l.b16 %v5191
    %v5963 = vunpack.c.h.b16 %v5191
    %v5964 = vunpack.c.l.b16 %v5192
    %v5965 = vunpack.c.h.b16 %v5192
    %v5966 = vunpack.c.l.b16 %v5193
    %v5967 = vunpack.c.h.b16 %v5193
    %v5968 = vunpack.c.l.b16 %v5194
    %v5969 = vunpack.c.h.b16 %v5194
    %v5970 = vunpack.c.l.b16 %v5195
    %v5971 = vunpack.c.h.b16 %v5195
    %v5972 = vunpack.c.l.b16 %v5196
    %v5973 = vunpack.c.h.b16 %v5196
    %v5974 = vunpack.c.l.b16 %v5197
    %v5975 = vunpack.c.h.b16 %v5197
    %v5976 = vunpack.c.l.b16 %v5198
    %v5977 = vunpack.c.h.b16 %v5198
    %v5978 = vunpack.c.l.b16 %v5199
    %v5979 = vunpack.c.h.b16 %v5199
    %v5980 = vunpack.c.l.b16 %v5200
    %v5981 = vunpack.c.h.b16 %v5200
    %v5982 = vunpack.c.l.b16 %v5201
    %v5983 = vunpack.c.h.b16 %v5201
    %v5984 = vunpack.c.l.b16 %v5202
    %v5985 = vunpack.c.h.b16 %v5202
    %v5986 = vunpack.c.l.b16 %v5203
    %v5987 = vunpack.c.h.b16 %v5203
    %v5988 = vunpack.c.l.b16 %v5204
    %v5989 = vunpack.c.h.b16 %v5204
    %v5990 = vunpack.c.l.b16 %v5205
    %v5991 = vunpack.c.h.b16 %v5205
    %v5992 = vunpack.c.l.b16 %v5206
    %v5993 = vunpack.c.h.b16 %v5206
    %v5994 = vunpack.c.l.b16 %v5207
    %v5995 = vunpack.c.h.b16 %v5207
    %v5996 = vunpack.c.l.b16 %v5208
    %v5997 = vunpack.c.h.b16 %v5208
    %v5998 = vunpack.c.l.b16 %v5209
    %v5999 = vunpack.c.h.b16 %v5209
    %v6000 = vunpack.c.l.b16 %v5210
    %v6001 = vunpack.c.h.b16 %v5210
    %v6002 = vunpack.c.l.b16 %v5211
    %v6003 = vunpack.c.h.b16 %v5211
    %v6004 = vunpack.c.l.b16 %v5212
    %v6005 = vunpack.c.h.b16 %v5212
    %v6006 = vunpack.c.l.b16 %v5213
    %v6007 = vunpack.c.h.b16 %v5213
    %v6008 = vunpack.c.l.b16 %v5214
    %v6009 = vunpack.c.h.b16 %v5214
    %v6010 = vunpack.c.l.b16 %v5215
    %v6011 = vunpack.c.h.b16 %v5215
    %v6012 = vunpack.c.l.b16 %v5216
    %v6013 = vunpack.c.h.b16 %v5216
    %v6014 = vunpack.c.l.b16 %v5217
    %v6015 = vunpack.c.h.b16 %v5217
    %v6016 = vunpack.c.l.b16 %v5218
    %v6017 = vunpack.c.h.b16 %v5218
    %v6018 = vunpack.c.l.b16 %v5219
    %v6019 = vunpack.c.h.b16 %v5219
    %v6020 = vunpack.c.l.b16 %v5220
    %v6021 = vunpack.c.h.b16 %v5220
    %v6022 = vunpack.c.l.b16 %v5221
    %v6023 = vunpack.c.h.b16 %v5221
    %v6024 = vunpack.c.l.b16 %v5222
    %v6025 = vunpack.c.h.b16 %v5222
    %v6026 = vunpack.c.l.b16 %v5223
    %v6027 = vunpack.c.h.b16 %v5223
    %v6028 = vunpack.c.l.b16 %v5224
    %v6029 = vunpack.c.h.b16 %v5224
    %v6030 = vunpack.c.l.b16 %v5225
    %v6031 = vunpack.c.h.b16 %v5225
    %v6032 = vunpack.c.l.b16 %v5226
    %v6033 = vunpack.c.h.b16 %v5226
    %v6034 = vunpack.c.l.b16 %v5227
    %v6035 = vunpack.c.h.b16 %v5227
    %v6036 = vunpack.c.l.b16 %v5228
    %v6037 = vunpack.c.h.b16 %v5228
    %v6038 = vunpack.c.l.b16 %v5229
    %v6039 = vunpack.c.h.b16 %v5229
    %v6040 = vunpack.c.l.b16 %v5230
    %v6041 = vunpack.c.h.b16 %v5230
    %v6042 = vunpack.c.l.b16 %v5231
    %v6043 = vunpack.c.h.b16 %v5231
    %v6044 = vunpack.c.l.b16 %v5232
    %v6045 = vunpack.c.h.b16 %v5232
    %v6046 = vunpack.c.l.b16 %v5233
    %v6047 = vunpack.c.h.b16 %v5233
    %v6048 = vunpack.c.l.b16 %v5234
    %v6049 = vunpack.c.h.b16 %v5234
    %v6050 = vunpack.c.l.b16 %v5235
    %v6051 = vunpack.c.h.b16 %v5235
    %v6052 = vunpack.c.l.b16 %v5236
    %v6053 = vunpack.c.h.b16 %v5236
    %v6054 = vunpack.c.l.b16 %v5237
    %v6055 = vunpack.c.h.b16 %v5237
    %v6056 = vunpack.c.l.b16 %v5238
    %v6057 = vunpack.c.h.b16 %v5238
    %v6058 = vunpack.c.l.b16 %v5239
    %v6059 = vunpack.c.h.b16 %v5239
    %v6060 = vunpack.c.l.b16 %v5240
    %v6061 = vunpack.c.h.b16 %v5240
    %v6062 = vunpack.c.l.b16 %v5241
    %v6063 = vunpack.c.h.b16 %v5241
    %v6064 = vunpack.c.l.b16 %v5242
    %v6065 = vunpack.c.h.b16 %v5242
    %v6066 = vunpack.c.l.b16 %v5243
    %v6067 = vunpack.c.h.b16 %v5243
    %v6068 = vunpack.c.l.b16 %v5244
    %v6069 = vunpack.c.h.b16 %v5244
    %v6070 = vunpack.c.l.b16 %v5245
    %v6071 = vunpack.c.h.b16 %v5245
    %v6072 = vunpack.c.l.b16 %v5246
    %v6073 = vunpack.c.h.b16 %v5246
    %v6074 = vunpack.c.l.b16 %v5247
    %v6075 = vunpack.c.h.b16 %v5247
    %v6076 = vunpack.c.l.b16 %v5248
    %v6077 = vunpack.c.h.b16 %v5248
    %v6078 = vunpack.c.l.b16 %v5249
    %v6079 = vunpack.c.h.b16 %v5249
    %v6080 = vunpack.c.l.b16 %v5250
    %v6081 = vunpack.c.h.b16 %v5250
    %v6082 = vunpack.c.l.b16 %v5251
    %v6083 = vunpack.c.h.b16 %v5251
    %v6084 = vunpack.c.l.b16 %v5252
    %v6085 = vunpack.c.h.b16 %v5252
    %v6086 = vunpack.c.l.b16 %v5253
    %v6087 = vunpack.c.h.b16 %v5253
    %v6088 = vunpack.c.l.b16 %v5254
    %v6089 = vunpack.c.h.b16 %v5254
    %v6090 = vunpack.c.l.b16 %v5255
    %v6091 = vunpack.c.h.b16 %v5255
    %v6092 = vunpack.c.l.b16 %v5256
    %v6093 = vunpack.c.h.b16 %v5256
    %v6094 = vunpack.c.l.b16 %v5257
    %v6095 = vunpack.c.h.b16 %v5257
    %v6096 = vunpack.c.l.b16 %v5258
    %v6097 = vunpack.c.h.b16 %v5258
    %v6098 = vunpack.c.l.b16 %v5259
    %v6099 = vunpack.c.h.b16 %v5259
    %v6100 = vunpack.c.l.b16 %v5260
    %v6101 = vunpack.c.h.b16 %v5260
    %v6102 = vunpack.c.l.b16 %v5261
    %v6103 = vunpack.c.h.b16 %v5261
    %v6104 = vunpack.c.l.b16 %v5262
    %v6105 = vunpack.c.h.b16 %v5262
    %v6106 = vunpack.c.l.b16 %v5263
    %v6107 = vunpack.c.h.b16 %v5263
    %v6108 = vunpack.c.l.b16 %v5264
    %v6109 = vunpack.c.h.b16 %v5264
    %v6110 = vunpack.c.l.b16 %v5265
    %v6111 = vunpack.c.h.b16 %v5265
    %v6112 = vunpack.c.l.b16 %v5266
    %v6113 = vunpack.c.h.b16 %v5266
    %v6114 = vunpack.c.l.b16 %v5267
    %v6115 = vunpack.c.h.b16 %v5267
    %v6116 = vunpack.c.l.b16 %v5268
    %v6117 = vunpack.c.h.b16 %v5268
    %v6118 = vunpack.c.l.b16 %v5269
    %v6119 = vunpack.c.h.b16 %v5269
    %v6120 = vunpack.c.l.b16 %v5270
    %v6121 = vunpack.c.h.b16 %v5270
    %v6122 = vunpack.c.l.b16 %v5271
    %v6123 = vunpack.c.h.b16 %v5271
    %v6124 = vunpack.c.l.b16 %v5272
    %v6125 = vunpack.c.h.b16 %v5272
    %v6126 = vunpack.c.l.b16 %v5273
    %v6127 = vunpack.c.h.b16 %v5273
    %v6128 = vunpack.c.l.b16 %v5274
    %v6129 = vunpack.c.h.b16 %v5274
    %v6130 = vunpack.c.l.b16 %v5275
    %v6131 = vunpack.c.h.b16 %v5275
    %v6132 = vunpack.c.l.b16 %v5276
    %v6133 = vunpack.c.h.b16 %v5276
    %v6134 = vunpack.c.l.b16 %v5277
    %v6135 = vunpack.c.h.b16 %v5277
    %v6136 = vunpack.c.l.b16 %v5278
    %v6137 = vunpack.c.h.b16 %v5278
    %v6138 = vunpack.c.l.b16 %v5279
    %v6139 = vunpack.c.h.b16 %v5279
    %v6140 = vunpack.c.l.b16 %v5280
    %v6141 = vunpack.c.h.b16 %v5280
    %v6142 = vunpack.c.l.b16 %v5281
    %v6143 = vunpack.c.h.b16 %v5281
    %v6144 = vunpack.c.l.b16 %v5282
    %v6145 = vunpack.c.h.b16 %v5282
    %v6146 = vunpack.c.l.b16 %v5283
    %v6147 = vunpack.c.h.b16 %v5283
    %v6148 = vpack.c.b16 %v5578, %v5572
    %v6149 = vpack.c.b16 %v5579, %v5573
    %v6150 = vpack.c.b16 %v5580, %v5574
    %v6151 = vpack.c.b16 %v5581, %v5575
    %v6152 = vpack.c.b16 %v5582, %v5576
    %v6153 = vpack.c.b16 %v5583, %v5577
    %v6154 = vpack.c.b16 %v5590, %v5584
    %v6155 = vpack.c.b16 %v5591, %v5585
    %v6156 = vpack.c.b16 %v5592, %v5586
    %v6157 = vpack.c.b16 %v5593, %v5587
    %v6158 = vpack.c.b16 %v5594, %v5588
    %v6159 = vpack.c.b16 %v5595, %v5589
    %v6160 = vpack.c.b16 %v5602, %v5596
    %v6161 = vpack.c.b16 %v5603, %v5597
    %v6162 = vpack.c.b16 %v5604, %v5598
    %v6163 = vpack.c.b16 %v5605, %v5599
    %v6164 = vpack.c.b16 %v5606, %v5600
    %v6165 = vpack.c.b16 %v5607, %v5601
    %v6166 = vpack.c.b16 %v5614, %v5608
    %v6167 = vpack.c.b16 %v5615, %v5609
    %v6168 = vpack.c.b16 %v5616, %v5610
    %v6169 = vpack.c.b16 %v5617, %v5611
    %v6170 = vpack.c.b16 %v5618, %v5612
    %v6171 = vpack.c.b16 %v5619, %v5613
    %v6172 = vpack.c.b16 %v5626, %v5620
    %v6173 = vpack.c.b16 %v5627, %v5621
    %v6174 = vpack.c.b16 %v5628, %v5622
    %v6175 = vpack.c.b16 %v5629, %v5623
    %v6176 = vpack.c.b16 %v5630, %v5624
    %v6177 = vpack.c.b16 %v5631, %v5625
    %v6178 = vpack.c.b16 %v5638, %v5632
    %v6179 = vpack.c.b16 %v5639, %v5633
    %v6180 = vpack.c.b16 %v5640, %v5634
    %v6181 = vpack.c.b16 %v5641, %v5635
    %v6182 = vpack.c.b16 %v5642, %v5636
    %v6183 = vpack.c.b16 %v5643, %v5637
    %v6184 = vpack.c.b16 %v5650, %v5644
    %v6185 = vpack.c.b16 %v5651, %v5645
    %v6186 = vpack.c.b16 %v5652, %v5646
    %v6187 = vpack.c.b16 %v5653, %v5647
    %v6188 = vpack.c.b16 %v5654, %v5648
    %v6189 = vpack.c.b16 %v5655, %v5649
    %v6190 = vpack.c.b16 %v5662, %v5656
    %v6191 = vpack.c.b16 %v5663, %v5657
    %v6192 = vpack.c.b16 %v5664, %v5658
    %v6193 = vpack.c.b16 %v5665, %v5659
    %v6194 = vpack.c.b16 %v5666, %v5660
    %v6195 = vpack.c.b16 %v5667, %v5661
    %v6196 = vpack.c.b16 %v5674, %v5668
    %v6197 = vpack.c.b16 %v5675, %v5669
    %v6198 = vpack.c.b16 %v5676, %v5670
    %v6199 = vpack.c.b16 %v5677, %v5671
    %v6200 = vpack.c.b16 %v5678, %v5672
    %v6201 = vpack.c.b16 %v5679, %v5673
    %v6202 = vpack.c.b16 %v5686, %v5680
    %v6203 = vpack.c.b16 %v5687, %v5681
    %v6204 = vpack.c.b16 %v5688, %v5682
    %v6205 = vpack.c.b16 %v5689, %v5683
    %v6206 = vpack.c.b16 %v5690, %v5684
    %v6207 = vpack.c.b16 %v5691, %v5685
    %v6208 = vpack.c.b16 %v5698, %v5692
    %v6209 = vpack.c.b16 %v5699, %v5693
    %v6210 = vpack.c.b16 %v5700, %v5694
    %v6211 = vpack.c.b16 %v5701, %v5695
    %v6212 = vpack.c.b16 %v5702, %v5696
    %v6213 = vpack.c.b16 %v5703, %v5697
    %v6214 = vpack.c.b16 %v5710, %v5704
    %v6215 = vpack.c.b16 %v5711, %v5705
    %v6216 = vpack.c.b16 %v5712, %v5706
    %v6217 = vpack.c.b16 %v5713, %v5707
    %v6218 = vpack.c.b16 %v5714, %v5708
    %v6219 = vpack.c.b16 %v5715, %v5709
    %v6220 = vpack.c.b16 %v5722, %v5716
    %v6221 = vpack.c.b16 %v5723, %v5717
    %v6222 = vpack.c.b16 %v5724, %v5718
    %v6223 = vpack.c.b16 %v5725, %v5719
    %v6224 = vpack.c.b16 %v5726, %v5720
    %v6225 = vpack.c.b16 %v5727, %v5721
    %v6226 = vpack.c.b16 %v5734, %v5728
    %v6227 = vpack.c.b16 %v5735, %v5729
    %v6228 = vpack.c.b16 %v5736, %v5730
    %v6229 = vpack.c.b16 %v5737, %v5731
    %v6230 = vpack.c.b16 %v5738, %v5732
    %v6231 = vpack.c.b16 %v5739, %v5733
    %v6232 = vpack.c.b16 %v5746, %v5740
    %v6233 = vpack.c.b16 %v5747, %v5741
    %v6234 = vpack.c.b16 %v5748, %v5742
    %v6235 = vpack.c.b16 %v5749, %v5743
    %v6236 = vpack.c.b16 %v5750, %v5744
    %v6237 = vpack.c.b16 %v5751, %v5745
    %v6238 = vpack.c.b16 %v5758, %v5752
    %v6239 = vpack.c.b16 %v5759, %v5753
    %v6240 = vpack.c.b16 %v5760, %v5754
    %v6241 = vpack.c.b16 %v5761, %v5755
    %v6242 = vpack.c.b16 %v5762, %v5756
    %v6243 = vpack.c.b16 %v5763, %v5757
    %v6244 = vpack.c.b16 %v5770, %v5764
    %v6245 = vpack.c.b16 %v5771, %v5765
    %v6246 = vpack.c.b16 %v5772, %v5766
    %v6247 = vpack.c.b16 %v5773, %v5767
    %v6248 = vpack.c.b16 %v5774, %v5768
    %v6249 = vpack.c.b16 %v5775, %v5769
    %v6250 = vpack.c.b16 %v5782, %v5776
    %v6251 = vpack.c.b16 %v5783, %v5777
    %v6252 = vpack.c.b16 %v5784, %v5778
    %v6253 = vpack.c.b16 %v5785, %v5779
    %v6254 = vpack.c.b16 %v5786, %v5780
    %v6255 = vpack.c.b16 %v5787, %v5781
    %v6256 = vpack.c.b16 %v5794, %v5788
    %v6257 = vpack.c.b16 %v5795, %v5789
    %v6258 = vpack.c.b16 %v5796, %v5790
    %v6259 = vpack.c.b16 %v5797, %v5791
    %v6260 = vpack.c.b16 %v5798, %v5792
    %v6261 = vpack.c.b16 %v5799, %v5793
    %v6262 = vpack.c.b16 %v5806, %v5800
    %v6263 = vpack.c.b16 %v5807, %v5801
    %v6264 = vpack.c.b16 %v5808, %v5802
    %v6265 = vpack.c.b16 %v5809, %v5803
    %v6266 = vpack.c.b16 %v5810, %v5804
    %v6267 = vpack.c.b16 %v5811, %v5805
    %v6268 = vpack.c.b16 %v5818, %v5812
    %v6269 = vpack.c.b16 %v5819, %v5813
    %v6270 = vpack.c.b16 %v5820, %v5814
    %v6271 = vpack.c.b16 %v5821, %v5815
    %v6272 = vpack.c.b16 %v5822, %v5816
    %v6273 = vpack.c.b16 %v5823, %v5817
    %v6274 = vpack.c.b16 %v5830, %v5824
    %v6275 = vpack.c.b16 %v5831, %v5825
    %v6276 = vpack.c.b16 %v5832, %v5826
    %v6277 = vpack.c.b16 %v5833, %v5827
    %v6278 = vpack.c.b16 %v5834, %v5828
    %v6279 = vpack.c.b16 %v5835, %v5829
    %v6280 = vpack.c.b16 %v5842, %v5836
    %v6281 = vpack.c.b16 %v5843, %v5837
    %v6282 = vpack.c.b16 %v5844, %v5838
    %v6283 = vpack.c.b16 %v5845, %v5839
    %v6284 = vpack.c.b16 %v5846, %v5840
    %v6285 = vpack.c.b16 %v5847, %v5841
    %v6286 = vpack.c.b16 %v5854, %v5848
    %v6287 = vpack.c.b16 %v5855, %v5849
    %v6288 = vpack.c.b16 %v5856, %v5850
    %v6289 = vpack.c.b16 %v5857, %v5851
    %v6290 = vpack.c.b16 %v5858, %v5852
    %v6291 = vpack.c.b16 %v5859, %v5853
    %v6292 = vpack.c.b16 %v5866, %v5860
    %v6293 = vpack.c.b16 %v5867, %v5861
    %v6294 = vpack.c.b16 %v5868, %v5862
    %v6295 = vpack.c.b16 %v5869, %v5863
    %v6296 = vpack.c.b16 %v5870, %v5864
    %v6297 = vpack.c.b16 %v5871, %v5865
    %v6298 = vpack.c.b16 %v5878, %v5872
    %v6299 = vpack.c.b16 %v5879, %v5873
    %v6300 = vpack.c.b16 %v5880, %v5874
    %v6301 = vpack.c.b16 %v5881, %v5875
    %v6302 = vpack.c.b16 %v5882, %v5876
    %v6303 = vpack.c.b16 %v5883, %v5877
    %v6304 = vpack.c.b16 %v5890, %v5884
    %v6305 = vpack.c.b16 %v5891, %v5885
    %v6306 = vpack.c.b16 %v5892, %v5886
    %v6307 = vpack.c.b16 %v5893, %v5887
    %v6308 = vpack.c.b16 %v5894, %v5888
    %v6309 = vpack.c.b16 %v5895, %v5889
    %v6310 = vpack.c.b16 %v5902, %v5896
    %v6311 = vpack.c.b16 %v5903, %v5897
    %v6312 = vpack.c.b16 %v5904, %v5898
    %v6313 = vpack.c.b16 %v5905, %v5899
    %v6314 = vpack.c.b16 %v5906, %v5900
    %v6315 = vpack.c.b16 %v5907, %v5901
    %v6316 = vpack.c.b16 %v5914, %v5908
    %v6317 = vpack.c.b16 %v5915, %v5909
    %v6318 = vpack.c.b16 %v5916, %v5910
    %v6319 = vpack.c.b16 %v5917, %v5911
    %v6320 = vpack.c.b16 %v5918, %v5912
    %v6321 = vpack.c.b16 %v5919, %v5913
    %v6322 = vpack.c.b16 %v5926, %v5920
    %v6323 = vpack.c.b16 %v5927, %v5921
    %v6324 = vpack.c.b16 %v5928, %v5922
    %v6325 = vpack.c.b16 %v5929, %v5923
    %v6326 = vpack.c.b16 %v5930, %v5924
    %v6327 = vpack.c.b16 %v5931, %v5925
    %v6328 = vpack.c.b16 %v5938, %v5932
    %v6329 = vpack.c.b16 %v5939, %v5933
    %v6330 = vpack.c.b16 %v5940, %v5934
    %v6331 = vpack.c.b16 %v5941, %v5935
    %v6332 = vpack.c.b16 %v5942, %v5936
    %v6333 = vpack.c.b16 %v5943, %v5937
    %v6334 = vpack.c.b16 %v5950, %v5944
    %v6335 = vpack.c.b16 %v5951, %v5945
    %v6336 = vpack.c.b16 %v5952, %v5946
    %v6337 = vpack.c.b16 %v5953, %v5947
    %v6338 = vpack.c.b16 %v5954, %v5948
    %v6339 = vpack.c.b16 %v5955, %v5949
    %v6340 = vpack.c.b16 %v5962, %v5956
    %v6341 = vpack.c.b16 %v5963, %v5957
    %v6342 = vpack.c.b16 %v5964, %v5958
    %v6343 = vpack.c.b16 %v5965, %v5959
    %v6344 = vpack.c.b16 %v5966, %v5960
    %v6345 = vpack.c.b16 %v5967, %v5961
    %v6346 = vpack.c.b16 %v5974, %v5968
    %v6347 = vpack.c.b16 %v5975, %v5969
    %v6348 = vpack.c.b16 %v5976, %v5970
    %v6349 = vpack.c.b16 %v5977, %v5971
    %v6350 = vpack.c.b16 %v5978, %v5972
    %v6351 = vpack.c.b16 %v5979, %v5973
    %v6352 = vpack.c.b16 %v5986, %v5980
    %v6353 = vpack.c.b16 %v5987, %v5981
    %v6354 = vpack.c.b16 %v5988, %v5982
    %v6355 = vpack.c.b16 %v5989, %v5983
    %v6356 = vpack.c.b16 %v5990, %v5984
    %v6357 = vpack.c.b16 %v5991, %v5985
    %v6358 = vpack.c.b16 %v5998, %v5992
    %v6359 = vpack.c.b16 %v5999, %v5993
    %v6360 = vpack.c.b16 %v6000, %v5994
    %v6361 = vpack.c.b16 %v6001, %v5995
    %v6362 = vpack.c.b16 %v6002, %v5996
    %v6363 = vpack.c.b16 %v6003, %v5997
    %v6364 = vpack.c.b16 %v6010, %v6004
    %v6365 = vpack.c.b16 %v6011, %v6005
    %v6366 = vpack.c.b16 %v6012, %v6006
    %v6367 = vpack.c.b16 %v6013, %v6007
    %v6368 = vpack.c.b16 %v6014, %v6008
    %v6369 = vpack.c.b16 %v6015, %v6009
    %v6370 = vpack.c.b16 %v6022, %v6016
    %v6371 = vpack.c.b16 %v6023, %v6017
    %v6372 = vpack.c.b16 %v6024, %v6018
    %v6373 = vpack.c.b16 %v6025, %v6019
    %v6374 = vpack.c.b16 %v6026, %v6020
    %v6375 = vpack.c.b16 %v6027, %v6021
    %v6376 = vpack.c.b16 %v6034, %v6028
    %v6377 = vpack.c.b16 %v6035, %v6029
    %v6378 = vpack.c.b16 %v6036, %v6030
    %v6379 = vpack.c.b16 %v6037, %v6031
    %v6380 = vpack.c.b16 %v6038, %v6032
    %v6381 = vpack.c.b16 %v6039, %v6033
    %v6382 = vpack.c.b16 %v6046, %v6040
    %v6383 = vpack.c.b16 %v6047, %v6041
    %v6384 = vpack.c.b16 %v6048, %v6042
    %v6385 = vpack.c.b16 %v6049, %v6043
    %v6386 = vpack.c.b16 %v6050, %v6044
    %v6387 = vpack.c.b16 %v6051, %v6045
    %v6388 = vpack.c.b16 %v6058, %v6052
    %v6389 = vpack.c.b16 %v6059, %v6053
    %v6390 = vpack.c.b16 %v6060, %v6054
    %v6391 = vpack.c.b16 %v6061, %v6055
    %v6392 = vpack.c.b16 %v6062, %v6056
    %v6393 = vpack.c.b16 %v6063, %v6057
    %v6394 = vpack.c.b16 %v6070, %v6064
    %v6395 = vpack.c.b16 %v6071, %v6065
    %v6396 = vpack.c.b16 %v6072, %v6066
    %v6397 = vpack.c.b16 %v6073, %v6067
    %v6398 = vpack.c.b16 %v6074, %v6068
    %v6399 = vpack.c.b16 %v6075, %v6069
    %v6400 = vpack.c.b16 %v6082, %v6076
    %v6401 = vpack.c.b16 %v6083, %v6077
    %v6402 = vpack.c.b16 %v6084, %v6078
    %v6403 = vpack.c.b16 %v6085, %v6079
    %v6404 = vpack.c.b16 %v6086, %v6080
    %v6405 = vpack.c.b16 %v6087, %v6081
    %v6406 = vpack.c.b16 %v6094, %v6088
    %v6407 = vpack.c.b16 %v6095, %v6089
    %v6408 = vpack.c.b16 %v6096, %v6090
    %v6409 = vpack.c.b16 %v6097, %v6091
    %v6410 = vpack.c.b16 %v6098, %v6092
    %v6411 = vpack.c.b16 %v6099, %v6093
    %v6412 = vpack.c.b16 %v6106, %v6100
    %v6413 = vpack.c.b16 %v6107, %v6101
    %v6414 = vpack.c.b16 %v6108, %v6102
    %v6415 = vpack.c.b16 %v6109, %v6103
    %v6416 = vpack.c.b16 %v6110, %v6104
    %v6417 = vpack.c.b16 %v6111, %v6105
    %v6418 = vpack.c.b16 %v6118, %v6112
    %v6419 = vpack.c.b16 %v6119, %v6113
    %v6420 = vpack.c.b16 %v6120, %v6114
    %v6421 = vpack.c.b16 %v6121, %v6115
    %v6422 = vpack.c.b16 %v6122, %v6116
    %v6423 = vpack.c.b16 %v6123, %v6117
    %v6424 = vpack.c.b16 %v6130, %v6124
    %v6425 = vpack.c.b16 %v6131, %v6125
    %v6426 = vpack.c.b16 %v6132, %v6126
    %v6427 = vpack.c.b16 %v6133, %v6127
    %v6428 = vpack.c.b16 %v6134, %v6128
    %v6429 = vpack.c.b16 %v6135, %v6129
    %v6430 = vpack.c.b16 %v6142, %v6136
    %v6431 = vpack.c.b16 %v6143, %v6137
    %v6432 = vpack.c.b16 %v6144, %v6138
    %v6433 = vpack.c.b16 %v6145, %v6139
    %v6434 = vpack.c.b16 %v6146, %v6140
    %v6435 = vpack.c.b16 %v6147, %v6141
    %6724 = vmatprep.subr.bf16.mxu0 %v6149
    %6725 = vmatpush1.bf16.msra.mxu0 %v6148
    %6726 = vmatprep.subr.bf16.mxu0 %v6155
    %6727 = vmatpush1.bf16.msra.mxu0 %v6154
    %6728 = vmatprep.subr.bf16.mxu0 %v6161
    %6729 = vmatpush1.bf16.msra.mxu0 %v6160
    %6730 = vmatprep.subr.bf16.mxu0 %v6167
    %6731 = vmatpush1.bf16.msra.mxu0 %v6166
    %6732 = vmatprep.subr.bf16.mxu0 %v6173
    %6733 = vmatpush1.bf16.msra.mxu0 %v6172
    %6734 = vmatprep.subr.bf16.mxu0 %v6179
    %6735 = vmatpush1.bf16.msra.mxu0 %v6178
    %6736 = vmatprep.subr.bf16.mxu0 %v6185
    %6737 = vmatpush1.bf16.msra.mxu0 %v6184
    %6738 = vmatprep.subr.bf16.mxu0 %v6191
    %6739 = vmatpush1.bf16.msra.mxu0 %v6190
    %6740 = vmatprep.subr.bf16.mxu0 %v6197
    %6741 = vmatpush1.bf16.msra.mxu0 %v6196
    %6742 = vmatprep.subr.bf16.mxu0 %v6203
    %6743 = vmatpush1.bf16.msra.mxu0 %v6202
    %6744 = vmatprep.subr.bf16.mxu0 %v6209
    %6745 = vmatpush1.bf16.msra.mxu0 %v6208
    %6746 = vmatprep.subr.bf16.mxu0 %v6215
    %6747 = vmatpush1.bf16.msra.mxu0 %v6214
    %6748 = vmatprep.subr.bf16.mxu0 %v6221
    %6749 = vmatpush1.bf16.msra.mxu0 %v6220
    %6750 = vmatprep.subr.bf16.mxu0 %v6227
    %6751 = vmatpush1.bf16.msra.mxu0 %v6226
    %6752 = vmatprep.subr.bf16.mxu0 %v6233
    %6753 = vmatpush1.bf16.msra.mxu0 %v6232
    %6754 = vmatprep.subr.bf16.mxu0 %v6239
    %6755 = vmatpush1.bf16.msra.mxu0 %v6238
    %6756 = vmatprep.mubr.bf16.mxu0 %v4967
    %6757 = vmatmul.mubr.bf16.gmra.mrb[0].mxu0 %v4966
    %v6758 = vpop.f32.mrb[0].mxu0
    %v6759 = vadd.f32 0.0, %v6758
    %v6760 = vpop.f32.mrb[0].mxu0
    %v6761 = vadd.f32 0.0, %v6760
    %v6762 = vpop.f32.mrb[0].mxu0
    %v6763 = vpop.f32.mrb[0].mxu0
    %6764 = vdwg.mxu0
    %6765 = vmatprep.subr.bf16.mxu0 %v6245
    %6766 = vmatpush1.bf16.msra.mxu0 %v6244
    %6767 = vmatprep.subr.bf16.mxu0 %v6251
    %6768 = vmatpush1.bf16.msra.mxu0 %v6250
    %6769 = vmatprep.subr.bf16.mxu0 %v6257
    %6770 = vmatpush1.bf16.msra.mxu0 %v6256
    %6771 = vmatprep.subr.bf16.mxu0 %v6263
    %6772 = vmatpush1.bf16.msra.mxu0 %v6262
    %6773 = vmatprep.subr.bf16.mxu0 %v6269
    %6774 = vmatpush1.bf16.msra.mxu0 %v6268
    %6775 = vmatprep.subr.bf16.mxu0 %v6275
    %6776 = vmatpush1.bf16.msra.mxu0 %v6274
    %6777 = vmatprep.subr.bf16.mxu0 %v6281
    %6778 = vmatpush1.bf16.msra.mxu0 %v6280
    %6779 = vmatprep.subr.bf16.mxu0 %v6287
    %6780 = vmatpush1.bf16.msra.mxu0 %v6286
    %6781 = vmatprep.subr.bf16.mxu0 %v6293
    %6782 = vmatpush1.bf16.msra.mxu0 %v6292
    %6783 = vmatprep.subr.bf16.mxu0 %v6299
    %6784 = vmatpush1.bf16.msra.mxu0 %v6298
    %6785 = vmatprep.subr.bf16.mxu0 %v6305
    %6786 = vmatpush1.bf16.msra.mxu0 %v6304
    %6787 = vmatprep.subr.bf16.mxu0 %v6311
    %6788 = vmatpush1.bf16.msra.mxu0 %v6310
    %6789 = vmatprep.subr.bf16.mxu0 %v6317
    %6790 = vmatpush1.bf16.msra.mxu0 %v6316
    %6791 = vmatprep.subr.bf16.mxu0 %v6323
    %6792 = vmatpush1.bf16.msra.mxu0 %v6322
    %6793 = vmatprep.subr.bf16.mxu0 %v6329
    %6794 = vmatpush1.bf16.msra.mxu0 %v6328
    %6795 = vmatprep.subr.bf16.mxu0 %v6335
    %6796 = vmatpush1.bf16.msra.mxu0 %v6334
    %6797 = vmatprep.mubr.bf16.mxu0 %v4969
    %6798 = vmatmul.mubr.bf16.gmra.mrb[0].mxu0 %v4968
    %v6799 = vpop.f32.mrb[0].mxu0
    %v6800 = vadd.f32 %v6759, %v6799
    %v6801 = vpop.f32.mrb[0].mxu0
    %v6802 = vadd.f32 %v6761, %v6801
    %v6803 = vpop.f32.mrb[0].mxu0
    %v6804 = vpop.f32.mrb[0].mxu0
    %6805 = vdwg.mxu0
    %6806 = vmatprep.subr.bf16.mxu0 %v6341
    %6807 = vmatpush1.bf16.msra.mxu0 %v6340
    %6808 = vmatprep.subr.bf16.mxu0 %v6347
    %6809 = vmatpush1.bf16.msra.mxu0 %v6346
    %6810 = vmatprep.subr.bf16.mxu0 %v6353
    %6811 = vmatpush1.bf16.msra.mxu0 %v6352
    %6812 = vmatprep.subr.bf16.mxu0 %v6359
    %6813 = vmatpush1.bf16.msra.mxu0 %v6358
    %6814 = vmatprep.subr.bf16.mxu0 %v6365
    %6815 = vmatpush1.bf16.msra.mxu0 %v6364
    %6816 = vmatprep.subr.bf16.mxu0 %v6371
    %6817 = vmatpush1.bf16.msra.mxu0 %v6370
    %6818 = vmatprep.subr.bf16.mxu0 %v6377
    %6819 = vmatpush1.bf16.msra.mxu0 %v6376
    %6820 = vmatprep.subr.bf16.mxu0 %v6383
    %6821 = vmatpush1.bf16.msra.mxu0 %v6382
    %6822 = vmatprep.subr.bf16.mxu0 %v6389
    %6823 = vmatpush1.bf16.msra.mxu0 %v6388
    %6824 = vmatprep.subr.bf16.mxu0 %v6395
    %6825 = vmatpush1.bf16.msra.mxu0 %v6394
    %6826 = vmatprep.subr.bf16.mxu0 %v6401
    %6827 = vmatpush1.bf16.msra.mxu0 %v6400
    %6828 = vmatprep.subr.bf16.mxu0 %v6407
    %6829 = vmatpush1.bf16.msra.mxu0 %v6406
    %6830 = vmatprep.subr.bf16.mxu0 %v6413
    %6831 = vmatpush1.bf16.msra.mxu0 %v6412
    %6832 = vmatprep.subr.bf16.mxu0 %v6419
    %6833 = vmatpush1.bf16.msra.mxu0 %v6418
    %6834 = vmatprep.subr.bf16.mxu0 %v6425
    %6835 = vmatpush1.bf16.msra.mxu0 %v6424
    %6836 = vmatprep.subr.bf16.mxu0 %v6431
    %6837 = vmatpush1.bf16.msra.mxu0 %v6430
    %6838 = vmatprep.mubr.bf16.mxu0 %v4971
    %6839 = vmatmul.mubr.bf16.gmra.mrb[0].mxu0 %v4970
    %v6840 = vpop.f32.mrb[0].mxu0
    %v6841 = vadd.f32 %v6800, %v6840
    %v6842 = vpop.f32.mrb[0].mxu0
    %v6843 = vadd.f32 %v6802, %v6842
    %v6844 = vpop.f32.mrb[0].mxu0
    %v6845 = vpop.f32.mrb[0].mxu0
    %6846 = vdwg.mxu0
    %6847 = vmatprep.subr.bf16.mxu0 %v6151
    %6848 = vmatpush1.bf16.msra.mxu0 %v6150
    %6849 = vmatprep.subr.bf16.mxu0 %v6157
    %6850 = vmatpush1.bf16.msra.mxu0 %v6156
    %6851 = vmatprep.subr.bf16.mxu0 %v6163
    %6852 = vmatpush1.bf16.msra.mxu0 %v6162
    %6853 = vmatprep.subr.bf16.mxu0 %v6169
    %6854 = vmatpush1.bf16.msra.mxu0 %v6168
    %6855 = vmatprep.subr.bf16.mxu0 %v6175
    %6856 = vmatpush1.bf16.msra.mxu0 %v6174
    %6857 = vmatprep.subr.bf16.mxu0 %v6181
    %6858 = vmatpush1.bf16.msra.mxu0 %v6180
    %6859 = vmatprep.subr.bf16.mxu0 %v6187
    %6860 = vmatpush1.bf16.msra.mxu0 %v6186
    %6861 = vmatprep.subr.bf16.mxu0 %v6193
    %6862 = vmatpush1.bf16.msra.mxu0 %v6192
    %6863 = vmatprep.subr.bf16.mxu0 %v6199
    %6864 = vmatpush1.bf16.msra.mxu0 %v6198
    %6865 = vmatprep.subr.bf16.mxu0 %v6205
    %6866 = vmatpush1.bf16.msra.mxu0 %v6204
    %6867 = vmatprep.subr.bf16.mxu0 %v6211
    %6868 = vmatpush1.bf16.msra.mxu0 %v6210
    %6869 = vmatprep.subr.bf16.mxu0 %v6217
    %6870 = vmatpush1.bf16.msra.mxu0 %v6216
    %6871 = vmatprep.subr.bf16.mxu0 %v6223
    %6872 = vmatpush1.bf16.msra.mxu0 %v6222
    %6873 = vmatprep.subr.bf16.mxu0 %v6229
    %6874 = vmatpush1.bf16.msra.mxu0 %v6228
    %6875 = vmatprep.subr.bf16.mxu0 %v6235
    %6876 = vmatpush1.bf16.msra.mxu0 %v6234
    %6877 = vmatprep.subr.bf16.mxu0 %v6241
    %6878 = vmatpush1.bf16.msra.mxu0 %v6240
    %6879 = vmatprep.mubr.bf16.mxu0 %v4967
    %6880 = vmatmul.mubr.bf16.gmra.mrb[0].mxu0 %v4966
    %v6881 = vpop.f32.mrb[0].mxu0
    %v6882 = vadd.f32 0.0, %v6881
    %v6883 = vpop.f32.mrb[0].mxu0
    %v6884 = vadd.f32 0.0, %v6883
    %v6885 = vpop.f32.mrb[0].mxu0
    %v6886 = vpop.f32.mrb[0].mxu0
    %6887 = vdwg.mxu0
    %6888 = vmatprep.subr.bf16.mxu0 %v6247
    %6889 = vmatpush1.bf16.msra.mxu0 %v6246
    %6890 = vmatprep.subr.bf16.mxu0 %v6253
    %6891 = vmatpush1.bf16.msra.mxu0 %v6252
    %6892 = vmatprep.subr.bf16.mxu0 %v6259
    %6893 = vmatpush1.bf16.msra.mxu0 %v6258
    %6894 = vmatprep.subr.bf16.mxu0 %v6265
    %6895 = vmatpush1.bf16.msra.mxu0 %v6264
    %6896 = vmatprep.subr.bf16.mxu0 %v6271
    %6897 = vmatpush1.bf16.msra.mxu0 %v6270
    %6898 = vmatprep.subr.bf16.mxu0 %v6277
    %6899 = vmatpush1.bf16.msra.mxu0 %v6276
    %6900 = vmatprep.subr.bf16.mxu0 %v6283
    %6901 = vmatpush1.bf16.msra.mxu0 %v6282
    %6902 = vmatprep.subr.bf16.mxu0 %v6289
    %6903 = vmatpush1.bf16.msra.mxu0 %v6288
    %6904 = vmatprep.subr.bf16.mxu0 %v6295
    %6905 = vmatpush1.bf16.msra.mxu0 %v6294
    %6906 = vmatprep.subr.bf16.mxu0 %v6301
    %6907 = vmatpush1.bf16.msra.mxu0 %v6300
    %6908 = vmatprep.subr.bf16.mxu0 %v6307
    %6909 = vmatpush1.bf16.msra.mxu0 %v6306
    %6910 = vmatprep.subr.bf16.mxu0 %v6313
    %6911 = vmatpush1.bf16.msra.mxu0 %v6312
    %6912 = vmatprep.subr.bf16.mxu0 %v6319
    %6913 = vmatpush1.bf16.msra.mxu0 %v6318
    %6914 = vmatprep.subr.bf16.mxu0 %v6325
    %6915 = vmatpush1.bf16.msra.mxu0 %v6324
    %6916 = vmatprep.subr.bf16.mxu0 %v6331
    %6917 = vmatpush1.bf16.msra.mxu0 %v6330
    %6918 = vmatprep.subr.bf16.mxu0 %v6337
    %6919 = vmatpush1.bf16.msra.mxu0 %v6336
    %6920 = vmatprep.mubr.bf16.mxu0 %v4969
    %6921 = vmatmul.mubr.bf16.gmra.mrb[0].mxu0 %v4968
    %v6922 = vpop.f32.mrb[0].mxu0
    %v6923 = vadd.f32 %v6882, %v6922
    %v6924 = vpop.f32.mrb[0].mxu0
    %v6925 = vadd.f32 %v6884, %v6924
    %v6926 = vpop.f32.mrb[0].mxu0
    %v6927 = vpop.f32.mrb[0].mxu0
    %6928 = vdwg.mxu0
    %6929 = vmatprep.subr.bf16.mxu0 %v6343
    %6930 = vmatpush1.bf16.msra.mxu0 %v6342
    %6931 = vmatprep.subr.bf16.mxu0 %v6349
    %6932 = vmatpush1.bf16.msra.mxu0 %v6348
    %6933 = vmatprep.subr.bf16.mxu0 %v6355
    %6934 = vmatpush1.bf16.msra.mxu0 %v6354
    %6935 = vmatprep.subr.bf16.mxu0 %v6361
    %6936 = vmatpush1.bf16.msra.mxu0 %v6360
    %6937 = vmatprep.subr.bf16.mxu0 %v6367
    %6938 = vmatpush1.bf16.msra.mxu0 %v6366
    %6939 = vmatprep.subr.bf16.mxu0 %v6373
    %6940 = vmatpush1.bf16.msra.mxu0 %v6372
    %6941 = vmatprep.subr.bf16.mxu0 %v6379
    %6942 = vmatpush1.bf16.msra.mxu0 %v6378
    %6943 = vmatprep.subr.bf16.mxu0 %v6385
    %6944 = vmatpush1.bf16.msra.mxu0 %v6384
    %6945 = vmatprep.subr.bf16.mxu0 %v6391
    %6946 = vmatpush1.bf16.msra.mxu0 %v6390
    %6947 = vmatprep.subr.bf16.mxu0 %v6397
    %6948 = vmatpush1.bf16.msra.mxu0 %v6396
    %6949 = vmatprep.subr.bf16.mxu0 %v6403
    %6950 = vmatpush1.bf16.msra.mxu0 %v6402
    %6951 = vmatprep.subr.bf16.mxu0 %v6409
    %6952 = vmatpush1.bf16.msra.mxu0 %v6408
    %6953 = vmatprep.subr.bf16.mxu0 %v6415
    %6954 = vmatpush1.bf16.msra.mxu0 %v6414
    %6955 = vmatprep.subr.bf16.mxu0 %v6421
    %6956 = vmatpush1.bf16.msra.mxu0 %v6420
    %6957 = vmatprep.subr.bf16.mxu0 %v6427
    %6958 = vmatpush1.bf16.msra.mxu0 %v6426
    %6959 = vmatprep.subr.bf16.mxu0 %v6433
    %6960 = vmatpush1.bf16.msra.mxu0 %v6432
    %6961 = vmatprep.mubr.bf16.mxu0 %v4971
    %6962 = vmatmul.mubr.bf16.gmra.mrb[0].mxu0 %v4970
    %v6963 = vpop.f32.mrb[0].mxu0
    %v6964 = vadd.f32 %v6923, %v6963
    %v6965 = vpop.f32.mrb[0].mxu0
    %v6966 = vadd.f32 %v6925, %v6965
    %v6967 = vpop.f32.mrb[0].mxu0
    %v6968 = vpop.f32.mrb[0].mxu0
    %6969 = vdwg.mxu0
    %6970 = vmatprep.subr.bf16.mxu0 %v6153
    %6971 = vmatpush1.bf16.msra.mxu0 %v6152
    %6972 = vmatprep.subr.bf16.mxu0 %v6159
    %6973 = vmatpush1.bf16.msra.mxu0 %v6158
    %6974 = vmatprep.subr.bf16.mxu0 %v6165
    %6975 = vmatpush1.bf16.msra.mxu0 %v6164
    %6976 = vmatprep.subr.bf16.mxu0 %v6171
    %6977 = vmatpush1.bf16.msra.mxu0 %v6170
    %6978 = vmatprep.subr.bf16.mxu0 %v6177
    %6979 = vmatpush1.bf16.msra.mxu0 %v6176
    %6980 = vmatprep.subr.bf16.mxu0 %v6183
    %6981 = vmatpush1.bf16.msra.mxu0 %v6182
    %6982 = vmatprep.subr.bf16.mxu0 %v6189
    %6983 = vmatpush1.bf16.msra.mxu0 %v6188
    %6984 = vmatprep.subr.bf16.mxu0 %v6195
    %6985 = vmatpush1.bf16.msra.mxu0 %v6194
    %6986 = vmatprep.subr.bf16.mxu0 %v6201
    %6987 = vmatpush1.bf16.msra.mxu0 %v6200
    %6988 = vmatprep.subr.bf16.mxu0 %v6207
    %6989 = vmatpush1.bf16.msra.mxu0 %v6206
    %6990 = vmatprep.subr.bf16.mxu0 %v6213
    %6991 = vmatpush1.bf16.msra.mxu0 %v6212
    %6992 = vmatprep.subr.bf16.mxu0 %v6219
    %6993 = vmatpush1.bf16.msra.mxu0 %v6218
    %6994 = vmatprep.subr.bf16.mxu0 %v6225
    %6995 = vmatpush1.bf16.msra.mxu0 %v6224
    %6996 = vmatprep.subr.bf16.mxu0 %v6231
    %6997 = vmatpush1.bf16.msra.mxu0 %v6230
    %6998 = vmatprep.subr.bf16.mxu0 %v6237
    %6999 = vmatpush1.bf16.msra.mxu0 %v6236
    %7000 = vmatprep.subr.bf16.mxu0 %v6243
    %7001 = vmatpush1.bf16.msra.mxu0 %v6242
    %7002 = vmatprep.mubr.bf16.mxu0 %v4967
    %7003 = vmatmul.mubr.bf16.gmra.mrb[0].mxu0 %v4966
    %v7004 = vpop.f32.mrb[0].mxu0
    %v7005 = vadd.f32 0.0, %v7004
    %v7006 = vpop.f32.mrb[0].mxu0
    %v7007 = vadd.f32 0.0, %v7006
    %v7008 = vpop.f32.mrb[0].mxu0
    %v7009 = vpop.f32.mrb[0].mxu0
    %7010 = vdwg.mxu0
    %7011 = vmatprep.subr.bf16.mxu0 %v6249
    %7012 = vmatpush1.bf16.msra.mxu0 %v6248
    %7013 = vmatprep.subr.bf16.mxu0 %v6255
    %7014 = vmatpush1.bf16.msra.mxu0 %v6254
    %7015 = vmatprep.subr.bf16.mxu0 %v6261
    %7016 = vmatpush1.bf16.msra.mxu0 %v6260
    %7017 = vmatprep.subr.bf16.mxu0 %v6267
    %7018 = vmatpush1.bf16.msra.mxu0 %v6266
    %7019 = vmatprep.subr.bf16.mxu0 %v6273
    %7020 = vmatpush1.bf16.msra.mxu0 %v6272
    %7021 = vmatprep.subr.bf16.mxu0 %v6279
    %7022 = vmatpush1.bf16.msra.mxu0 %v6278
    %7023 = vmatprep.subr.bf16.mxu0 %v6285
    %7024 = vmatpush1.bf16.msra.mxu0 %v6284
    %7025 = vmatprep.subr.bf16.mxu0 %v6291
    %7026 = vmatpush1.bf16.msra.mxu0 %v6290
    %7027 = vmatprep.subr.bf16.mxu0 %v6297
    %7028 = vmatpush1.bf16.msra.mxu0 %v6296
    %7029 = vmatprep.subr.bf16.mxu0 %v6303
    %7030 = vmatpush1.bf16.msra.mxu0 %v6302
    %7031 = vmatprep.subr.bf16.mxu0 %v6309
    %7032 = vmatpush1.bf16.msra.mxu0 %v6308
    %7033 = vmatprep.subr.bf16.mxu0 %v6315
    %7034 = vmatpush1.bf16.msra.mxu0 %v6314
    %7035 = vmatprep.subr.bf16.mxu0 %v6321
    %7036 = vmatpush1.bf16.msra.mxu0 %v6320
    %7037 = vmatprep.subr.bf16.mxu0 %v6327
    %7038 = vmatpush1.bf16.msra.mxu0 %v6326
    %7039 = vmatprep.subr.bf16.mxu0 %v6333
    %7040 = vmatpush1.bf16.msra.mxu0 %v6332
    %7041 = vmatprep.subr.bf16.mxu0 %v6339
    %7042 = vmatpush1.bf16.msra.mxu0 %v6338
    %7043 = vmatprep.mubr.bf16.mxu0 %v4969
    %7044 = vmatmul.mubr.bf16.gmra.mrb[0].mxu0 %v4968
    %v7045 = vpop.f32.mrb[0].mxu0
    %v7046 = vadd.f32 %v7005, %v7045
    %v7047 = vpop.f32.mrb[0].mxu0
    %v7048 = vadd.f32 %v7007, %v7047
    %v7049 = vpop.f32.mrb[0].mxu0
    %v7050 = vpop.f32.mrb[0].mxu0
    %7051 = vdwg.mxu0
    %7052 = vmatprep.subr.bf16.mxu0 %v6345
    %7053 = vmatpush1.bf16.msra.mxu0 %v6344
    %7054 = vmatprep.subr.bf16.mxu0 %v6351
    %7055 = vmatpush1.bf16.msra.mxu0 %v6350
    %7056 = vmatprep.subr.bf16.mxu0 %v6357
    %7057 = vmatpush1.bf16.msra.mxu0 %v6356
    %7058 = vmatprep.subr.bf16.mxu0 %v6363
    %7059 = vmatpush1.bf16.msra.mxu0 %v6362
    %7060 = vmatprep.subr.bf16.mxu0 %v6369
    %7061 = vmatpush1.bf16.msra.mxu0 %v6368
    %7062 = vmatprep.subr.bf16.mxu0 %v6375
    %7063 = vmatpush1.bf16.msra.mxu0 %v6374
    %7064 = vmatprep.subr.bf16.mxu0 %v6381
    %7065 = vmatpush1.bf16.msra.mxu0 %v6380
    %7066 = vmatprep.subr.bf16.mxu0 %v6387
    %7067 = vmatpush1.bf16.msra.mxu0 %v6386
    %7068 = vmatprep.subr.bf16.mxu0 %v6393
    %7069 = vmatpush1.bf16.msra.mxu0 %v6392
    %7070 = vmatprep.subr.bf16.mxu0 %v6399
    %7071 = vmatpush1.bf16.msra.mxu0 %v6398
    %7072 = vmatprep.subr.bf16.mxu0 %v6405
    %7073 = vmatpush1.bf16.msra.mxu0 %v6404
    %7074 = vmatprep.subr.bf16.mxu0 %v6411
    %7075 = vmatpush1.bf16.msra.mxu0 %v6410
    %7076 = vmatprep.subr.bf16.mxu0 %v6417
    %7077 = vmatpush1.bf16.msra.mxu0 %v6416
    %7078 = vmatprep.subr.bf16.mxu0 %v6423
    %7079 = vmatpush1.bf16.msra.mxu0 %v6422
    %7080 = vmatprep.subr.bf16.mxu0 %v6429
    %7081 = vmatpush1.bf16.msra.mxu0 %v6428
    %7082 = vmatprep.subr.bf16.mxu0 %v6435
    %7083 = vmatpush1.bf16.msra.mxu0 %v6434
    %7084 = vmatprep.mubr.bf16.mxu0 %v4971
    %7085 = vmatmul.mubr.bf16.gmra.mrb[0].mxu0 %v4970
    %v7086 = vpop.f32.mrb[0].mxu0
    %v7087 = vadd.f32 %v7046, %v7086
    %v7088 = vpop.f32.mrb[0].mxu0
    %v7089 = vadd.f32 %v7048, %v7088
    %v7090 = vpop.f32.mrb[0].mxu0
    %v7091 = vpop.f32.mrb[0].mxu0
    %7092 = vdwg.mxu0
    %v7095 = vunpack.c.l.b16 %v368
    %v7096 = vunpack.c.l.b16 %v369
    %v7097 = vsel %vm822, %v7096, %v7095
    %v7098 = vpack.c.b16 %v7097, %v7097
    %v7123 = vunpack.c.l.b16 %v4972
    %v7124 = vunpack.c.h.b16 %v4972
    %v7125 = vunpack.c.l.b16 %v4973
    %v7126 = vunpack.c.h.b16 %v4973
    %v7127 = vunpack.c.l.b16 %v4974
    %v7128 = vunpack.c.h.b16 %v4974
    %v7129 = vunpack.c.l.b16 %v4975
    %v7130 = vunpack.c.h.b16 %v4975
    %v7131 = vunpack.c.l.b16 %v4976
    %v7132 = vunpack.c.h.b16 %v4976
    %v7133 = vunpack.c.l.b16 %v4977
    %v7134 = vunpack.c.h.b16 %v4977
    %v7135 = vunpack.c.l.b16 %v4978
    %v7136 = vunpack.c.h.b16 %v4978
    %v7137 = vunpack.c.l.b16 %v4979
    %v7138 = vunpack.c.h.b16 %v4979
    %v7139 = vunpack.c.l.b16 %v4980
    %v7140 = vunpack.c.h.b16 %v4980
    %v7141 = vunpack.c.l.b16 %v4981
    %v7142 = vunpack.c.h.b16 %v4981
    %v7143 = vunpack.c.l.b16 %v4982
    %v7144 = vunpack.c.h.b16 %v4982
    %v7145 = vunpack.c.l.b16 %v4983
    %v7146 = vunpack.c.h.b16 %v4983
    %v7147 = vunpack.c.l.b16 %v4984
    %v7148 = vunpack.c.h.b16 %v4984
    %v7149 = vunpack.c.l.b16 %v4985
    %v7150 = vunpack.c.h.b16 %v4985
    %v7151 = vunpack.c.l.b16 %v4986
    %v7152 = vunpack.c.h.b16 %v4986
    %v7153 = vunpack.c.l.b16 %v4987
    %v7154 = vunpack.c.h.b16 %v4987
    %v7155 = vunpack.c.l.b16 %v4988
    %v7156 = vunpack.c.h.b16 %v4988
    %v7157 = vunpack.c.l.b16 %v4989
    %v7158 = vunpack.c.h.b16 %v4989
    %v7159 = vunpack.c.l.b16 %v4990
    %v7160 = vunpack.c.h.b16 %v4990
    %v7161 = vunpack.c.l.b16 %v4991
    %v7162 = vunpack.c.h.b16 %v4991
    %v7163 = vunpack.c.l.b16 %v4992
    %v7164 = vunpack.c.h.b16 %v4992
    %v7165 = vunpack.c.l.b16 %v4993
    %v7166 = vunpack.c.h.b16 %v4993
    %v7167 = vunpack.c.l.b16 %v4994
    %v7168 = vunpack.c.h.b16 %v4994
    %v7169 = vunpack.c.l.b16 %v4995
    %v7170 = vunpack.c.h.b16 %v4995
    %v7171 = vpack.c.b16 %v7129, %v7123
    %v7172 = vpack.c.b16 %v7130, %v7124
    %v7173 = vpack.c.b16 %v7131, %v7125
    %v7174 = vpack.c.b16 %v7132, %v7126
    %v7175 = vpack.c.b16 %v7133, %v7127
    %v7176 = vpack.c.b16 %v7134, %v7128
    %v7177 = vpack.c.b16 %v7141, %v7135
    %v7178 = vpack.c.b16 %v7142, %v7136
    %v7179 = vpack.c.b16 %v7143, %v7137
    %v7180 = vpack.c.b16 %v7144, %v7138
    %v7181 = vpack.c.b16 %v7145, %v7139
    %v7182 = vpack.c.b16 %v7146, %v7140
    %v7183 = vpack.c.b16 %v7153, %v7147
    %v7184 = vpack.c.b16 %v7154, %v7148
    %v7185 = vpack.c.b16 %v7155, %v7149
    %v7186 = vpack.c.b16 %v7156, %v7150
    %v7187 = vpack.c.b16 %v7157, %v7151
    %v7188 = vpack.c.b16 %v7158, %v7152
    %v7189 = vpack.c.b16 %v7165, %v7159
    %v7190 = vpack.c.b16 %v7166, %v7160
    %v7191 = vpack.c.b16 %v7167, %v7161
    %v7192 = vpack.c.b16 %v7168, %v7162
    %v7193 = vpack.c.b16 %v7169, %v7163
    %v7194 = vpack.c.b16 %v7170, %v7164
    %v7220 = vsel %vm347, %v7098, 0
    %7222 = vmatprep.subr.bf16.mxu0 %v7172
    %7223 = vmatpush1.bf16.msra.mxu0 %v7171
    %7224 = vmatprep.subr.bf16.mxu0 %v7178
    %7225 = vmatpush1.bf16.msra.mxu0 %v7177
    %7226 = vmatprep.subr.bf16.mxu0 %v7184
    %7227 = vmatpush1.bf16.msra.mxu0 %v7183
    %7228 = vmatprep.subr.bf16.mxu0 %v7190
    %7229 = vmatpush1.bf16.msra.mxu0 %v7189
    %7230 = vmatprep.subr.bf16.mxu0 0
    %7231 = vmatpush1.bf16.msra.mxu0 0
    %7232 = vmatprep.subr.bf16.mxu0 0
    %7233 = vmatpush1.bf16.msra.mxu0 0
    %7234 = vmatprep.subr.bf16.mxu0 0
    %7235 = vmatpush1.bf16.msra.mxu0 0
    %7236 = vmatprep.subr.bf16.mxu0 0
    %7237 = vmatpush1.bf16.msra.mxu0 0
    %7238 = vmatprep.subr.bf16.mxu0 0
    %7239 = vmatpush1.bf16.msra.mxu0 0
    %7240 = vmatprep.subr.bf16.mxu0 0
    %7241 = vmatpush1.bf16.msra.mxu0 0
    %7242 = vmatprep.subr.bf16.mxu0 0
    %7243 = vmatpush1.bf16.msra.mxu0 0
    %7244 = vmatprep.subr.bf16.mxu0 0
    %7245 = vmatpush1.bf16.msra.mxu0 0
    %7246 = vmatprep.subr.bf16.mxu0 0
    %7247 = vmatpush1.bf16.msra.mxu0 0
    %7248 = vmatprep.subr.bf16.mxu0 0
    %7249 = vmatpush1.bf16.msra.mxu0 0
    %7250 = vmatprep.subr.bf16.mxu0 0
    %7251 = vmatpush1.bf16.msra.mxu0 0
    %7252 = vmatprep.subr.bf16.mxu0 0
    %7253 = vmatpush1.bf16.msra.mxu0 0
    %7254 = vmatprep.mubr.bf16.mxu0 0
    %7255 = vmatmul.mubr.bf16.gmra.mrb[0].mxu0 %v7220
    %v7256 = vpop.f32.mrb[0].mxu0
    %v7257 = vadd.f32 %v6841, %v7256
    %v7258 = vpop.f32.mrb[0].mxu0
    %v7259 = vadd.f32 %v6843, %v7258
    %v7260 = vpop.f32.mrb[0].mxu0
    %v7261 = vpop.f32.mrb[0].mxu0
    %7262 = vdwg.mxu0
    %7263 = vmatprep.subr.bf16.mxu0 %v7174
    %7264 = vmatpush1.bf16.msra.mxu0 %v7173
    %7265 = vmatprep.subr.bf16.mxu0 %v7180
    %7266 = vmatpush1.bf16.msra.mxu0 %v7179
    %7267 = vmatprep.subr.bf16.mxu0 %v7186
    %7268 = vmatpush1.bf16.msra.mxu0 %v7185
    %7269 = vmatprep.subr.bf16.mxu0 %v7192
    %7270 = vmatpush1.bf16.msra.mxu0 %v7191
    %7271 = vmatprep.subr.bf16.mxu0 0
    %7272 = vmatpush1.bf16.msra.mxu0 0
    %7273 = vmatprep.subr.bf16.mxu0 0
    %7274 = vmatpush1.bf16.msra.mxu0 0
    %7275 = vmatprep.subr.bf16.mxu0 0
    %7276 = vmatpush1.bf16.msra.mxu0 0
    %7277 = vmatprep.subr.bf16.mxu0 0
    %7278 = vmatpush1.bf16.msra.mxu0 0
    %7279 = vmatprep.subr.bf16.mxu0 0
    %7280 = vmatpush1.bf16.msra.mxu0 0
    %7281 = vmatprep.subr.bf16.mxu0 0
    %7282 = vmatpush1.bf16.msra.mxu0 0
    %7283 = vmatprep.subr.bf16.mxu0 0
    %7284 = vmatpush1.bf16.msra.mxu0 0
    %7285 = vmatprep.subr.bf16.mxu0 0
    %7286 = vmatpush1.bf16.msra.mxu0 0
    %7287 = vmatprep.subr.bf16.mxu0 0
    %7288 = vmatpush1.bf16.msra.mxu0 0
    %7289 = vmatprep.subr.bf16.mxu0 0
    %7290 = vmatpush1.bf16.msra.mxu0 0
    %7291 = vmatprep.subr.bf16.mxu0 0
    %7292 = vmatpush1.bf16.msra.mxu0 0
    %7293 = vmatprep.subr.bf16.mxu0 0
    %7294 = vmatpush1.bf16.msra.mxu0 0
    %7295 = vmatprep.mubr.bf16.mxu0 0
    %7296 = vmatmul.mubr.bf16.gmra.mrb[0].mxu0 %v7220
    %v7297 = vpop.f32.mrb[0].mxu0
    %v7298 = vadd.f32 %v6964, %v7297
    %v7299 = vpop.f32.mrb[0].mxu0
    %v7300 = vadd.f32 %v6966, %v7299
    %v7301 = vpop.f32.mrb[0].mxu0
    %v7302 = vpop.f32.mrb[0].mxu0
    %7303 = vdwg.mxu0
    %7304 = vmatprep.subr.bf16.mxu0 %v7176
    %7305 = vmatpush1.bf16.msra.mxu0 %v7175
    %7306 = vmatprep.subr.bf16.mxu0 %v7182
    %7307 = vmatpush1.bf16.msra.mxu0 %v7181
    %7308 = vmatprep.subr.bf16.mxu0 %v7188
    %7309 = vmatpush1.bf16.msra.mxu0 %v7187
    %7310 = vmatprep.subr.bf16.mxu0 %v7194
    %7311 = vmatpush1.bf16.msra.mxu0 %v7193
    %7312 = vmatprep.subr.bf16.mxu0 0
    %7313 = vmatpush1.bf16.msra.mxu0 0
    %7314 = vmatprep.subr.bf16.mxu0 0
    %7315 = vmatpush1.bf16.msra.mxu0 0
    %7316 = vmatprep.subr.bf16.mxu0 0
    %7317 = vmatpush1.bf16.msra.mxu0 0
    %7318 = vmatprep.subr.bf16.mxu0 0
    %7319 = vmatpush1.bf16.msra.mxu0 0
    %7320 = vmatprep.subr.bf16.mxu0 0
    %7321 = vmatpush1.bf16.msra.mxu0 0
    %7322 = vmatprep.subr.bf16.mxu0 0
    %7323 = vmatpush1.bf16.msra.mxu0 0
    %7324 = vmatprep.subr.bf16.mxu0 0
    %7325 = vmatpush1.bf16.msra.mxu0 0
    %7326 = vmatprep.subr.bf16.mxu0 0
    %7327 = vmatpush1.bf16.msra.mxu0 0
    %7328 = vmatprep.subr.bf16.mxu0 0
    %7329 = vmatpush1.bf16.msra.mxu0 0
    %7330 = vmatprep.subr.bf16.mxu0 0
    %7331 = vmatpush1.bf16.msra.mxu0 0
    %7332 = vmatprep.subr.bf16.mxu0 0
    %7333 = vmatpush1.bf16.msra.mxu0 0
    %7334 = vmatprep.subr.bf16.mxu0 0
    %7335 = vmatpush1.bf16.msra.mxu0 0
    %7336 = vmatprep.mubr.bf16.mxu0 0
    %7337 = vmatmul.mubr.bf16.gmra.mrb[0].mxu0 %v7220
    %v7338 = vpop.f32.mrb[0].mxu0
    %v7339 = vadd.f32 %v7087, %v7338
    %v7340 = vpop.f32.mrb[0].mxu0
    %v7341 = vadd.f32 %v7089, %v7340
    %v7342 = vpop.f32.mrb[0].mxu0
    %v7343 = vpop.f32.mrb[0].mxu0
    %7344 = vdwg.mxu0
    %v7345 = vld [vmem:[#allocation19] sm:$0xff]
    %v7346 = vld [vmem:[#allocation19 + $0x8] sm:$0xff]
    %v7347 = vld [vmem:[#allocation19 + $0x10] sm:$0xff]
    %v7348 = vld [vmem:[#allocation19 + $0x18] sm:$0xff]
    %v7349 = vld [vmem:[#allocation19 + $0x20] sm:$0xff]
    %v7350 = vld [vmem:[#allocation19 + $0x28] sm:$0xff]
    %v7351 = vld [vmem:[#allocation19 + $0x30] sm:$0xff]
    %v7352 = vld [vmem:[#allocation19 + $0x38] sm:$0xff]
    %v7353 = vld [vmem:[#allocation19 + $0x40] sm:$0xff]
    %v7354 = vld [vmem:[#allocation19 + $0x48] sm:$0xff]
    %v7355 = vld [vmem:[#allocation19 + $0x50] sm:$0xff]
    %v7356 = vld [vmem:[#allocation19 + $0x58] sm:$0xff]
    %v7357 = vld [vmem:[#allocation19 + $0x60] sm:$0xff]
    %v7358 = vld [vmem:[#allocation19 + $0x68] sm:$0xff]
    %v7359 = vld [vmem:[#allocation19 + $0x70] sm:$0xff]
    %v7360 = vld [vmem:[#allocation19 + $0x78] sm:$0xff]
    %v7361 = vld [vmem:[#allocation19 + $0x80] sm:$0xff]
    %v7362 = vld [vmem:[#allocation19 + $0x88] sm:$0xff]
    %v7363 = vld [vmem:[#allocation19 + $0x90] sm:$0xff]
    %v7364 = vld [vmem:[#allocation19 + $0x98] sm:$0xff]
    %v7365 = vld [vmem:[#allocation19 + $0xa0] sm:$0xff]
    %v7366 = vld [vmem:[#allocation19 + $0xa8] sm:$0xff]
    %v7367 = vld [vmem:[#allocation19 + $0xb0] sm:$0xff]
    %v7368 = vld [vmem:[#allocation19 + $0xb8] sm:$0xff]
    %v7369 = vld [vmem:[#allocation19 + $0xc0] sm:$0xff]
    %v7370 = vld [vmem:[#allocation19 + $0xc8] sm:$0xff]
    %v7371 = vld [vmem:[#allocation19 + $0xd0] sm:$0xff]
    %v7372 = vld [vmem:[#allocation19 + $0xd8] sm:$0xff]
    %v7373 = vld [vmem:[#allocation19 + $0xe0] sm:$0xff]
    %v7374 = vld [vmem:[#allocation19 + $0xe8] sm:$0xff]
    %v7375 = vld [vmem:[#allocation19 + $0xf0] sm:$0xff]
    %v7376 = vld [vmem:[#allocation19 + $0xf8] sm:$0xff]
    %v7377 = vld [vmem:[#allocation19 + $0x100] sm:$0xff]
    %v7378 = vld [vmem:[#allocation19 + $0x108] sm:$0xff]
    %v7379 = vld [vmem:[#allocation19 + $0x110] sm:$0xff]
    %v7380 = vld [vmem:[#allocation19 + $0x118] sm:$0xff]
    %v7381 = vld [vmem:[#allocation19 + $0x120] sm:$0xff]
    %v7382 = vld [vmem:[#allocation19 + $0x128] sm:$0xff]
    %v7383 = vld [vmem:[#allocation19 + $0x130] sm:$0xff]
    %v7384 = vld [vmem:[#allocation19 + $0x138] sm:$0xff]
    %v7385 = vld [vmem:[#allocation19 + $0x140] sm:$0xff]
    %v7386 = vld [vmem:[#allocation19 + $0x148] sm:$0xff]
    %v7387 = vld [vmem:[#allocation19 + $0x150] sm:$0xff]
    %v7388 = vld [vmem:[#allocation19 + $0x158] sm:$0xff]
    %v7389 = vld [vmem:[#allocation19 + $0x160] sm:$0xff]
    %v7390 = vld [vmem:[#allocation19 + $0x168] sm:$0xff]
    %v7391 = vld [vmem:[#allocation19 + $0x170] sm:$0xff]
    %v7392 = vld [vmem:[#allocation19 + $0x178] sm:$0xff]
    %v7393 = vld [vmem:[#allocation19 + $0x180] sm:$0xff]
    %v7394 = vld [vmem:[#allocation19 + $0x188] sm:$0xff]
    %v7395 = vld [vmem:[#allocation19 + $0x190] sm:$0xff]
    %v7396 = vld [vmem:[#allocation19 + $0x198] sm:$0xff]
    %v7397 = vld [vmem:[#allocation19 + $0x1a0] sm:$0xff]
    %v7398 = vld [vmem:[#allocation19 + $0x1a8] sm:$0xff]
    %v7399 = vld [vmem:[#allocation19 + $0x1b0] sm:$0xff]
    %v7400 = vld [vmem:[#allocation19 + $0x1b8] sm:$0xff]
    %v7401 = vld [vmem:[#allocation19 + $0x1c0] sm:$0xff]
    %v7402 = vld [vmem:[#allocation19 + $0x1c8] sm:$0xff]
    %v7403 = vld [vmem:[#allocation19 + $0x1d0] sm:$0xff]
    %v7404 = vld [vmem:[#allocation19 + $0x1d8] sm:$0xff]
    %v7405 = vld [vmem:[#allocation19 + $0x1e0] sm:$0xff]
    %v7406 = vld [vmem:[#allocation19 + $0x1e8] sm:$0xff]
    %v7407 = vld [vmem:[#allocation19 + $0x1f0] sm:$0xff]
    %v7408 = vld [vmem:[#allocation19 + $0x1f8] sm:$0xff]
    %v7409 = vld [vmem:[#allocation19 + $0x200] sm:$0xff]
    %v7410 = vld [vmem:[#allocation19 + $0x208] sm:$0xff]
    %v7411 = vld [vmem:[#allocation19 + $0x210] sm:$0xff]
    %v7412 = vld [vmem:[#allocation19 + $0x218] sm:$0xff]
    %v7413 = vld [vmem:[#allocation19 + $0x220] sm:$0xff]
    %v7414 = vld [vmem:[#allocation19 + $0x228] sm:$0xff]
    %v7415 = vld [vmem:[#allocation19 + $0x230] sm:$0xff]
    %v7416 = vld [vmem:[#allocation19 + $0x238] sm:$0xff]
    %v7417 = vld [vmem:[#allocation19 + $0x240] sm:$0xff]
    %v7418 = vld [vmem:[#allocation19 + $0x248] sm:$0xff]
    %v7419 = vld [vmem:[#allocation19 + $0x250] sm:$0xff]
    %v7420 = vld [vmem:[#allocation19 + $0x258] sm:$0xff]
    %v7421 = vld [vmem:[#allocation19 + $0x260] sm:$0xff]
    %v7422 = vld [vmem:[#allocation19 + $0x268] sm:$0xff]
    %v7423 = vld [vmem:[#allocation19 + $0x270] sm:$0xff]
    %v7424 = vld [vmem:[#allocation19 + $0x278] sm:$0xff]
    %v7425 = vld [vmem:[#allocation19 + $0x280] sm:$0xff]
    %v7426 = vld [vmem:[#allocation19 + $0x288] sm:$0xff]
    %v7427 = vld [vmem:[#allocation19 + $0x290] sm:$0xff]
    %v7428 = vld [vmem:[#allocation19 + $0x298] sm:$0xff]
    %v7429 = vld [vmem:[#allocation19 + $0x2a0] sm:$0xff]
    %v7430 = vld [vmem:[#allocation19 + $0x2a8] sm:$0xff]
    %v7431 = vld [vmem:[#allocation19 + $0x2b0] sm:$0xff]
    %v7432 = vld [vmem:[#allocation19 + $0x2b8] sm:$0xff]
    %v7433 = vld [vmem:[#allocation19 + $0x2c0] sm:$0xff]
    %v7434 = vld [vmem:[#allocation19 + $0x2c8] sm:$0xff]
    %v7435 = vld [vmem:[#allocation19 + $0x2d0] sm:$0xff]
    %v7436 = vld [vmem:[#allocation19 + $0x2d8] sm:$0xff]
    %v7437 = vld [vmem:[#allocation19 + $0x2e0] sm:$0xff]
    %v7438 = vld [vmem:[#allocation19 + $0x2e8] sm:$0xff]
    %v7439 = vld [vmem:[#allocation19 + $0x2f0] sm:$0xff]
    %v7440 = vld [vmem:[#allocation19 + $0x2f8] sm:$0xff]
    %v7441 = vld [vmem:[#allocation19 + $0x300] sm:$0xff]
    %v7442 = vld [vmem:[#allocation19 + $0x308] sm:$0xff]
    %v7443 = vld [vmem:[#allocation19 + $0x310] sm:$0xff]
    %v7444 = vld [vmem:[#allocation19 + $0x318] sm:$0xff]
    %v7445 = vld [vmem:[#allocation19 + $0x320] sm:$0xff]
    %v7446 = vld [vmem:[#allocation19 + $0x328] sm:$0xff]
    %v7447 = vld [vmem:[#allocation19 + $0x330] sm:$0xff]
    %v7448 = vld [vmem:[#allocation19 + $0x338] sm:$0xff]
    %v7449 = vld [vmem:[#allocation19 + $0x340] sm:$0xff]
    %v7450 = vld [vmem:[#allocation19 + $0x348] sm:$0xff]
    %v7451 = vld [vmem:[#allocation19 + $0x350] sm:$0xff]
    %v7452 = vld [vmem:[#allocation19 + $0x358] sm:$0xff]
    %v7453 = vld [vmem:[#allocation19 + $0x360] sm:$0xff]
    %v7454 = vld [vmem:[#allocation19 + $0x368] sm:$0xff]
    %v7455 = vld [vmem:[#allocation19 + $0x370] sm:$0xff]
    %v7456 = vld [vmem:[#allocation19 + $0x378] sm:$0xff]
    %v7457 = vld [vmem:[#allocation19 + $0x380] sm:$0xff]
    %v7458 = vld [vmem:[#allocation19 + $0x388] sm:$0xff]
    %v7459 = vld [vmem:[#allocation19 + $0x390] sm:$0xff]
    %v7460 = vld [vmem:[#allocation19 + $0x398] sm:$0xff]
    %v7461 = vld [vmem:[#allocation19 + $0x3a0] sm:$0xff]
    %v7462 = vld [vmem:[#allocation19 + $0x3a8] sm:$0xff]
    %v7463 = vld [vmem:[#allocation19 + $0x3b0] sm:$0xff]
    %v7464 = vld [vmem:[#allocation19 + $0x3b8] sm:$0xff]
    %v7465 = vld [vmem:[#allocation19 + $0x3c0] sm:$0xff]
    %v7466 = vld [vmem:[#allocation19 + $0x3c8] sm:$0xff]
    %v7467 = vld [vmem:[#allocation19 + $0x3d0] sm:$0xff]
    %v7468 = vld [vmem:[#allocation19 + $0x3d8] sm:$0xff]
    %v7469 = vld [vmem:[#allocation19 + $0x3e0] sm:$0xff]
    %v7470 = vld [vmem:[#allocation19 + $0x3e8] sm:$0xff]
    %v7471 = vld [vmem:[#allocation19 + $0x3f0] sm:$0xff]
    %v7472 = vld [vmem:[#allocation19 + $0x3f8] sm:$0xff]
    %v7473 = vld [vmem:[#allocation19 + $0x400] sm:$0xff]
    %v7474 = vld [vmem:[#allocation19 + $0x408] sm:$0xff]
    %v7475 = vld [vmem:[#allocation19 + $0x410] sm:$0xff]
    %v7476 = vld [vmem:[#allocation19 + $0x418] sm:$0xff]
    %v7477 = vld [vmem:[#allocation19 + $0x420] sm:$0xff]
    %v7478 = vld [vmem:[#allocation19 + $0x428] sm:$0xff]
    %v7479 = vld [vmem:[#allocation19 + $0x430] sm:$0xff]
    %v7480 = vld [vmem:[#allocation19 + $0x438] sm:$0xff]
    %v7481 = vld [vmem:[#allocation19 + $0x440] sm:$0xff]
    %v7482 = vld [vmem:[#allocation19 + $0x448] sm:$0xff]
    %v7483 = vld [vmem:[#allocation19 + $0x450] sm:$0xff]
    %v7484 = vld [vmem:[#allocation19 + $0x458] sm:$0xff]
    %v7485 = vld [vmem:[#allocation19 + $0x460] sm:$0xff]
    %v7486 = vld [vmem:[#allocation19 + $0x468] sm:$0xff]
    %v7487 = vld [vmem:[#allocation19 + $0x470] sm:$0xff]
    %v7488 = vld [vmem:[#allocation19 + $0x478] sm:$0xff]
    %v7489 = vld [vmem:[#allocation19 + $0x480] sm:$0xff]
    %v7490 = vld [vmem:[#allocation19 + $0x488] sm:$0xff]
    %v7491 = vld [vmem:[#allocation19 + $0x490] sm:$0xff]
    %v7492 = vld [vmem:[#allocation19 + $0x498] sm:$0xff]
    %v7493 = vld [vmem:[#allocation19 + $0x4a0] sm:$0xff]
    %v7494 = vld [vmem:[#allocation19 + $0x4a8] sm:$0xff]
    %v7495 = vld [vmem:[#allocation19 + $0x4b0] sm:$0xff]
    %v7496 = vld [vmem:[#allocation19 + $0x4b8] sm:$0xff]
    %v7497 = vld [vmem:[#allocation19 + $0x4c0] sm:$0xff]
    %v7498 = vld [vmem:[#allocation19 + $0x4c8] sm:$0xff]
    %v7499 = vld [vmem:[#allocation19 + $0x4d0] sm:$0xff]
    %v7500 = vld [vmem:[#allocation19 + $0x4d8] sm:$0xff]
    %v7501 = vld [vmem:[#allocation19 + $0x4e0] sm:$0xff]
    %v7502 = vld [vmem:[#allocation19 + $0x4e8] sm:$0xff]
    %v7503 = vld [vmem:[#allocation19 + $0x4f0] sm:$0xff]
    %v7504 = vld [vmem:[#allocation19 + $0x4f8] sm:$0xff]
    %v7505 = vld [vmem:[#allocation19 + $0x500] sm:$0xff]
    %v7506 = vld [vmem:[#allocation19 + $0x508] sm:$0xff]
    %v7507 = vld [vmem:[#allocation19 + $0x510] sm:$0xff]
    %v7508 = vld [vmem:[#allocation19 + $0x518] sm:$0xff]
    %v7509 = vld [vmem:[#allocation19 + $0x520] sm:$0xff]
    %v7510 = vld [vmem:[#allocation19 + $0x528] sm:$0xff]
    %v7511 = vld [vmem:[#allocation19 + $0x530] sm:$0xff]
    %v7512 = vld [vmem:[#allocation19 + $0x538] sm:$0xff]
    %v7513 = vld [vmem:[#allocation19 + $0x540] sm:$0xff]
    %v7514 = vld [vmem:[#allocation19 + $0x548] sm:$0xff]
    %v7515 = vld [vmem:[#allocation19 + $0x550] sm:$0xff]
    %v7516 = vld [vmem:[#allocation19 + $0x558] sm:$0xff]
    %v7517 = vld [vmem:[#allocation19 + $0x560] sm:$0xff]
    %v7518 = vld [vmem:[#allocation19 + $0x568] sm:$0xff]
    %v7519 = vld [vmem:[#allocation19 + $0x570] sm:$0xff]
    %v7520 = vld [vmem:[#allocation19 + $0x578] sm:$0xff]
    %v7521 = vld [vmem:[#allocation19 + $0x580] sm:$0xff]
    %v7522 = vld [vmem:[#allocation19 + $0x588] sm:$0xff]
    %v7523 = vld [vmem:[#allocation19 + $0x590] sm:$0xff]
    %v7524 = vld [vmem:[#allocation19 + $0x598] sm:$0xff]
    %v7525 = vld [vmem:[#allocation19 + $0x5a0] sm:$0xff]
    %v7526 = vld [vmem:[#allocation19 + $0x5a8] sm:$0xff]
    %v7527 = vld [vmem:[#allocation19 + $0x5b0] sm:$0xff]
    %v7528 = vld [vmem:[#allocation19 + $0x5b8] sm:$0xff]
    %v7529 = vld [vmem:[#allocation19 + $0x5c0] sm:$0xff]
    %v7530 = vld [vmem:[#allocation19 + $0x5c8] sm:$0xff]
    %v7531 = vld [vmem:[#allocation19 + $0x5d0] sm:$0xff]
    %v7532 = vld [vmem:[#allocation19 + $0x5d8] sm:$0xff]
    %v7533 = vld [vmem:[#allocation19 + $0x5e0] sm:$0xff]
    %v7534 = vld [vmem:[#allocation19 + $0x5e8] sm:$0xff]
    %v7535 = vld [vmem:[#allocation19 + $0x5f0] sm:$0xff]
    %v7536 = vld [vmem:[#allocation19 + $0x5f8] sm:$0xff]
    %v7537 = vld [vmem:[#allocation19 + $0x600] sm:$0xff]
    %v7538 = vld [vmem:[#allocation19 + $0x608] sm:$0xff]
    %v7539 = vld [vmem:[#allocation19 + $0x610] sm:$0xff]
    %v7540 = vld [vmem:[#allocation19 + $0x618] sm:$0xff]
    %v7541 = vld [vmem:[#allocation19 + $0x620] sm:$0xff]
    %v7542 = vld [vmem:[#allocation19 + $0x628] sm:$0xff]
    %v7543 = vld [vmem:[#allocation19 + $0x630] sm:$0xff]
    %v7544 = vld [vmem:[#allocation19 + $0x638] sm:$0xff]
    %v7545 = vld [vmem:[#allocation19 + $0x640] sm:$0xff]
    %v7546 = vld [vmem:[#allocation19 + $0x648] sm:$0xff]
    %v7547 = vld [vmem:[#allocation19 + $0x650] sm:$0xff]
    %v7548 = vld [vmem:[#allocation19 + $0x658] sm:$0xff]
    %v7549 = vld [vmem:[#allocation19 + $0x660] sm:$0xff]
    %v7550 = vld [vmem:[#allocation19 + $0x668] sm:$0xff]
    %v7551 = vld [vmem:[#allocation19 + $0x670] sm:$0xff]
    %v7552 = vld [vmem:[#allocation19 + $0x678] sm:$0xff]
    %v7553 = vld [vmem:[#allocation19 + $0x680] sm:$0xff]
    %v7554 = vld [vmem:[#allocation19 + $0x688] sm:$0xff]
    %v7555 = vld [vmem:[#allocation19 + $0x690] sm:$0xff]
    %v7556 = vld [vmem:[#allocation19 + $0x698] sm:$0xff]
    %v7557 = vld [vmem:[#allocation19 + $0x6a0] sm:$0xff]
    %v7558 = vld [vmem:[#allocation19 + $0x6a8] sm:$0xff]
    %v7559 = vld [vmem:[#allocation19 + $0x6b0] sm:$0xff]
    %v7560 = vld [vmem:[#allocation19 + $0x6b8] sm:$0xff]
    %v7561 = vld [vmem:[#allocation19 + $0x6c0] sm:$0xff]
    %v7562 = vld [vmem:[#allocation19 + $0x6c8] sm:$0xff]
    %v7563 = vld [vmem:[#allocation19 + $0x6d0] sm:$0xff]
    %v7564 = vld [vmem:[#allocation19 + $0x6d8] sm:$0xff]
    %v7565 = vld [vmem:[#allocation19 + $0x6e0] sm:$0xff]
    %v7566 = vld [vmem:[#allocation19 + $0x6e8] sm:$0xff]
    %v7567 = vld [vmem:[#allocation19 + $0x6f0] sm:$0xff]
    %v7568 = vld [vmem:[#allocation19 + $0x6f8] sm:$0xff]
    %v7569 = vld [vmem:[#allocation19 + $0x700] sm:$0xff]
    %v7570 = vld [vmem:[#allocation19 + $0x708] sm:$0xff]
    %v7571 = vld [vmem:[#allocation19 + $0x710] sm:$0xff]
    %v7572 = vld [vmem:[#allocation19 + $0x718] sm:$0xff]
    %v7573 = vld [vmem:[#allocation19 + $0x720] sm:$0xff]
    %v7574 = vld [vmem:[#allocation19 + $0x728] sm:$0xff]
    %v7575 = vld [vmem:[#allocation19 + $0x730] sm:$0xff]
    %v7576 = vld [vmem:[#allocation19 + $0x738] sm:$0xff]
    %v7577 = vld [vmem:[#allocation19 + $0x740] sm:$0xff]
    %v7578 = vld [vmem:[#allocation19 + $0x748] sm:$0xff]
    %v7579 = vld [vmem:[#allocation19 + $0x750] sm:$0xff]
    %v7580 = vld [vmem:[#allocation19 + $0x758] sm:$0xff]
    %v7581 = vld [vmem:[#allocation19 + $0x760] sm:$0xff]
    %v7582 = vld [vmem:[#allocation19 + $0x768] sm:$0xff]
    %v7583 = vld [vmem:[#allocation19 + $0x770] sm:$0xff]
    %v7584 = vld [vmem:[#allocation19 + $0x778] sm:$0xff]
    %v7585 = vld [vmem:[#allocation19 + $0x780] sm:$0xff]
    %v7586 = vld [vmem:[#allocation19 + $0x788] sm:$0xff]
    %v7587 = vld [vmem:[#allocation19 + $0x790] sm:$0xff]
    %v7588 = vld [vmem:[#allocation19 + $0x798] sm:$0xff]
    %v7589 = vld [vmem:[#allocation19 + $0x7a0] sm:$0xff]
    %v7590 = vld [vmem:[#allocation19 + $0x7a8] sm:$0xff]
    %v7591 = vld [vmem:[#allocation19 + $0x7b0] sm:$0xff]
    %v7592 = vld [vmem:[#allocation19 + $0x7b8] sm:$0xff]
    %v7593 = vld [vmem:[#allocation19 + $0x7c0] sm:$0xff]
    %v7594 = vld [vmem:[#allocation19 + $0x7c8] sm:$0xff]
    %v7595 = vld [vmem:[#allocation19 + $0x7d0] sm:$0xff]
    %v7596 = vld [vmem:[#allocation19 + $0x7d8] sm:$0xff]
    %v7597 = vld [vmem:[#allocation19 + $0x7e0] sm:$0xff]
    %v7598 = vld [vmem:[#allocation19 + $0x7e8] sm:$0xff]
    %v7599 = vld [vmem:[#allocation19 + $0x7f0] sm:$0xff]
    %v7600 = vld [vmem:[#allocation19 + $0x7f8] sm:$0xff]
    %v7601 = vld [vmem:[#allocation19 + $0x800] sm:$0xff]
    %v7602 = vld [vmem:[#allocation19 + $0x808] sm:$0xff]
    %v7603 = vld [vmem:[#allocation19 + $0x810] sm:$0xff]
    %v7604 = vld [vmem:[#allocation19 + $0x818] sm:$0xff]
    %v7605 = vld [vmem:[#allocation19 + $0x820] sm:$0xff]
    %v7606 = vld [vmem:[#allocation19 + $0x828] sm:$0xff]
    %v7607 = vld [vmem:[#allocation19 + $0x830] sm:$0xff]
    %v7608 = vld [vmem:[#allocation19 + $0x838] sm:$0xff]
    %v7609 = vld [vmem:[#allocation19 + $0x840] sm:$0xff]
    %v7610 = vld [vmem:[#allocation19 + $0x848] sm:$0xff]
    %v7611 = vld [vmem:[#allocation19 + $0x850] sm:$0xff]
    %v7612 = vld [vmem:[#allocation19 + $0x858] sm:$0xff]
    %v7613 = vld [vmem:[#allocation19 + $0x860] sm:$0xff]
    %v7614 = vld [vmem:[#allocation19 + $0x868] sm:$0xff]
    %v7615 = vld [vmem:[#allocation19 + $0x870] sm:$0xff]
    %v7616 = vld [vmem:[#allocation19 + $0x878] sm:$0xff]
    %v7617 = vld [vmem:[#allocation19 + $0x880] sm:$0xff]
    %v7618 = vld [vmem:[#allocation19 + $0x888] sm:$0xff]
    %v7619 = vld [vmem:[#allocation19 + $0x890] sm:$0xff]
    %v7620 = vld [vmem:[#allocation19 + $0x898] sm:$0xff]
    %v7621 = vld [vmem:[#allocation19 + $0x8a0] sm:$0xff]
    %v7622 = vld [vmem:[#allocation19 + $0x8a8] sm:$0xff]
    %v7623 = vld [vmem:[#allocation19 + $0x8b0] sm:$0xff]
    %v7624 = vld [vmem:[#allocation19 + $0x8b8] sm:$0xff]
    %v7625 = vld [vmem:[#allocation19 + $0x8c0] sm:$0xff]
    %v7626 = vld [vmem:[#allocation19 + $0x8c8] sm:$0xff]
    %v7627 = vld [vmem:[#allocation19 + $0x8d0] sm:$0xff]
    %v7628 = vld [vmem:[#allocation19 + $0x8d8] sm:$0xff]
    %v7629 = vld [vmem:[#allocation19 + $0x8e0] sm:$0xff]
    %v7630 = vld [vmem:[#allocation19 + $0x8e8] sm:$0xff]
    %v7631 = vld [vmem:[#allocation19 + $0x8f0] sm:$0xff]
    %v7632 = vld [vmem:[#allocation19 + $0x8f8] sm:$0xff]
    %v7921 = vunpack.c.l.b16 %v7345
    %v7922 = vunpack.c.h.b16 %v7345
    %v7923 = vunpack.c.l.b16 %v7346
    %v7924 = vunpack.c.h.b16 %v7346
    %v7925 = vunpack.c.l.b16 %v7347
    %v7926 = vunpack.c.h.b16 %v7347
    %v7927 = vunpack.c.l.b16 %v7348
    %v7928 = vunpack.c.h.b16 %v7348
    %v7929 = vunpack.c.l.b16 %v7349
    %v7930 = vunpack.c.h.b16 %v7349
    %v7931 = vunpack.c.l.b16 %v7350
    %v7932 = vunpack.c.h.b16 %v7350
    %v7933 = vunpack.c.l.b16 %v7351
    %v7934 = vunpack.c.h.b16 %v7351
    %v7935 = vunpack.c.l.b16 %v7352
    %v7936 = vunpack.c.h.b16 %v7352
    %v7937 = vunpack.c.l.b16 %v7353
    %v7938 = vunpack.c.h.b16 %v7353
    %v7939 = vunpack.c.l.b16 %v7354
    %v7940 = vunpack.c.h.b16 %v7354
    %v7941 = vunpack.c.l.b16 %v7355
    %v7942 = vunpack.c.h.b16 %v7355
    %v7943 = vunpack.c.l.b16 %v7356
    %v7944 = vunpack.c.h.b16 %v7356
    %v7945 = vunpack.c.l.b16 %v7357
    %v7946 = vunpack.c.h.b16 %v7357
    %v7947 = vunpack.c.l.b16 %v7358
    %v7948 = vunpack.c.h.b16 %v7358
    %v7949 = vunpack.c.l.b16 %v7359
    %v7950 = vunpack.c.h.b16 %v7359
    %v7951 = vunpack.c.l.b16 %v7360
    %v7952 = vunpack.c.h.b16 %v7360
    %v7953 = vunpack.c.l.b16 %v7361
    %v7954 = vunpack.c.h.b16 %v7361
    %v7955 = vunpack.c.l.b16 %v7362
    %v7956 = vunpack.c.h.b16 %v7362
    %v7957 = vunpack.c.l.b16 %v7363
    %v7958 = vunpack.c.h.b16 %v7363
    %v7959 = vunpack.c.l.b16 %v7364
    %v7960 = vunpack.c.h.b16 %v7364
    %v7961 = vunpack.c.l.b16 %v7365
    %v7962 = vunpack.c.h.b16 %v7365
    %v7963 = vunpack.c.l.b16 %v7366
    %v7964 = vunpack.c.h.b16 %v7366
    %v7965 = vunpack.c.l.b16 %v7367
    %v7966 = vunpack.c.h.b16 %v7367
    %v7967 = vunpack.c.l.b16 %v7368
    %v7968 = vunpack.c.h.b16 %v7368
    %v7969 = vunpack.c.l.b16 %v7369
    %v7970 = vunpack.c.h.b16 %v7369
    %v7971 = vunpack.c.l.b16 %v7370
    %v7972 = vunpack.c.h.b16 %v7370
    %v7973 = vunpack.c.l.b16 %v7371
    %v7974 = vunpack.c.h.b16 %v7371
    %v7975 = vunpack.c.l.b16 %v7372
    %v7976 = vunpack.c.h.b16 %v7372
    %v7977 = vunpack.c.l.b16 %v7373
    %v7978 = vunpack.c.h.b16 %v7373
    %v7979 = vunpack.c.l.b16 %v7374
    %v7980 = vunpack.c.h.b16 %v7374
    %v7981 = vunpack.c.l.b16 %v7375
    %v7982 = vunpack.c.h.b16 %v7375
    %v7983 = vunpack.c.l.b16 %v7376
    %v7984 = vunpack.c.h.b16 %v7376
    %v7985 = vunpack.c.l.b16 %v7377
    %v7986 = vunpack.c.h.b16 %v7377
    %v7987 = vunpack.c.l.b16 %v7378
    %v7988 = vunpack.c.h.b16 %v7378
    %v7989 = vunpack.c.l.b16 %v7379
    %v7990 = vunpack.c.h.b16 %v7379
    %v7991 = vunpack.c.l.b16 %v7380
    %v7992 = vunpack.c.h.b16 %v7380
    %v7993 = vunpack.c.l.b16 %v7381
    %v7994 = vunpack.c.h.b16 %v7381
    %v7995 = vunpack.c.l.b16 %v7382
    %v7996 = vunpack.c.h.b16 %v7382
    %v7997 = vunpack.c.l.b16 %v7383
    %v7998 = vunpack.c.h.b16 %v7383
    %v7999 = vunpack.c.l.b16 %v7384
    %v8000 = vunpack.c.h.b16 %v7384
    %v8001 = vunpack.c.l.b16 %v7385
    %v8002 = vunpack.c.h.b16 %v7385
    %v8003 = vunpack.c.l.b16 %v7386
    %v8004 = vunpack.c.h.b16 %v7386
    %v8005 = vunpack.c.l.b16 %v7387
    %v8006 = vunpack.c.h.b16 %v7387
    %v8007 = vunpack.c.l.b16 %v7388
    %v8008 = vunpack.c.h.b16 %v7388
    %v8009 = vunpack.c.l.b16 %v7389
    %v8010 = vunpack.c.h.b16 %v7389
    %v8011 = vunpack.c.l.b16 %v7390
    %v8012 = vunpack.c.h.b16 %v7390
    %v8013 = vunpack.c.l.b16 %v7391
    %v8014 = vunpack.c.h.b16 %v7391
    %v8015 = vunpack.c.l.b16 %v7392
    %v8016 = vunpack.c.h.b16 %v7392
    %v8017 = vunpack.c.l.b16 %v7393
    %v8018 = vunpack.c.h.b16 %v7393
    %v8019 = vunpack.c.l.b16 %v7394
    %v8020 = vunpack.c.h.b16 %v7394
    %v8021 = vunpack.c.l.b16 %v7395
    %v8022 = vunpack.c.h.b16 %v7395
    %v8023 = vunpack.c.l.b16 %v7396
    %v8024 = vunpack.c.h.b16 %v7396
    %v8025 = vunpack.c.l.b16 %v7397
    %v8026 = vunpack.c.h.b16 %v7397
    %v8027 = vunpack.c.l.b16 %v7398
    %v8028 = vunpack.c.h.b16 %v7398
    %v8029 = vunpack.c.l.b16 %v7399
    %v8030 = vunpack.c.h.b16 %v7399
    %v8031 = vunpack.c.l.b16 %v7400
    %v8032 = vunpack.c.h.b16 %v7400
    %v8033 = vunpack.c.l.b16 %v7401
    %v8034 = vunpack.c.h.b16 %v7401
    %v8035 = vunpack.c.l.b16 %v7402
    %v8036 = vunpack.c.h.b16 %v7402
    %v8037 = vunpack.c.l.b16 %v7403
    %v8038 = vunpack.c.h.b16 %v7403
    %v8039 = vunpack.c.l.b16 %v7404
    %v8040 = vunpack.c.h.b16 %v7404
    %v8041 = vunpack.c.l.b16 %v7405
    %v8042 = vunpack.c.h.b16 %v7405
    %v8043 = vunpack.c.l.b16 %v7406
    %v8044 = vunpack.c.h.b16 %v7406
    %v8045 = vunpack.c.l.b16 %v7407
    %v8046 = vunpack.c.h.b16 %v7407
    %v8047 = vunpack.c.l.b16 %v7408
    %v8048 = vunpack.c.h.b16 %v7408
    %v8049 = vunpack.c.l.b16 %v7409
    %v8050 = vunpack.c.h.b16 %v7409
    %v8051 = vunpack.c.l.b16 %v7410
    %v8052 = vunpack.c.h.b16 %v7410
    %v8053 = vunpack.c.l.b16 %v7411
    %v8054 = vunpack.c.h.b16 %v7411
    %v8055 = vunpack.c.l.b16 %v7412
    %v8056 = vunpack.c.h.b16 %v7412
    %v8057 = vunpack.c.l.b16 %v7413
    %v8058 = vunpack.c.h.b16 %v7413
    %v8059 = vunpack.c.l.b16 %v7414
    %v8060 = vunpack.c.h.b16 %v7414
    %v8061 = vunpack.c.l.b16 %v7415
    %v8062 = vunpack.c.h.b16 %v7415
    %v8063 = vunpack.c.l.b16 %v7416
    %v8064 = vunpack.c.h.b16 %v7416
    %v8065 = vunpack.c.l.b16 %v7417
    %v8066 = vunpack.c.h.b16 %v7417
    %v8067 = vunpack.c.l.b16 %v7418
    %v8068 = vunpack.c.h.b16 %v7418
    %v8069 = vunpack.c.l.b16 %v7419
    %v8070 = vunpack.c.h.b16 %v7419
    %v8071 = vunpack.c.l.b16 %v7420
    %v8072 = vunpack.c.h.b16 %v7420
    %v8073 = vunpack.c.l.b16 %v7421
    %v8074 = vunpack.c.h.b16 %v7421
    %v8075 = vunpack.c.l.b16 %v7422
    %v8076 = vunpack.c.h.b16 %v7422
    %v8077 = vunpack.c.l.b16 %v7423
    %v8078 = vunpack.c.h.b16 %v7423
    %v8079 = vunpack.c.l.b16 %v7424
    %v8080 = vunpack.c.h.b16 %v7424
    %v8081 = vunpack.c.l.b16 %v7425
    %v8082 = vunpack.c.h.b16 %v7425
    %v8083 = vunpack.c.l.b16 %v7426
    %v8084 = vunpack.c.h.b16 %v7426
    %v8085 = vunpack.c.l.b16 %v7427
    %v8086 = vunpack.c.h.b16 %v7427
    %v8087 = vunpack.c.l.b16 %v7428
    %v8088 = vunpack.c.h.b16 %v7428
    %v8089 = vunpack.c.l.b16 %v7429
    %v8090 = vunpack.c.h.b16 %v7429
    %v8091 = vunpack.c.l.b16 %v7430
    %v8092 = vunpack.c.h.b16 %v7430
    %v8093 = vunpack.c.l.b16 %v7431
    %v8094 = vunpack.c.h.b16 %v7431
    %v8095 = vunpack.c.l.b16 %v7432
    %v8096 = vunpack.c.h.b16 %v7432
    %v8097 = vunpack.c.l.b16 %v7433
    %v8098 = vunpack.c.h.b16 %v7433
    %v8099 = vunpack.c.l.b16 %v7434
    %v8100 = vunpack.c.h.b16 %v7434
    %v8101 = vunpack.c.l.b16 %v7435
    %v8102 = vunpack.c.h.b16 %v7435
    %v8103 = vunpack.c.l.b16 %v7436
    %v8104 = vunpack.c.h.b16 %v7436
    %v8105 = vunpack.c.l.b16 %v7437
    %v8106 = vunpack.c.h.b16 %v7437
    %v8107 = vunpack.c.l.b16 %v7438
    %v8108 = vunpack.c.h.b16 %v7438
    %v8109 = vunpack.c.l.b16 %v7439
    %v8110 = vunpack.c.h.b16 %v7439
    %v8111 = vunpack.c.l.b16 %v7440
    %v8112 = vunpack.c.h.b16 %v7440
    %v8113 = vunpack.c.l.b16 %v7441
    %v8114 = vunpack.c.h.b16 %v7441
    %v8115 = vunpack.c.l.b16 %v7442
    %v8116 = vunpack.c.h.b16 %v7442
    %v8117 = vunpack.c.l.b16 %v7443
    %v8118 = vunpack.c.h.b16 %v7443
    %v8119 = vunpack.c.l.b16 %v7444
    %v8120 = vunpack.c.h.b16 %v7444
    %v8121 = vunpack.c.l.b16 %v7445
    %v8122 = vunpack.c.h.b16 %v7445
    %v8123 = vunpack.c.l.b16 %v7446
    %v8124 = vunpack.c.h.b16 %v7446
    %v8125 = vunpack.c.l.b16 %v7447
    %v8126 = vunpack.c.h.b16 %v7447
    %v8127 = vunpack.c.l.b16 %v7448
    %v8128 = vunpack.c.h.b16 %v7448
    %v8129 = vunpack.c.l.b16 %v7449
    %v8130 = vunpack.c.h.b16 %v7449
    %v8131 = vunpack.c.l.b16 %v7450
    %v8132 = vunpack.c.h.b16 %v7450
    %v8133 = vunpack.c.l.b16 %v7451
    %v8134 = vunpack.c.h.b16 %v7451
    %v8135 = vunpack.c.l.b16 %v7452
    %v8136 = vunpack.c.h.b16 %v7452
    %v8137 = vunpack.c.l.b16 %v7453
    %v8138 = vunpack.c.h.b16 %v7453
    %v8139 = vunpack.c.l.b16 %v7454
    %v8140 = vunpack.c.h.b16 %v7454
    %v8141 = vunpack.c.l.b16 %v7455
    %v8142 = vunpack.c.h.b16 %v7455
    %v8143 = vunpack.c.l.b16 %v7456
    %v8144 = vunpack.c.h.b16 %v7456
    %v8145 = vunpack.c.l.b16 %v7457
    %v8146 = vunpack.c.h.b16 %v7457
    %v8147 = vunpack.c.l.b16 %v7458
    %v8148 = vunpack.c.h.b16 %v7458
    %v8149 = vunpack.c.l.b16 %v7459
    %v8150 = vunpack.c.h.b16 %v7459
    %v8151 = vunpack.c.l.b16 %v7460
    %v8152 = vunpack.c.h.b16 %v7460
    %v8153 = vunpack.c.l.b16 %v7461
    %v8154 = vunpack.c.h.b16 %v7461
    %v8155 = vunpack.c.l.b16 %v7462
    %v8156 = vunpack.c.h.b16 %v7462
    %v8157 = vunpack.c.l.b16 %v7463
    %v8158 = vunpack.c.h.b16 %v7463
    %v8159 = vunpack.c.l.b16 %v7464
    %v8160 = vunpack.c.h.b16 %v7464
    %v8161 = vunpack.c.l.b16 %v7465
    %v8162 = vunpack.c.h.b16 %v7465
    %v8163 = vunpack.c.l.b16 %v7466
    %v8164 = vunpack.c.h.b16 %v7466
    %v8165 = vunpack.c.l.b16 %v7467
    %v8166 = vunpack.c.h.b16 %v7467
    %v8167 = vunpack.c.l.b16 %v7468
    %v8168 = vunpack.c.h.b16 %v7468
    %v8169 = vunpack.c.l.b16 %v7469
    %v8170 = vunpack.c.h.b16 %v7469
    %v8171 = vunpack.c.l.b16 %v7470
    %v8172 = vunpack.c.h.b16 %v7470
    %v8173 = vunpack.c.l.b16 %v7471
    %v8174 = vunpack.c.h.b16 %v7471
    %v8175 = vunpack.c.l.b16 %v7472
    %v8176 = vunpack.c.h.b16 %v7472
    %v8177 = vunpack.c.l.b16 %v7473
    %v8178 = vunpack.c.h.b16 %v7473
    %v8179 = vunpack.c.l.b16 %v7474
    %v8180 = vunpack.c.h.b16 %v7474
    %v8181 = vunpack.c.l.b16 %v7475
    %v8182 = vunpack.c.h.b16 %v7475
    %v8183 = vunpack.c.l.b16 %v7476
    %v8184 = vunpack.c.h.b16 %v7476
    %v8185 = vunpack.c.l.b16 %v7477
    %v8186 = vunpack.c.h.b16 %v7477
    %v8187 = vunpack.c.l.b16 %v7478
    %v8188 = vunpack.c.h.b16 %v7478
    %v8189 = vunpack.c.l.b16 %v7479
    %v8190 = vunpack.c.h.b16 %v7479
    %v8191 = vunpack.c.l.b16 %v7480
    %v8192 = vunpack.c.h.b16 %v7480
    %v8193 = vunpack.c.l.b16 %v7481
    %v8194 = vunpack.c.h.b16 %v7481
    %v8195 = vunpack.c.l.b16 %v7482
    %v8196 = vunpack.c.h.b16 %v7482
    %v8197 = vunpack.c.l.b16 %v7483
    %v8198 = vunpack.c.h.b16 %v7483
    %v8199 = vunpack.c.l.b16 %v7484
    %v8200 = vunpack.c.h.b16 %v7484
    %v8201 = vunpack.c.l.b16 %v7485
    %v8202 = vunpack.c.h.b16 %v7485
    %v8203 = vunpack.c.l.b16 %v7486
    %v8204 = vunpack.c.h.b16 %v7486
    %v8205 = vunpack.c.l.b16 %v7487
    %v8206 = vunpack.c.h.b16 %v7487
    %v8207 = vunpack.c.l.b16 %v7488
    %v8208 = vunpack.c.h.b16 %v7488
    %v8209 = vunpack.c.l.b16 %v7489
    %v8210 = vunpack.c.h.b16 %v7489
    %v8211 = vunpack.c.l.b16 %v7490
    %v8212 = vunpack.c.h.b16 %v7490
    %v8213 = vunpack.c.l.b16 %v7491
    %v8214 = vunpack.c.h.b16 %v7491
    %v8215 = vunpack.c.l.b16 %v7492
    %v8216 = vunpack.c.h.b16 %v7492
    %v8217 = vunpack.c.l.b16 %v7493
    %v8218 = vunpack.c.h.b16 %v7493
    %v8219 = vunpack.c.l.b16 %v7494
    %v8220 = vunpack.c.h.b16 %v7494
    %v8221 = vunpack.c.l.b16 %v7495
    %v8222 = vunpack.c.h.b16 %v7495
    %v8223 = vunpack.c.l.b16 %v7496
    %v8224 = vunpack.c.h.b16 %v7496
    %v8225 = vunpack.c.l.b16 %v7497
    %v8226 = vunpack.c.h.b16 %v7497
    %v8227 = vunpack.c.l.b16 %v7498
    %v8228 = vunpack.c.h.b16 %v7498
    %v8229 = vunpack.c.l.b16 %v7499
    %v8230 = vunpack.c.h.b16 %v7499
    %v8231 = vunpack.c.l.b16 %v7500
    %v8232 = vunpack.c.h.b16 %v7500
    %v8233 = vunpack.c.l.b16 %v7501
    %v8234 = vunpack.c.h.b16 %v7501
    %v8235 = vunpack.c.l.b16 %v7502
    %v8236 = vunpack.c.h.b16 %v7502
    %v8237 = vunpack.c.l.b16 %v7503
    %v8238 = vunpack.c.h.b16 %v7503
    %v8239 = vunpack.c.l.b16 %v7504
    %v8240 = vunpack.c.h.b16 %v7504
    %v8241 = vunpack.c.l.b16 %v7505
    %v8242 = vunpack.c.h.b16 %v7505
    %v8243 = vunpack.c.l.b16 %v7506
    %v8244 = vunpack.c.h.b16 %v7506
    %v8245 = vunpack.c.l.b16 %v7507
    %v8246 = vunpack.c.h.b16 %v7507
    %v8247 = vunpack.c.l.b16 %v7508
    %v8248 = vunpack.c.h.b16 %v7508
    %v8249 = vunpack.c.l.b16 %v7509
    %v8250 = vunpack.c.h.b16 %v7509
    %v8251 = vunpack.c.l.b16 %v7510
    %v8252 = vunpack.c.h.b16 %v7510
    %v8253 = vunpack.c.l.b16 %v7511
    %v8254 = vunpack.c.h.b16 %v7511
    %v8255 = vunpack.c.l.b16 %v7512
    %v8256 = vunpack.c.h.b16 %v7512
    %v8257 = vunpack.c.l.b16 %v7513
    %v8258 = vunpack.c.h.b16 %v7513
    %v8259 = vunpack.c.l.b16 %v7514
    %v8260 = vunpack.c.h.b16 %v7514
    %v8261 = vunpack.c.l.b16 %v7515
    %v8262 = vunpack.c.h.b16 %v7515
    %v8263 = vunpack.c.l.b16 %v7516
    %v8264 = vunpack.c.h.b16 %v7516
    %v8265 = vunpack.c.l.b16 %v7517
    %v8266 = vunpack.c.h.b16 %v7517
    %v8267 = vunpack.c.l.b16 %v7518
    %v8268 = vunpack.c.h.b16 %v7518
    %v8269 = vunpack.c.l.b16 %v7519
    %v8270 = vunpack.c.h.b16 %v7519
    %v8271 = vunpack.c.l.b16 %v7520
    %v8272 = vunpack.c.h.b16 %v7520
    %v8273 = vunpack.c.l.b16 %v7521
    %v8274 = vunpack.c.h.b16 %v7521
    %v8275 = vunpack.c.l.b16 %v7522
    %v8276 = vunpack.c.h.b16 %v7522
    %v8277 = vunpack.c.l.b16 %v7523
    %v8278 = vunpack.c.h.b16 %v7523
    %v8279 = vunpack.c.l.b16 %v7524
    %v8280 = vunpack.c.h.b16 %v7524
    %v8281 = vunpack.c.l.b16 %v7525
    %v8282 = vunpack.c.h.b16 %v7525
    %v8283 = vunpack.c.l.b16 %v7526
    %v8284 = vunpack.c.h.b16 %v7526
    %v8285 = vunpack.c.l.b16 %v7527
    %v8286 = vunpack.c.h.b16 %v7527
    %v8287 = vunpack.c.l.b16 %v7528
    %v8288 = vunpack.c.h.b16 %v7528
    %v8289 = vunpack.c.l.b16 %v7529
    %v8290 = vunpack.c.h.b16 %v7529
    %v8291 = vunpack.c.l.b16 %v7530
    %v8292 = vunpack.c.h.b16 %v7530
    %v8293 = vunpack.c.l.b16 %v7531
    %v8294 = vunpack.c.h.b16 %v7531
    %v8295 = vunpack.c.l.b16 %v7532
    %v8296 = vunpack.c.h.b16 %v7532
    %v8297 = vunpack.c.l.b16 %v7533
    %v8298 = vunpack.c.h.b16 %v7533
    %v8299 = vunpack.c.l.b16 %v7534
    %v8300 = vunpack.c.h.b16 %v7534
    %v8301 = vunpack.c.l.b16 %v7535
    %v8302 = vunpack.c.h.b16 %v7535
    %v8303 = vunpack.c.l.b16 %v7536
    %v8304 = vunpack.c.h.b16 %v7536
    %v8305 = vunpack.c.l.b16 %v7537
    %v8306 = vunpack.c.h.b16 %v7537
    %v8307 = vunpack.c.l.b16 %v7538
    %v8308 = vunpack.c.h.b16 %v7538
    %v8309 = vunpack.c.l.b16 %v7539
    %v8310 = vunpack.c.h.b16 %v7539
    %v8311 = vunpack.c.l.b16 %v7540
    %v8312 = vunpack.c.h.b16 %v7540
    %v8313 = vunpack.c.l.b16 %v7541
    %v8314 = vunpack.c.h.b16 %v7541
    %v8315 = vunpack.c.l.b16 %v7542
    %v8316 = vunpack.c.h.b16 %v7542
    %v8317 = vunpack.c.l.b16 %v7543
    %v8318 = vunpack.c.h.b16 %v7543
    %v8319 = vunpack.c.l.b16 %v7544
    %v8320 = vunpack.c.h.b16 %v7544
    %v8321 = vunpack.c.l.b16 %v7545
    %v8322 = vunpack.c.h.b16 %v7545
    %v8323 = vunpack.c.l.b16 %v7546
    %v8324 = vunpack.c.h.b16 %v7546
    %v8325 = vunpack.c.l.b16 %v7547
    %v8326 = vunpack.c.h.b16 %v7547
    %v8327 = vunpack.c.l.b16 %v7548
    %v8328 = vunpack.c.h.b16 %v7548
    %v8329 = vunpack.c.l.b16 %v7549
    %v8330 = vunpack.c.h.b16 %v7549
    %v8331 = vunpack.c.l.b16 %v7550
    %v8332 = vunpack.c.h.b16 %v7550
    %v8333 = vunpack.c.l.b16 %v7551
    %v8334 = vunpack.c.h.b16 %v7551
    %v8335 = vunpack.c.l.b16 %v7552
    %v8336 = vunpack.c.h.b16 %v7552
    %v8337 = vunpack.c.l.b16 %v7553
    %v8338 = vunpack.c.h.b16 %v7553
    %v8339 = vunpack.c.l.b16 %v7554
    %v8340 = vunpack.c.h.b16 %v7554
    %v8341 = vunpack.c.l.b16 %v7555
    %v8342 = vunpack.c.h.b16 %v7555
    %v8343 = vunpack.c.l.b16 %v7556
    %v8344 = vunpack.c.h.b16 %v7556
    %v8345 = vunpack.c.l.b16 %v7557
    %v8346 = vunpack.c.h.b16 %v7557
    %v8347 = vunpack.c.l.b16 %v7558
    %v8348 = vunpack.c.h.b16 %v7558
    %v8349 = vunpack.c.l.b16 %v7559
    %v8350 = vunpack.c.h.b16 %v7559
    %v8351 = vunpack.c.l.b16 %v7560
    %v8352 = vunpack.c.h.b16 %v7560
    %v8353 = vunpack.c.l.b16 %v7561
    %v8354 = vunpack.c.h.b16 %v7561
    %v8355 = vunpack.c.l.b16 %v7562
    %v8356 = vunpack.c.h.b16 %v7562
    %v8357 = vunpack.c.l.b16 %v7563
    %v8358 = vunpack.c.h.b16 %v7563
    %v8359 = vunpack.c.l.b16 %v7564
    %v8360 = vunpack.c.h.b16 %v7564
    %v8361 = vunpack.c.l.b16 %v7565
    %v8362 = vunpack.c.h.b16 %v7565
    %v8363 = vunpack.c.l.b16 %v7566
    %v8364 = vunpack.c.h.b16 %v7566
    %v8365 = vunpack.c.l.b16 %v7567
    %v8366 = vunpack.c.h.b16 %v7567
    %v8367 = vunpack.c.l.b16 %v7568
    %v8368 = vunpack.c.h.b16 %v7568
    %v8369 = vunpack.c.l.b16 %v7569
    %v8370 = vunpack.c.h.b16 %v7569
    %v8371 = vunpack.c.l.b16 %v7570
    %v8372 = vunpack.c.h.b16 %v7570
    %v8373 = vunpack.c.l.b16 %v7571
    %v8374 = vunpack.c.h.b16 %v7571
    %v8375 = vunpack.c.l.b16 %v7572
    %v8376 = vunpack.c.h.b16 %v7572
    %v8377 = vunpack.c.l.b16 %v7573
    %v8378 = vunpack.c.h.b16 %v7573
    %v8379 = vunpack.c.l.b16 %v7574
    %v8380 = vunpack.c.h.b16 %v7574
    %v8381 = vunpack.c.l.b16 %v7575
    %v8382 = vunpack.c.h.b16 %v7575
    %v8383 = vunpack.c.l.b16 %v7576
    %v8384 = vunpack.c.h.b16 %v7576
    %v8385 = vunpack.c.l.b16 %v7577
    %v8386 = vunpack.c.h.b16 %v7577
    %v8387 = vunpack.c.l.b16 %v7578
    %v8388 = vunpack.c.h.b16 %v7578
    %v8389 = vunpack.c.l.b16 %v7579
    %v8390 = vunpack.c.h.b16 %v7579
    %v8391 = vunpack.c.l.b16 %v7580
    %v8392 = vunpack.c.h.b16 %v7580
    %v8393 = vunpack.c.l.b16 %v7581
    %v8394 = vunpack.c.h.b16 %v7581
    %v8395 = vunpack.c.l.b16 %v7582
    %v8396 = vunpack.c.h.b16 %v7582
    %v8397 = vunpack.c.l.b16 %v7583
    %v8398 = vunpack.c.h.b16 %v7583
    %v8399 = vunpack.c.l.b16 %v7584
    %v8400 = vunpack.c.h.b16 %v7584
    %v8401 = vunpack.c.l.b16 %v7585
    %v8402 = vunpack.c.h.b16 %v7585
    %v8403 = vunpack.c.l.b16 %v7586
    %v8404 = vunpack.c.h.b16 %v7586
    %v8405 = vunpack.c.l.b16 %v7587
    %v8406 = vunpack.c.h.b16 %v7587
    %v8407 = vunpack.c.l.b16 %v7588
    %v8408 = vunpack.c.h.b16 %v7588
    %v8409 = vunpack.c.l.b16 %v7589
    %v8410 = vunpack.c.h.b16 %v7589
    %v8411 = vunpack.c.l.b16 %v7590
    %v8412 = vunpack.c.h.b16 %v7590
    %v8413 = vunpack.c.l.b16 %v7591
    %v8414 = vunpack.c.h.b16 %v7591
    %v8415 = vunpack.c.l.b16 %v7592
    %v8416 = vunpack.c.h.b16 %v7592
    %v8417 = vunpack.c.l.b16 %v7593
    %v8418 = vunpack.c.h.b16 %v7593
    %v8419 = vunpack.c.l.b16 %v7594
    %v8420 = vunpack.c.h.b16 %v7594
    %v8421 = vunpack.c.l.b16 %v7595
    %v8422 = vunpack.c.h.b16 %v7595
    %v8423 = vunpack.c.l.b16 %v7596
    %v8424 = vunpack.c.h.b16 %v7596
    %v8425 = vunpack.c.l.b16 %v7597
    %v8426 = vunpack.c.h.b16 %v7597
    %v8427 = vunpack.c.l.b16 %v7598
    %v8428 = vunpack.c.h.b16 %v7598
    %v8429 = vunpack.c.l.b16 %v7599
    %v8430 = vunpack.c.h.b16 %v7599
    %v8431 = vunpack.c.l.b16 %v7600
    %v8432 = vunpack.c.h.b16 %v7600
    %v8433 = vunpack.c.l.b16 %v7601
    %v8434 = vunpack.c.h.b16 %v7601
    %v8435 = vunpack.c.l.b16 %v7602
    %v8436 = vunpack.c.h.b16 %v7602
    %v8437 = vunpack.c.l.b16 %v7603
    %v8438 = vunpack.c.h.b16 %v7603
    %v8439 = vunpack.c.l.b16 %v7604
    %v8440 = vunpack.c.h.b16 %v7604
    %v8441 = vunpack.c.l.b16 %v7605
    %v8442 = vunpack.c.h.b16 %v7605
    %v8443 = vunpack.c.l.b16 %v7606
    %v8444 = vunpack.c.h.b16 %v7606
    %v8445 = vunpack.c.l.b16 %v7607
    %v8446 = vunpack.c.h.b16 %v7607
    %v8447 = vunpack.c.l.b16 %v7608
    %v8448 = vunpack.c.h.b16 %v7608
    %v8449 = vunpack.c.l.b16 %v7609
    %v8450 = vunpack.c.h.b16 %v7609
    %v8451 = vunpack.c.l.b16 %v7610
    %v8452 = vunpack.c.h.b16 %v7610
    %v8453 = vunpack.c.l.b16 %v7611
    %v8454 = vunpack.c.h.b16 %v7611
    %v8455 = vunpack.c.l.b16 %v7612
    %v8456 = vunpack.c.h.b16 %v7612
    %v8457 = vunpack.c.l.b16 %v7613
    %v8458 = vunpack.c.h.b16 %v7613
    %v8459 = vunpack.c.l.b16 %v7614
    %v8460 = vunpack.c.h.b16 %v7614
    %v8461 = vunpack.c.l.b16 %v7615
    %v8462 = vunpack.c.h.b16 %v7615
    %v8463 = vunpack.c.l.b16 %v7616
    %v8464 = vunpack.c.h.b16 %v7616
    %v8465 = vunpack.c.l.b16 %v7617
    %v8466 = vunpack.c.h.b16 %v7617
    %v8467 = vunpack.c.l.b16 %v7618
    %v8468 = vunpack.c.h.b16 %v7618
    %v8469 = vunpack.c.l.b16 %v7619
    %v8470 = vunpack.c.h.b16 %v7619
    %v8471 = vunpack.c.l.b16 %v7620
    %v8472 = vunpack.c.h.b16 %v7620
    %v8473 = vunpack.c.l.b16 %v7621
    %v8474 = vunpack.c.h.b16 %v7621
    %v8475 = vunpack.c.l.b16 %v7622
    %v8476 = vunpack.c.h.b16 %v7622
    %v8477 = vunpack.c.l.b16 %v7623
    %v8478 = vunpack.c.h.b16 %v7623
    %v8479 = vunpack.c.l.b16 %v7624
    %v8480 = vunpack.c.h.b16 %v7624
    %v8481 = vunpack.c.l.b16 %v7625
    %v8482 = vunpack.c.h.b16 %v7625
    %v8483 = vunpack.c.l.b16 %v7626
    %v8484 = vunpack.c.h.b16 %v7626
    %v8485 = vunpack.c.l.b16 %v7627
    %v8486 = vunpack.c.h.b16 %v7627
    %v8487 = vunpack.c.l.b16 %v7628
    %v8488 = vunpack.c.h.b16 %v7628
    %v8489 = vunpack.c.l.b16 %v7629
    %v8490 = vunpack.c.h.b16 %v7629
    %v8491 = vunpack.c.l.b16 %v7630
    %v8492 = vunpack.c.h.b16 %v7630
    %v8493 = vunpack.c.l.b16 %v7631
    %v8494 = vunpack.c.h.b16 %v7631
    %v8495 = vunpack.c.l.b16 %v7632
    %v8496 = vunpack.c.h.b16 %v7632
    %v8497 = vpack.c.b16 %v7927, %v7921
    %v8498 = vpack.c.b16 %v7928, %v7922
    %v8499 = vpack.c.b16 %v7929, %v7923
    %v8500 = vpack.c.b16 %v7930, %v7924
    %v8501 = vpack.c.b16 %v7931, %v7925
    %v8502 = vpack.c.b16 %v7932, %v7926
    %v8503 = vpack.c.b16 %v7939, %v7933
    %v8504 = vpack.c.b16 %v7940, %v7934
    %v8505 = vpack.c.b16 %v7941, %v7935
    %v8506 = vpack.c.b16 %v7942, %v7936
    %v8507 = vpack.c.b16 %v7943, %v7937
    %v8508 = vpack.c.b16 %v7944, %v7938
    %v8509 = vpack.c.b16 %v7951, %v7945
    %v8510 = vpack.c.b16 %v7952, %v7946
    %v8511 = vpack.c.b16 %v7953, %v7947
    %v8512 = vpack.c.b16 %v7954, %v7948
    %v8513 = vpack.c.b16 %v7955, %v7949
    %v8514 = vpack.c.b16 %v7956, %v7950
    %v8515 = vpack.c.b16 %v7963, %v7957
    %v8516 = vpack.c.b16 %v7964, %v7958
    %v8517 = vpack.c.b16 %v7965, %v7959
    %v8518 = vpack.c.b16 %v7966, %v7960
    %v8519 = vpack.c.b16 %v7967, %v7961
    %v8520 = vpack.c.b16 %v7968, %v7962
    %v8521 = vpack.c.b16 %v7975, %v7969
    %v8522 = vpack.c.b16 %v7976, %v7970
    %v8523 = vpack.c.b16 %v7977, %v7971
    %v8524 = vpack.c.b16 %v7978, %v7972
    %v8525 = vpack.c.b16 %v7979, %v7973
    %v8526 = vpack.c.b16 %v7980, %v7974
    %v8527 = vpack.c.b16 %v7987, %v7981
    %v8528 = vpack.c.b16 %v7988, %v7982
    %v8529 = vpack.c.b16 %v7989, %v7983
    %v8530 = vpack.c.b16 %v7990, %v7984
    %v8531 = vpack.c.b16 %v7991, %v7985
    %v8532 = vpack.c.b16 %v7992, %v7986
    %v8533 = vpack.c.b16 %v7999, %v7993
    %v8534 = vpack.c.b16 %v8000, %v7994
    %v8535 = vpack.c.b16 %v8001, %v7995
    %v8536 = vpack.c.b16 %v8002, %v7996
    %v8537 = vpack.c.b16 %v8003, %v7997
    %v8538 = vpack.c.b16 %v8004, %v7998
    %v8539 = vpack.c.b16 %v8011, %v8005
    %v8540 = vpack.c.b16 %v8012, %v8006
    %v8541 = vpack.c.b16 %v8013, %v8007
    %v8542 = vpack.c.b16 %v8014, %v8008
    %v8543 = vpack.c.b16 %v8015, %v8009
    %v8544 = vpack.c.b16 %v8016, %v8010
    %v8545 = vpack.c.b16 %v8023, %v8017
    %v8546 = vpack.c.b16 %v8024, %v8018
    %v8547 = vpack.c.b16 %v8025, %v8019
    %v8548 = vpack.c.b16 %v8026, %v8020
    %v8549 = vpack.c.b16 %v8027, %v8021
    %v8550 = vpack.c.b16 %v8028, %v8022
    %v8551 = vpack.c.b16 %v8035, %v8029
    %v8552 = vpack.c.b16 %v8036, %v8030
    %v8553 = vpack.c.b16 %v8037, %v8031
    %v8554 = vpack.c.b16 %v8038, %v8032
    %v8555 = vpack.c.b16 %v8039, %v8033
    %v8556 = vpack.c.b16 %v8040, %v8034
    %v8557 = vpack.c.b16 %v8047, %v8041
    %v8558 = vpack.c.b16 %v8048, %v8042
    %v8559 = vpack.c.b16 %v8049, %v8043
    %v8560 = vpack.c.b16 %v8050, %v8044
    %v8561 = vpack.c.b16 %v8051, %v8045
    %v8562 = vpack.c.b16 %v8052, %v8046
    %v8563 = vpack.c.b16 %v8059, %v8053
    %v8564 = vpack.c.b16 %v8060, %v8054
    %v8565 = vpack.c.b16 %v8061, %v8055
    %v8566 = vpack.c.b16 %v8062, %v8056
    %v8567 = vpack.c.b16 %v8063, %v8057
    %v8568 = vpack.c.b16 %v8064, %v8058
    %v8569 = vpack.c.b16 %v8071, %v8065
    %v8570 = vpack.c.b16 %v8072, %v8066
    %v8571 = vpack.c.b16 %v8073, %v8067
    %v8572 = vpack.c.b16 %v8074, %v8068
    %v8573 = vpack.c.b16 %v8075, %v8069
    %v8574 = vpack.c.b16 %v8076, %v8070
    %v8575 = vpack.c.b16 %v8083, %v8077
    %v8576 = vpack.c.b16 %v8084, %v8078
    %v8577 = vpack.c.b16 %v8085, %v8079
    %v8578 = vpack.c.b16 %v8086, %v8080
    %v8579 = vpack.c.b16 %v8087, %v8081
    %v8580 = vpack.c.b16 %v8088, %v8082
    %v8581 = vpack.c.b16 %v8095, %v8089
    %v8582 = vpack.c.b16 %v8096, %v8090
    %v8583 = vpack.c.b16 %v8097, %v8091
    %v8584 = vpack.c.b16 %v8098, %v8092
    %v8585 = vpack.c.b16 %v8099, %v8093
    %v8586 = vpack.c.b16 %v8100, %v8094
    %v8587 = vpack.c.b16 %v8107, %v8101
    %v8588 = vpack.c.b16 %v8108, %v8102
    %v8589 = vpack.c.b16 %v8109, %v8103
    %v8590 = vpack.c.b16 %v8110, %v8104
    %v8591 = vpack.c.b16 %v8111, %v8105
    %v8592 = vpack.c.b16 %v8112, %v8106
    %v8593 = vpack.c.b16 %v8119, %v8113
    %v8594 = vpack.c.b16 %v8120, %v8114
    %v8595 = vpack.c.b16 %v8121, %v8115
    %v8596 = vpack.c.b16 %v8122, %v8116
    %v8597 = vpack.c.b16 %v8123, %v8117
    %v8598 = vpack.c.b16 %v8124, %v8118
    %v8599 = vpack.c.b16 %v8131, %v8125
    %v8600 = vpack.c.b16 %v8132, %v8126
    %v8601 = vpack.c.b16 %v8133, %v8127
    %v8602 = vpack.c.b16 %v8134, %v8128
    %v8603 = vpack.c.b16 %v8135, %v8129
    %v8604 = vpack.c.b16 %v8136, %v8130
    %v8605 = vpack.c.b16 %v8143, %v8137
    %v8606 = vpack.c.b16 %v8144, %v8138
    %v8607 = vpack.c.b16 %v8145, %v8139
    %v8608 = vpack.c.b16 %v8146, %v8140
    %v8609 = vpack.c.b16 %v8147, %v8141
    %v8610 = vpack.c.b16 %v8148, %v8142
    %v8611 = vpack.c.b16 %v8155, %v8149
    %v8612 = vpack.c.b16 %v8156, %v8150
    %v8613 = vpack.c.b16 %v8157, %v8151
    %v8614 = vpack.c.b16 %v8158, %v8152
    %v8615 = vpack.c.b16 %v8159, %v8153
    %v8616 = vpack.c.b16 %v8160, %v8154
    %v8617 = vpack.c.b16 %v8167, %v8161
    %v8618 = vpack.c.b16 %v8168, %v8162
    %v8619 = vpack.c.b16 %v8169, %v8163
    %v8620 = vpack.c.b16 %v8170, %v8164
    %v8621 = vpack.c.b16 %v8171, %v8165
    %v8622 = vpack.c.b16 %v8172, %v8166
    %v8623 = vpack.c.b16 %v8179, %v8173
    %v8624 = vpack.c.b16 %v8180, %v8174
    %v8625 = vpack.c.b16 %v8181, %v8175
    %v8626 = vpack.c.b16 %v8182, %v8176
    %v8627 = vpack.c.b16 %v8183, %v8177
    %v8628 = vpack.c.b16 %v8184, %v8178
    %v8629 = vpack.c.b16 %v8191, %v8185
    %v8630 = vpack.c.b16 %v8192, %v8186
    %v8631 = vpack.c.b16 %v8193, %v8187
    %v8632 = vpack.c.b16 %v8194, %v8188
    %v8633 = vpack.c.b16 %v8195, %v8189
    %v8634 = vpack.c.b16 %v8196, %v8190
    %v8635 = vpack.c.b16 %v8203, %v8197
    %v8636 = vpack.c.b16 %v8204, %v8198
    %v8637 = vpack.c.b16 %v8205, %v8199
    %v8638 = vpack.c.b16 %v8206, %v8200
    %v8639 = vpack.c.b16 %v8207, %v8201
    %v8640 = vpack.c.b16 %v8208, %v8202
    %v8641 = vpack.c.b16 %v8215, %v8209
    %v8642 = vpack.c.b16 %v8216, %v8210
    %v8643 = vpack.c.b16 %v8217, %v8211
    %v8644 = vpack.c.b16 %v8218, %v8212
    %v8645 = vpack.c.b16 %v8219, %v8213
    %v8646 = vpack.c.b16 %v8220, %v8214
    %v8647 = vpack.c.b16 %v8227, %v8221
    %v8648 = vpack.c.b16 %v8228, %v8222
    %v8649 = vpack.c.b16 %v8229, %v8223
    %v8650 = vpack.c.b16 %v8230, %v8224
    %v8651 = vpack.c.b16 %v8231, %v8225
    %v8652 = vpack.c.b16 %v8232, %v8226
    %v8653 = vpack.c.b16 %v8239, %v8233
    %v8654 = vpack.c.b16 %v8240, %v8234
    %v8655 = vpack.c.b16 %v8241, %v8235
    %v8656 = vpack.c.b16 %v8242, %v8236
    %v8657 = vpack.c.b16 %v8243, %v8237
    %v8658 = vpack.c.b16 %v8244, %v8238
    %v8659 = vpack.c.b16 %v8251, %v8245
    %v8660 = vpack.c.b16 %v8252, %v8246
    %v8661 = vpack.c.b16 %v8253, %v8247
    %v8662 = vpack.c.b16 %v8254, %v8248
    %v8663 = vpack.c.b16 %v8255, %v8249
    %v8664 = vpack.c.b16 %v8256, %v8250
    %v8665 = vpack.c.b16 %v8263, %v8257
    %v8666 = vpack.c.b16 %v8264, %v8258
    %v8667 = vpack.c.b16 %v8265, %v8259
    %v8668 = vpack.c.b16 %v8266, %v8260
    %v8669 = vpack.c.b16 %v8267, %v8261
    %v8670 = vpack.c.b16 %v8268, %v8262
    %v8671 = vpack.c.b16 %v8275, %v8269
    %v8672 = vpack.c.b16 %v8276, %v8270
    %v8673 = vpack.c.b16 %v8277, %v8271
    %v8674 = vpack.c.b16 %v8278, %v8272
    %v8675 = vpack.c.b16 %v8279, %v8273
    %v8676 = vpack.c.b16 %v8280, %v8274
    %v8677 = vpack.c.b16 %v8287, %v8281
    %v8678 = vpack.c.b16 %v8288, %v8282
    %v8679 = vpack.c.b16 %v8289, %v8283
    %v8680 = vpack.c.b16 %v8290, %v8284
    %v8681 = vpack.c.b16 %v8291, %v8285
    %v8682 = vpack.c.b16 %v8292, %v8286
    %v8683 = vpack.c.b16 %v8299, %v8293
    %v8684 = vpack.c.b16 %v8300, %v8294
    %v8685 = vpack.c.b16 %v8301, %v8295
    %v8686 = vpack.c.b16 %v8302, %v8296
    %v8687 = vpack.c.b16 %v8303, %v8297
    %v8688 = vpack.c.b16 %v8304, %v8298
    %v8689 = vpack.c.b16 %v8311, %v8305
    %v8690 = vpack.c.b16 %v8312, %v8306
    %v8691 = vpack.c.b16 %v8313, %v8307
    %v8692 = vpack.c.b16 %v8314, %v8308
    %v8693 = vpack.c.b16 %v8315, %v8309
    %v8694 = vpack.c.b16 %v8316, %v8310
    %v8695 = vpack.c.b16 %v8323, %v8317
    %v8696 = vpack.c.b16 %v8324, %v8318
    %v8697 = vpack.c.b16 %v8325, %v8319
    %v8698 = vpack.c.b16 %v8326, %v8320
    %v8699 = vpack.c.b16 %v8327, %v8321
    %v8700 = vpack.c.b16 %v8328, %v8322
    %v8701 = vpack.c.b16 %v8335, %v8329
    %v8702 = vpack.c.b16 %v8336, %v8330
    %v8703 = vpack.c.b16 %v8337, %v8331
    %v8704 = vpack.c.b16 %v8338, %v8332
    %v8705 = vpack.c.b16 %v8339, %v8333
    %v8706 = vpack.c.b16 %v8340, %v8334
    %v8707 = vpack.c.b16 %v8347, %v8341
    %v8708 = vpack.c.b16 %v8348, %v8342
    %v8709 = vpack.c.b16 %v8349, %v8343
    %v8710 = vpack.c.b16 %v8350, %v8344
    %v8711 = vpack.c.b16 %v8351, %v8345
    %v8712 = vpack.c.b16 %v8352, %v8346
    %v8713 = vpack.c.b16 %v8359, %v8353
    %v8714 = vpack.c.b16 %v8360, %v8354
    %v8715 = vpack.c.b16 %v8361, %v8355
    %v8716 = vpack.c.b16 %v8362, %v8356
    %v8717 = vpack.c.b16 %v8363, %v8357
    %v8718 = vpack.c.b16 %v8364, %v8358
    %v8719 = vpack.c.b16 %v8371, %v8365
    %v8720 = vpack.c.b16 %v8372, %v8366
    %v8721 = vpack.c.b16 %v8373, %v8367
    %v8722 = vpack.c.b16 %v8374, %v8368
    %v8723 = vpack.c.b16 %v8375, %v8369
    %v8724 = vpack.c.b16 %v8376, %v8370
    %v8725 = vpack.c.b16 %v8383, %v8377
    %v8726 = vpack.c.b16 %v8384, %v8378
    %v8727 = vpack.c.b16 %v8385, %v8379
    %v8728 = vpack.c.b16 %v8386, %v8380
    %v8729 = vpack.c.b16 %v8387, %v8381
    %v8730 = vpack.c.b16 %v8388, %v8382
    %v8731 = vpack.c.b16 %v8395, %v8389
    %v8732 = vpack.c.b16 %v8396, %v8390
    %v8733 = vpack.c.b16 %v8397, %v8391
    %v8734 = vpack.c.b16 %v8398, %v8392
    %v8735 = vpack.c.b16 %v8399, %v8393
    %v8736 = vpack.c.b16 %v8400, %v8394
    %v8737 = vpack.c.b16 %v8407, %v8401
    %v8738 = vpack.c.b16 %v8408, %v8402
    %v8739 = vpack.c.b16 %v8409, %v8403
    %v8740 = vpack.c.b16 %v8410, %v8404
    %v8741 = vpack.c.b16 %v8411, %v8405
    %v8742 = vpack.c.b16 %v8412, %v8406
    %v8743 = vpack.c.b16 %v8419, %v8413
    %v8744 = vpack.c.b16 %v8420, %v8414
    %v8745 = vpack.c.b16 %v8421, %v8415
    %v8746 = vpack.c.b16 %v8422, %v8416
    %v8747 = vpack.c.b16 %v8423, %v8417
    %v8748 = vpack.c.b16 %v8424, %v8418
    %v8749 = vpack.c.b16 %v8431, %v8425
    %v8750 = vpack.c.b16 %v8432, %v8426
    %v8751 = vpack.c.b16 %v8433, %v8427
    %v8752 = vpack.c.b16 %v8434, %v8428
    %v8753 = vpack.c.b16 %v8435, %v8429
    %v8754 = vpack.c.b16 %v8436, %v8430
    %v8755 = vpack.c.b16 %v8443, %v8437
    %v8756 = vpack.c.b16 %v8444, %v8438
    %v8757 = vpack.c.b16 %v8445, %v8439
    %v8758 = vpack.c.b16 %v8446, %v8440
    %v8759 = vpack.c.b16 %v8447, %v8441
    %v8760 = vpack.c.b16 %v8448, %v8442
    %v8761 = vpack.c.b16 %v8455, %v8449
    %v8762 = vpack.c.b16 %v8456, %v8450
    %v8763 = vpack.c.b16 %v8457, %v8451
    %v8764 = vpack.c.b16 %v8458, %v8452
    %v8765 = vpack.c.b16 %v8459, %v8453
    %v8766 = vpack.c.b16 %v8460, %v8454
    %v8767 = vpack.c.b16 %v8467, %v8461
    %v8768 = vpack.c.b16 %v8468, %v8462
    %v8769 = vpack.c.b16 %v8469, %v8463
    %v8770 = vpack.c.b16 %v8470, %v8464
    %v8771 = vpack.c.b16 %v8471, %v8465
    %v8772 = vpack.c.b16 %v8472, %v8466
    %v8773 = vpack.c.b16 %v8479, %v8473
    %v8774 = vpack.c.b16 %v8480, %v8474
    %v8775 = vpack.c.b16 %v8481, %v8475
    %v8776 = vpack.c.b16 %v8482, %v8476
    %v8777 = vpack.c.b16 %v8483, %v8477
    %v8778 = vpack.c.b16 %v8484, %v8478
    %v8779 = vpack.c.b16 %v8491, %v8485
    %v8780 = vpack.c.b16 %v8492, %v8486
    %v8781 = vpack.c.b16 %v8493, %v8487
    %v8782 = vpack.c.b16 %v8494, %v8488
    %v8783 = vpack.c.b16 %v8495, %v8489
    %v8784 = vpack.c.b16 %v8496, %v8490
    %9073 = vmatprep.subr.bf16.mxu0 %v8498
    %9074 = vmatpush1.bf16.msra.mxu0 %v8497
    %9075 = vmatprep.subr.bf16.mxu0 %v8504
    %9076 = vmatpush1.bf16.msra.mxu0 %v8503
    %9077 = vmatprep.subr.bf16.mxu0 %v8510
    %9078 = vmatpush1.bf16.msra.mxu0 %v8509
    %9079 = vmatprep.subr.bf16.mxu0 %v8516
    %9080 = vmatpush1.bf16.msra.mxu0 %v8515
    %9081 = vmatprep.subr.bf16.mxu0 %v8522
    %9082 = vmatpush1.bf16.msra.mxu0 %v8521
    %9083 = vmatprep.subr.bf16.mxu0 %v8528
    %9084 = vmatpush1.bf16.msra.mxu0 %v8527
    %9085 = vmatprep.subr.bf16.mxu0 %v8534
    %9086 = vmatpush1.bf16.msra.mxu0 %v8533
    %9087 = vmatprep.subr.bf16.mxu0 %v8540
    %9088 = vmatpush1.bf16.msra.mxu0 %v8539
    %9089 = vmatprep.subr.bf16.mxu0 %v8546
    %9090 = vmatpush1.bf16.msra.mxu0 %v8545
    %9091 = vmatprep.subr.bf16.mxu0 %v8552
    %9092 = vmatpush1.bf16.msra.mxu0 %v8551
    %9093 = vmatprep.subr.bf16.mxu0 %v8558
    %9094 = vmatpush1.bf16.msra.mxu0 %v8557
    %9095 = vmatprep.subr.bf16.mxu0 %v8564
    %9096 = vmatpush1.bf16.msra.mxu0 %v8563
    %9097 = vmatprep.subr.bf16.mxu0 %v8570
    %9098 = vmatpush1.bf16.msra.mxu0 %v8569
    %9099 = vmatprep.subr.bf16.mxu0 %v8576
    %9100 = vmatpush1.bf16.msra.mxu0 %v8575
    %9101 = vmatprep.subr.bf16.mxu0 %v8582
    %9102 = vmatpush1.bf16.msra.mxu0 %v8581
    %9103 = vmatprep.subr.bf16.mxu0 %v8588
    %9104 = vmatpush1.bf16.msra.mxu0 %v8587
    %9105 = vmatprep.mubr.bf16.mxu0 %v2657
    %9106 = vmatmul.mubr.bf16.gmra.mrb[0].mxu0 %v2656
    %v9107 = vpop.f32.mrb[0].mxu0
    %v9108 = vadd.f32 0.0, %v9107
    %v9109 = vpop.f32.mrb[0].mxu0
    %v9110 = vadd.f32 0.0, %v9109
    %v9111 = vpop.f32.mrb[0].mxu0
    %v9112 = vpop.f32.mrb[0].mxu0
    %9113 = vdwg.mxu0
    %9114 = vmatprep.subr.bf16.mxu0 %v8594
    %9115 = vmatpush1.bf16.msra.mxu0 %v8593
    %9116 = vmatprep.subr.bf16.mxu0 %v8600
    %9117 = vmatpush1.bf16.msra.mxu0 %v8599
    %9118 = vmatprep.subr.bf16.mxu0 %v8606
    %9119 = vmatpush1.bf16.msra.mxu0 %v8605
    %9120 = vmatprep.subr.bf16.mxu0 %v8612
    %9121 = vmatpush1.bf16.msra.mxu0 %v8611
    %9122 = vmatprep.subr.bf16.mxu0 %v8618
    %9123 = vmatpush1.bf16.msra.mxu0 %v8617
    %9124 = vmatprep.subr.bf16.mxu0 %v8624
    %9125 = vmatpush1.bf16.msra.mxu0 %v8623
    %9126 = vmatprep.subr.bf16.mxu0 %v8630
    %9127 = vmatpush1.bf16.msra.mxu0 %v8629
    %9128 = vmatprep.subr.bf16.mxu0 %v8636
    %9129 = vmatpush1.bf16.msra.mxu0 %v8635
    %9130 = vmatprep.subr.bf16.mxu0 %v8642
    %9131 = vmatpush1.bf16.msra.mxu0 %v8641
    %9132 = vmatprep.subr.bf16.mxu0 %v8648
    %9133 = vmatpush1.bf16.msra.mxu0 %v8647
    %9134 = vmatprep.subr.bf16.mxu0 %v8654
    %9135 = vmatpush1.bf16.msra.mxu0 %v8653
    %9136 = vmatprep.subr.bf16.mxu0 %v8660
    %9137 = vmatpush1.bf16.msra.mxu0 %v8659
    %9138 = vmatprep.subr.bf16.mxu0 %v8666
    %9139 = vmatpush1.bf16.msra.mxu0 %v8665
    %9140 = vmatprep.subr.bf16.mxu0 %v8672
    %9141 = vmatpush1.bf16.msra.mxu0 %v8671
    %9142 = vmatprep.subr.bf16.mxu0 %v8678
    %9143 = vmatpush1.bf16.msra.mxu0 %v8677
    %9144 = vmatprep.subr.bf16.mxu0 %v8684
    %9145 = vmatpush1.bf16.msra.mxu0 %v8683
    %9146 = vmatprep.mubr.bf16.mxu0 %v2659
    %9147 = vmatmul.mubr.bf16.gmra.mrb[0].mxu0 %v2658
    %v9148 = vpop.f32.mrb[0].mxu0
    %v9149 = vadd.f32 %v9108, %v9148
    %v9150 = vpop.f32.mrb[0].mxu0
    %v9151 = vadd.f32 %v9110, %v9150
    %v9152 = vpop.f32.mrb[0].mxu0
    %v9153 = vpop.f32.mrb[0].mxu0
    %9154 = vdwg.mxu0
    %9155 = vmatprep.subr.bf16.mxu0 %v8690
    %9156 = vmatpush1.bf16.msra.mxu0 %v8689
    %9157 = vmatprep.subr.bf16.mxu0 %v8696
    %9158 = vmatpush1.bf16.msra.mxu0 %v8695
    %9159 = vmatprep.subr.bf16.mxu0 %v8702
    %9160 = vmatpush1.bf16.msra.mxu0 %v8701
    %9161 = vmatprep.subr.bf16.mxu0 %v8708
    %9162 = vmatpush1.bf16.msra.mxu0 %v8707
    %9163 = vmatprep.subr.bf16.mxu0 %v8714
    %9164 = vmatpush1.bf16.msra.mxu0 %v8713
    %9165 = vmatprep.subr.bf16.mxu0 %v8720
    %9166 = vmatpush1.bf16.msra.mxu0 %v8719
    %9167 = vmatprep.subr.bf16.mxu0 %v8726
    %9168 = vmatpush1.bf16.msra.mxu0 %v8725
    %9169 = vmatprep.subr.bf16.mxu0 %v8732
    %9170 = vmatpush1.bf16.msra.mxu0 %v8731
    %9171 = vmatprep.subr.bf16.mxu0 %v8738
    %9172 = vmatpush1.bf16.msra.mxu0 %v8737
    %9173 = vmatprep.subr.bf16.mxu0 %v8744
    %9174 = vmatpush1.bf16.msra.mxu0 %v8743
    %9175 = vmatprep.subr.bf16.mxu0 %v8750
    %9176 = vmatpush1.bf16.msra.mxu0 %v8749
    %9177 = vmatprep.subr.bf16.mxu0 %v8756
    %9178 = vmatpush1.bf16.msra.mxu0 %v8755
    %9179 = vmatprep.subr.bf16.mxu0 %v8762
    %9180 = vmatpush1.bf16.msra.mxu0 %v8761
    %9181 = vmatprep.subr.bf16.mxu0 %v8768
    %9182 = vmatpush1.bf16.msra.mxu0 %v8767
    %9183 = vmatprep.subr.bf16.mxu0 %v8774
    %9184 = vmatpush1.bf16.msra.mxu0 %v8773
    %9185 = vmatprep.subr.bf16.mxu0 %v8780
    %9186 = vmatpush1.bf16.msra.mxu0 %v8779
    %9187 = vmatprep.mubr.bf16.mxu0 %v2661
    %9188 = vmatmul.mubr.bf16.gmra.mrb[0].mxu0 %v2660
    %v9189 = vpop.f32.mrb[0].mxu0
    %v9190 = vadd.f32 %v9149, %v9189
    %v9191 = vpop.f32.mrb[0].mxu0
    %v9192 = vadd.f32 %v9151, %v9191
    %v9193 = vpop.f32.mrb[0].mxu0
    %v9194 = vpop.f32.mrb[0].mxu0
    %9195 = vdwg.mxu0
    %9196 = vmatprep.subr.bf16.mxu0 %v8500
    %9197 = vmatpush1.bf16.msra.mxu0 %v8499
    %9198 = vmatprep.subr.bf16.mxu0 %v8506
    %9199 = vmatpush1.bf16.msra.mxu0 %v8505
    %9200 = vmatprep.subr.bf16.mxu0 %v8512
    %9201 = vmatpush1.bf16.msra.mxu0 %v8511
    %9202 = vmatprep.subr.bf16.mxu0 %v8518
    %9203 = vmatpush1.bf16.msra.mxu0 %v8517
    %9204 = vmatprep.subr.bf16.mxu0 %v8524
    %9205 = vmatpush1.bf16.msra.mxu0 %v8523
    %9206 = vmatprep.subr.bf16.mxu0 %v8530
    %9207 = vmatpush1.bf16.msra.mxu0 %v8529
    %9208 = vmatprep.subr.bf16.mxu0 %v8536
    %9209 = vmatpush1.bf16.msra.mxu0 %v8535
    %9210 = vmatprep.subr.bf16.mxu0 %v8542
    %9211 = vmatpush1.bf16.msra.mxu0 %v8541
    %9212 = vmatprep.subr.bf16.mxu0 %v8548
    %9213 = vmatpush1.bf16.msra.mxu0 %v8547
    %9214 = vmatprep.subr.bf16.mxu0 %v8554
    %9215 = vmatpush1.bf16.msra.mxu0 %v8553
    %9216 = vmatprep.subr.bf16.mxu0 %v8560
    %9217 = vmatpush1.bf16.msra.mxu0 %v8559
    %9218 = vmatprep.subr.bf16.mxu0 %v8566
    %9219 = vmatpush1.bf16.msra.mxu0 %v8565
    %9220 = vmatprep.subr.bf16.mxu0 %v8572
    %9221 = vmatpush1.bf16.msra.mxu0 %v8571
    %9222 = vmatprep.subr.bf16.mxu0 %v8578
    %9223 = vmatpush1.bf16.msra.mxu0 %v8577
    %9224 = vmatprep.subr.bf16.mxu0 %v8584
    %9225 = vmatpush1.bf16.msra.mxu0 %v8583
    %9226 = vmatprep.subr.bf16.mxu0 %v8590
    %9227 = vmatpush1.bf16.msra.mxu0 %v8589
    %9228 = vmatprep.mubr.bf16.mxu0 %v2657
    %9229 = vmatmul.mubr.bf16.gmra.mrb[0].mxu0 %v2656
    %v9230 = vpop.f32.mrb[0].mxu0
    %v9231 = vadd.f32 0.0, %v9230
    %v9232 = vpop.f32.mrb[0].mxu0
    %v9233 = vadd.f32 0.0, %v9232
    %v9234 = vpop.f32.mrb[0].mxu0
    %v9235 = vpop.f32.mrb[0].mxu0
    %9236 = vdwg.mxu0
    %9237 = vmatprep.subr.bf16.mxu0 %v8596
    %9238 = vmatpush1.bf16.msra.mxu0 %v8595
    %9239 = vmatprep.subr.bf16.mxu0 %v8602
    %9240 = vmatpush1.bf16.msra.mxu0 %v8601
    %9241 = vmatprep.subr.bf16.mxu0 %v8608
    %9242 = vmatpush1.bf16.msra.mxu0 %v8607
    %9243 = vmatprep.subr.bf16.mxu0 %v8614
    %9244 = vmatpush1.bf16.msra.mxu0 %v8613
    %9245 = vmatprep.subr.bf16.mxu0 %v8620
    %9246 = vmatpush1.bf16.msra.mxu0 %v8619
    %9247 = vmatprep.subr.bf16.mxu0 %v8626
    %9248 = vmatpush1.bf16.msra.mxu0 %v8625
    %9249 = vmatprep.subr.bf16.mxu0 %v8632
    %9250 = vmatpush1.bf16.msra.mxu0 %v8631
    %9251 = vmatprep.subr.bf16.mxu0 %v8638
    %9252 = vmatpush1.bf16.msra.mxu0 %v8637
    %9253 = vmatprep.subr.bf16.mxu0 %v8644
    %9254 = vmatpush1.bf16.msra.mxu0 %v8643
    %9255 = vmatprep.subr.bf16.mxu0 %v8650
    %9256 = vmatpush1.bf16.msra.mxu0 %v8649
    %9257 = vmatprep.subr.bf16.mxu0 %v8656
    %9258 = vmatpush1.bf16.msra.mxu0 %v8655
    %9259 = vmatprep.subr.bf16.mxu0 %v8662
    %9260 = vmatpush1.bf16.msra.mxu0 %v8661
    %9261 = vmatprep.subr.bf16.mxu0 %v8668
    %9262 = vmatpush1.bf16.msra.mxu0 %v8667
    %9263 = vmatprep.subr.bf16.mxu0 %v8674
    %9264 = vmatpush1.bf16.msra.mxu0 %v8673
    %9265 = vmatprep.subr.bf16.mxu0 %v8680
    %9266 = vmatpush1.bf16.msra.mxu0 %v8679
    %9267 = vmatprep.subr.bf16.mxu0 %v8686
    %9268 = vmatpush1.bf16.msra.mxu0 %v8685
    %9269 = vmatprep.mubr.bf16.mxu0 %v2659
    %9270 = vmatmul.mubr.bf16.gmra.mrb[0].mxu0 %v2658
    %v9271 = vpop.f32.mrb[0].mxu0
    %v9272 = vadd.f32 %v9231, %v9271
    %v9273 = vpop.f32.mrb[0].mxu0
    %v9274 = vadd.f32 %v9233, %v9273
    %v9275 = vpop.f32.mrb[0].mxu0
    %v9276 = vpop.f32.mrb[0].mxu0
    %9277 = vdwg.mxu0
    %9278 = vmatprep.subr.bf16.mxu0 %v8692
    %9279 = vmatpush1.bf16.msra.mxu0 %v8691
    %9280 = vmatprep.subr.bf16.mxu0 %v8698
    %9281 = vmatpush1.bf16.msra.mxu0 %v8697
    %9282 = vmatprep.subr.bf16.mxu0 %v8704
    %9283 = vmatpush1.bf16.msra.mxu0 %v8703
    %9284 = vmatprep.subr.bf16.mxu0 %v8710
    %9285 = vmatpush1.bf16.msra.mxu0 %v8709
    %9286 = vmatprep.subr.bf16.mxu0 %v8716
    %9287 = vmatpush1.bf16.msra.mxu0 %v8715
    %9288 = vmatprep.subr.bf16.mxu0 %v8722
    %9289 = vmatpush1.bf16.msra.mxu0 %v8721
    %9290 = vmatprep.subr.bf16.mxu0 %v8728
    %9291 = vmatpush1.bf16.msra.mxu0 %v8727
    %9292 = vmatprep.subr.bf16.mxu0 %v8734
    %9293 = vmatpush1.bf16.msra.mxu0 %v8733
    %9294 = vmatprep.subr.bf16.mxu0 %v8740
    %9295 = vmatpush1.bf16.msra.mxu0 %v8739
    %9296 = vmatprep.subr.bf16.mxu0 %v8746
    %9297 = vmatpush1.bf16.msra.mxu0 %v8745
    %9298 = vmatprep.subr.bf16.mxu0 %v8752
    %9299 = vmatpush1.bf16.msra.mxu0 %v8751
    %9300 = vmatprep.subr.bf16.mxu0 %v8758
    %9301 = vmatpush1.bf16.msra.mxu0 %v8757
    %9302 = vmatprep.subr.bf16.mxu0 %v8764
    %9303 = vmatpush1.bf16.msra.mxu0 %v8763
    %9304 = vmatprep.subr.bf16.mxu0 %v8770
    %9305 = vmatpush1.bf16.msra.mxu0 %v8769
    %9306 = vmatprep.subr.bf16.mxu0 %v8776
    %9307 = vmatpush1.bf16.msra.mxu0 %v8775
    %9308 = vmatprep.subr.bf16.mxu0 %v8782
    %9309 = vmatpush1.bf16.msra.mxu0 %v8781
    %9310 = vmatprep.mubr.bf16.mxu0 %v2661
    %9311 = vmatmul.mubr.bf16.gmra.mrb[0].mxu0 %v2660
    %v9312 = vpop.f32.mrb[0].mxu0
    %v9313 = vadd.f32 %v9272, %v9312
    %v9314 = vpop.f32.mrb[0].mxu0
    %v9315 = vadd.f32 %v9274, %v9314
    %v9316 = vpop.f32.mrb[0].mxu0
    %v9317 = vpop.f32.mrb[0].mxu0
    %9318 = vdwg.mxu0
    %9319 = vmatprep.subr.bf16.mxu0 %v8502
    %9320 = vmatpush1.bf16.msra.mxu0 %v8501
    %9321 = vmatprep.subr.bf16.mxu0 %v8508
    %9322 = vmatpush1.bf16.msra.mxu0 %v8507
    %9323 = vmatprep.subr.bf16.mxu0 %v8514
    %9324 = vmatpush1.bf16.msra.mxu0 %v8513
    %9325 = vmatprep.subr.bf16.mxu0 %v8520
    %9326 = vmatpush1.bf16.msra.mxu0 %v8519
    %9327 = vmatprep.subr.bf16.mxu0 %v8526
    %9328 = vmatpush1.bf16.msra.mxu0 %v8525
    %9329 = vmatprep.subr.bf16.mxu0 %v8532
    %9330 = vmatpush1.bf16.msra.mxu0 %v8531
    %9331 = vmatprep.subr.bf16.mxu0 %v8538
    %9332 = vmatpush1.bf16.msra.mxu0 %v8537
    %9333 = vmatprep.subr.bf16.mxu0 %v8544
    %9334 = vmatpush1.bf16.msra.mxu0 %v8543
    %9335 = vmatprep.subr.bf16.mxu0 %v8550
    %9336 = vmatpush1.bf16.msra.mxu0 %v8549
    %9337 = vmatprep.subr.bf16.mxu0 %v8556
    %9338 = vmatpush1.bf16.msra.mxu0 %v8555
    %9339 = vmatprep.subr.bf16.mxu0 %v8562
    %9340 = vmatpush1.bf16.msra.mxu0 %v8561
    %9341 = vmatprep.subr.bf16.mxu0 %v8568
    %9342 = vmatpush1.bf16.msra.mxu0 %v8567
    %9343 = vmatprep.subr.bf16.mxu0 %v8574
    %9344 = vmatpush1.bf16.msra.mxu0 %v8573
    %9345 = vmatprep.subr.bf16.mxu0 %v8580
    %9346 = vmatpush1.bf16.msra.mxu0 %v8579
    %9347 = vmatprep.subr.bf16.mxu0 %v8586
    %9348 = vmatpush1.bf16.msra.mxu0 %v8585
    %9349 = vmatprep.subr.bf16.mxu0 %v8592
    %9350 = vmatpush1.bf16.msra.mxu0 %v8591
    %9351 = vmatprep.mubr.bf16.mxu0 %v2657
    %9352 = vmatmul.mubr.bf16.gmra.mrb[0].mxu0 %v2656
    %v9353 = vpop.f32.mrb[0].mxu0
    %v9354 = vadd.f32 0.0, %v9353
    %v9355 = vpop.f32.mrb[0].mxu0
    %v9356 = vadd.f32 0.0, %v9355
    %v9357 = vpop.f32.mrb[0].mxu0
    %v9358 = vpop.f32.mrb[0].mxu0
    %9359 = vdwg.mxu0
    %9360 = vmatprep.subr.bf16.mxu0 %v8598
    %9361 = vmatpush1.bf16.msra.mxu0 %v8597
    %9362 = vmatprep.subr.bf16.mxu0 %v8604
    %9363 = vmatpush1.bf16.msra.mxu0 %v8603
    %9364 = vmatprep.subr.bf16.mxu0 %v8610
    %9365 = vmatpush1.bf16.msra.mxu0 %v8609
    %9366 = vmatprep.subr.bf16.mxu0 %v8616
    %9367 = vmatpush1.bf16.msra.mxu0 %v8615
    %9368 = vmatprep.subr.bf16.mxu0 %v8622
    %9369 = vmatpush1.bf16.msra.mxu0 %v8621
    %9370 = vmatprep.subr.bf16.mxu0 %v8628
    %9371 = vmatpush1.bf16.msra.mxu0 %v8627
    %9372 = vmatprep.subr.bf16.mxu0 %v8634
    %9373 = vmatpush1.bf16.msra.mxu0 %v8633
    %9374 = vmatprep.subr.bf16.mxu0 %v8640
    %9375 = vmatpush1.bf16.msra.mxu0 %v8639
    %9376 = vmatprep.subr.bf16.mxu0 %v8646
    %9377 = vmatpush1.bf16.msra.mxu0 %v8645
    %9378 = vmatprep.subr.bf16.mxu0 %v8652
    %9379 = vmatpush1.bf16.msra.mxu0 %v8651
    %9380 = vmatprep.subr.bf16.mxu0 %v8658
    %9381 = vmatpush1.bf16.msra.mxu0 %v8657
    %9382 = vmatprep.subr.bf16.mxu0 %v8664
    %9383 = vmatpush1.bf16.msra.mxu0 %v8663
    %9384 = vmatprep.subr.bf16.mxu0 %v8670
    %9385 = vmatpush1.bf16.msra.mxu0 %v8669
    %9386 = vmatprep.subr.bf16.mxu0 %v8676
    %9387 = vmatpush1.bf16.msra.mxu0 %v8675
    %9388 = vmatprep.subr.bf16.mxu0 %v8682
    %9389 = vmatpush1.bf16.msra.mxu0 %v8681
    %9390 = vmatprep.subr.bf16.mxu0 %v8688
    %9391 = vmatpush1.bf16.msra.mxu0 %v8687
    %9392 = vmatprep.mubr.bf16.mxu0 %v2659
    %9393 = vmatmul.mubr.bf16.gmra.mrb[0].mxu0 %v2658
    %v9394 = vpop.f32.mrb[0].mxu0
    %v9395 = vadd.f32 %v9354, %v9394
    %v9396 = vpop.f32.mrb[0].mxu0
    %v9397 = vadd.f32 %v9356, %v9396
    %v9398 = vpop.f32.mrb[0].mxu0
    %v9399 = vpop.f32.mrb[0].mxu0
    %9400 = vdwg.mxu0
    %9401 = vmatprep.subr.bf16.mxu0 %v8694
    %9402 = vmatpush1.bf16.msra.mxu0 %v8693
    %9403 = vmatprep.subr.bf16.mxu0 %v8700
    %9404 = vmatpush1.bf16.msra.mxu0 %v8699
    %9405 = vmatprep.subr.bf16.mxu0 %v8706
    %9406 = vmatpush1.bf16.msra.mxu0 %v8705
    %9407 = vmatprep.subr.bf16.mxu0 %v8712
    %9408 = vmatpush1.bf16.msra.mxu0 %v8711
    %9409 = vmatprep.subr.bf16.mxu0 %v8718
    %9410 = vmatpush1.bf16.msra.mxu0 %v8717
    %9411 = vmatprep.subr.bf16.mxu0 %v8724
    %9412 = vmatpush1.bf16.msra.mxu0 %v8723
    %9413 = vmatprep.subr.bf16.mxu0 %v8730
    %9414 = vmatpush1.bf16.msra.mxu0 %v8729
    %9415 = vmatprep.subr.bf16.mxu0 %v8736
    %9416 = vmatpush1.bf16.msra.mxu0 %v8735
    %9417 = vmatprep.subr.bf16.mxu0 %v8742
    %9418 = vmatpush1.bf16.msra.mxu0 %v8741
    %9419 = vmatprep.subr.bf16.mxu0 %v8748
    %9420 = vmatpush1.bf16.msra.mxu0 %v8747
    %9421 = vmatprep.subr.bf16.mxu0 %v8754
    %9422 = vmatpush1.bf16.msra.mxu0 %v8753
    %9423 = vmatprep.subr.bf16.mxu0 %v8760
    %9424 = vmatpush1.bf16.msra.mxu0 %v8759
    %9425 = vmatprep.subr.bf16.mxu0 %v8766
    %9426 = vmatpush1.bf16.msra.mxu0 %v8765
    %9427 = vmatprep.subr.bf16.mxu0 %v8772
    %9428 = vmatpush1.bf16.msra.mxu0 %v8771
    %9429 = vmatprep.subr.bf16.mxu0 %v8778
    %9430 = vmatpush1.bf16.msra.mxu0 %v8777
    %9431 = vmatprep.subr.bf16.mxu0 %v8784
    %9432 = vmatpush1.bf16.msra.mxu0 %v8783
    %9433 = vmatprep.mubr.bf16.mxu0 %v2661
    %9434 = vmatmul.mubr.bf16.gmra.mrb[0].mxu0 %v2660
    %v9435 = vpop.f32.mrb[0].mxu0
    %v9436 = vadd.f32 %v9395, %v9435
    %v9437 = vpop.f32.mrb[0].mxu0
    %v9438 = vadd.f32 %v9397, %v9437
    %v9439 = vpop.f32.mrb[0].mxu0
    %v9440 = vpop.f32.mrb[0].mxu0
    %9441 = vdwg.mxu0
    %v9442 = vadd.f32 %v7257, %v9190
    %v9443 = vadd.f32 %v7259, %v9192
    %v9444 = vadd.f32 %v7298, %v9313
    %v9445 = vadd.f32 %v7300, %v9315
    %v9446 = vadd.f32 %v7339, %v9436
    %v9447 = vadd.f32 %v7341, %v9438
    %v9448 = vld [vmem:[#allocation20] sm:$0x3f]
    %v9450 = vlaneseq
    %v9451 = vshrl.u32 %v9450, 7
    %v9452 = vsub.s32 0, %v9451
    %v9453 = vrot.slane %v9448, %v9452
    %v9454 = vlaneseq
    %v9455 = vshrl.u32 %v9454, 7
    %v9456 = vsub.s32 1, %v9455
    %v9457 = vrot.slane %v9448, %v9456
    %v9458 = vlaneseq
    %v9459 = vshrl.u32 %v9458, 7
    %v9460 = vsub.s32 2, %v9459
    %v9461 = vrot.slane %v9448, %v9460
    %v9462 = vlaneseq
    %v9463 = vshrl.u32 %v9462, 7
    %v9464 = vsub.s32 3, %v9463
    %v9465 = vrot.slane %v9448, %v9464
    %v9466 = vlaneseq
    %v9467 = vshrl.u32 %v9466, 7
    %v9468 = vsub.s32 4, %v9467
    %v9469 = vrot.slane %v9448, %v9468
    %v9470 = vlaneseq
    %v9471 = vshrl.u32 %v9470, 7
    %v9472 = vsub.s32 5, %v9471
    %v9473 = vrot.slane %v9448, %v9472
    %v9480 = vadd.f32 %v9442, %v9453
    %v9481 = vadd.f32 %v9443, %v9457
    %v9482 = vadd.f32 %v9444, %v9461
    %v9483 = vadd.f32 %v9445, %v9465
    %v9484 = vadd.f32 %v9446, %v9469
    %v9485 = vadd.f32 %v9447, %v9473
    %v9486 = vpack.c.bf16 %v9480, %v9480
    %v9487 = vpack.c.bf16 %v9481, %v9481
    %v9488 = vpack.c.bf16 %v9482, %v9482
    %v9489 = vpack.c.bf16 %v9483, %v9483
    %v9490 = vpack.c.bf16 %v9484, %v9484
    %v9491 = vpack.c.bf16 %v9485, %v9485
    %v9492 = vld [vmem:[#allocation22] sm:$0xff]
    %v9493 = vld [vmem:[#allocation22 + $0x8] sm:$0xff]
    %v9494 = vld [vmem:[#allocation22 + $0x10] sm:$0xff]
    %v9495 = vld [vmem:[#allocation22 + $0x18] sm:$0xff]
    %v9496 = vld [vmem:[#allocation22 + $0x20] sm:$0xff]
    %v9497 = vld [vmem:[#allocation22 + $0x28] sm:$0xff]
    %v9498 = vld [vmem:[#allocation22 + $0x30] sm:$0xff]
    %v9499 = vld [vmem:[#allocation22 + $0x38] sm:$0xff]
    %v9500 = vld [vmem:[#allocation22 + $0x40] sm:$0xff]
    %v9501 = vld [vmem:[#allocation22 + $0x48] sm:$0xff]
    %v9502 = vld [vmem:[#allocation22 + $0x50] sm:$0xff]
    %v9503 = vld [vmem:[#allocation22 + $0x58] sm:$0xff]
    %v9504 = vld [vmem:[#allocation22 + $0x60] sm:$0xff]
    %v9505 = vld [vmem:[#allocation22 + $0x68] sm:$0xff]
    %v9506 = vld [vmem:[#allocation22 + $0x70] sm:$0xff]
    %v9507 = vld [vmem:[#allocation22 + $0x78] sm:$0xff]
    %v9508 = vld [vmem:[#allocation22 + $0x80] sm:$0xff]
    %v9509 = vld [vmem:[#allocation22 + $0x88] sm:$0xff]
    %v9510 = vld [vmem:[#allocation22 + $0x90] sm:$0xff]
    %v9511 = vld [vmem:[#allocation22 + $0x98] sm:$0xff]
    %v9512 = vld [vmem:[#allocation22 + $0xa0] sm:$0xff]
    %v9513 = vld [vmem:[#allocation22 + $0xa8] sm:$0xff]
    %v9514 = vld [vmem:[#allocation22 + $0xb0] sm:$0xff]
    %v9515 = vld [vmem:[#allocation22 + $0xb8] sm:$0xff]
    %v9516 = vld [vmem:[#allocation22 + $0xc0] sm:$0xff]
    %v9517 = vld [vmem:[#allocation22 + $0xc8] sm:$0xff]
    %v9518 = vld [vmem:[#allocation22 + $0xd0] sm:$0xff]
    %v9519 = vld [vmem:[#allocation22 + $0xd8] sm:$0xff]
    %v9520 = vld [vmem:[#allocation22 + $0xe0] sm:$0xff]
    %v9521 = vld [vmem:[#allocation22 + $0xe8] sm:$0xff]
    %v9522 = vld [vmem:[#allocation22 + $0xf0] sm:$0xff]
    %v9523 = vld [vmem:[#allocation22 + $0xf8] sm:$0xff]
    %v9524 = vld [vmem:[#allocation22 + $0x100] sm:$0xff]
    %v9525 = vld [vmem:[#allocation22 + $0x108] sm:$0xff]
    %v9526 = vld [vmem:[#allocation22 + $0x110] sm:$0xff]
    %v9527 = vld [vmem:[#allocation22 + $0x118] sm:$0xff]
    %v9528 = vld [vmem:[#allocation22 + $0x120] sm:$0xff]
    %v9529 = vld [vmem:[#allocation22 + $0x128] sm:$0xff]
    %v9530 = vld [vmem:[#allocation22 + $0x130] sm:$0xff]
    %v9531 = vld [vmem:[#allocation22 + $0x138] sm:$0xff]
    %v9532 = vld [vmem:[#allocation22 + $0x140] sm:$0xff]
    %v9533 = vld [vmem:[#allocation22 + $0x148] sm:$0xff]
    %v9534 = vld [vmem:[#allocation22 + $0x150] sm:$0xff]
    %v9535 = vld [vmem:[#allocation22 + $0x158] sm:$0xff]
    %v9536 = vld [vmem:[#allocation22 + $0x160] sm:$0xff]
    %v9537 = vld [vmem:[#allocation22 + $0x168] sm:$0xff]
    %v9538 = vld [vmem:[#allocation22 + $0x170] sm:$0xff]
    %v9539 = vld [vmem:[#allocation22 + $0x178] sm:$0xff]
    %v9540 = vld [vmem:[#allocation22 + $0x180] sm:$0xff]
    %v9541 = vld [vmem:[#allocation22 + $0x188] sm:$0xff]
    %v9542 = vld [vmem:[#allocation22 + $0x190] sm:$0xff]
    %v9543 = vld [vmem:[#allocation22 + $0x198] sm:$0xff]
    %v9544 = vld [vmem:[#allocation22 + $0x1a0] sm:$0xff]
    %v9545 = vld [vmem:[#allocation22 + $0x1a8] sm:$0xff]
    %v9546 = vld [vmem:[#allocation22 + $0x1b0] sm:$0xff]
    %v9547 = vld [vmem:[#allocation22 + $0x1b8] sm:$0xff]
    %v9548 = vld [vmem:[#allocation22 + $0x1c0] sm:$0xff]
    %v9549 = vld [vmem:[#allocation22 + $0x1c8] sm:$0xff]
    %v9550 = vld [vmem:[#allocation22 + $0x1d0] sm:$0xff]
    %v9551 = vld [vmem:[#allocation22 + $0x1d8] sm:$0xff]
    %v9552 = vld [vmem:[#allocation22 + $0x1e0] sm:$0xff]
    %v9553 = vld [vmem:[#allocation22 + $0x1e8] sm:$0xff]
    %v9554 = vld [vmem:[#allocation22 + $0x1f0] sm:$0xff]
    %v9555 = vld [vmem:[#allocation22 + $0x1f8] sm:$0xff]
    %v9556 = vld [vmem:[#allocation22 + $0x200] sm:$0xff]
    %v9557 = vld [vmem:[#allocation22 + $0x208] sm:$0xff]
    %v9558 = vld [vmem:[#allocation22 + $0x210] sm:$0xff]
    %v9559 = vld [vmem:[#allocation22 + $0x218] sm:$0xff]
    %v9560 = vld [vmem:[#allocation22 + $0x220] sm:$0xff]
    %v9561 = vld [vmem:[#allocation22 + $0x228] sm:$0xff]
    %v9562 = vld [vmem:[#allocation22 + $0x230] sm:$0xff]
    %v9563 = vld [vmem:[#allocation22 + $0x238] sm:$0xff]
    %v9564 = vld [vmem:[#allocation22 + $0x240] sm:$0xff]
    %v9565 = vld [vmem:[#allocation22 + $0x248] sm:$0xff]
    %v9566 = vld [vmem:[#allocation22 + $0x250] sm:$0xff]
    %v9567 = vld [vmem:[#allocation22 + $0x258] sm:$0xff]
    %v9568 = vld [vmem:[#allocation22 + $0x260] sm:$0xff]
    %v9569 = vld [vmem:[#allocation22 + $0x268] sm:$0xff]
    %v9570 = vld [vmem:[#allocation22 + $0x270] sm:$0xff]
    %v9571 = vld [vmem:[#allocation22 + $0x278] sm:$0xff]
    %v9572 = vld [vmem:[#allocation22 + $0x280] sm:$0xff]
    %v9573 = vld [vmem:[#allocation22 + $0x288] sm:$0xff]
    %v9574 = vld [vmem:[#allocation22 + $0x290] sm:$0xff]
    %v9575 = vld [vmem:[#allocation22 + $0x298] sm:$0xff]
    %v9576 = vld [vmem:[#allocation22 + $0x2a0] sm:$0xff]
    %v9577 = vld [vmem:[#allocation22 + $0x2a8] sm:$0xff]
    %v9578 = vld [vmem:[#allocation22 + $0x2b0] sm:$0xff]
    %v9579 = vld [vmem:[#allocation22 + $0x2b8] sm:$0xff]
    %v9580 = vld [vmem:[#allocation22 + $0x2c0] sm:$0xff]
    %v9581 = vld [vmem:[#allocation22 + $0x2c8] sm:$0xff]
    %v9582 = vld [vmem:[#allocation22 + $0x2d0] sm:$0xff]
    %v9583 = vld [vmem:[#allocation22 + $0x2d8] sm:$0xff]
    %v9584 = vld [vmem:[#allocation22 + $0x2e0] sm:$0xff]
    %v9585 = vld [vmem:[#allocation22 + $0x2e8] sm:$0xff]
    %v9586 = vld [vmem:[#allocation22 + $0x2f0] sm:$0xff]
    %v9587 = vld [vmem:[#allocation22 + $0x2f8] sm:$0xff]
    %v9588 = vld [vmem:[#allocation22 + $0x300] sm:$0xff]
    %v9589 = vld [vmem:[#allocation22 + $0x308] sm:$0xff]
    %v9590 = vld [vmem:[#allocation22 + $0x310] sm:$0xff]
    %v9591 = vld [vmem:[#allocation22 + $0x318] sm:$0xff]
    %v9592 = vld [vmem:[#allocation22 + $0x320] sm:$0xff]
    %v9593 = vld [vmem:[#allocation22 + $0x328] sm:$0xff]
    %v9594 = vld [vmem:[#allocation22 + $0x330] sm:$0xff]
    %v9595 = vld [vmem:[#allocation22 + $0x338] sm:$0xff]
    %v9596 = vld [vmem:[#allocation22 + $0x340] sm:$0xff]
    %v9597 = vld [vmem:[#allocation22 + $0x348] sm:$0xff]
    %v9598 = vld [vmem:[#allocation22 + $0x350] sm:$0xff]
    %v9599 = vld [vmem:[#allocation22 + $0x358] sm:$0xff]
    %v9600 = vld [vmem:[#allocation22 + $0x360] sm:$0xff]
    %v9601 = vld [vmem:[#allocation22 + $0x368] sm:$0xff]
    %v9602 = vld [vmem:[#allocation22 + $0x370] sm:$0xff]
    %v9603 = vld [vmem:[#allocation22 + $0x378] sm:$0xff]
    %v9604 = vld [vmem:[#allocation22 + $0x380] sm:$0xff]
    %v9605 = vld [vmem:[#allocation22 + $0x388] sm:$0xff]
    %v9606 = vld [vmem:[#allocation22 + $0x390] sm:$0xff]
    %v9607 = vld [vmem:[#allocation22 + $0x398] sm:$0xff]
    %v9608 = vld [vmem:[#allocation22 + $0x3a0] sm:$0xff]
    %v9609 = vld [vmem:[#allocation22 + $0x3a8] sm:$0xff]
    %v9610 = vld [vmem:[#allocation22 + $0x3b0] sm:$0xff]
    %v9611 = vld [vmem:[#allocation22 + $0x3b8] sm:$0xff]
    %v9612 = vld [vmem:[#allocation22 + $0x3c0] sm:$0xff]
    %v9613 = vld [vmem:[#allocation22 + $0x3c8] sm:$0xff]
    %v9614 = vld [vmem:[#allocation22 + $0x3d0] sm:$0xff]
    %v9615 = vld [vmem:[#allocation22 + $0x3d8] sm:$0xff]
    %v9616 = vld [vmem:[#allocation22 + $0x3e0] sm:$0xff]
    %v9617 = vld [vmem:[#allocation22 + $0x3e8] sm:$0xff]
    %v9618 = vld [vmem:[#allocation22 + $0x3f0] sm:$0xff]
    %v9619 = vld [vmem:[#allocation22 + $0x3f8] sm:$0xff]
    %v9620 = vld [vmem:[#allocation22 + $0x400] sm:$0xff]
    %v9621 = vld [vmem:[#allocation22 + $0x408] sm:$0xff]
    %v9622 = vld [vmem:[#allocation22 + $0x410] sm:$0xff]
    %v9623 = vld [vmem:[#allocation22 + $0x418] sm:$0xff]
    %v9624 = vld [vmem:[#allocation22 + $0x420] sm:$0xff]
    %v9625 = vld [vmem:[#allocation22 + $0x428] sm:$0xff]
    %v9626 = vld [vmem:[#allocation22 + $0x430] sm:$0xff]
    %v9627 = vld [vmem:[#allocation22 + $0x438] sm:$0xff]
    %v9628 = vld [vmem:[#allocation22 + $0x440] sm:$0xff]
    %v9629 = vld [vmem:[#allocation22 + $0x448] sm:$0xff]
    %v9630 = vld [vmem:[#allocation22 + $0x450] sm:$0xff]
    %v9631 = vld [vmem:[#allocation22 + $0x458] sm:$0xff]
    %v9632 = vld [vmem:[#allocation22 + $0x460] sm:$0xff]
    %v9633 = vld [vmem:[#allocation22 + $0x468] sm:$0xff]
    %v9634 = vld [vmem:[#allocation22 + $0x470] sm:$0xff]
    %v9635 = vld [vmem:[#allocation22 + $0x478] sm:$0xff]
    %v9636 = vld [vmem:[#allocation22 + $0x480] sm:$0xff]
    %v9637 = vld [vmem:[#allocation22 + $0x488] sm:$0xff]
    %v9638 = vld [vmem:[#allocation22 + $0x490] sm:$0xff]
    %v9639 = vld [vmem:[#allocation22 + $0x498] sm:$0xff]
    %v9640 = vld [vmem:[#allocation22 + $0x4a0] sm:$0xff]
    %v9641 = vld [vmem:[#allocation22 + $0x4a8] sm:$0xff]
    %v9642 = vld [vmem:[#allocation22 + $0x4b0] sm:$0xff]
    %v9643 = vld [vmem:[#allocation22 + $0x4b8] sm:$0xff]
    %v9644 = vld [vmem:[#allocation22 + $0x4c0] sm:$0xff]
    %v9645 = vld [vmem:[#allocation22 + $0x4c8] sm:$0xff]
    %v9646 = vld [vmem:[#allocation22 + $0x4d0] sm:$0xff]
    %v9647 = vld [vmem:[#allocation22 + $0x4d8] sm:$0xff]
    %v9648 = vld [vmem:[#allocation22 + $0x4e0] sm:$0xff]
    %v9649 = vld [vmem:[#allocation22 + $0x4e8] sm:$0xff]
    %v9650 = vld [vmem:[#allocation22 + $0x4f0] sm:$0xff]
    %v9651 = vld [vmem:[#allocation22 + $0x4f8] sm:$0xff]
    %v9652 = vld [vmem:[#allocation22 + $0x500] sm:$0xff]
    %v9653 = vld [vmem:[#allocation22 + $0x508] sm:$0xff]
    %v9654 = vld [vmem:[#allocation22 + $0x510] sm:$0xff]
    %v9655 = vld [vmem:[#allocation22 + $0x518] sm:$0xff]
    %v9656 = vld [vmem:[#allocation22 + $0x520] sm:$0xff]
    %v9657 = vld [vmem:[#allocation22 + $0x528] sm:$0xff]
    %v9658 = vld [vmem:[#allocation22 + $0x530] sm:$0xff]
    %v9659 = vld [vmem:[#allocation22 + $0x538] sm:$0xff]
    %v9660 = vld [vmem:[#allocation22 + $0x540] sm:$0xff]
    %v9661 = vld [vmem:[#allocation22 + $0x548] sm:$0xff]
    %v9662 = vld [vmem:[#allocation22 + $0x550] sm:$0xff]
    %v9663 = vld [vmem:[#allocation22 + $0x558] sm:$0xff]
    %v9664 = vld [vmem:[#allocation22 + $0x560] sm:$0xff]
    %v9665 = vld [vmem:[#allocation22 + $0x568] sm:$0xff]
    %v9666 = vld [vmem:[#allocation22 + $0x570] sm:$0xff]
    %v9667 = vld [vmem:[#allocation22 + $0x578] sm:$0xff]
    %v9668 = vld [vmem:[#allocation22 + $0x580] sm:$0xff]
    %v9669 = vld [vmem:[#allocation22 + $0x588] sm:$0xff]
    %v9670 = vld [vmem:[#allocation22 + $0x590] sm:$0xff]
    %v9671 = vld [vmem:[#allocation22 + $0x598] sm:$0xff]
    %v9672 = vld [vmem:[#allocation22 + $0x5a0] sm:$0xff]
    %v9673 = vld [vmem:[#allocation22 + $0x5a8] sm:$0xff]
    %v9674 = vld [vmem:[#allocation22 + $0x5b0] sm:$0xff]
    %v9675 = vld [vmem:[#allocation22 + $0x5b8] sm:$0xff]
    %v9676 = vld [vmem:[#allocation22 + $0x5c0] sm:$0xff]
    %v9677 = vld [vmem:[#allocation22 + $0x5c8] sm:$0xff]
    %v9678 = vld [vmem:[#allocation22 + $0x5d0] sm:$0xff]
    %v9679 = vld [vmem:[#allocation22 + $0x5d8] sm:$0xff]
    %v9680 = vld [vmem:[#allocation22 + $0x5e0] sm:$0xff]
    %v9681 = vld [vmem:[#allocation22 + $0x5e8] sm:$0xff]
    %v9682 = vld [vmem:[#allocation22 + $0x5f0] sm:$0xff]
    %v9683 = vld [vmem:[#allocation22 + $0x5f8] sm:$0xff]
    %v9684 = vld [vmem:[#allocation22 + $0x600] sm:$0xff]
    %v9685 = vld [vmem:[#allocation22 + $0x608] sm:$0xff]
    %v9686 = vld [vmem:[#allocation22 + $0x610] sm:$0xff]
    %v9687 = vld [vmem:[#allocation22 + $0x618] sm:$0xff]
    %v9688 = vld [vmem:[#allocation22 + $0x620] sm:$0xff]
    %v9689 = vld [vmem:[#allocation22 + $0x628] sm:$0xff]
    %v9690 = vld [vmem:[#allocation22 + $0x630] sm:$0xff]
    %v9691 = vld [vmem:[#allocation22 + $0x638] sm:$0xff]
    %v9692 = vld [vmem:[#allocation22 + $0x640] sm:$0xff]
    %v9693 = vld [vmem:[#allocation22 + $0x648] sm:$0xff]
    %v9694 = vld [vmem:[#allocation22 + $0x650] sm:$0xff]
    %v9695 = vld [vmem:[#allocation22 + $0x658] sm:$0xff]
    %v9696 = vld [vmem:[#allocation22 + $0x660] sm:$0xff]
    %v9697 = vld [vmem:[#allocation22 + $0x668] sm:$0xff]
    %v9698 = vld [vmem:[#allocation22 + $0x670] sm:$0xff]
    %v9699 = vld [vmem:[#allocation22 + $0x678] sm:$0xff]
    %v9700 = vld [vmem:[#allocation22 + $0x680] sm:$0xff]
    %v9701 = vld [vmem:[#allocation22 + $0x688] sm:$0xff]
    %v9702 = vld [vmem:[#allocation22 + $0x690] sm:$0xff]
    %v9703 = vld [vmem:[#allocation22 + $0x698] sm:$0xff]
    %v9704 = vld [vmem:[#allocation22 + $0x6a0] sm:$0xff]
    %v9705 = vld [vmem:[#allocation22 + $0x6a8] sm:$0xff]
    %v9706 = vld [vmem:[#allocation22 + $0x6b0] sm:$0xff]
    %v9707 = vld [vmem:[#allocation22 + $0x6b8] sm:$0xff]
    %v9708 = vld [vmem:[#allocation22 + $0x6c0] sm:$0xff]
    %v9709 = vld [vmem:[#allocation22 + $0x6c8] sm:$0xff]
    %v9710 = vld [vmem:[#allocation22 + $0x6d0] sm:$0xff]
    %v9711 = vld [vmem:[#allocation22 + $0x6d8] sm:$0xff]
    %v9712 = vld [vmem:[#allocation22 + $0x6e0] sm:$0xff]
    %v9713 = vld [vmem:[#allocation22 + $0x6e8] sm:$0xff]
    %v9714 = vld [vmem:[#allocation22 + $0x6f0] sm:$0xff]
    %v9715 = vld [vmem:[#allocation22 + $0x6f8] sm:$0xff]
    %v9716 = vld [vmem:[#allocation22 + $0x700] sm:$0xff]
    %v9717 = vld [vmem:[#allocation22 + $0x708] sm:$0xff]
    %v9718 = vld [vmem:[#allocation22 + $0x710] sm:$0xff]
    %v9719 = vld [vmem:[#allocation22 + $0x718] sm:$0xff]
    %v9720 = vld [vmem:[#allocation22 + $0x720] sm:$0xff]
    %v9721 = vld [vmem:[#allocation22 + $0x728] sm:$0xff]
    %v9722 = vld [vmem:[#allocation22 + $0x730] sm:$0xff]
    %v9723 = vld [vmem:[#allocation22 + $0x738] sm:$0xff]
    %v9724 = vld [vmem:[#allocation22 + $0x740] sm:$0xff]
    %v9725 = vld [vmem:[#allocation22 + $0x748] sm:$0xff]
    %v9726 = vld [vmem:[#allocation22 + $0x750] sm:$0xff]
    %v9727 = vld [vmem:[#allocation22 + $0x758] sm:$0xff]
    %v9728 = vld [vmem:[#allocation22 + $0x760] sm:$0xff]
    %v9729 = vld [vmem:[#allocation22 + $0x768] sm:$0xff]
    %v9730 = vld [vmem:[#allocation22 + $0x770] sm:$0xff]
    %v9731 = vld [vmem:[#allocation22 + $0x778] sm:$0xff]
    %v9732 = vld [vmem:[#allocation22 + $0x780] sm:$0xff]
    %v9733 = vld [vmem:[#allocation22 + $0x788] sm:$0xff]
    %v9734 = vld [vmem:[#allocation22 + $0x790] sm:$0xff]
    %v9735 = vld [vmem:[#allocation22 + $0x798] sm:$0xff]
    %v9736 = vld [vmem:[#allocation22 + $0x7a0] sm:$0xff]
    %v9737 = vld [vmem:[#allocation22 + $0x7a8] sm:$0xff]
    %v9738 = vld [vmem:[#allocation22 + $0x7b0] sm:$0xff]
    %v9739 = vld [vmem:[#allocation22 + $0x7b8] sm:$0xff]
    %v9740 = vld [vmem:[#allocation22 + $0x7c0] sm:$0xff]
    %v9741 = vld [vmem:[#allocation22 + $0x7c8] sm:$0xff]
    %v9742 = vld [vmem:[#allocation22 + $0x7d0] sm:$0xff]
    %v9743 = vld [vmem:[#allocation22 + $0x7d8] sm:$0xff]
    %v9744 = vld [vmem:[#allocation22 + $0x7e0] sm:$0xff]
    %v9745 = vld [vmem:[#allocation22 + $0x7e8] sm:$0xff]
    %v9746 = vld [vmem:[#allocation22 + $0x7f0] sm:$0xff]
    %v9747 = vld [vmem:[#allocation22 + $0x7f8] sm:$0xff]
    %v9748 = vld [vmem:[#allocation22 + $0x800] sm:$0xff]
    %v9749 = vld [vmem:[#allocation22 + $0x808] sm:$0xff]
    %v9750 = vld [vmem:[#allocation22 + $0x810] sm:$0xff]
    %v9751 = vld [vmem:[#allocation22 + $0x818] sm:$0xff]
    %v9752 = vld [vmem:[#allocation22 + $0x820] sm:$0xff]
    %v9753 = vld [vmem:[#allocation22 + $0x828] sm:$0xff]
    %v9754 = vld [vmem:[#allocation22 + $0x830] sm:$0xff]
    %v9755 = vld [vmem:[#allocation22 + $0x838] sm:$0xff]
    %v9756 = vld [vmem:[#allocation22 + $0x840] sm:$0xff]
    %v9757 = vld [vmem:[#allocation22 + $0x848] sm:$0xff]
    %v9758 = vld [vmem:[#allocation22 + $0x850] sm:$0xff]
    %v9759 = vld [vmem:[#allocation22 + $0x858] sm:$0xff]
    %v9760 = vld [vmem:[#allocation22 + $0x860] sm:$0xff]
    %v9761 = vld [vmem:[#allocation22 + $0x868] sm:$0xff]
    %v9762 = vld [vmem:[#allocation22 + $0x870] sm:$0xff]
    %v9763 = vld [vmem:[#allocation22 + $0x878] sm:$0xff]
    %v9764 = vld [vmem:[#allocation22 + $0x880] sm:$0xff]
    %v9765 = vld [vmem:[#allocation22 + $0x888] sm:$0xff]
    %v9766 = vld [vmem:[#allocation22 + $0x890] sm:$0xff]
    %v9767 = vld [vmem:[#allocation22 + $0x898] sm:$0xff]
    %v9768 = vld [vmem:[#allocation22 + $0x8a0] sm:$0xff]
    %v9769 = vld [vmem:[#allocation22 + $0x8a8] sm:$0xff]
    %v9770 = vld [vmem:[#allocation22 + $0x8b0] sm:$0xff]
    %v9771 = vld [vmem:[#allocation22 + $0x8b8] sm:$0xff]
    %v9772 = vld [vmem:[#allocation22 + $0x8c0] sm:$0xff]
    %v9773 = vld [vmem:[#allocation22 + $0x8c8] sm:$0xff]
    %v9774 = vld [vmem:[#allocation22 + $0x8d0] sm:$0xff]
    %v9775 = vld [vmem:[#allocation22 + $0x8d8] sm:$0xff]
    %v9776 = vld [vmem:[#allocation22 + $0x8e0] sm:$0xff]
    %v9777 = vld [vmem:[#allocation22 + $0x8e8] sm:$0xff]
    %v9778 = vld [vmem:[#allocation22 + $0x8f0] sm:$0xff]
    %v9779 = vld [vmem:[#allocation22 + $0x8f8] sm:$0xff]
    %v10068 = vunpack.c.l.b16 %v9492
    %v10069 = vunpack.c.h.b16 %v9492
    %v10070 = vunpack.c.l.b16 %v9493
    %v10071 = vunpack.c.h.b16 %v9493
    %v10072 = vunpack.c.l.b16 %v9494
    %v10073 = vunpack.c.h.b16 %v9494
    %v10074 = vunpack.c.l.b16 %v9495
    %v10075 = vunpack.c.h.b16 %v9495
    %v10076 = vunpack.c.l.b16 %v9496
    %v10077 = vunpack.c.h.b16 %v9496
    %v10078 = vunpack.c.l.b16 %v9497
    %v10079 = vunpack.c.h.b16 %v9497
    %v10080 = vunpack.c.l.b16 %v9498
    %v10081 = vunpack.c.h.b16 %v9498
    %v10082 = vunpack.c.l.b16 %v9499
    %v10083 = vunpack.c.h.b16 %v9499
    %v10084 = vunpack.c.l.b16 %v9500
    %v10085 = vunpack.c.h.b16 %v9500
    %v10086 = vunpack.c.l.b16 %v9501
    %v10087 = vunpack.c.h.b16 %v9501
    %v10088 = vunpack.c.l.b16 %v9502
    %v10089 = vunpack.c.h.b16 %v9502
    %v10090 = vunpack.c.l.b16 %v9503
    %v10091 = vunpack.c.h.b16 %v9503
    %v10092 = vunpack.c.l.b16 %v9504
    %v10093 = vunpack.c.h.b16 %v9504
    %v10094 = vunpack.c.l.b16 %v9505
    %v10095 = vunpack.c.h.b16 %v9505
    %v10096 = vunpack.c.l.b16 %v9506
    %v10097 = vunpack.c.h.b16 %v9506
    %v10098 = vunpack.c.l.b16 %v9507
    %v10099 = vunpack.c.h.b16 %v9507
    %v10100 = vunpack.c.l.b16 %v9508
    %v10101 = vunpack.c.h.b16 %v9508
    %v10102 = vunpack.c.l.b16 %v9509
    %v10103 = vunpack.c.h.b16 %v9509
    %v10104 = vunpack.c.l.b16 %v9510
    %v10105 = vunpack.c.h.b16 %v9510
    %v10106 = vunpack.c.l.b16 %v9511
    %v10107 = vunpack.c.h.b16 %v9511
    %v10108 = vunpack.c.l.b16 %v9512
    %v10109 = vunpack.c.h.b16 %v9512
    %v10110 = vunpack.c.l.b16 %v9513
    %v10111 = vunpack.c.h.b16 %v9513
    %v10112 = vunpack.c.l.b16 %v9514
    %v10113 = vunpack.c.h.b16 %v9514
    %v10114 = vunpack.c.l.b16 %v9515
    %v10115 = vunpack.c.h.b16 %v9515
    %v10116 = vunpack.c.l.b16 %v9516
    %v10117 = vunpack.c.h.b16 %v9516
    %v10118 = vunpack.c.l.b16 %v9517
    %v10119 = vunpack.c.h.b16 %v9517
    %v10120 = vunpack.c.l.b16 %v9518
    %v10121 = vunpack.c.h.b16 %v9518
    %v10122 = vunpack.c.l.b16 %v9519
    %v10123 = vunpack.c.h.b16 %v9519
    %v10124 = vunpack.c.l.b16 %v9520
    %v10125 = vunpack.c.h.b16 %v9520
    %v10126 = vunpack.c.l.b16 %v9521
    %v10127 = vunpack.c.h.b16 %v9521
    %v10128 = vunpack.c.l.b16 %v9522
    %v10129 = vunpack.c.h.b16 %v9522
    %v10130 = vunpack.c.l.b16 %v9523
    %v10131 = vunpack.c.h.b16 %v9523
    %v10132 = vunpack.c.l.b16 %v9524
    %v10133 = vunpack.c.h.b16 %v9524
    %v10134 = vunpack.c.l.b16 %v9525
    %v10135 = vunpack.c.h.b16 %v9525
    %v10136 = vunpack.c.l.b16 %v9526
    %v10137 = vunpack.c.h.b16 %v9526
    %v10138 = vunpack.c.l.b16 %v9527
    %v10139 = vunpack.c.h.b16 %v9527
    %v10140 = vunpack.c.l.b16 %v9528
    %v10141 = vunpack.c.h.b16 %v9528
    %v10142 = vunpack.c.l.b16 %v9529
    %v10143 = vunpack.c.h.b16 %v9529
    %v10144 = vunpack.c.l.b16 %v9530
    %v10145 = vunpack.c.h.b16 %v9530
    %v10146 = vunpack.c.l.b16 %v9531
    %v10147 = vunpack.c.h.b16 %v9531
    %v10148 = vunpack.c.l.b16 %v9532
    %v10149 = vunpack.c.h.b16 %v9532
    %v10150 = vunpack.c.l.b16 %v9533
    %v10151 = vunpack.c.h.b16 %v9533
    %v10152 = vunpack.c.l.b16 %v9534
    %v10153 = vunpack.c.h.b16 %v9534
    %v10154 = vunpack.c.l.b16 %v9535
    %v10155 = vunpack.c.h.b16 %v9535
    %v10156 = vunpack.c.l.b16 %v9536
    %v10157 = vunpack.c.h.b16 %v9536
    %v10158 = vunpack.c.l.b16 %v9537
    %v10159 = vunpack.c.h.b16 %v9537
    %v10160 = vunpack.c.l.b16 %v9538
    %v10161 = vunpack.c.h.b16 %v9538
    %v10162 = vunpack.c.l.b16 %v9539
    %v10163 = vunpack.c.h.b16 %v9539
    %v10164 = vunpack.c.l.b16 %v9540
    %v10165 = vunpack.c.h.b16 %v9540
    %v10166 = vunpack.c.l.b16 %v9541
    %v10167 = vunpack.c.h.b16 %v9541
    %v10168 = vunpack.c.l.b16 %v9542
    %v10169 = vunpack.c.h.b16 %v9542
    %v10170 = vunpack.c.l.b16 %v9543
    %v10171 = vunpack.c.h.b16 %v9543
    %v10172 = vunpack.c.l.b16 %v9544
    %v10173 = vunpack.c.h.b16 %v9544
    %v10174 = vunpack.c.l.b16 %v9545
    %v10175 = vunpack.c.h.b16 %v9545
    %v10176 = vunpack.c.l.b16 %v9546
    %v10177 = vunpack.c.h.b16 %v9546
    %v10178 = vunpack.c.l.b16 %v9547
    %v10179 = vunpack.c.h.b16 %v9547
    %v10180 = vunpack.c.l.b16 %v9548
    %v10181 = vunpack.c.h.b16 %v9548
    %v10182 = vunpack.c.l.b16 %v9549
    %v10183 = vunpack.c.h.b16 %v9549
    %v10184 = vunpack.c.l.b16 %v9550
    %v10185 = vunpack.c.h.b16 %v9550
    %v10186 = vunpack.c.l.b16 %v9551
    %v10187 = vunpack.c.h.b16 %v9551
    %v10188 = vunpack.c.l.b16 %v9552
    %v10189 = vunpack.c.h.b16 %v9552
    %v10190 = vunpack.c.l.b16 %v9553
    %v10191 = vunpack.c.h.b16 %v9553
    %v10192 = vunpack.c.l.b16 %v9554
    %v10193 = vunpack.c.h.b16 %v9554
    %v10194 = vunpack.c.l.b16 %v9555
    %v10195 = vunpack.c.h.b16 %v9555
    %v10196 = vunpack.c.l.b16 %v9556
    %v10197 = vunpack.c.h.b16 %v9556
    %v10198 = vunpack.c.l.b16 %v9557
    %v10199 = vunpack.c.h.b16 %v9557
    %v10200 = vunpack.c.l.b16 %v9558
    %v10201 = vunpack.c.h.b16 %v9558
    %v10202 = vunpack.c.l.b16 %v9559
    %v10203 = vunpack.c.h.b16 %v9559
    %v10204 = vunpack.c.l.b16 %v9560
    %v10205 = vunpack.c.h.b16 %v9560
    %v10206 = vunpack.c.l.b16 %v9561
    %v10207 = vunpack.c.h.b16 %v9561
    %v10208 = vunpack.c.l.b16 %v9562
    %v10209 = vunpack.c.h.b16 %v9562
    %v10210 = vunpack.c.l.b16 %v9563
    %v10211 = vunpack.c.h.b16 %v9563
    %v10212 = vunpack.c.l.b16 %v9564
    %v10213 = vunpack.c.h.b16 %v9564
    %v10214 = vunpack.c.l.b16 %v9565
    %v10215 = vunpack.c.h.b16 %v9565
    %v10216 = vunpack.c.l.b16 %v9566
    %v10217 = vunpack.c.h.b16 %v9566
    %v10218 = vunpack.c.l.b16 %v9567
    %v10219 = vunpack.c.h.b16 %v9567
    %v10220 = vunpack.c.l.b16 %v9568
    %v10221 = vunpack.c.h.b16 %v9568
    %v10222 = vunpack.c.l.b16 %v9569
    %v10223 = vunpack.c.h.b16 %v9569
    %v10224 = vunpack.c.l.b16 %v9570
    %v10225 = vunpack.c.h.b16 %v9570
    %v10226 = vunpack.c.l.b16 %v9571
    %v10227 = vunpack.c.h.b16 %v9571
    %v10228 = vunpack.c.l.b16 %v9572
    %v10229 = vunpack.c.h.b16 %v9572
    %v10230 = vunpack.c.l.b16 %v9573
    %v10231 = vunpack.c.h.b16 %v9573
    %v10232 = vunpack.c.l.b16 %v9574
    %v10233 = vunpack.c.h.b16 %v9574
    %v10234 = vunpack.c.l.b16 %v9575
    %v10235 = vunpack.c.h.b16 %v9575
    %v10236 = vunpack.c.l.b16 %v9576
    %v10237 = vunpack.c.h.b16 %v9576
    %v10238 = vunpack.c.l.b16 %v9577
    %v10239 = vunpack.c.h.b16 %v9577
    %v10240 = vunpack.c.l.b16 %v9578
    %v10241 = vunpack.c.h.b16 %v9578
    %v10242 = vunpack.c.l.b16 %v9579
    %v10243 = vunpack.c.h.b16 %v9579
    %v10244 = vunpack.c.l.b16 %v9580
    %v10245 = vunpack.c.h.b16 %v9580
    %v10246 = vunpack.c.l.b16 %v9581
    %v10247 = vunpack.c.h.b16 %v9581
    %v10248 = vunpack.c.l.b16 %v9582
    %v10249 = vunpack.c.h.b16 %v9582
    %v10250 = vunpack.c.l.b16 %v9583
    %v10251 = vunpack.c.h.b16 %v9583
    %v10252 = vunpack.c.l.b16 %v9584
    %v10253 = vunpack.c.h.b16 %v9584
    %v10254 = vunpack.c.l.b16 %v9585
    %v10255 = vunpack.c.h.b16 %v9585
    %v10256 = vunpack.c.l.b16 %v9586
    %v10257 = vunpack.c.h.b16 %v9586
    %v10258 = vunpack.c.l.b16 %v9587
    %v10259 = vunpack.c.h.b16 %v9587
    %v10260 = vunpack.c.l.b16 %v9588
    %v10261 = vunpack.c.h.b16 %v9588
    %v10262 = vunpack.c.l.b16 %v9589
    %v10263 = vunpack.c.h.b16 %v9589
    %v10264 = vunpack.c.l.b16 %v9590
    %v10265 = vunpack.c.h.b16 %v9590
    %v10266 = vunpack.c.l.b16 %v9591
    %v10267 = vunpack.c.h.b16 %v9591
    %v10268 = vunpack.c.l.b16 %v9592
    %v10269 = vunpack.c.h.b16 %v9592
    %v10270 = vunpack.c.l.b16 %v9593
    %v10271 = vunpack.c.h.b16 %v9593
    %v10272 = vunpack.c.l.b16 %v9594
    %v10273 = vunpack.c.h.b16 %v9594
    %v10274 = vunpack.c.l.b16 %v9595
    %v10275 = vunpack.c.h.b16 %v9595
    %v10276 = vunpack.c.l.b16 %v9596
    %v10277 = vunpack.c.h.b16 %v9596
    %v10278 = vunpack.c.l.b16 %v9597
    %v10279 = vunpack.c.h.b16 %v9597
    %v10280 = vunpack.c.l.b16 %v9598
    %v10281 = vunpack.c.h.b16 %v9598
    %v10282 = vunpack.c.l.b16 %v9599
    %v10283 = vunpack.c.h.b16 %v9599
    %v10284 = vunpack.c.l.b16 %v9600
    %v10285 = vunpack.c.h.b16 %v9600
    %v10286 = vunpack.c.l.b16 %v9601
    %v10287 = vunpack.c.h.b16 %v9601
    %v10288 = vunpack.c.l.b16 %v9602
    %v10289 = vunpack.c.h.b16 %v9602
    %v10290 = vunpack.c.l.b16 %v9603
    %v10291 = vunpack.c.h.b16 %v9603
    %v10292 = vunpack.c.l.b16 %v9604
    %v10293 = vunpack.c.h.b16 %v9604
    %v10294 = vunpack.c.l.b16 %v9605
    %v10295 = vunpack.c.h.b16 %v9605
    %v10296 = vunpack.c.l.b16 %v9606
    %v10297 = vunpack.c.h.b16 %v9606
    %v10298 = vunpack.c.l.b16 %v9607
    %v10299 = vunpack.c.h.b16 %v9607
    %v10300 = vunpack.c.l.b16 %v9608
    %v10301 = vunpack.c.h.b16 %v9608
    %v10302 = vunpack.c.l.b16 %v9609
    %v10303 = vunpack.c.h.b16 %v9609
    %v10304 = vunpack.c.l.b16 %v9610
    %v10305 = vunpack.c.h.b16 %v9610
    %v10306 = vunpack.c.l.b16 %v9611
    %v10307 = vunpack.c.h.b16 %v9611
    %v10308 = vunpack.c.l.b16 %v9612
    %v10309 = vunpack.c.h.b16 %v9612
    %v10310 = vunpack.c.l.b16 %v9613
    %v10311 = vunpack.c.h.b16 %v9613
    %v10312 = vunpack.c.l.b16 %v9614
    %v10313 = vunpack.c.h.b16 %v9614
    %v10314 = vunpack.c.l.b16 %v9615
    %v10315 = vunpack.c.h.b16 %v9615
    %v10316 = vunpack.c.l.b16 %v9616
    %v10317 = vunpack.c.h.b16 %v9616
    %v10318 = vunpack.c.l.b16 %v9617
    %v10319 = vunpack.c.h.b16 %v9617
    %v10320 = vunpack.c.l.b16 %v9618
    %v10321 = vunpack.c.h.b16 %v9618
    %v10322 = vunpack.c.l.b16 %v9619
    %v10323 = vunpack.c.h.b16 %v9619
    %v10324 = vunpack.c.l.b16 %v9620
    %v10325 = vunpack.c.h.b16 %v9620
    %v10326 = vunpack.c.l.b16 %v9621
    %v10327 = vunpack.c.h.b16 %v9621
    %v10328 = vunpack.c.l.b16 %v9622
    %v10329 = vunpack.c.h.b16 %v9622
    %v10330 = vunpack.c.l.b16 %v9623
    %v10331 = vunpack.c.h.b16 %v9623
    %v10332 = vunpack.c.l.b16 %v9624
    %v10333 = vunpack.c.h.b16 %v9624
    %v10334 = vunpack.c.l.b16 %v9625
    %v10335 = vunpack.c.h.b16 %v9625
    %v10336 = vunpack.c.l.b16 %v9626
    %v10337 = vunpack.c.h.b16 %v9626
    %v10338 = vunpack.c.l.b16 %v9627
    %v10339 = vunpack.c.h.b16 %v9627
    %v10340 = vunpack.c.l.b16 %v9628
    %v10341 = vunpack.c.h.b16 %v9628
    %v10342 = vunpack.c.l.b16 %v9629
    %v10343 = vunpack.c.h.b16 %v9629
    %v10344 = vunpack.c.l.b16 %v9630
    %v10345 = vunpack.c.h.b16 %v9630
    %v10346 = vunpack.c.l.b16 %v9631
    %v10347 = vunpack.c.h.b16 %v9631
    %v10348 = vunpack.c.l.b16 %v9632
    %v10349 = vunpack.c.h.b16 %v9632
    %v10350 = vunpack.c.l.b16 %v9633
    %v10351 = vunpack.c.h.b16 %v9633
    %v10352 = vunpack.c.l.b16 %v9634
    %v10353 = vunpack.c.h.b16 %v9634
    %v10354 = vunpack.c.l.b16 %v9635
    %v10355 = vunpack.c.h.b16 %v9635
    %v10356 = vunpack.c.l.b16 %v9636
    %v10357 = vunpack.c.h.b16 %v9636
    %v10358 = vunpack.c.l.b16 %v9637
    %v10359 = vunpack.c.h.b16 %v9637
    %v10360 = vunpack.c.l.b16 %v9638
    %v10361 = vunpack.c.h.b16 %v9638
    %v10362 = vunpack.c.l.b16 %v9639
    %v10363 = vunpack.c.h.b16 %v9639
    %v10364 = vunpack.c.l.b16 %v9640
    %v10365 = vunpack.c.h.b16 %v9640
    %v10366 = vunpack.c.l.b16 %v9641
    %v10367 = vunpack.c.h.b16 %v9641
    %v10368 = vunpack.c.l.b16 %v9642
    %v10369 = vunpack.c.h.b16 %v9642
    %v10370 = vunpack.c.l.b16 %v9643
    %v10371 = vunpack.c.h.b16 %v9643
    %v10372 = vunpack.c.l.b16 %v9644
    %v10373 = vunpack.c.h.b16 %v9644
    %v10374 = vunpack.c.l.b16 %v9645
    %v10375 = vunpack.c.h.b16 %v9645
    %v10376 = vunpack.c.l.b16 %v9646
    %v10377 = vunpack.c.h.b16 %v9646
    %v10378 = vunpack.c.l.b16 %v9647
    %v10379 = vunpack.c.h.b16 %v9647
    %v10380 = vunpack.c.l.b16 %v9648
    %v10381 = vunpack.c.h.b16 %v9648
    %v10382 = vunpack.c.l.b16 %v9649
    %v10383 = vunpack.c.h.b16 %v9649
    %v10384 = vunpack.c.l.b16 %v9650
    %v10385 = vunpack.c.h.b16 %v9650
    %v10386 = vunpack.c.l.b16 %v9651
    %v10387 = vunpack.c.h.b16 %v9651
    %v10388 = vunpack.c.l.b16 %v9652
    %v10389 = vunpack.c.h.b16 %v9652
    %v10390 = vunpack.c.l.b16 %v9653
    %v10391 = vunpack.c.h.b16 %v9653
    %v10392 = vunpack.c.l.b16 %v9654
    %v10393 = vunpack.c.h.b16 %v9654
    %v10394 = vunpack.c.l.b16 %v9655
    %v10395 = vunpack.c.h.b16 %v9655
    %v10396 = vunpack.c.l.b16 %v9656
    %v10397 = vunpack.c.h.b16 %v9656
    %v10398 = vunpack.c.l.b16 %v9657
    %v10399 = vunpack.c.h.b16 %v9657
    %v10400 = vunpack.c.l.b16 %v9658
    %v10401 = vunpack.c.h.b16 %v9658
    %v10402 = vunpack.c.l.b16 %v9659
    %v10403 = vunpack.c.h.b16 %v9659
    %v10404 = vunpack.c.l.b16 %v9660
    %v10405 = vunpack.c.h.b16 %v9660
    %v10406 = vunpack.c.l.b16 %v9661
    %v10407 = vunpack.c.h.b16 %v9661
    %v10408 = vunpack.c.l.b16 %v9662
    %v10409 = vunpack.c.h.b16 %v9662
    %v10410 = vunpack.c.l.b16 %v9663
    %v10411 = vunpack.c.h.b16 %v9663
    %v10412 = vunpack.c.l.b16 %v9664
    %v10413 = vunpack.c.h.b16 %v9664
    %v10414 = vunpack.c.l.b16 %v9665
    %v10415 = vunpack.c.h.b16 %v9665
    %v10416 = vunpack.c.l.b16 %v9666
    %v10417 = vunpack.c.h.b16 %v9666
    %v10418 = vunpack.c.l.b16 %v9667
    %v10419 = vunpack.c.h.b16 %v9667
    %v10420 = vunpack.c.l.b16 %v9668
    %v10421 = vunpack.c.h.b16 %v9668
    %v10422 = vunpack.c.l.b16 %v9669
    %v10423 = vunpack.c.h.b16 %v9669
    %v10424 = vunpack.c.l.b16 %v9670
    %v10425 = vunpack.c.h.b16 %v9670
    %v10426 = vunpack.c.l.b16 %v9671
    %v10427 = vunpack.c.h.b16 %v9671
    %v10428 = vunpack.c.l.b16 %v9672
    %v10429 = vunpack.c.h.b16 %v9672
    %v10430 = vunpack.c.l.b16 %v9673
    %v10431 = vunpack.c.h.b16 %v9673
    %v10432 = vunpack.c.l.b16 %v9674
    %v10433 = vunpack.c.h.b16 %v9674
    %v10434 = vunpack.c.l.b16 %v9675
    %v10435 = vunpack.c.h.b16 %v9675
    %v10436 = vunpack.c.l.b16 %v9676
    %v10437 = vunpack.c.h.b16 %v9676
    %v10438 = vunpack.c.l.b16 %v9677
    %v10439 = vunpack.c.h.b16 %v9677
    %v10440 = vunpack.c.l.b16 %v9678
    %v10441 = vunpack.c.h.b16 %v9678
    %v10442 = vunpack.c.l.b16 %v9679
    %v10443 = vunpack.c.h.b16 %v9679
    %v10444 = vunpack.c.l.b16 %v9680
    %v10445 = vunpack.c.h.b16 %v9680
    %v10446 = vunpack.c.l.b16 %v9681
    %v10447 = vunpack.c.h.b16 %v9681
    %v10448 = vunpack.c.l.b16 %v9682
    %v10449 = vunpack.c.h.b16 %v9682
    %v10450 = vunpack.c.l.b16 %v9683
    %v10451 = vunpack.c.h.b16 %v9683
    %v10452 = vunpack.c.l.b16 %v9684
    %v10453 = vunpack.c.h.b16 %v9684
    %v10454 = vunpack.c.l.b16 %v9685
    %v10455 = vunpack.c.h.b16 %v9685
    %v10456 = vunpack.c.l.b16 %v9686
    %v10457 = vunpack.c.h.b16 %v9686
    %v10458 = vunpack.c.l.b16 %v9687
    %v10459 = vunpack.c.h.b16 %v9687
    %v10460 = vunpack.c.l.b16 %v9688
    %v10461 = vunpack.c.h.b16 %v9688
    %v10462 = vunpack.c.l.b16 %v9689
    %v10463 = vunpack.c.h.b16 %v9689
    %v10464 = vunpack.c.l.b16 %v9690
    %v10465 = vunpack.c.h.b16 %v9690
    %v10466 = vunpack.c.l.b16 %v9691
    %v10467 = vunpack.c.h.b16 %v9691
    %v10468 = vunpack.c.l.b16 %v9692
    %v10469 = vunpack.c.h.b16 %v9692
    %v10470 = vunpack.c.l.b16 %v9693
    %v10471 = vunpack.c.h.b16 %v9693
    %v10472 = vunpack.c.l.b16 %v9694
    %v10473 = vunpack.c.h.b16 %v9694
    %v10474 = vunpack.c.l.b16 %v9695
    %v10475 = vunpack.c.h.b16 %v9695
    %v10476 = vunpack.c.l.b16 %v9696
    %v10477 = vunpack.c.h.b16 %v9696
    %v10478 = vunpack.c.l.b16 %v9697
    %v10479 = vunpack.c.h.b16 %v9697
    %v10480 = vunpack.c.l.b16 %v9698
    %v10481 = vunpack.c.h.b16 %v9698
    %v10482 = vunpack.c.l.b16 %v9699
    %v10483 = vunpack.c.h.b16 %v9699
    %v10484 = vunpack.c.l.b16 %v9700
    %v10485 = vunpack.c.h.b16 %v9700
    %v10486 = vunpack.c.l.b16 %v9701
    %v10487 = vunpack.c.h.b16 %v9701
    %v10488 = vunpack.c.l.b16 %v9702
    %v10489 = vunpack.c.h.b16 %v9702
    %v10490 = vunpack.c.l.b16 %v9703
    %v10491 = vunpack.c.h.b16 %v9703
    %v10492 = vunpack.c.l.b16 %v9704
    %v10493 = vunpack.c.h.b16 %v9704
    %v10494 = vunpack.c.l.b16 %v9705
    %v10495 = vunpack.c.h.b16 %v9705
    %v10496 = vunpack.c.l.b16 %v9706
    %v10497 = vunpack.c.h.b16 %v9706
    %v10498 = vunpack.c.l.b16 %v9707
    %v10499 = vunpack.c.h.b16 %v9707
    %v10500 = vunpack.c.l.b16 %v9708
    %v10501 = vunpack.c.h.b16 %v9708
    %v10502 = vunpack.c.l.b16 %v9709
    %v10503 = vunpack.c.h.b16 %v9709
    %v10504 = vunpack.c.l.b16 %v9710
    %v10505 = vunpack.c.h.b16 %v9710
    %v10506 = vunpack.c.l.b16 %v9711
    %v10507 = vunpack.c.h.b16 %v9711
    %v10508 = vunpack.c.l.b16 %v9712
    %v10509 = vunpack.c.h.b16 %v9712
    %v10510 = vunpack.c.l.b16 %v9713
    %v10511 = vunpack.c.h.b16 %v9713
    %v10512 = vunpack.c.l.b16 %v9714
    %v10513 = vunpack.c.h.b16 %v9714
    %v10514 = vunpack.c.l.b16 %v9715
    %v10515 = vunpack.c.h.b16 %v9715
    %v10516 = vunpack.c.l.b16 %v9716
    %v10517 = vunpack.c.h.b16 %v9716
    %v10518 = vunpack.c.l.b16 %v9717
    %v10519 = vunpack.c.h.b16 %v9717
    %v10520 = vunpack.c.l.b16 %v9718
    %v10521 = vunpack.c.h.b16 %v9718
    %v10522 = vunpack.c.l.b16 %v9719
    %v10523 = vunpack.c.h.b16 %v9719
    %v10524 = vunpack.c.l.b16 %v9720
    %v10525 = vunpack.c.h.b16 %v9720
    %v10526 = vunpack.c.l.b16 %v9721
    %v10527 = vunpack.c.h.b16 %v9721
    %v10528 = vunpack.c.l.b16 %v9722
    %v10529 = vunpack.c.h.b16 %v9722
    %v10530 = vunpack.c.l.b16 %v9723
    %v10531 = vunpack.c.h.b16 %v9723
    %v10532 = vunpack.c.l.b16 %v9724
    %v10533 = vunpack.c.h.b16 %v9724
    %v10534 = vunpack.c.l.b16 %v9725
    %v10535 = vunpack.c.h.b16 %v9725
    %v10536 = vunpack.c.l.b16 %v9726
    %v10537 = vunpack.c.h.b16 %v9726
    %v10538 = vunpack.c.l.b16 %v9727
    %v10539 = vunpack.c.h.b16 %v9727
    %v10540 = vunpack.c.l.b16 %v9728
    %v10541 = vunpack.c.h.b16 %v9728
    %v10542 = vunpack.c.l.b16 %v9729
    %v10543 = vunpack.c.h.b16 %v9729
    %v10544 = vunpack.c.l.b16 %v9730
    %v10545 = vunpack.c.h.b16 %v9730
    %v10546 = vunpack.c.l.b16 %v9731
    %v10547 = vunpack.c.h.b16 %v9731
    %v10548 = vunpack.c.l.b16 %v9732
    %v10549 = vunpack.c.h.b16 %v9732
    %v10550 = vunpack.c.l.b16 %v9733
    %v10551 = vunpack.c.h.b16 %v9733
    %v10552 = vunpack.c.l.b16 %v9734
    %v10553 = vunpack.c.h.b16 %v9734
    %v10554 = vunpack.c.l.b16 %v9735
    %v10555 = vunpack.c.h.b16 %v9735
    %v10556 = vunpack.c.l.b16 %v9736
    %v10557 = vunpack.c.h.b16 %v9736
    %v10558 = vunpack.c.l.b16 %v9737
    %v10559 = vunpack.c.h.b16 %v9737
    %v10560 = vunpack.c.l.b16 %v9738
    %v10561 = vunpack.c.h.b16 %v9738
    %v10562 = vunpack.c.l.b16 %v9739
    %v10563 = vunpack.c.h.b16 %v9739
    %v10564 = vunpack.c.l.b16 %v9740
    %v10565 = vunpack.c.h.b16 %v9740
    %v10566 = vunpack.c.l.b16 %v9741
    %v10567 = vunpack.c.h.b16 %v9741
    %v10568 = vunpack.c.l.b16 %v9742
    %v10569 = vunpack.c.h.b16 %v9742
    %v10570 = vunpack.c.l.b16 %v9743
    %v10571 = vunpack.c.h.b16 %v9743
    %v10572 = vunpack.c.l.b16 %v9744
    %v10573 = vunpack.c.h.b16 %v9744
    %v10574 = vunpack.c.l.b16 %v9745
    %v10575 = vunpack.c.h.b16 %v9745
    %v10576 = vunpack.c.l.b16 %v9746
    %v10577 = vunpack.c.h.b16 %v9746
    %v10578 = vunpack.c.l.b16 %v9747
    %v10579 = vunpack.c.h.b16 %v9747
    %v10580 = vunpack.c.l.b16 %v9748
    %v10581 = vunpack.c.h.b16 %v9748
    %v10582 = vunpack.c.l.b16 %v9749
    %v10583 = vunpack.c.h.b16 %v9749
    %v10584 = vunpack.c.l.b16 %v9750
    %v10585 = vunpack.c.h.b16 %v9750
    %v10586 = vunpack.c.l.b16 %v9751
    %v10587 = vunpack.c.h.b16 %v9751
    %v10588 = vunpack.c.l.b16 %v9752
    %v10589 = vunpack.c.h.b16 %v9752
    %v10590 = vunpack.c.l.b16 %v9753
    %v10591 = vunpack.c.h.b16 %v9753
    %v10592 = vunpack.c.l.b16 %v9754
    %v10593 = vunpack.c.h.b16 %v9754
    %v10594 = vunpack.c.l.b16 %v9755
    %v10595 = vunpack.c.h.b16 %v9755
    %v10596 = vunpack.c.l.b16 %v9756
    %v10597 = vunpack.c.h.b16 %v9756
    %v10598 = vunpack.c.l.b16 %v9757
    %v10599 = vunpack.c.h.b16 %v9757
    %v10600 = vunpack.c.l.b16 %v9758
    %v10601 = vunpack.c.h.b16 %v9758
    %v10602 = vunpack.c.l.b16 %v9759
    %v10603 = vunpack.c.h.b16 %v9759
    %v10604 = vunpack.c.l.b16 %v9760
    %v10605 = vunpack.c.h.b16 %v9760
    %v10606 = vunpack.c.l.b16 %v9761
    %v10607 = vunpack.c.h.b16 %v9761
    %v10608 = vunpack.c.l.b16 %v9762
    %v10609 = vunpack.c.h.b16 %v9762
    %v10610 = vunpack.c.l.b16 %v9763
    %v10611 = vunpack.c.h.b16 %v9763
    %v10612 = vunpack.c.l.b16 %v9764
    %v10613 = vunpack.c.h.b16 %v9764
    %v10614 = vunpack.c.l.b16 %v9765
    %v10615 = vunpack.c.h.b16 %v9765
    %v10616 = vunpack.c.l.b16 %v9766
    %v10617 = vunpack.c.h.b16 %v9766
    %v10618 = vunpack.c.l.b16 %v9767
    %v10619 = vunpack.c.h.b16 %v9767
    %v10620 = vunpack.c.l.b16 %v9768
    %v10621 = vunpack.c.h.b16 %v9768
    %v10622 = vunpack.c.l.b16 %v9769
    %v10623 = vunpack.c.h.b16 %v9769
    %v10624 = vunpack.c.l.b16 %v9770
    %v10625 = vunpack.c.h.b16 %v9770
    %v10626 = vunpack.c.l.b16 %v9771
    %v10627 = vunpack.c.h.b16 %v9771
    %v10628 = vunpack.c.l.b16 %v9772
    %v10629 = vunpack.c.h.b16 %v9772
    %v10630 = vunpack.c.l.b16 %v9773
    %v10631 = vunpack.c.h.b16 %v9773
    %v10632 = vunpack.c.l.b16 %v9774
    %v10633 = vunpack.c.h.b16 %v9774
    %v10634 = vunpack.c.l.b16 %v9775
    %v10635 = vunpack.c.h.b16 %v9775
    %v10636 = vunpack.c.l.b16 %v9776
    %v10637 = vunpack.c.h.b16 %v9776
    %v10638 = vunpack.c.l.b16 %v9777
    %v10639 = vunpack.c.h.b16 %v9777
    %v10640 = vunpack.c.l.b16 %v9778
    %v10641 = vunpack.c.h.b16 %v9778
    %v10642 = vunpack.c.l.b16 %v9779
    %v10643 = vunpack.c.h.b16 %v9779
    %v10644 = vpack.c.b16 %v10074, %v10068
    %v10645 = vpack.c.b16 %v10075, %v10069
    %v10646 = vpack.c.b16 %v10076, %v10070
    %v10647 = vpack.c.b16 %v10077, %v10071
    %v10648 = vpack.c.b16 %v10078, %v10072
    %v10649 = vpack.c.b16 %v10079, %v10073
    %v10650 = vpack.c.b16 %v10086, %v10080
    %v10651 = vpack.c.b16 %v10087, %v10081
    %v10652 = vpack.c.b16 %v10088, %v10082
    %v10653 = vpack.c.b16 %v10089, %v10083
    %v10654 = vpack.c.b16 %v10090, %v10084
    %v10655 = vpack.c.b16 %v10091, %v10085
    %v10656 = vpack.c.b16 %v10098, %v10092
    %v10657 = vpack.c.b16 %v10099, %v10093
    %v10658 = vpack.c.b16 %v10100, %v10094
    %v10659 = vpack.c.b16 %v10101, %v10095
    %v10660 = vpack.c.b16 %v10102, %v10096
    %v10661 = vpack.c.b16 %v10103, %v10097
    %v10662 = vpack.c.b16 %v10110, %v10104
    %v10663 = vpack.c.b16 %v10111, %v10105
    %v10664 = vpack.c.b16 %v10112, %v10106
    %v10665 = vpack.c.b16 %v10113, %v10107
    %v10666 = vpack.c.b16 %v10114, %v10108
    %v10667 = vpack.c.b16 %v10115, %v10109
    %v10668 = vpack.c.b16 %v10122, %v10116
    %v10669 = vpack.c.b16 %v10123, %v10117
    %v10670 = vpack.c.b16 %v10124, %v10118
    %v10671 = vpack.c.b16 %v10125, %v10119
    %v10672 = vpack.c.b16 %v10126, %v10120
    %v10673 = vpack.c.b16 %v10127, %v10121
    %v10674 = vpack.c.b16 %v10134, %v10128
    %v10675 = vpack.c.b16 %v10135, %v10129
    %v10676 = vpack.c.b16 %v10136, %v10130
    %v10677 = vpack.c.b16 %v10137, %v10131
    %v10678 = vpack.c.b16 %v10138, %v10132
    %v10679 = vpack.c.b16 %v10139, %v10133
    %v10680 = vpack.c.b16 %v10146, %v10140
    %v10681 = vpack.c.b16 %v10147, %v10141
    %v10682 = vpack.c.b16 %v10148, %v10142
    %v10683 = vpack.c.b16 %v10149, %v10143
    %v10684 = vpack.c.b16 %v10150, %v10144
    %v10685 = vpack.c.b16 %v10151, %v10145
    %v10686 = vpack.c.b16 %v10158, %v10152
    %v10687 = vpack.c.b16 %v10159, %v10153
    %v10688 = vpack.c.b16 %v10160, %v10154
    %v10689 = vpack.c.b16 %v10161, %v10155
    %v10690 = vpack.c.b16 %v10162, %v10156
    %v10691 = vpack.c.b16 %v10163, %v10157
    %v10692 = vpack.c.b16 %v10170, %v10164
    %v10693 = vpack.c.b16 %v10171, %v10165
    %v10694 = vpack.c.b16 %v10172, %v10166
    %v10695 = vpack.c.b16 %v10173, %v10167
    %v10696 = vpack.c.b16 %v10174, %v10168
    %v10697 = vpack.c.b16 %v10175, %v10169
    %v10698 = vpack.c.b16 %v10182, %v10176
    %v10699 = vpack.c.b16 %v10183, %v10177
    %v10700 = vpack.c.b16 %v10184, %v10178
    %v10701 = vpack.c.b16 %v10185, %v10179
    %v10702 = vpack.c.b16 %v10186, %v10180
    %v10703 = vpack.c.b16 %v10187, %v10181
    %v10704 = vpack.c.b16 %v10194, %v10188
    %v10705 = vpack.c.b16 %v10195, %v10189
    %v10706 = vpack.c.b16 %v10196, %v10190
    %v10707 = vpack.c.b16 %v10197, %v10191
    %v10708 = vpack.c.b16 %v10198, %v10192
    %v10709 = vpack.c.b16 %v10199, %v10193
    %v10710 = vpack.c.b16 %v10206, %v10200
    %v10711 = vpack.c.b16 %v10207, %v10201
    %v10712 = vpack.c.b16 %v10208, %v10202
    %v10713 = vpack.c.b16 %v10209, %v10203
    %v10714 = vpack.c.b16 %v10210, %v10204
    %v10715 = vpack.c.b16 %v10211, %v10205
    %v10716 = vpack.c.b16 %v10218, %v10212
    %v10717 = vpack.c.b16 %v10219, %v10213
    %v10718 = vpack.c.b16 %v10220, %v10214
    %v10719 = vpack.c.b16 %v10221, %v10215
    %v10720 = vpack.c.b16 %v10222, %v10216
    %v10721 = vpack.c.b16 %v10223, %v10217
    %v10722 = vpack.c.b16 %v10230, %v10224
    %v10723 = vpack.c.b16 %v10231, %v10225
    %v10724 = vpack.c.b16 %v10232, %v10226
    %v10725 = vpack.c.b16 %v10233, %v10227
    %v10726 = vpack.c.b16 %v10234, %v10228
    %v10727 = vpack.c.b16 %v10235, %v10229
    %v10728 = vpack.c.b16 %v10242, %v10236
    %v10729 = vpack.c.b16 %v10243, %v10237
    %v10730 = vpack.c.b16 %v10244, %v10238
    %v10731 = vpack.c.b16 %v10245, %v10239
    %v10732 = vpack.c.b16 %v10246, %v10240
    %v10733 = vpack.c.b16 %v10247, %v10241
    %v10734 = vpack.c.b16 %v10254, %v10248
    %v10735 = vpack.c.b16 %v10255, %v10249
    %v10736 = vpack.c.b16 %v10256, %v10250
    %v10737 = vpack.c.b16 %v10257, %v10251
    %v10738 = vpack.c.b16 %v10258, %v10252
    %v10739 = vpack.c.b16 %v10259, %v10253
    %v10740 = vpack.c.b16 %v10266, %v10260
    %v10741 = vpack.c.b16 %v10267, %v10261
    %v10742 = vpack.c.b16 %v10268, %v10262
    %v10743 = vpack.c.b16 %v10269, %v10263
    %v10744 = vpack.c.b16 %v10270, %v10264
    %v10745 = vpack.c.b16 %v10271, %v10265
    %v10746 = vpack.c.b16 %v10278, %v10272
    %v10747 = vpack.c.b16 %v10279, %v10273
    %v10748 = vpack.c.b16 %v10280, %v10274
    %v10749 = vpack.c.b16 %v10281, %v10275
    %v10750 = vpack.c.b16 %v10282, %v10276
    %v10751 = vpack.c.b16 %v10283, %v10277
    %v10752 = vpack.c.b16 %v10290, %v10284
    %v10753 = vpack.c.b16 %v10291, %v10285
    %v10754 = vpack.c.b16 %v10292, %v10286
    %v10755 = vpack.c.b16 %v10293, %v10287
    %v10756 = vpack.c.b16 %v10294, %v10288
    %v10757 = vpack.c.b16 %v10295, %v10289
    %v10758 = vpack.c.b16 %v10302, %v10296
    %v10759 = vpack.c.b16 %v10303, %v10297
    %v10760 = vpack.c.b16 %v10304, %v10298
    %v10761 = vpack.c.b16 %v10305, %v10299
    %v10762 = vpack.c.b16 %v10306, %v10300
    %v10763 = vpack.c.b16 %v10307, %v10301
    %v10764 = vpack.c.b16 %v10314, %v10308
    %v10765 = vpack.c.b16 %v10315, %v10309
    %v10766 = vpack.c.b16 %v10316, %v10310
    %v10767 = vpack.c.b16 %v10317, %v10311
    %v10768 = vpack.c.b16 %v10318, %v10312
    %v10769 = vpack.c.b16 %v10319, %v10313
    %v10770 = vpack.c.b16 %v10326, %v10320
    %v10771 = vpack.c.b16 %v10327, %v10321
    %v10772 = vpack.c.b16 %v10328, %v10322
    %v10773 = vpack.c.b16 %v10329, %v10323
    %v10774 = vpack.c.b16 %v10330, %v10324
    %v10775 = vpack.c.b16 %v10331, %v10325
    %v10776 = vpack.c.b16 %v10338, %v10332
    %v10777 = vpack.c.b16 %v10339, %v10333
    %v10778 = vpack.c.b16 %v10340, %v10334
    %v10779 = vpack.c.b16 %v10341, %v10335
    %v10780 = vpack.c.b16 %v10342, %v10336
    %v10781 = vpack.c.b16 %v10343, %v10337
    %v10782 = vpack.c.b16 %v10350, %v10344
    %v10783 = vpack.c.b16 %v10351, %v10345
    %v10784 = vpack.c.b16 %v10352, %v10346
    %v10785 = vpack.c.b16 %v10353, %v10347
    %v10786 = vpack.c.b16 %v10354, %v10348
    %v10787 = vpack.c.b16 %v10355, %v10349
    %v10788 = vpack.c.b16 %v10362, %v10356
    %v10789 = vpack.c.b16 %v10363, %v10357
    %v10790 = vpack.c.b16 %v10364, %v10358
    %v10791 = vpack.c.b16 %v10365, %v10359
    %v10792 = vpack.c.b16 %v10366, %v10360
    %v10793 = vpack.c.b16 %v10367, %v10361
    %v10794 = vpack.c.b16 %v10374, %v10368
    %v10795 = vpack.c.b16 %v10375, %v10369
    %v10796 = vpack.c.b16 %v10376, %v10370
    %v10797 = vpack.c.b16 %v10377, %v10371
    %v10798 = vpack.c.b16 %v10378, %v10372
    %v10799 = vpack.c.b16 %v10379, %v10373
    %v10800 = vpack.c.b16 %v10386, %v10380
    %v10801 = vpack.c.b16 %v10387, %v10381
    %v10802 = vpack.c.b16 %v10388, %v10382
    %v10803 = vpack.c.b16 %v10389, %v10383
    %v10804 = vpack.c.b16 %v10390, %v10384
    %v10805 = vpack.c.b16 %v10391, %v10385
    %v10806 = vpack.c.b16 %v10398, %v10392
    %v10807 = vpack.c.b16 %v10399, %v10393
    %v10808 = vpack.c.b16 %v10400, %v10394
    %v10809 = vpack.c.b16 %v10401, %v10395
    %v10810 = vpack.c.b16 %v10402, %v10396
    %v10811 = vpack.c.b16 %v10403, %v10397
    %v10812 = vpack.c.b16 %v10410, %v10404
    %v10813 = vpack.c.b16 %v10411, %v10405
    %v10814 = vpack.c.b16 %v10412, %v10406
    %v10815 = vpack.c.b16 %v10413, %v10407
    %v10816 = vpack.c.b16 %v10414, %v10408
    %v10817 = vpack.c.b16 %v10415, %v10409
    %v10818 = vpack.c.b16 %v10422, %v10416
    %v10819 = vpack.c.b16 %v10423, %v10417
    %v10820 = vpack.c.b16 %v10424, %v10418
    %v10821 = vpack.c.b16 %v10425, %v10419
    %v10822 = vpack.c.b16 %v10426, %v10420
    %v10823 = vpack.c.b16 %v10427, %v10421
    %v10824 = vpack.c.b16 %v10434, %v10428
    %v10825 = vpack.c.b16 %v10435, %v10429
    %v10826 = vpack.c.b16 %v10436, %v10430
    %v10827 = vpack.c.b16 %v10437, %v10431
    %v10828 = vpack.c.b16 %v10438, %v10432
    %v10829 = vpack.c.b16 %v10439, %v10433
    %v10830 = vpack.c.b16 %v10446, %v10440
    %v10831 = vpack.c.b16 %v10447, %v10441
    %v10832 = vpack.c.b16 %v10448, %v10442
    %v10833 = vpack.c.b16 %v10449, %v10443
    %v10834 = vpack.c.b16 %v10450, %v10444
    %v10835 = vpack.c.b16 %v10451, %v10445
    %v10836 = vpack.c.b16 %v10458, %v10452
    %v10837 = vpack.c.b16 %v10459, %v10453
    %v10838 = vpack.c.b16 %v10460, %v10454
    %v10839 = vpack.c.b16 %v10461, %v10455
    %v10840 = vpack.c.b16 %v10462, %v10456
    %v10841 = vpack.c.b16 %v10463, %v10457
    %v10842 = vpack.c.b16 %v10470, %v10464
    %v10843 = vpack.c.b16 %v10471, %v10465
    %v10844 = vpack.c.b16 %v10472, %v10466
    %v10845 = vpack.c.b16 %v10473, %v10467
    %v10846 = vpack.c.b16 %v10474, %v10468
    %v10847 = vpack.c.b16 %v10475, %v10469
    %v10848 = vpack.c.b16 %v10482, %v10476
    %v10849 = vpack.c.b16 %v10483, %v10477
    %v10850 = vpack.c.b16 %v10484, %v10478
    %v10851 = vpack.c.b16 %v10485, %v10479
    %v10852 = vpack.c.b16 %v10486, %v10480
    %v10853 = vpack.c.b16 %v10487, %v10481
    %v10854 = vpack.c.b16 %v10494, %v10488
    %v10855 = vpack.c.b16 %v10495, %v10489
    %v10856 = vpack.c.b16 %v10496, %v10490
    %v10857 = vpack.c.b16 %v10497, %v10491
    %v10858 = vpack.c.b16 %v10498, %v10492
    %v10859 = vpack.c.b16 %v10499, %v10493
    %v10860 = vpack.c.b16 %v10506, %v10500
    %v10861 = vpack.c.b16 %v10507, %v10501
    %v10862 = vpack.c.b16 %v10508, %v10502
    %v10863 = vpack.c.b16 %v10509, %v10503
    %v10864 = vpack.c.b16 %v10510, %v10504
    %v10865 = vpack.c.b16 %v10511, %v10505
    %v10866 = vpack.c.b16 %v10518, %v10512
    %v10867 = vpack.c.b16 %v10519, %v10513
    %v10868 = vpack.c.b16 %v10520, %v10514
    %v10869 = vpack.c.b16 %v10521, %v10515
    %v10870 = vpack.c.b16 %v10522, %v10516
    %v10871 = vpack.c.b16 %v10523, %v10517
    %v10872 = vpack.c.b16 %v10530, %v10524
    %v10873 = vpack.c.b16 %v10531, %v10525
    %v10874 = vpack.c.b16 %v10532, %v10526
    %v10875 = vpack.c.b16 %v10533, %v10527
    %v10876 = vpack.c.b16 %v10534, %v10528
    %v10877 = vpack.c.b16 %v10535, %v10529
    %v10878 = vpack.c.b16 %v10542, %v10536
    %v10879 = vpack.c.b16 %v10543, %v10537
    %v10880 = vpack.c.b16 %v10544, %v10538
    %v10881 = vpack.c.b16 %v10545, %v10539
    %v10882 = vpack.c.b16 %v10546, %v10540
    %v10883 = vpack.c.b16 %v10547, %v10541
    %v10884 = vpack.c.b16 %v10554, %v10548
    %v10885 = vpack.c.b16 %v10555, %v10549
    %v10886 = vpack.c.b16 %v10556, %v10550
    %v10887 = vpack.c.b16 %v10557, %v10551
    %v10888 = vpack.c.b16 %v10558, %v10552
    %v10889 = vpack.c.b16 %v10559, %v10553
    %v10890 = vpack.c.b16 %v10566, %v10560
    %v10891 = vpack.c.b16 %v10567, %v10561
    %v10892 = vpack.c.b16 %v10568, %v10562
    %v10893 = vpack.c.b16 %v10569, %v10563
    %v10894 = vpack.c.b16 %v10570, %v10564
    %v10895 = vpack.c.b16 %v10571, %v10565
    %v10896 = vpack.c.b16 %v10578, %v10572
    %v10897 = vpack.c.b16 %v10579, %v10573
    %v10898 = vpack.c.b16 %v10580, %v10574
    %v10899 = vpack.c.b16 %v10581, %v10575
    %v10900 = vpack.c.b16 %v10582, %v10576
    %v10901 = vpack.c.b16 %v10583, %v10577
    %v10902 = vpack.c.b16 %v10590, %v10584
    %v10903 = vpack.c.b16 %v10591, %v10585
    %v10904 = vpack.c.b16 %v10592, %v10586
    %v10905 = vpack.c.b16 %v10593, %v10587
    %v10906 = vpack.c.b16 %v10594, %v10588
    %v10907 = vpack.c.b16 %v10595, %v10589
    %v10908 = vpack.c.b16 %v10602, %v10596
    %v10909 = vpack.c.b16 %v10603, %v10597
    %v10910 = vpack.c.b16 %v10604, %v10598
    %v10911 = vpack.c.b16 %v10605, %v10599
    %v10912 = vpack.c.b16 %v10606, %v10600
    %v10913 = vpack.c.b16 %v10607, %v10601
    %v10914 = vpack.c.b16 %v10614, %v10608
    %v10915 = vpack.c.b16 %v10615, %v10609
    %v10916 = vpack.c.b16 %v10616, %v10610
    %v10917 = vpack.c.b16 %v10617, %v10611
    %v10918 = vpack.c.b16 %v10618, %v10612
    %v10919 = vpack.c.b16 %v10619, %v10613
    %v10920 = vpack.c.b16 %v10626, %v10620
    %v10921 = vpack.c.b16 %v10627, %v10621
    %v10922 = vpack.c.b16 %v10628, %v10622
    %v10923 = vpack.c.b16 %v10629, %v10623
    %v10924 = vpack.c.b16 %v10630, %v10624
    %v10925 = vpack.c.b16 %v10631, %v10625
    %v10926 = vpack.c.b16 %v10638, %v10632
    %v10927 = vpack.c.b16 %v10639, %v10633
    %v10928 = vpack.c.b16 %v10640, %v10634
    %v10929 = vpack.c.b16 %v10641, %v10635
    %v10930 = vpack.c.b16 %v10642, %v10636
    %v10931 = vpack.c.b16 %v10643, %v10637
    %11220 = vmatprep.subr.bf16.mxu0 %v10645
    %11221 = vmatpush1.bf16.msra.mxu0 %v10644
    %11222 = vmatprep.subr.bf16.mxu0 %v10651
    %11223 = vmatpush1.bf16.msra.mxu0 %v10650
    %11224 = vmatprep.subr.bf16.mxu0 %v10657
    %11225 = vmatpush1.bf16.msra.mxu0 %v10656
    %11226 = vmatprep.subr.bf16.mxu0 %v10663
    %11227 = vmatpush1.bf16.msra.mxu0 %v10662
    %11228 = vmatprep.subr.bf16.mxu0 %v10669
    %11229 = vmatpush1.bf16.msra.mxu0 %v10668
    %11230 = vmatprep.subr.bf16.mxu0 %v10675
    %11231 = vmatpush1.bf16.msra.mxu0 %v10674
    %11232 = vmatprep.subr.bf16.mxu0 %v10681
    %11233 = vmatpush1.bf16.msra.mxu0 %v10680
    %11234 = vmatprep.subr.bf16.mxu0 %v10687
    %11235 = vmatpush1.bf16.msra.mxu0 %v10686
    %11236 = vmatprep.subr.bf16.mxu0 %v10693
    %11237 = vmatpush1.bf16.msra.mxu0 %v10692
    %11238 = vmatprep.subr.bf16.mxu0 %v10699
    %11239 = vmatpush1.bf16.msra.mxu0 %v10698
    %11240 = vmatprep.subr.bf16.mxu0 %v10705
    %11241 = vmatpush1.bf16.msra.mxu0 %v10704
    %11242 = vmatprep.subr.bf16.mxu0 %v10711
    %11243 = vmatpush1.bf16.msra.mxu0 %v10710
    %11244 = vmatprep.subr.bf16.mxu0 %v10717
    %11245 = vmatpush1.bf16.msra.mxu0 %v10716
    %11246 = vmatprep.subr.bf16.mxu0 %v10723
    %11247 = vmatpush1.bf16.msra.mxu0 %v10722
    %11248 = vmatprep.subr.bf16.mxu0 %v10729
    %11249 = vmatpush1.bf16.msra.mxu0 %v10728
    %11250 = vmatprep.subr.bf16.mxu0 %v10735
    %11251 = vmatpush1.bf16.msra.mxu0 %v10734
    %11252 = vmatprep.mubr.bf16.mxu0 %v9487
    %11253 = vmatmul.mubr.bf16.gmra.mrb[0].mxu0 %v9486
    %v11254 = vpop.f32.mrb[0].mxu0
    %v11255 = vadd.f32 0.0, %v11254
    %v11256 = vpop.f32.mrb[0].mxu0
    %v11257 = vadd.f32 0.0, %v11256
    %v11258 = vpop.f32.mrb[0].mxu0
    %v11259 = vpop.f32.mrb[0].mxu0
    %11260 = vdwg.mxu0
    %11261 = vmatprep.subr.bf16.mxu0 %v10741
    %11262 = vmatpush1.bf16.msra.mxu0 %v10740
    %11263 = vmatprep.subr.bf16.mxu0 %v10747
    %11264 = vmatpush1.bf16.msra.mxu0 %v10746
    %11265 = vmatprep.subr.bf16.mxu0 %v10753
    %11266 = vmatpush1.bf16.msra.mxu0 %v10752
    %11267 = vmatprep.subr.bf16.mxu0 %v10759
    %11268 = vmatpush1.bf16.msra.mxu0 %v10758
    %11269 = vmatprep.subr.bf16.mxu0 %v10765
    %11270 = vmatpush1.bf16.msra.mxu0 %v10764
    %11271 = vmatprep.subr.bf16.mxu0 %v10771
    %11272 = vmatpush1.bf16.msra.mxu0 %v10770
    %11273 = vmatprep.subr.bf16.mxu0 %v10777
    %11274 = vmatpush1.bf16.msra.mxu0 %v10776
    %11275 = vmatprep.subr.bf16.mxu0 %v10783
    %11276 = vmatpush1.bf16.msra.mxu0 %v10782
    %11277 = vmatprep.subr.bf16.mxu0 %v10789
    %11278 = vmatpush1.bf16.msra.mxu0 %v10788
    %11279 = vmatprep.subr.bf16.mxu0 %v10795
    %11280 = vmatpush1.bf16.msra.mxu0 %v10794
    %11281 = vmatprep.subr.bf16.mxu0 %v10801
    %11282 = vmatpush1.bf16.msra.mxu0 %v10800
    %11283 = vmatprep.subr.bf16.mxu0 %v10807
    %11284 = vmatpush1.bf16.msra.mxu0 %v10806
    %11285 = vmatprep.subr.bf16.mxu0 %v10813
    %11286 = vmatpush1.bf16.msra.mxu0 %v10812
    %11287 = vmatprep.subr.bf16.mxu0 %v10819
    %11288 = vmatpush1.bf16.msra.mxu0 %v10818
    %11289 = vmatprep.subr.bf16.mxu0 %v10825
    %11290 = vmatpush1.bf16.msra.mxu0 %v10824
    %11291 = vmatprep.subr.bf16.mxu0 %v10831
    %11292 = vmatpush1.bf16.msra.mxu0 %v10830
    %11293 = vmatprep.mubr.bf16.mxu0 %v9489
    %11294 = vmatmul.mubr.bf16.gmra.mrb[0].mxu0 %v9488
    %v11295 = vpop.f32.mrb[0].mxu0
    %v11296 = vadd.f32 %v11255, %v11295
    %v11297 = vpop.f32.mrb[0].mxu0
    %v11298 = vadd.f32 %v11257, %v11297
    %v11299 = vpop.f32.mrb[0].mxu0
    %v11300 = vpop.f32.mrb[0].mxu0
    %11301 = vdwg.mxu0
    %11302 = vmatprep.subr.bf16.mxu0 %v10837
    %11303 = vmatpush1.bf16.msra.mxu0 %v10836
    %11304 = vmatprep.subr.bf16.mxu0 %v10843
    %11305 = vmatpush1.bf16.msra.mxu0 %v10842
    %11306 = vmatprep.subr.bf16.mxu0 %v10849
    %11307 = vmatpush1.bf16.msra.mxu0 %v10848
    %11308 = vmatprep.subr.bf16.mxu0 %v10855
    %11309 = vmatpush1.bf16.msra.mxu0 %v10854
    %11310 = vmatprep.subr.bf16.mxu0 %v10861
    %11311 = vmatpush1.bf16.msra.mxu0 %v10860
    %11312 = vmatprep.subr.bf16.mxu0 %v10867
    %11313 = vmatpush1.bf16.msra.mxu0 %v10866
    %11314 = vmatprep.subr.bf16.mxu0 %v10873
    %11315 = vmatpush1.bf16.msra.mxu0 %v10872
    %11316 = vmatprep.subr.bf16.mxu0 %v10879
    %11317 = vmatpush1.bf16.msra.mxu0 %v10878
    %11318 = vmatprep.subr.bf16.mxu0 %v10885
    %11319 = vmatpush1.bf16.msra.mxu0 %v10884
    %11320 = vmatprep.subr.bf16.mxu0 %v10891
    %11321 = vmatpush1.bf16.msra.mxu0 %v10890
    %11322 = vmatprep.subr.bf16.mxu0 %v10897
    %11323 = vmatpush1.bf16.msra.mxu0 %v10896
    %11324 = vmatprep.subr.bf16.mxu0 %v10903
    %11325 = vmatpush1.bf16.msra.mxu0 %v10902
    %11326 = vmatprep.subr.bf16.mxu0 %v10909
    %11327 = vmatpush1.bf16.msra.mxu0 %v10908
    %11328 = vmatprep.subr.bf16.mxu0 %v10915
    %11329 = vmatpush1.bf16.msra.mxu0 %v10914
    %11330 = vmatprep.subr.bf16.mxu0 %v10921
    %11331 = vmatpush1.bf16.msra.mxu0 %v10920
    %11332 = vmatprep.subr.bf16.mxu0 %v10927
    %11333 = vmatpush1.bf16.msra.mxu0 %v10926
    %11334 = vmatprep.mubr.bf16.mxu0 %v9491
    %11335 = vmatmul.mubr.bf16.gmra.mrb[0].mxu0 %v9490
    %v11336 = vpop.f32.mrb[0].mxu0
    %v11337 = vadd.f32 %v11296, %v11336
    %v11338 = vpop.f32.mrb[0].mxu0
    %v11339 = vadd.f32 %v11298, %v11338
    %v11340 = vpop.f32.mrb[0].mxu0
    %v11341 = vpop.f32.mrb[0].mxu0
    %11342 = vdwg.mxu0
    %11343 = vmatprep.subr.bf16.mxu0 %v10647
    %11344 = vmatpush1.bf16.msra.mxu0 %v10646
    %11345 = vmatprep.subr.bf16.mxu0 %v10653
    %11346 = vmatpush1.bf16.msra.mxu0 %v10652
    %11347 = vmatprep.subr.bf16.mxu0 %v10659
    %11348 = vmatpush1.bf16.msra.mxu0 %v10658
    %11349 = vmatprep.subr.bf16.mxu0 %v10665
    %11350 = vmatpush1.bf16.msra.mxu0 %v10664
    %11351 = vmatprep.subr.bf16.mxu0 %v10671
    %11352 = vmatpush1.bf16.msra.mxu0 %v10670
    %11353 = vmatprep.subr.bf16.mxu0 %v10677
    %11354 = vmatpush1.bf16.msra.mxu0 %v10676
    %11355 = vmatprep.subr.bf16.mxu0 %v10683
    %11356 = vmatpush1.bf16.msra.mxu0 %v10682
    %11357 = vmatprep.subr.bf16.mxu0 %v10689
    %11358 = vmatpush1.bf16.msra.mxu0 %v10688
    %11359 = vmatprep.subr.bf16.mxu0 %v10695
    %11360 = vmatpush1.bf16.msra.mxu0 %v10694
    %11361 = vmatprep.subr.bf16.mxu0 %v10701
    %11362 = vmatpush1.bf16.msra.mxu0 %v10700
    %11363 = vmatprep.subr.bf16.mxu0 %v10707
    %11364 = vmatpush1.bf16.msra.mxu0 %v10706
    %11365 = vmatprep.subr.bf16.mxu0 %v10713
    %11366 = vmatpush1.bf16.msra.mxu0 %v10712
    %11367 = vmatprep.subr.bf16.mxu0 %v10719
    %11368 = vmatpush1.bf16.msra.mxu0 %v10718
    %11369 = vmatprep.subr.bf16.mxu0 %v10725
    %11370 = vmatpush1.bf16.msra.mxu0 %v10724
    %11371 = vmatprep.subr.bf16.mxu0 %v10731
    %11372 = vmatpush1.bf16.msra.mxu0 %v10730
    %11373 = vmatprep.subr.bf16.mxu0 %v10737
    %11374 = vmatpush1.bf16.msra.mxu0 %v10736
    %11375 = vmatprep.mubr.bf16.mxu0 %v9487
    %11376 = vmatmul.mubr.bf16.gmra.mrb[0].mxu0 %v9486
    %v11377 = vpop.f32.mrb[0].mxu0
    %v11378 = vadd.f32 0.0, %v11377
    %v11379 = vpop.f32.mrb[0].mxu0
    %v11380 = vadd.f32 0.0, %v11379
    %v11381 = vpop.f32.mrb[0].mxu0
    %v11382 = vpop.f32.mrb[0].mxu0
    %11383 = vdwg.mxu0
    %11384 = vmatprep.subr.bf16.mxu0 %v10743
    %11385 = vmatpush1.bf16.msra.mxu0 %v10742
    %11386 = vmatprep.subr.bf16.mxu0 %v10749
    %11387 = vmatpush1.bf16.msra.mxu0 %v10748
    %11388 = vmatprep.subr.bf16.mxu0 %v10755
    %11389 = vmatpush1.bf16.msra.mxu0 %v10754
    %11390 = vmatprep.subr.bf16.mxu0 %v10761
    %11391 = vmatpush1.bf16.msra.mxu0 %v10760
    %11392 = vmatprep.subr.bf16.mxu0 %v10767
    %11393 = vmatpush1.bf16.msra.mxu0 %v10766
    %11394 = vmatprep.subr.bf16.mxu0 %v10773
    %11395 = vmatpush1.bf16.msra.mxu0 %v10772
    %11396 = vmatprep.subr.bf16.mxu0 %v10779
    %11397 = vmatpush1.bf16.msra.mxu0 %v10778
    %11398 = vmatprep.subr.bf16.mxu0 %v10785
    %11399 = vmatpush1.bf16.msra.mxu0 %v10784
    %11400 = vmatprep.subr.bf16.mxu0 %v10791
    %11401 = vmatpush1.bf16.msra.mxu0 %v10790
    %11402 = vmatprep.subr.bf16.mxu0 %v10797
    %11403 = vmatpush1.bf16.msra.mxu0 %v10796
    %11404 = vmatprep.subr.bf16.mxu0 %v10803
    %11405 = vmatpush1.bf16.msra.mxu0 %v10802
    %11406 = vmatprep.subr.bf16.mxu0 %v10809
    %11407 = vmatpush1.bf16.msra.mxu0 %v10808
    %11408 = vmatprep.subr.bf16.mxu0 %v10815
    %11409 = vmatpush1.bf16.msra.mxu0 %v10814
    %11410 = vmatprep.subr.bf16.mxu0 %v10821
    %11411 = vmatpush1.bf16.msra.mxu0 %v10820
    %11412 = vmatprep.subr.bf16.mxu0 %v10827
    %11413 = vmatpush1.bf16.msra.mxu0 %v10826
    %11414 = vmatprep.subr.bf16.mxu0 %v10833
    %11415 = vmatpush1.bf16.msra.mxu0 %v10832
    %11416 = vmatprep.mubr.bf16.mxu0 %v9489
    %11417 = vmatmul.mubr.bf16.gmra.mrb[0].mxu0 %v9488
    %v11418 = vpop.f32.mrb[0].mxu0
    %v11419 = vadd.f32 %v11378, %v11418
    %v11420 = vpop.f32.mrb[0].mxu0
    %v11421 = vadd.f32 %v11380, %v11420
    %v11422 = vpop.f32.mrb[0].mxu0
    %v11423 = vpop.f32.mrb[0].mxu0
    %11424 = vdwg.mxu0
    %11425 = vmatprep.subr.bf16.mxu0 %v10839
    %11426 = vmatpush1.bf16.msra.mxu0 %v10838
    %11427 = vmatprep.subr.bf16.mxu0 %v10845
    %11428 = vmatpush1.bf16.msra.mxu0 %v10844
    %11429 = vmatprep.subr.bf16.mxu0 %v10851
    %11430 = vmatpush1.bf16.msra.mxu0 %v10850
    %11431 = vmatprep.subr.bf16.mxu0 %v10857
    %11432 = vmatpush1.bf16.msra.mxu0 %v10856
    %11433 = vmatprep.subr.bf16.mxu0 %v10863
    %11434 = vmatpush1.bf16.msra.mxu0 %v10862
    %11435 = vmatprep.subr.bf16.mxu0 %v10869
    %11436 = vmatpush1.bf16.msra.mxu0 %v10868
    %11437 = vmatprep.subr.bf16.mxu0 %v10875
    %11438 = vmatpush1.bf16.msra.mxu0 %v10874
    %11439 = vmatprep.subr.bf16.mxu0 %v10881
    %11440 = vmatpush1.bf16.msra.mxu0 %v10880
    %11441 = vmatprep.subr.bf16.mxu0 %v10887
    %11442 = vmatpush1.bf16.msra.mxu0 %v10886
    %11443 = vmatprep.subr.bf16.mxu0 %v10893
    %11444 = vmatpush1.bf16.msra.mxu0 %v10892
    %11445 = vmatprep.subr.bf16.mxu0 %v10899
    %11446 = vmatpush1.bf16.msra.mxu0 %v10898
    %11447 = vmatprep.subr.bf16.mxu0 %v10905
    %11448 = vmatpush1.bf16.msra.mxu0 %v10904
    %11449 = vmatprep.subr.bf16.mxu0 %v10911
    %11450 = vmatpush1.bf16.msra.mxu0 %v10910
    %11451 = vmatprep.subr.bf16.mxu0 %v10917
    %11452 = vmatpush1.bf16.msra.mxu0 %v10916
    %11453 = vmatprep.subr.bf16.mxu0 %v10923
    %11454 = vmatpush1.bf16.msra.mxu0 %v10922
    %11455 = vmatprep.subr.bf16.mxu0 %v10929
    %11456 = vmatpush1.bf16.msra.mxu0 %v10928
    %11457 = vmatprep.mubr.bf16.mxu0 %v9491
    %11458 = vmatmul.mubr.bf16.gmra.mrb[0].mxu0 %v9490
    %v11459 = vpop.f32.mrb[0].mxu0
    %v11460 = vadd.f32 %v11419, %v11459
    %v11461 = vpop.f32.mrb[0].mxu0
    %v11462 = vadd.f32 %v11421, %v11461
    %v11463 = vpop.f32.mrb[0].mxu0
    %v11464 = vpop.f32.mrb[0].mxu0
    %11465 = vdwg.mxu0
    %11466 = vmatprep.subr.bf16.mxu0 %v10649
    %11467 = vmatpush1.bf16.msra.mxu0 %v10648
    %11468 = vmatprep.subr.bf16.mxu0 %v10655
    %11469 = vmatpush1.bf16.msra.mxu0 %v10654
    %11470 = vmatprep.subr.bf16.mxu0 %v10661
    %11471 = vmatpush1.bf16.msra.mxu0 %v10660
    %11472 = vmatprep.subr.bf16.mxu0 %v10667
    %11473 = vmatpush1.bf16.msra.mxu0 %v10666
    %11474 = vmatprep.subr.bf16.mxu0 %v10673
    %11475 = vmatpush1.bf16.msra.mxu0 %v10672
    %11476 = vmatprep.subr.bf16.mxu0 %v10679
    %11477 = vmatpush1.bf16.msra.mxu0 %v10678
    %11478 = vmatprep.subr.bf16.mxu0 %v10685
    %11479 = vmatpush1.bf16.msra.mxu0 %v10684
    %11480 = vmatprep.subr.bf16.mxu0 %v10691
    %11481 = vmatpush1.bf16.msra.mxu0 %v10690
    %11482 = vmatprep.subr.bf16.mxu0 %v10697
    %11483 = vmatpush1.bf16.msra.mxu0 %v10696
    %11484 = vmatprep.subr.bf16.mxu0 %v10703
    %11485 = vmatpush1.bf16.msra.mxu0 %v10702
    %11486 = vmatprep.subr.bf16.mxu0 %v10709
    %11487 = vmatpush1.bf16.msra.mxu0 %v10708
    %11488 = vmatprep.subr.bf16.mxu0 %v10715
    %11489 = vmatpush1.bf16.msra.mxu0 %v10714
    %11490 = vmatprep.subr.bf16.mxu0 %v10721
    %11491 = vmatpush1.bf16.msra.mxu0 %v10720
    %11492 = vmatprep.subr.bf16.mxu0 %v10727
    %11493 = vmatpush1.bf16.msra.mxu0 %v10726
    %11494 = vmatprep.subr.bf16.mxu0 %v10733
    %11495 = vmatpush1.bf16.msra.mxu0 %v10732
    %11496 = vmatprep.subr.bf16.mxu0 %v10739
    %11497 = vmatpush1.bf16.msra.mxu0 %v10738
    %11498 = vmatprep.mubr.bf16.mxu0 %v9487
    %11499 = vmatmul.mubr.bf16.gmra.mrb[0].mxu0 %v9486
    %v11500 = vpop.f32.mrb[0].mxu0
    %v11501 = vadd.f32 0.0, %v11500
    %v11502 = vpop.f32.mrb[0].mxu0
    %v11503 = vadd.f32 0.0, %v11502
    %v11504 = vpop.f32.mrb[0].mxu0
    %v11505 = vpop.f32.mrb[0].mxu0
    %11506 = vdwg.mxu0
    %11507 = vmatprep.subr.bf16.mxu0 %v10745
    %11508 = vmatpush1.bf16.msra.mxu0 %v10744
    %11509 = vmatprep.subr.bf16.mxu0 %v10751
    %11510 = vmatpush1.bf16.msra.mxu0 %v10750
    %11511 = vmatprep.subr.bf16.mxu0 %v10757
    %11512 = vmatpush1.bf16.msra.mxu0 %v10756
    %11513 = vmatprep.subr.bf16.mxu0 %v10763
    %11514 = vmatpush1.bf16.msra.mxu0 %v10762
    %11515 = vmatprep.subr.bf16.mxu0 %v10769
    %11516 = vmatpush1.bf16.msra.mxu0 %v10768
    %11517 = vmatprep.subr.bf16.mxu0 %v10775
    %11518 = vmatpush1.bf16.msra.mxu0 %v10774
    %11519 = vmatprep.subr.bf16.mxu0 %v10781
    %11520 = vmatpush1.bf16.msra.mxu0 %v10780
    %11521 = vmatprep.subr.bf16.mxu0 %v10787
    %11522 = vmatpush1.bf16.msra.mxu0 %v10786
    %11523 = vmatprep.subr.bf16.mxu0 %v10793
    %11524 = vmatpush1.bf16.msra.mxu0 %v10792
    %11525 = vmatprep.subr.bf16.mxu0 %v10799
    %11526 = vmatpush1.bf16.msra.mxu0 %v10798
    %11527 = vmatprep.subr.bf16.mxu0 %v10805
    %11528 = vmatpush1.bf16.msra.mxu0 %v10804
    %11529 = vmatprep.subr.bf16.mxu0 %v10811
    %11530 = vmatpush1.bf16.msra.mxu0 %v10810
    %11531 = vmatprep.subr.bf16.mxu0 %v10817
    %11532 = vmatpush1.bf16.msra.mxu0 %v10816
    %11533 = vmatprep.subr.bf16.mxu0 %v10823
    %11534 = vmatpush1.bf16.msra.mxu0 %v10822
    %11535 = vmatprep.subr.bf16.mxu0 %v10829
    %11536 = vmatpush1.bf16.msra.mxu0 %v10828
    %11537 = vmatprep.subr.bf16.mxu0 %v10835
    %11538 = vmatpush1.bf16.msra.mxu0 %v10834
    %11539 = vmatprep.mubr.bf16.mxu0 %v9489
    %11540 = vmatmul.mubr.bf16.gmra.mrb[0].mxu0 %v9488
    %v11541 = vpop.f32.mrb[0].mxu0
    %v11542 = vadd.f32 %v11501, %v11541
    %v11543 = vpop.f32.mrb[0].mxu0
    %v11544 = vadd.f32 %v11503, %v11543
    %v11545 = vpop.f32.mrb[0].mxu0
    %v11546 = vpop.f32.mrb[0].mxu0
    %11547 = vdwg.mxu0
    %11548 = vmatprep.subr.bf16.mxu0 %v10841
    %11549 = vmatpush1.bf16.msra.mxu0 %v10840
    %11550 = vmatprep.subr.bf16.mxu0 %v10847
    %11551 = vmatpush1.bf16.msra.mxu0 %v10846
    %11552 = vmatprep.subr.bf16.mxu0 %v10853
    %11553 = vmatpush1.bf16.msra.mxu0 %v10852
    %11554 = vmatprep.subr.bf16.mxu0 %v10859
    %11555 = vmatpush1.bf16.msra.mxu0 %v10858
    %11556 = vmatprep.subr.bf16.mxu0 %v10865
    %11557 = vmatpush1.bf16.msra.mxu0 %v10864
    %11558 = vmatprep.subr.bf16.mxu0 %v10871
    %11559 = vmatpush1.bf16.msra.mxu0 %v10870
    %11560 = vmatprep.subr.bf16.mxu0 %v10877
    %11561 = vmatpush1.bf16.msra.mxu0 %v10876
    %11562 = vmatprep.subr.bf16.mxu0 %v10883
    %11563 = vmatpush1.bf16.msra.mxu0 %v10882
    %11564 = vmatprep.subr.bf16.mxu0 %v10889
    %11565 = vmatpush1.bf16.msra.mxu0 %v10888
    %11566 = vmatprep.subr.bf16.mxu0 %v10895
    %11567 = vmatpush1.bf16.msra.mxu0 %v10894
    %11568 = vmatprep.subr.bf16.mxu0 %v10901
    %11569 = vmatpush1.bf16.msra.mxu0 %v10900
    %11570 = vmatprep.subr.bf16.mxu0 %v10907
    %11571 = vmatpush1.bf16.msra.mxu0 %v10906
    %11572 = vmatprep.subr.bf16.mxu0 %v10913
    %11573 = vmatpush1.bf16.msra.mxu0 %v10912
    %11574 = vmatprep.subr.bf16.mxu0 %v10919
    %11575 = vmatpush1.bf16.msra.mxu0 %v10918
    %11576 = vmatprep.subr.bf16.mxu0 %v10925
    %11577 = vmatpush1.bf16.msra.mxu0 %v10924
    %11578 = vmatprep.subr.bf16.mxu0 %v10931
    %11579 = vmatpush1.bf16.msra.mxu0 %v10930
    %11580 = vmatprep.mubr.bf16.mxu0 %v9491
    %11581 = vmatmul.mubr.bf16.gmra.mrb[0].mxu0 %v9490
    %v11582 = vpop.f32.mrb[0].mxu0
    %v11583 = vadd.f32 %v11542, %v11582
    %v11584 = vpop.f32.mrb[0].mxu0
    %v11585 = vadd.f32 %v11544, %v11584
    %v11586 = vpop.f32.mrb[0].mxu0
    %v11587 = vpop.f32.mrb[0].mxu0
    %11588 = vdwg.mxu0
    %v11589 = vpack.c.bf16 %v11337, %v11337
    %v11590 = vpack.c.bf16 %v11339, %v11339
    %v11591 = vpack.c.bf16 %v11460, %v11460
    %v11592 = vpack.c.bf16 %v11462, %v11462
    %v11593 = vpack.c.bf16 %v11583, %v11583
    %v11594 = vpack.c.bf16 %v11585, %v11585
    %v11595 = vld [vmem:[#allocation23] sm:$0xff]
    %v11596 = vld [vmem:[#allocation23 + $0x8] sm:$0xff]
    %v11597 = vld [vmem:[#allocation23 + $0x10] sm:$0xff]
    %v11601 = vunpack.c.l.b16 %v11595
    %v11602 = vunpack.c.h.b16 %v11595
    %v11603 = vunpack.c.l.b16 %v11596
    %v11604 = vunpack.c.h.b16 %v11596
    %v11605 = vunpack.c.l.b16 %v11597
    %v11606 = vunpack.c.h.b16 %v11597
    %v11607 = vpack.c.b16 %v11601, %v11601
    %v11608 = vpack.c.b16 %v11602, %v11602
    %v11609 = vpack.c.b16 %v11603, %v11603
    %v11610 = vpack.c.b16 %v11604, %v11604
    %v11611 = vpack.c.b16 %v11605, %v11605
    %v11612 = vpack.c.b16 %v11606, %v11606
    %11619 = vmatprep.subr.bf16.mxu0 %v11608
    %11620 = vmatpush1.bf16.xpose.msra.mxu0 %v11607
    %11621 = vmatprep.subr.bf16.mxu0 0
    %11622 = vmatpush1.bf16.xpose.msra.mxu0 0
    %11623 = vmatprep.subr.bf16.mxu0 0
    %11624 = vmatpush1.bf16.xpose.msra.mxu0 0
    %11625 = vmatprep.subr.bf16.mxu0 0
    %11626 = vmatpush1.bf16.xpose.msra.mxu0 0
    %11627 = vmatprep.subr.bf16.mxu0 0
    %11628 = vmatpush1.bf16.xpose.msra.mxu0 0
    %11629 = vmatprep.subr.bf16.mxu0 0
    %11630 = vmatpush1.bf16.xpose.msra.mxu0 0
    %11631 = vmatprep.subr.bf16.mxu0 0
    %11632 = vmatpush1.bf16.xpose.msra.mxu0 0
    %11633 = vmatprep.subr.bf16.mxu0 0
    %11634 = vmatpush1.bf16.xpose.msra.mxu0 0
    %11635 = vmatprep.subr.bf16.mxu0 0
    %11636 = vmatpush1.bf16.xpose.msra.mxu0 0
    %11637 = vmatprep.subr.bf16.mxu0 0
    %11638 = vmatpush1.bf16.xpose.msra.mxu0 0
    %11639 = vmatprep.subr.bf16.mxu0 0
    %11640 = vmatpush1.bf16.xpose.msra.mxu0 0
    %11641 = vmatprep.subr.bf16.mxu0 0
    %11642 = vmatpush1.bf16.xpose.msra.mxu0 0
    %11643 = vmatprep.subr.bf16.mxu0 0
    %11644 = vmatpush1.bf16.xpose.msra.mxu0 0
    %11645 = vmatprep.subr.bf16.mxu0 0
    %11646 = vmatpush1.bf16.xpose.msra.mxu0 0
    %11647 = vmatprep.subr.bf16.mxu0 0
    %11648 = vmatpush1.bf16.xpose.msra.mxu0 0
    %11649 = vmatprep.subr.bf16.mxu0 0
    %11650 = vmatpush1.bf16.xpose.msra.mxu0 0
    %11651 = vmatprep.mubr.bf16.mxu0 %v11590
    %11652 = vmatmul.mubr.bf16.gmra.mrb[0].mxu0 %v11589
    %v11653 = vpop.f32.mrb[0].mxu0
    %v11654 = vadd.f32 0.0, %v11653
    %v11655 = vpop.f32.mrb[0].mxu0
    %v11656 = vpop.f32.mrb[0].mxu0
    %v11657 = vpop.f32.mrb[0].mxu0
    %11658 = vdwg.mxu0
    %11659 = vmatprep.subr.bf16.mxu0 %v11610
    %11660 = vmatpush1.bf16.xpose.msra.mxu0 %v11609
    %11661 = vmatprep.subr.bf16.mxu0 0
    %11662 = vmatpush1.bf16.xpose.msra.mxu0 0
    %11663 = vmatprep.subr.bf16.mxu0 0
    %11664 = vmatpush1.bf16.xpose.msra.mxu0 0
    %11665 = vmatprep.subr.bf16.mxu0 0
    %11666 = vmatpush1.bf16.xpose.msra.mxu0 0
    %11667 = vmatprep.subr.bf16.mxu0 0
    %11668 = vmatpush1.bf16.xpose.msra.mxu0 0
    %11669 = vmatprep.subr.bf16.mxu0 0
    %11670 = vmatpush1.bf16.xpose.msra.mxu0 0
    %11671 = vmatprep.subr.bf16.mxu0 0
    %11672 = vmatpush1.bf16.xpose.msra.mxu0 0
    %11673 = vmatprep.subr.bf16.mxu0 0
    %11674 = vmatpush1.bf16.xpose.msra.mxu0 0
    %11675 = vmatprep.subr.bf16.mxu0 0
    %11676 = vmatpush1.bf16.xpose.msra.mxu0 0
    %11677 = vmatprep.subr.bf16.mxu0 0
    %11678 = vmatpush1.bf16.xpose.msra.mxu0 0
    %11679 = vmatprep.subr.bf16.mxu0 0
    %11680 = vmatpush1.bf16.xpose.msra.mxu0 0
    %11681 = vmatprep.subr.bf16.mxu0 0
    %11682 = vmatpush1.bf16.xpose.msra.mxu0 0
    %11683 = vmatprep.subr.bf16.mxu0 0
    %11684 = vmatpush1.bf16.xpose.msra.mxu0 0
    %11685 = vmatprep.subr.bf16.mxu0 0
    %11686 = vmatpush1.bf16.xpose.msra.mxu0 0
    %11687 = vmatprep.subr.bf16.mxu0 0
    %11688 = vmatpush1.bf16.xpose.msra.mxu0 0
    %11689 = vmatprep.subr.bf16.mxu0 0
    %11690 = vmatpush1.bf16.xpose.msra.mxu0 0
    %11691 = vmatprep.mubr.bf16.mxu0 %v11592
    %11692 = vmatmul.mubr.bf16.gmra.mrb[0].mxu0 %v11591
    %v11693 = vpop.f32.mrb[0].mxu0
    %v11694 = vadd.f32 %v11654, %v11693
    %v11695 = vpop.f32.mrb[0].mxu0
    %v11696 = vpop.f32.mrb[0].mxu0
    %v11697 = vpop.f32.mrb[0].mxu0
    %11698 = vdwg.mxu0
    %11699 = vmatprep.subr.bf16.mxu0 %v11612
    %11700 = vmatpush1.bf16.xpose.msra.mxu0 %v11611
    %11701 = vmatprep.subr.bf16.mxu0 0
    %11702 = vmatpush1.bf16.xpose.msra.mxu0 0
    %11703 = vmatprep.subr.bf16.mxu0 0
    %11704 = vmatpush1.bf16.xpose.msra.mxu0 0
    %11705 = vmatprep.subr.bf16.mxu0 0
    %11706 = vmatpush1.bf16.xpose.msra.mxu0 0
    %11707 = vmatprep.subr.bf16.mxu0 0
    %11708 = vmatpush1.bf16.xpose.msra.mxu0 0
    %11709 = vmatprep.subr.bf16.mxu0 0
    %11710 = vmatpush1.bf16.xpose.msra.mxu0 0
    %11711 = vmatprep.subr.bf16.mxu0 0
    %11712 = vmatpush1.bf16.xpose.msra.mxu0 0
    %11713 = vmatprep.subr.bf16.mxu0 0
    %11714 = vmatpush1.bf16.xpose.msra.mxu0 0
    %11715 = vmatprep.subr.bf16.mxu0 0
    %11716 = vmatpush1.bf16.xpose.msra.mxu0 0
    %11717 = vmatprep.subr.bf16.mxu0 0
    %11718 = vmatpush1.bf16.xpose.msra.mxu0 0
    %11719 = vmatprep.subr.bf16.mxu0 0
    %11720 = vmatpush1.bf16.xpose.msra.mxu0 0
    %11721 = vmatprep.subr.bf16.mxu0 0
    %11722 = vmatpush1.bf16.xpose.msra.mxu0 0
    %11723 = vmatprep.subr.bf16.mxu0 0
    %11724 = vmatpush1.bf16.xpose.msra.mxu0 0
    %11725 = vmatprep.subr.bf16.mxu0 0
    %11726 = vmatpush1.bf16.xpose.msra.mxu0 0
    %11727 = vmatprep.subr.bf16.mxu0 0
    %11728 = vmatpush1.bf16.xpose.msra.mxu0 0
    %11729 = vmatprep.subr.bf16.mxu0 0
    %11730 = vmatpush1.bf16.xpose.msra.mxu0 0
    %11731 = vmatprep.mubr.bf16.mxu0 %v11594
    %11732 = vmatmul.mubr.bf16.gmra.mrb[0].mxu0 %v11593
    %v11733 = vpop.f32.mrb[0].mxu0
    %v11734 = vadd.f32 %v11694, %v11733
    %v11735 = vpop.f32.mrb[0].mxu0
    %v11736 = vpop.f32.mrb[0].mxu0
    %v11737 = vpop.f32.mrb[0].mxu0
    %11738 = vdwg.mxu0
    %v11739 = vmul.f32 %v11734, 0.03608439
    %vm11740 = vcmask 58368
    %v11741 = vsel %vm11740, %v11739, -inf
    %11742 = vmax.xlane.f32.xlu0 %v11741
    %v11743 = vpop.xlane.xlu0 %11742
    %v11744 = vsub.f32 %v11739, %v11743
    %v11745 = vmul.f32 %v11744, 1.442695
    %v11746 = vpow.pop %v11745
    %v11747 = vsel %vm11740, %v11746, 0.0
    %11748 = vadd.xlane.f32.xlu0 %v11747
    %v11749 = vpop.xlane.xlu0 %11748
    %v11750 = vrcp.pop %v11749
    %v11751 = vmul.f32 %v11746, %v11750
    %v11752 = vpack.c.bf16 %v11751, %v11751
    %v11753 = vld [vmem:[#allocation25] sm:$0xff]
    %v11754 = vld [vmem:[#allocation25 + $0x8] sm:$0xff]
    %v11755 = vld [vmem:[#allocation25 + $0x10] sm:$0xff]
    %v11759 = vunpack.c.l.b16 %v11753
    %v11760 = vunpack.c.h.b16 %v11753
    %v11761 = vunpack.c.l.b16 %v11754
    %v11762 = vunpack.c.h.b16 %v11754
    %v11763 = vunpack.c.l.b16 %v11755
    %v11764 = vunpack.c.h.b16 %v11755
    %v11765 = vpack.c.b16 %v11759, %v11759
    %v11766 = vpack.c.b16 %v11760, %v11760
    %v11767 = vpack.c.b16 %v11761, %v11761
    %v11768 = vpack.c.b16 %v11762, %v11762
    %v11769 = vpack.c.b16 %v11763, %v11763
    %v11770 = vpack.c.b16 %v11764, %v11764
    %vm11771 = vcmask 64512
    %v11773 = vsel %vm11771, %v11752, 0
    %v11776 = vsel %vm2686, %v11765, 0
    %v11779 = vsel %vm2686, %v11766, 0
    %v11782 = vsel %vm2686, %v11767, 0
    %v11785 = vsel %vm2686, %v11768, 0
    %v11788 = vsel %vm2686, %v11769, 0
    %v11791 = vsel %vm2686, %v11770, 0
    %11793 = vmatprep.subr.bf16.mxu0 %v11779
    %11794 = vmatpush1.bf16.msra.mxu0 %v11776
    %11795 = vmatprep.subr.bf16.mxu0 0
    %11796 = vmatpush1.bf16.msra.mxu0 0
    %11797 = vmatprep.subr.bf16.mxu0 0
    %11798 = vmatpush1.bf16.msra.mxu0 0
    %11799 = vmatprep.subr.bf16.mxu0 0
    %11800 = vmatpush1.bf16.msra.mxu0 0
    %11801 = vmatprep.subr.bf16.mxu0 0
    %11802 = vmatpush1.bf16.msra.mxu0 0
    %11803 = vmatprep.subr.bf16.mxu0 0
    %11804 = vmatpush1.bf16.msra.mxu0 0
    %11805 = vmatprep.subr.bf16.mxu0 0
    %11806 = vmatpush1.bf16.msra.mxu0 0
    %11807 = vmatprep.subr.bf16.mxu0 0
    %11808 = vmatpush1.bf16.msra.mxu0 0
    %11809 = vmatprep.subr.bf16.mxu0 0
    %11810 = vmatpush1.bf16.msra.mxu0 0
    %11811 = vmatprep.subr.bf16.mxu0 0
    %11812 = vmatpush1.bf16.msra.mxu0 0
    %11813 = vmatprep.subr.bf16.mxu0 0
    %11814 = vmatpush1.bf16.msra.mxu0 0
    %11815 = vmatprep.subr.bf16.mxu0 0
    %11816 = vmatpush1.bf16.msra.mxu0 0
    %11817 = vmatprep.subr.bf16.mxu0 0
    %11818 = vmatpush1.bf16.msra.mxu0 0
    %11819 = vmatprep.subr.bf16.mxu0 0
    %11820 = vmatpush1.bf16.msra.mxu0 0
    %11821 = vmatprep.subr.bf16.mxu0 0
    %11822 = vmatpush1.bf16.msra.mxu0 0
    %11823 = vmatprep.subr.bf16.mxu0 0
    %11824 = vmatpush1.bf16.msra.mxu0 0
    %11825 = vmatprep.mubr.bf16.mxu0 0
    %11826 = vmatmul.mubr.bf16.gmra.mrb[0].mxu0 %v11773
    %v11827 = vpop.f32.mrb[0].mxu0
    %v11828 = vadd.f32 0.0, %v11827
    %v11829 = vpop.f32.mrb[0].mxu0
    %v11830 = vadd.f32 0.0, %v11829
    %v11831 = vpop.f32.mrb[0].mxu0
    %v11832 = vpop.f32.mrb[0].mxu0
    %11833 = vdwg.mxu0
    %11834 = vmatprep.subr.bf16.mxu0 %v11785
    %11835 = vmatpush1.bf16.msra.mxu0 %v11782
    %11836 = vmatprep.subr.bf16.mxu0 0
    %11837 = vmatpush1.bf16.msra.mxu0 0
    %11838 = vmatprep.subr.bf16.mxu0 0
    %11839 = vmatpush1.bf16.msra.mxu0 0
    %11840 = vmatprep.subr.bf16.mxu0 0
    %11841 = vmatpush1.bf16.msra.mxu0 0
    %11842 = vmatprep.subr.bf16.mxu0 0
    %11843 = vmatpush1.bf16.msra.mxu0 0
    %11844 = vmatprep.subr.bf16.mxu0 0
    %11845 = vmatpush1.bf16.msra.mxu0 0
    %11846 = vmatprep.subr.bf16.mxu0 0
    %11847 = vmatpush1.bf16.msra.mxu0 0
    %11848 = vmatprep.subr.bf16.mxu0 0
    %11849 = vmatpush1.bf16.msra.mxu0 0
    %11850 = vmatprep.subr.bf16.mxu0 0
    %11851 = vmatpush1.bf16.msra.mxu0 0
    %11852 = vmatprep.subr.bf16.mxu0 0
    %11853 = vmatpush1.bf16.msra.mxu0 0
    %11854 = vmatprep.subr.bf16.mxu0 0
    %11855 = vmatpush1.bf16.msra.mxu0 0
    %11856 = vmatprep.subr.bf16.mxu0 0
    %11857 = vmatpush1.bf16.msra.mxu0 0
    %11858 = vmatprep.subr.bf16.mxu0 0
    %11859 = vmatpush1.bf16.msra.mxu0 0
    %11860 = vmatprep.subr.bf16.mxu0 0
    %11861 = vmatpush1.bf16.msra.mxu0 0
    %11862 = vmatprep.subr.bf16.mxu0 0
    %11863 = vmatpush1.bf16.msra.mxu0 0
    %11864 = vmatprep.subr.bf16.mxu0 0
    %11865 = vmatpush1.bf16.msra.mxu0 0
    %11866 = vmatprep.mubr.bf16.mxu0 0
    %11867 = vmatmul.mubr.bf16.gmra.mrb[0].mxu0 %v11773
    %v11868 = vpop.f32.mrb[0].mxu0
    %v11869 = vadd.f32 0.0, %v11868
    %v11870 = vpop.f32.mrb[0].mxu0
    %v11871 = vadd.f32 0.0, %v11870
    %v11872 = vpop.f32.mrb[0].mxu0
    %v11873 = vpop.f32.mrb[0].mxu0
    %11874 = vdwg.mxu0
    %11875 = vmatprep.subr.bf16.mxu0 %v11791
    %11876 = vmatpush1.bf16.msra.mxu0 %v11788
    %11877 = vmatprep.subr.bf16.mxu0 0
    %11878 = vmatpush1.bf16.msra.mxu0 0
    %11879 = vmatprep.subr.bf16.mxu0 0
    %11880 = vmatpush1.bf16.msra.mxu0 0
    %11881 = vmatprep.subr.bf16.mxu0 0
    %11882 = vmatpush1.bf16.msra.mxu0 0
    %11883 = vmatprep.subr.bf16.mxu0 0
    %11884 = vmatpush1.bf16.msra.mxu0 0
    %11885 = vmatprep.subr.bf16.mxu0 0
    %11886 = vmatpush1.bf16.msra.mxu0 0
    %11887 = vmatprep.subr.bf16.mxu0 0
    %11888 = vmatpush1.bf16.msra.mxu0 0
    %11889 = vmatprep.subr.bf16.mxu0 0
    %11890 = vmatpush1.bf16.msra.mxu0 0
    %11891 = vmatprep.subr.bf16.mxu0 0
    %11892 = vmatpush1.bf16.msra.mxu0 0
    %11893 = vmatprep.subr.bf16.mxu0 0
    %11894 = vmatpush1.bf16.msra.mxu0 0
    %11895 = vmatprep.subr.bf16.mxu0 0
    %11896 = vmatpush1.bf16.msra.mxu0 0
    %11897 = vmatprep.subr.bf16.mxu0 0
    %11898 = vmatpush1.bf16.msra.mxu0 0
    %11899 = vmatprep.subr.bf16.mxu0 0
    %11900 = vmatpush1.bf16.msra.mxu0 0
    %11901 = vmatprep.subr.bf16.mxu0 0
    %11902 = vmatpush1.bf16.msra.mxu0 0
    %11903 = vmatprep.subr.bf16.mxu0 0
    %11904 = vmatpush1.bf16.msra.mxu0 0
    %11905 = vmatprep.subr.bf16.mxu0 0
    %11906 = vmatpush1.bf16.msra.mxu0 0
    %11907 = vmatprep.mubr.bf16.mxu0 0
    %11908 = vmatmul.mubr.bf16.gmra.mrb[0].mxu0 %v11773
    %v11909 = vpop.f32.mrb[0].mxu0
    %v11910 = vadd.f32 0.0, %v11909
    %v11911 = vpop.f32.mrb[0].mxu0
    %v11912 = vadd.f32 0.0, %v11911
    %v11913 = vpop.f32.mrb[0].mxu0
    %v11914 = vpop.f32.mrb[0].mxu0
    %11915 = vdwg.mxu0
    %v11916 = vpack.c.bf16 %v11828, %v11828
    %v11917 = vpack.c.bf16 %v11830, %v11830
    %v11918 = vpack.c.bf16 %v11869, %v11869
    %v11919 = vpack.c.bf16 %v11871, %v11871
    %v11920 = vpack.c.bf16 %v11910, %v11910
    %v11921 = vpack.c.bf16 %v11912, %v11912
    %v11922 = vld [vmem:[#allocation26] sm:$0xff]
    %v11923 = vld [vmem:[#allocation26 + $0x8] sm:$0xff]
    %v11924 = vld [vmem:[#allocation26 + $0x10] sm:$0xff]
    %v11925 = vld [vmem:[#allocation26 + $0x18] sm:$0xff]
    %v11926 = vld [vmem:[#allocation26 + $0x20] sm:$0xff]
    %v11927 = vld [vmem:[#allocation26 + $0x28] sm:$0xff]
    %v11928 = vld [vmem:[#allocation26 + $0x30] sm:$0xff]
    %v11929 = vld [vmem:[#allocation26 + $0x38] sm:$0xff]
    %v11930 = vld [vmem:[#allocation26 + $0x40] sm:$0xff]
    %v11931 = vld [vmem:[#allocation26 + $0x48] sm:$0xff]
    %v11932 = vld [vmem:[#allocation26 + $0x50] sm:$0xff]
    %v11933 = vld [vmem:[#allocation26 + $0x58] sm:$0xff]
    %v11934 = vld [vmem:[#allocation26 + $0x60] sm:$0xff]
    %v11935 = vld [vmem:[#allocation26 + $0x68] sm:$0xff]
    %v11936 = vld [vmem:[#allocation26 + $0x70] sm:$0xff]
    %v11937 = vld [vmem:[#allocation26 + $0x78] sm:$0xff]
    %v11938 = vld [vmem:[#allocation26 + $0x80] sm:$0xff]
    %v11939 = vld [vmem:[#allocation26 + $0x88] sm:$0xff]
    %v11940 = vld [vmem:[#allocation26 + $0x90] sm:$0xff]
    %v11941 = vld [vmem:[#allocation26 + $0x98] sm:$0xff]
    %v11942 = vld [vmem:[#allocation26 + $0xa0] sm:$0xff]
    %v11943 = vld [vmem:[#allocation26 + $0xa8] sm:$0xff]
    %v11944 = vld [vmem:[#allocation26 + $0xb0] sm:$0xff]
    %v11945 = vld [vmem:[#allocation26 + $0xb8] sm:$0xff]
    %v11946 = vld [vmem:[#allocation26 + $0xc0] sm:$0xff]
    %v11947 = vld [vmem:[#allocation26 + $0xc8] sm:$0xff]
    %v11948 = vld [vmem:[#allocation26 + $0xd0] sm:$0xff]
    %v11949 = vld [vmem:[#allocation26 + $0xd8] sm:$0xff]
    %v11950 = vld [vmem:[#allocation26 + $0xe0] sm:$0xff]
    %v11951 = vld [vmem:[#allocation26 + $0xe8] sm:$0xff]
    %v11952 = vld [vmem:[#allocation26 + $0xf0] sm:$0xff]
    %v11953 = vld [vmem:[#allocation26 + $0xf8] sm:$0xff]
    %v11954 = vld [vmem:[#allocation26 + $0x100] sm:$0xff]
    %v11955 = vld [vmem:[#allocation26 + $0x108] sm:$0xff]
    %v11956 = vld [vmem:[#allocation26 + $0x110] sm:$0xff]
    %v11957 = vld [vmem:[#allocation26 + $0x118] sm:$0xff]
    %v11958 = vld [vmem:[#allocation26 + $0x120] sm:$0xff]
    %v11959 = vld [vmem:[#allocation26 + $0x128] sm:$0xff]
    %v11960 = vld [vmem:[#allocation26 + $0x130] sm:$0xff]
    %v11961 = vld [vmem:[#allocation26 + $0x138] sm:$0xff]
    %v11962 = vld [vmem:[#allocation26 + $0x140] sm:$0xff]
    %v11963 = vld [vmem:[#allocation26 + $0x148] sm:$0xff]
    %v11964 = vld [vmem:[#allocation26 + $0x150] sm:$0xff]
    %v11965 = vld [vmem:[#allocation26 + $0x158] sm:$0xff]
    %v11966 = vld [vmem:[#allocation26 + $0x160] sm:$0xff]
    %v11967 = vld [vmem:[#allocation26 + $0x168] sm:$0xff]
    %v11968 = vld [vmem:[#allocation26 + $0x170] sm:$0xff]
    %v11969 = vld [vmem:[#allocation26 + $0x178] sm:$0xff]
    %v11970 = vld [vmem:[#allocation26 + $0x180] sm:$0xff]
    %v11971 = vld [vmem:[#allocation26 + $0x188] sm:$0xff]
    %v11972 = vld [vmem:[#allocation26 + $0x190] sm:$0xff]
    %v11973 = vld [vmem:[#allocation26 + $0x198] sm:$0xff]
    %v11974 = vld [vmem:[#allocation26 + $0x1a0] sm:$0xff]
    %v11975 = vld [vmem:[#allocation26 + $0x1a8] sm:$0xff]
    %v11976 = vld [vmem:[#allocation26 + $0x1b0] sm:$0xff]
    %v11977 = vld [vmem:[#allocation26 + $0x1b8] sm:$0xff]
    %v11978 = vld [vmem:[#allocation26 + $0x1c0] sm:$0xff]
    %v11979 = vld [vmem:[#allocation26 + $0x1c8] sm:$0xff]
    %v11980 = vld [vmem:[#allocation26 + $0x1d0] sm:$0xff]
    %v11981 = vld [vmem:[#allocation26 + $0x1d8] sm:$0xff]
    %v11982 = vld [vmem:[#allocation26 + $0x1e0] sm:$0xff]
    %v11983 = vld [vmem:[#allocation26 + $0x1e8] sm:$0xff]
    %v11984 = vld [vmem:[#allocation26 + $0x1f0] sm:$0xff]
    %v11985 = vld [vmem:[#allocation26 + $0x1f8] sm:$0xff]
    %v11986 = vld [vmem:[#allocation26 + $0x200] sm:$0xff]
    %v11987 = vld [vmem:[#allocation26 + $0x208] sm:$0xff]
    %v11988 = vld [vmem:[#allocation26 + $0x210] sm:$0xff]
    %v11989 = vld [vmem:[#allocation26 + $0x218] sm:$0xff]
    %v11990 = vld [vmem:[#allocation26 + $0x220] sm:$0xff]
    %v11991 = vld [vmem:[#allocation26 + $0x228] sm:$0xff]
    %v11992 = vld [vmem:[#allocation26 + $0x230] sm:$0xff]
    %v11993 = vld [vmem:[#allocation26 + $0x238] sm:$0xff]
    %v11994 = vld [vmem:[#allocation26 + $0x240] sm:$0xff]
    %v11995 = vld [vmem:[#allocation26 + $0x248] sm:$0xff]
    %v11996 = vld [vmem:[#allocation26 + $0x250] sm:$0xff]
    %v11997 = vld [vmem:[#allocation26 + $0x258] sm:$0xff]
    %v11998 = vld [vmem:[#allocation26 + $0x260] sm:$0xff]
    %v11999 = vld [vmem:[#allocation26 + $0x268] sm:$0xff]
    %v12000 = vld [vmem:[#allocation26 + $0x270] sm:$0xff]
    %v12001 = vld [vmem:[#allocation26 + $0x278] sm:$0xff]
    %v12002 = vld [vmem:[#allocation26 + $0x280] sm:$0xff]
    %v12003 = vld [vmem:[#allocation26 + $0x288] sm:$0xff]
    %v12004 = vld [vmem:[#allocation26 + $0x290] sm:$0xff]
    %v12005 = vld [vmem:[#allocation26 + $0x298] sm:$0xff]
    %v12006 = vld [vmem:[#allocation26 + $0x2a0] sm:$0xff]
    %v12007 = vld [vmem:[#allocation26 + $0x2a8] sm:$0xff]
    %v12008 = vld [vmem:[#allocation26 + $0x2b0] sm:$0xff]
    %v12009 = vld [vmem:[#allocation26 + $0x2b8] sm:$0xff]
    %v12010 = vld [vmem:[#allocation26 + $0x2c0] sm:$0xff]
    %v12011 = vld [vmem:[#allocation26 + $0x2c8] sm:$0xff]
    %v12012 = vld [vmem:[#allocation26 + $0x2d0] sm:$0xff]
    %v12013 = vld [vmem:[#allocation26 + $0x2d8] sm:$0xff]
    %v12014 = vld [vmem:[#allocation26 + $0x2e0] sm:$0xff]
    %v12015 = vld [vmem:[#allocation26 + $0x2e8] sm:$0xff]
    %v12016 = vld [vmem:[#allocation26 + $0x2f0] sm:$0xff]
    %v12017 = vld [vmem:[#allocation26 + $0x2f8] sm:$0xff]
    %v12018 = vld [vmem:[#allocation26 + $0x300] sm:$0xff]
    %v12019 = vld [vmem:[#allocation26 + $0x308] sm:$0xff]
    %v12020 = vld [vmem:[#allocation26 + $0x310] sm:$0xff]
    %v12021 = vld [vmem:[#allocation26 + $0x318] sm:$0xff]
    %v12022 = vld [vmem:[#allocation26 + $0x320] sm:$0xff]
    %v12023 = vld [vmem:[#allocation26 + $0x328] sm:$0xff]
    %v12024 = vld [vmem:[#allocation26 + $0x330] sm:$0xff]
    %v12025 = vld [vmem:[#allocation26 + $0x338] sm:$0xff]
    %v12026 = vld [vmem:[#allocation26 + $0x340] sm:$0xff]
    %v12027 = vld [vmem:[#allocation26 + $0x348] sm:$0xff]
    %v12028 = vld [vmem:[#allocation26 + $0x350] sm:$0xff]
    %v12029 = vld [vmem:[#allocation26 + $0x358] sm:$0xff]
    %v12030 = vld [vmem:[#allocation26 + $0x360] sm:$0xff]
    %v12031 = vld [vmem:[#allocation26 + $0x368] sm:$0xff]
    %v12032 = vld [vmem:[#allocation26 + $0x370] sm:$0xff]
    %v12033 = vld [vmem:[#allocation26 + $0x378] sm:$0xff]
    %v12034 = vld [vmem:[#allocation26 + $0x380] sm:$0xff]
    %v12035 = vld [vmem:[#allocation26 + $0x388] sm:$0xff]
    %v12036 = vld [vmem:[#allocation26 + $0x390] sm:$0xff]
    %v12037 = vld [vmem:[#allocation26 + $0x398] sm:$0xff]
    %v12038 = vld [vmem:[#allocation26 + $0x3a0] sm:$0xff]
    %v12039 = vld [vmem:[#allocation26 + $0x3a8] sm:$0xff]
    %v12040 = vld [vmem:[#allocation26 + $0x3b0] sm:$0xff]
    %v12041 = vld [vmem:[#allocation26 + $0x3b8] sm:$0xff]
    %v12042 = vld [vmem:[#allocation26 + $0x3c0] sm:$0xff]
    %v12043 = vld [vmem:[#allocation26 + $0x3c8] sm:$0xff]
    %v12044 = vld [vmem:[#allocation26 + $0x3d0] sm:$0xff]
    %v12045 = vld [vmem:[#allocation26 + $0x3d8] sm:$0xff]
    %v12046 = vld [vmem:[#allocation26 + $0x3e0] sm:$0xff]
    %v12047 = vld [vmem:[#allocation26 + $0x3e8] sm:$0xff]
    %v12048 = vld [vmem:[#allocation26 + $0x3f0] sm:$0xff]
    %v12049 = vld [vmem:[#allocation26 + $0x3f8] sm:$0xff]
    %v12050 = vld [vmem:[#allocation26 + $0x400] sm:$0xff]
    %v12051 = vld [vmem:[#allocation26 + $0x408] sm:$0xff]
    %v12052 = vld [vmem:[#allocation26 + $0x410] sm:$0xff]
    %v12053 = vld [vmem:[#allocation26 + $0x418] sm:$0xff]
    %v12054 = vld [vmem:[#allocation26 + $0x420] sm:$0xff]
    %v12055 = vld [vmem:[#allocation26 + $0x428] sm:$0xff]
    %v12056 = vld [vmem:[#allocation26 + $0x430] sm:$0xff]
    %v12057 = vld [vmem:[#allocation26 + $0x438] sm:$0xff]
    %v12058 = vld [vmem:[#allocation26 + $0x440] sm:$0xff]
    %v12059 = vld [vmem:[#allocation26 + $0x448] sm:$0xff]
    %v12060 = vld [vmem:[#allocation26 + $0x450] sm:$0xff]
    %v12061 = vld [vmem:[#allocation26 + $0x458] sm:$0xff]
    %v12062 = vld [vmem:[#allocation26 + $0x460] sm:$0xff]
    %v12063 = vld [vmem:[#allocation26 + $0x468] sm:$0xff]
    %v12064 = vld [vmem:[#allocation26 + $0x470] sm:$0xff]
    %v12065 = vld [vmem:[#allocation26 + $0x478] sm:$0xff]
    %v12066 = vld [vmem:[#allocation26 + $0x480] sm:$0xff]
    %v12067 = vld [vmem:[#allocation26 + $0x488] sm:$0xff]
    %v12068 = vld [vmem:[#allocation26 + $0x490] sm:$0xff]
    %v12069 = vld [vmem:[#allocation26 + $0x498] sm:$0xff]
    %v12070 = vld [vmem:[#allocation26 + $0x4a0] sm:$0xff]
    %v12071 = vld [vmem:[#allocation26 + $0x4a8] sm:$0xff]
    %v12072 = vld [vmem:[#allocation26 + $0x4b0] sm:$0xff]
    %v12073 = vld [vmem:[#allocation26 + $0x4b8] sm:$0xff]
    %v12074 = vld [vmem:[#allocation26 + $0x4c0] sm:$0xff]
    %v12075 = vld [vmem:[#allocation26 + $0x4c8] sm:$0xff]
    %v12076 = vld [vmem:[#allocation26 + $0x4d0] sm:$0xff]
    %v12077 = vld [vmem:[#allocation26 + $0x4d8] sm:$0xff]
    %v12078 = vld [vmem:[#allocation26 + $0x4e0] sm:$0xff]
    %v12079 = vld [vmem:[#allocation26 + $0x4e8] sm:$0xff]
    %v12080 = vld [vmem:[#allocation26 + $0x4f0] sm:$0xff]
    %v12081 = vld [vmem:[#allocation26 + $0x4f8] sm:$0xff]
    %v12082 = vld [vmem:[#allocation26 + $0x500] sm:$0xff]
    %v12083 = vld [vmem:[#allocation26 + $0x508] sm:$0xff]
    %v12084 = vld [vmem:[#allocation26 + $0x510] sm:$0xff]
    %v12085 = vld [vmem:[#allocation26 + $0x518] sm:$0xff]
    %v12086 = vld [vmem:[#allocation26 + $0x520] sm:$0xff]
    %v12087 = vld [vmem:[#allocation26 + $0x528] sm:$0xff]
    %v12088 = vld [vmem:[#allocation26 + $0x530] sm:$0xff]
    %v12089 = vld [vmem:[#allocation26 + $0x538] sm:$0xff]
    %v12090 = vld [vmem:[#allocation26 + $0x540] sm:$0xff]
    %v12091 = vld [vmem:[#allocation26 + $0x548] sm:$0xff]
    %v12092 = vld [vmem:[#allocation26 + $0x550] sm:$0xff]
    %v12093 = vld [vmem:[#allocation26 + $0x558] sm:$0xff]
    %v12094 = vld [vmem:[#allocation26 + $0x560] sm:$0xff]
    %v12095 = vld [vmem:[#allocation26 + $0x568] sm:$0xff]
    %v12096 = vld [vmem:[#allocation26 + $0x570] sm:$0xff]
    %v12097 = vld [vmem:[#allocation26 + $0x578] sm:$0xff]
    %v12098 = vld [vmem:[#allocation26 + $0x580] sm:$0xff]
    %v12099 = vld [vmem:[#allocation26 + $0x588] sm:$0xff]
    %v12100 = vld [vmem:[#allocation26 + $0x590] sm:$0xff]
    %v12101 = vld [vmem:[#allocation26 + $0x598] sm:$0xff]
    %v12102 = vld [vmem:[#allocation26 + $0x5a0] sm:$0xff]
    %v12103 = vld [vmem:[#allocation26 + $0x5a8] sm:$0xff]
    %v12104 = vld [vmem:[#allocation26 + $0x5b0] sm:$0xff]
    %v12105 = vld [vmem:[#allocation26 + $0x5b8] sm:$0xff]
    %v12106 = vld [vmem:[#allocation26 + $0x5c0] sm:$0xff]
    %v12107 = vld [vmem:[#allocation26 + $0x5c8] sm:$0xff]
    %v12108 = vld [vmem:[#allocation26 + $0x5d0] sm:$0xff]
    %v12109 = vld [vmem:[#allocation26 + $0x5d8] sm:$0xff]
    %v12110 = vld [vmem:[#allocation26 + $0x5e0] sm:$0xff]
    %v12111 = vld [vmem:[#allocation26 + $0x5e8] sm:$0xff]
    %v12112 = vld [vmem:[#allocation26 + $0x5f0] sm:$0xff]
    %v12113 = vld [vmem:[#allocation26 + $0x5f8] sm:$0xff]
    %v12114 = vld [vmem:[#allocation26 + $0x600] sm:$0xff]
    %v12115 = vld [vmem:[#allocation26 + $0x608] sm:$0xff]
    %v12116 = vld [vmem:[#allocation26 + $0x610] sm:$0xff]
    %v12117 = vld [vmem:[#allocation26 + $0x618] sm:$0xff]
    %v12118 = vld [vmem:[#allocation26 + $0x620] sm:$0xff]
    %v12119 = vld [vmem:[#allocation26 + $0x628] sm:$0xff]
    %v12120 = vld [vmem:[#allocation26 + $0x630] sm:$0xff]
    %v12121 = vld [vmem:[#allocation26 + $0x638] sm:$0xff]
    %v12122 = vld [vmem:[#allocation26 + $0x640] sm:$0xff]
    %v12123 = vld [vmem:[#allocation26 + $0x648] sm:$0xff]
    %v12124 = vld [vmem:[#allocation26 + $0x650] sm:$0xff]
    %v12125 = vld [vmem:[#allocation26 + $0x658] sm:$0xff]
    %v12126 = vld [vmem:[#allocation26 + $0x660] sm:$0xff]
    %v12127 = vld [vmem:[#allocation26 + $0x668] sm:$0xff]
    %v12128 = vld [vmem:[#allocation26 + $0x670] sm:$0xff]
    %v12129 = vld [vmem:[#allocation26 + $0x678] sm:$0xff]
    %v12130 = vld [vmem:[#allocation26 + $0x680] sm:$0xff]
    %v12131 = vld [vmem:[#allocation26 + $0x688] sm:$0xff]
    %v12132 = vld [vmem:[#allocation26 + $0x690] sm:$0xff]
    %v12133 = vld [vmem:[#allocation26 + $0x698] sm:$0xff]
    %v12134 = vld [vmem:[#allocation26 + $0x6a0] sm:$0xff]
    %v12135 = vld [vmem:[#allocation26 + $0x6a8] sm:$0xff]
    %v12136 = vld [vmem:[#allocation26 + $0x6b0] sm:$0xff]
    %v12137 = vld [vmem:[#allocation26 + $0x6b8] sm:$0xff]
    %v12138 = vld [vmem:[#allocation26 + $0x6c0] sm:$0xff]
    %v12139 = vld [vmem:[#allocation26 + $0x6c8] sm:$0xff]
    %v12140 = vld [vmem:[#allocation26 + $0x6d0] sm:$0xff]
    %v12141 = vld [vmem:[#allocation26 + $0x6d8] sm:$0xff]
    %v12142 = vld [vmem:[#allocation26 + $0x6e0] sm:$0xff]
    %v12143 = vld [vmem:[#allocation26 + $0x6e8] sm:$0xff]
    %v12144 = vld [vmem:[#allocation26 + $0x6f0] sm:$0xff]
    %v12145 = vld [vmem:[#allocation26 + $0x6f8] sm:$0xff]
    %v12146 = vld [vmem:[#allocation26 + $0x700] sm:$0xff]
    %v12147 = vld [vmem:[#allocation26 + $0x708] sm:$0xff]
    %v12148 = vld [vmem:[#allocation26 + $0x710] sm:$0xff]
    %v12149 = vld [vmem:[#allocation26 + $0x718] sm:$0xff]
    %v12150 = vld [vmem:[#allocation26 + $0x720] sm:$0xff]
    %v12151 = vld [vmem:[#allocation26 + $0x728] sm:$0xff]
    %v12152 = vld [vmem:[#allocation26 + $0x730] sm:$0xff]
    %v12153 = vld [vmem:[#allocation26 + $0x738] sm:$0xff]
    %v12154 = vld [vmem:[#allocation26 + $0x740] sm:$0xff]
    %v12155 = vld [vmem:[#allocation26 + $0x748] sm:$0xff]
    %v12156 = vld [vmem:[#allocation26 + $0x750] sm:$0xff]
    %v12157 = vld [vmem:[#allocation26 + $0x758] sm:$0xff]
    %v12158 = vld [vmem:[#allocation26 + $0x760] sm:$0xff]
    %v12159 = vld [vmem:[#allocation26 + $0x768] sm:$0xff]
    %v12160 = vld [vmem:[#allocation26 + $0x770] sm:$0xff]
    %v12161 = vld [vmem:[#allocation26 + $0x778] sm:$0xff]
    %v12162 = vld [vmem:[#allocation26 + $0x780] sm:$0xff]
    %v12163 = vld [vmem:[#allocation26 + $0x788] sm:$0xff]
    %v12164 = vld [vmem:[#allocation26 + $0x790] sm:$0xff]
    %v12165 = vld [vmem:[#allocation26 + $0x798] sm:$0xff]
    %v12166 = vld [vmem:[#allocation26 + $0x7a0] sm:$0xff]
    %v12167 = vld [vmem:[#allocation26 + $0x7a8] sm:$0xff]
    %v12168 = vld [vmem:[#allocation26 + $0x7b0] sm:$0xff]
    %v12169 = vld [vmem:[#allocation26 + $0x7b8] sm:$0xff]
    %v12170 = vld [vmem:[#allocation26 + $0x7c0] sm:$0xff]
    %v12171 = vld [vmem:[#allocation26 + $0x7c8] sm:$0xff]
    %v12172 = vld [vmem:[#allocation26 + $0x7d0] sm:$0xff]
    %v12173 = vld [vmem:[#allocation26 + $0x7d8] sm:$0xff]
    %v12174 = vld [vmem:[#allocation26 + $0x7e0] sm:$0xff]
    %v12175 = vld [vmem:[#allocation26 + $0x7e8] sm:$0xff]
    %v12176 = vld [vmem:[#allocation26 + $0x7f0] sm:$0xff]
    %v12177 = vld [vmem:[#allocation26 + $0x7f8] sm:$0xff]
    %v12178 = vld [vmem:[#allocation26 + $0x800] sm:$0xff]
    %v12179 = vld [vmem:[#allocation26 + $0x808] sm:$0xff]
    %v12180 = vld [vmem:[#allocation26 + $0x810] sm:$0xff]
    %v12181 = vld [vmem:[#allocation26 + $0x818] sm:$0xff]
    %v12182 = vld [vmem:[#allocation26 + $0x820] sm:$0xff]
    %v12183 = vld [vmem:[#allocation26 + $0x828] sm:$0xff]
    %v12184 = vld [vmem:[#allocation26 + $0x830] sm:$0xff]
    %v12185 = vld [vmem:[#allocation26 + $0x838] sm:$0xff]
    %v12186 = vld [vmem:[#allocation26 + $0x840] sm:$0xff]
    %v12187 = vld [vmem:[#allocation26 + $0x848] sm:$0xff]
    %v12188 = vld [vmem:[#allocation26 + $0x850] sm:$0xff]
    %v12189 = vld [vmem:[#allocation26 + $0x858] sm:$0xff]
    %v12190 = vld [vmem:[#allocation26 + $0x860] sm:$0xff]
    %v12191 = vld [vmem:[#allocation26 + $0x868] sm:$0xff]
    %v12192 = vld [vmem:[#allocation26 + $0x870] sm:$0xff]
    %v12193 = vld [vmem:[#allocation26 + $0x878] sm:$0xff]
    %v12194 = vld [vmem:[#allocation26 + $0x880] sm:$0xff]
    %v12195 = vld [vmem:[#allocation26 + $0x888] sm:$0xff]
    %v12196 = vld [vmem:[#allocation26 + $0x890] sm:$0xff]
    %v12197 = vld [vmem:[#allocation26 + $0x898] sm:$0xff]
    %v12198 = vld [vmem:[#allocation26 + $0x8a0] sm:$0xff]
    %v12199 = vld [vmem:[#allocation26 + $0x8a8] sm:$0xff]
    %v12200 = vld [vmem:[#allocation26 + $0x8b0] sm:$0xff]
    %v12201 = vld [vmem:[#allocation26 + $0x8b8] sm:$0xff]
    %v12202 = vld [vmem:[#allocation26 + $0x8c0] sm:$0xff]
    %v12203 = vld [vmem:[#allocation26 + $0x8c8] sm:$0xff]
    %v12204 = vld [vmem:[#allocation26 + $0x8d0] sm:$0xff]
    %v12205 = vld [vmem:[#allocation26 + $0x8d8] sm:$0xff]
    %v12206 = vld [vmem:[#allocation26 + $0x8e0] sm:$0xff]
    %v12207 = vld [vmem:[#allocation26 + $0x8e8] sm:$0xff]
    %v12208 = vld [vmem:[#allocation26 + $0x8f0] sm:$0xff]
    %v12209 = vld [vmem:[#allocation26 + $0x8f8] sm:$0xff]
    %v12498 = vunpack.c.l.b16 %v11922
    %v12499 = vunpack.c.h.b16 %v11922
    %v12500 = vunpack.c.l.b16 %v11923
    %v12501 = vunpack.c.h.b16 %v11923
    %v12502 = vunpack.c.l.b16 %v11924
    %v12503 = vunpack.c.h.b16 %v11924
    %v12504 = vunpack.c.l.b16 %v11925
    %v12505 = vunpack.c.h.b16 %v11925
    %v12506 = vunpack.c.l.b16 %v11926
    %v12507 = vunpack.c.h.b16 %v11926
    %v12508 = vunpack.c.l.b16 %v11927
    %v12509 = vunpack.c.h.b16 %v11927
    %v12510 = vunpack.c.l.b16 %v11928
    %v12511 = vunpack.c.h.b16 %v11928
    %v12512 = vunpack.c.l.b16 %v11929
    %v12513 = vunpack.c.h.b16 %v11929
    %v12514 = vunpack.c.l.b16 %v11930
    %v12515 = vunpack.c.h.b16 %v11930
    %v12516 = vunpack.c.l.b16 %v11931
    %v12517 = vunpack.c.h.b16 %v11931
    %v12518 = vunpack.c.l.b16 %v11932
    %v12519 = vunpack.c.h.b16 %v11932
    %v12520 = vunpack.c.l.b16 %v11933
    %v12521 = vunpack.c.h.b16 %v11933
    %v12522 = vunpack.c.l.b16 %v11934
    %v12523 = vunpack.c.h.b16 %v11934
    %v12524 = vunpack.c.l.b16 %v11935
    %v12525 = vunpack.c.h.b16 %v11935
    %v12526 = vunpack.c.l.b16 %v11936
    %v12527 = vunpack.c.h.b16 %v11936
    %v12528 = vunpack.c.l.b16 %v11937
    %v12529 = vunpack.c.h.b16 %v11937
    %v12530 = vunpack.c.l.b16 %v11938
    %v12531 = vunpack.c.h.b16 %v11938
    %v12532 = vunpack.c.l.b16 %v11939
    %v12533 = vunpack.c.h.b16 %v11939
    %v12534 = vunpack.c.l.b16 %v11940
    %v12535 = vunpack.c.h.b16 %v11940
    %v12536 = vunpack.c.l.b16 %v11941
    %v12537 = vunpack.c.h.b16 %v11941
    %v12538 = vunpack.c.l.b16 %v11942
    %v12539 = vunpack.c.h.b16 %v11942
    %v12540 = vunpack.c.l.b16 %v11943
    %v12541 = vunpack.c.h.b16 %v11943
    %v12542 = vunpack.c.l.b16 %v11944
    %v12543 = vunpack.c.h.b16 %v11944
    %v12544 = vunpack.c.l.b16 %v11945
    %v12545 = vunpack.c.h.b16 %v11945
    %v12546 = vunpack.c.l.b16 %v11946
    %v12547 = vunpack.c.h.b16 %v11946
    %v12548 = vunpack.c.l.b16 %v11947
    %v12549 = vunpack.c.h.b16 %v11947
    %v12550 = vunpack.c.l.b16 %v11948
    %v12551 = vunpack.c.h.b16 %v11948
    %v12552 = vunpack.c.l.b16 %v11949
    %v12553 = vunpack.c.h.b16 %v11949
    %v12554 = vunpack.c.l.b16 %v11950
    %v12555 = vunpack.c.h.b16 %v11950
    %v12556 = vunpack.c.l.b16 %v11951
    %v12557 = vunpack.c.h.b16 %v11951
    %v12558 = vunpack.c.l.b16 %v11952
    %v12559 = vunpack.c.h.b16 %v11952
    %v12560 = vunpack.c.l.b16 %v11953
    %v12561 = vunpack.c.h.b16 %v11953
    %v12562 = vunpack.c.l.b16 %v11954
    %v12563 = vunpack.c.h.b16 %v11954
    %v12564 = vunpack.c.l.b16 %v11955
    %v12565 = vunpack.c.h.b16 %v11955
    %v12566 = vunpack.c.l.b16 %v11956
    %v12567 = vunpack.c.h.b16 %v11956
    %v12568 = vunpack.c.l.b16 %v11957
    %v12569 = vunpack.c.h.b16 %v11957
    %v12570 = vunpack.c.l.b16 %v11958
    %v12571 = vunpack.c.h.b16 %v11958
    %v12572 = vunpack.c.l.b16 %v11959
    %v12573 = vunpack.c.h.b16 %v11959
    %v12574 = vunpack.c.l.b16 %v11960
    %v12575 = vunpack.c.h.b16 %v11960
    %v12576 = vunpack.c.l.b16 %v11961
    %v12577 = vunpack.c.h.b16 %v11961
    %v12578 = vunpack.c.l.b16 %v11962
    %v12579 = vunpack.c.h.b16 %v11962
    %v12580 = vunpack.c.l.b16 %v11963
    %v12581 = vunpack.c.h.b16 %v11963
    %v12582 = vunpack.c.l.b16 %v11964
    %v12583 = vunpack.c.h.b16 %v11964
    %v12584 = vunpack.c.l.b16 %v11965
    %v12585 = vunpack.c.h.b16 %v11965
    %v12586 = vunpack.c.l.b16 %v11966
    %v12587 = vunpack.c.h.b16 %v11966
    %v12588 = vunpack.c.l.b16 %v11967
    %v12589 = vunpack.c.h.b16 %v11967
    %v12590 = vunpack.c.l.b16 %v11968
    %v12591 = vunpack.c.h.b16 %v11968
    %v12592 = vunpack.c.l.b16 %v11969
    %v12593 = vunpack.c.h.b16 %v11969
    %v12594 = vunpack.c.l.b16 %v11970
    %v12595 = vunpack.c.h.b16 %v11970
    %v12596 = vunpack.c.l.b16 %v11971
    %v12597 = vunpack.c.h.b16 %v11971
    %v12598 = vunpack.c.l.b16 %v11972
    %v12599 = vunpack.c.h.b16 %v11972
    %v12600 = vunpack.c.l.b16 %v11973
    %v12601 = vunpack.c.h.b16 %v11973
    %v12602 = vunpack.c.l.b16 %v11974
    %v12603 = vunpack.c.h.b16 %v11974
    %v12604 = vunpack.c.l.b16 %v11975
    %v12605 = vunpack.c.h.b16 %v11975
    %v12606 = vunpack.c.l.b16 %v11976
    %v12607 = vunpack.c.h.b16 %v11976
    %v12608 = vunpack.c.l.b16 %v11977
    %v12609 = vunpack.c.h.b16 %v11977
    %v12610 = vunpack.c.l.b16 %v11978
    %v12611 = vunpack.c.h.b16 %v11978
    %v12612 = vunpack.c.l.b16 %v11979
    %v12613 = vunpack.c.h.b16 %v11979
    %v12614 = vunpack.c.l.b16 %v11980
    %v12615 = vunpack.c.h.b16 %v11980
    %v12616 = vunpack.c.l.b16 %v11981
    %v12617 = vunpack.c.h.b16 %v11981
    %v12618 = vunpack.c.l.b16 %v11982
    %v12619 = vunpack.c.h.b16 %v11982
    %v12620 = vunpack.c.l.b16 %v11983
    %v12621 = vunpack.c.h.b16 %v11983
    %v12622 = vunpack.c.l.b16 %v11984
    %v12623 = vunpack.c.h.b16 %v11984
    %v12624 = vunpack.c.l.b16 %v11985
    %v12625 = vunpack.c.h.b16 %v11985
    %v12626 = vunpack.c.l.b16 %v11986
    %v12627 = vunpack.c.h.b16 %v11986
    %v12628 = vunpack.c.l.b16 %v11987
    %v12629 = vunpack.c.h.b16 %v11987
    %v12630 = vunpack.c.l.b16 %v11988
    %v12631 = vunpack.c.h.b16 %v11988
    %v12632 = vunpack.c.l.b16 %v11989
    %v12633 = vunpack.c.h.b16 %v11989
    %v12634 = vunpack.c.l.b16 %v11990
    %v12635 = vunpack.c.h.b16 %v11990
    %v12636 = vunpack.c.l.b16 %v11991
    %v12637 = vunpack.c.h.b16 %v11991
    %v12638 = vunpack.c.l.b16 %v11992
    %v12639 = vunpack.c.h.b16 %v11992
    %v12640 = vunpack.c.l.b16 %v11993
    %v12641 = vunpack.c.h.b16 %v11993
    %v12642 = vunpack.c.l.b16 %v11994
    %v12643 = vunpack.c.h.b16 %v11994
    %v12644 = vunpack.c.l.b16 %v11995
    %v12645 = vunpack.c.h.b16 %v11995
    %v12646 = vunpack.c.l.b16 %v11996
    %v12647 = vunpack.c.h.b16 %v11996
    %v12648 = vunpack.c.l.b16 %v11997
    %v12649 = vunpack.c.h.b16 %v11997
    %v12650 = vunpack.c.l.b16 %v11998
    %v12651 = vunpack.c.h.b16 %v11998
    %v12652 = vunpack.c.l.b16 %v11999
    %v12653 = vunpack.c.h.b16 %v11999
    %v12654 = vunpack.c.l.b16 %v12000
    %v12655 = vunpack.c.h.b16 %v12000
    %v12656 = vunpack.c.l.b16 %v12001
    %v12657 = vunpack.c.h.b16 %v12001
    %v12658 = vunpack.c.l.b16 %v12002
    %v12659 = vunpack.c.h.b16 %v12002
    %v12660 = vunpack.c.l.b16 %v12003
    %v12661 = vunpack.c.h.b16 %v12003
    %v12662 = vunpack.c.l.b16 %v12004
    %v12663 = vunpack.c.h.b16 %v12004
    %v12664 = vunpack.c.l.b16 %v12005
    %v12665 = vunpack.c.h.b16 %v12005
    %v12666 = vunpack.c.l.b16 %v12006
    %v12667 = vunpack.c.h.b16 %v12006
    %v12668 = vunpack.c.l.b16 %v12007
    %v12669 = vunpack.c.h.b16 %v12007
    %v12670 = vunpack.c.l.b16 %v12008
    %v12671 = vunpack.c.h.b16 %v12008
    %v12672 = vunpack.c.l.b16 %v12009
    %v12673 = vunpack.c.h.b16 %v12009
    %v12674 = vunpack.c.l.b16 %v12010
    %v12675 = vunpack.c.h.b16 %v12010
    %v12676 = vunpack.c.l.b16 %v12011
    %v12677 = vunpack.c.h.b16 %v12011
    %v12678 = vunpack.c.l.b16 %v12012
    %v12679 = vunpack.c.h.b16 %v12012
    %v12680 = vunpack.c.l.b16 %v12013
    %v12681 = vunpack.c.h.b16 %v12013
    %v12682 = vunpack.c.l.b16 %v12014
    %v12683 = vunpack.c.h.b16 %v12014
    %v12684 = vunpack.c.l.b16 %v12015
    %v12685 = vunpack.c.h.b16 %v12015
    %v12686 = vunpack.c.l.b16 %v12016
    %v12687 = vunpack.c.h.b16 %v12016
    %v12688 = vunpack.c.l.b16 %v12017
    %v12689 = vunpack.c.h.b16 %v12017
    %v12690 = vunpack.c.l.b16 %v12018
    %v12691 = vunpack.c.h.b16 %v12018
    %v12692 = vunpack.c.l.b16 %v12019
    %v12693 = vunpack.c.h.b16 %v12019
    %v12694 = vunpack.c.l.b16 %v12020
    %v12695 = vunpack.c.h.b16 %v12020
    %v12696 = vunpack.c.l.b16 %v12021
    %v12697 = vunpack.c.h.b16 %v12021
    %v12698 = vunpack.c.l.b16 %v12022
    %v12699 = vunpack.c.h.b16 %v12022
    %v12700 = vunpack.c.l.b16 %v12023
    %v12701 = vunpack.c.h.b16 %v12023
    %v12702 = vunpack.c.l.b16 %v12024
    %v12703 = vunpack.c.h.b16 %v12024
    %v12704 = vunpack.c.l.b16 %v12025
    %v12705 = vunpack.c.h.b16 %v12025
    %v12706 = vunpack.c.l.b16 %v12026
    %v12707 = vunpack.c.h.b16 %v12026
    %v12708 = vunpack.c.l.b16 %v12027
    %v12709 = vunpack.c.h.b16 %v12027
    %v12710 = vunpack.c.l.b16 %v12028
    %v12711 = vunpack.c.h.b16 %v12028
    %v12712 = vunpack.c.l.b16 %v12029
    %v12713 = vunpack.c.h.b16 %v12029
    %v12714 = vunpack.c.l.b16 %v12030
    %v12715 = vunpack.c.h.b16 %v12030
    %v12716 = vunpack.c.l.b16 %v12031
    %v12717 = vunpack.c.h.b16 %v12031
    %v12718 = vunpack.c.l.b16 %v12032
    %v12719 = vunpack.c.h.b16 %v12032
    %v12720 = vunpack.c.l.b16 %v12033
    %v12721 = vunpack.c.h.b16 %v12033
    %v12722 = vunpack.c.l.b16 %v12034
    %v12723 = vunpack.c.h.b16 %v12034
    %v12724 = vunpack.c.l.b16 %v12035
    %v12725 = vunpack.c.h.b16 %v12035
    %v12726 = vunpack.c.l.b16 %v12036
    %v12727 = vunpack.c.h.b16 %v12036
    %v12728 = vunpack.c.l.b16 %v12037
    %v12729 = vunpack.c.h.b16 %v12037
    %v12730 = vunpack.c.l.b16 %v12038
    %v12731 = vunpack.c.h.b16 %v12038
    %v12732 = vunpack.c.l.b16 %v12039
    %v12733 = vunpack.c.h.b16 %v12039
    %v12734 = vunpack.c.l.b16 %v12040
    %v12735 = vunpack.c.h.b16 %v12040
    %v12736 = vunpack.c.l.b16 %v12041
    %v12737 = vunpack.c.h.b16 %v12041
    %v12738 = vunpack.c.l.b16 %v12042
    %v12739 = vunpack.c.h.b16 %v12042
    %v12740 = vunpack.c.l.b16 %v12043
    %v12741 = vunpack.c.h.b16 %v12043
    %v12742 = vunpack.c.l.b16 %v12044
    %v12743 = vunpack.c.h.b16 %v12044
    %v12744 = vunpack.c.l.b16 %v12045
    %v12745 = vunpack.c.h.b16 %v12045
    %v12746 = vunpack.c.l.b16 %v12046
    %v12747 = vunpack.c.h.b16 %v12046
    %v12748 = vunpack.c.l.b16 %v12047
    %v12749 = vunpack.c.h.b16 %v12047
    %v12750 = vunpack.c.l.b16 %v12048
    %v12751 = vunpack.c.h.b16 %v12048
    %v12752 = vunpack.c.l.b16 %v12049
    %v12753 = vunpack.c.h.b16 %v12049
    %v12754 = vunpack.c.l.b16 %v12050
    %v12755 = vunpack.c.h.b16 %v12050
    %v12756 = vunpack.c.l.b16 %v12051
    %v12757 = vunpack.c.h.b16 %v12051
    %v12758 = vunpack.c.l.b16 %v12052
    %v12759 = vunpack.c.h.b16 %v12052
    %v12760 = vunpack.c.l.b16 %v12053
    %v12761 = vunpack.c.h.b16 %v12053
    %v12762 = vunpack.c.l.b16 %v12054
    %v12763 = vunpack.c.h.b16 %v12054
    %v12764 = vunpack.c.l.b16 %v12055
    %v12765 = vunpack.c.h.b16 %v12055
    %v12766 = vunpack.c.l.b16 %v12056
    %v12767 = vunpack.c.h.b16 %v12056
    %v12768 = vunpack.c.l.b16 %v12057
    %v12769 = vunpack.c.h.b16 %v12057
    %v12770 = vunpack.c.l.b16 %v12058
    %v12771 = vunpack.c.h.b16 %v12058
    %v12772 = vunpack.c.l.b16 %v12059
    %v12773 = vunpack.c.h.b16 %v12059
    %v12774 = vunpack.c.l.b16 %v12060
    %v12775 = vunpack.c.h.b16 %v12060
    %v12776 = vunpack.c.l.b16 %v12061
    %v12777 = vunpack.c.h.b16 %v12061
    %v12778 = vunpack.c.l.b16 %v12062
    %v12779 = vunpack.c.h.b16 %v12062
    %v12780 = vunpack.c.l.b16 %v12063
    %v12781 = vunpack.c.h.b16 %v12063
    %v12782 = vunpack.c.l.b16 %v12064
    %v12783 = vunpack.c.h.b16 %v12064
    %v12784 = vunpack.c.l.b16 %v12065
    %v12785 = vunpack.c.h.b16 %v12065
    %v12786 = vunpack.c.l.b16 %v12066
    %v12787 = vunpack.c.h.b16 %v12066
    %v12788 = vunpack.c.l.b16 %v12067
    %v12789 = vunpack.c.h.b16 %v12067
    %v12790 = vunpack.c.l.b16 %v12068
    %v12791 = vunpack.c.h.b16 %v12068
    %v12792 = vunpack.c.l.b16 %v12069
    %v12793 = vunpack.c.h.b16 %v12069
    %v12794 = vunpack.c.l.b16 %v12070
    %v12795 = vunpack.c.h.b16 %v12070
    %v12796 = vunpack.c.l.b16 %v12071
    %v12797 = vunpack.c.h.b16 %v12071
    %v12798 = vunpack.c.l.b16 %v12072
    %v12799 = vunpack.c.h.b16 %v12072
    %v12800 = vunpack.c.l.b16 %v12073
    %v12801 = vunpack.c.h.b16 %v12073
    %v12802 = vunpack.c.l.b16 %v12074
    %v12803 = vunpack.c.h.b16 %v12074
    %v12804 = vunpack.c.l.b16 %v12075
    %v12805 = vunpack.c.h.b16 %v12075
    %v12806 = vunpack.c.l.b16 %v12076
    %v12807 = vunpack.c.h.b16 %v12076
    %v12808 = vunpack.c.l.b16 %v12077
    %v12809 = vunpack.c.h.b16 %v12077
    %v12810 = vunpack.c.l.b16 %v12078
    %v12811 = vunpack.c.h.b16 %v12078
    %v12812 = vunpack.c.l.b16 %v12079
    %v12813 = vunpack.c.h.b16 %v12079
    %v12814 = vunpack.c.l.b16 %v12080
    %v12815 = vunpack.c.h.b16 %v12080
    %v12816 = vunpack.c.l.b16 %v12081
    %v12817 = vunpack.c.h.b16 %v12081
    %v12818 = vunpack.c.l.b16 %v12082
    %v12819 = vunpack.c.h.b16 %v12082
    %v12820 = vunpack.c.l.b16 %v12083
    %v12821 = vunpack.c.h.b16 %v12083
    %v12822 = vunpack.c.l.b16 %v12084
    %v12823 = vunpack.c.h.b16 %v12084
    %v12824 = vunpack.c.l.b16 %v12085
    %v12825 = vunpack.c.h.b16 %v12085
    %v12826 = vunpack.c.l.b16 %v12086
    %v12827 = vunpack.c.h.b16 %v12086
    %v12828 = vunpack.c.l.b16 %v12087
    %v12829 = vunpack.c.h.b16 %v12087
    %v12830 = vunpack.c.l.b16 %v12088
    %v12831 = vunpack.c.h.b16 %v12088
    %v12832 = vunpack.c.l.b16 %v12089
    %v12833 = vunpack.c.h.b16 %v12089
    %v12834 = vunpack.c.l.b16 %v12090
    %v12835 = vunpack.c.h.b16 %v12090
    %v12836 = vunpack.c.l.b16 %v12091
    %v12837 = vunpack.c.h.b16 %v12091
    %v12838 = vunpack.c.l.b16 %v12092
    %v12839 = vunpack.c.h.b16 %v12092
    %v12840 = vunpack.c.l.b16 %v12093
    %v12841 = vunpack.c.h.b16 %v12093
    %v12842 = vunpack.c.l.b16 %v12094
    %v12843 = vunpack.c.h.b16 %v12094
    %v12844 = vunpack.c.l.b16 %v12095
    %v12845 = vunpack.c.h.b16 %v12095
    %v12846 = vunpack.c.l.b16 %v12096
    %v12847 = vunpack.c.h.b16 %v12096
    %v12848 = vunpack.c.l.b16 %v12097
    %v12849 = vunpack.c.h.b16 %v12097
    %v12850 = vunpack.c.l.b16 %v12098
    %v12851 = vunpack.c.h.b16 %v12098
    %v12852 = vunpack.c.l.b16 %v12099
    %v12853 = vunpack.c.h.b16 %v12099
    %v12854 = vunpack.c.l.b16 %v12100
    %v12855 = vunpack.c.h.b16 %v12100
    %v12856 = vunpack.c.l.b16 %v12101
    %v12857 = vunpack.c.h.b16 %v12101
    %v12858 = vunpack.c.l.b16 %v12102
    %v12859 = vunpack.c.h.b16 %v12102
    %v12860 = vunpack.c.l.b16 %v12103
    %v12861 = vunpack.c.h.b16 %v12103
    %v12862 = vunpack.c.l.b16 %v12104
    %v12863 = vunpack.c.h.b16 %v12104
    %v12864 = vunpack.c.l.b16 %v12105
    %v12865 = vunpack.c.h.b16 %v12105
    %v12866 = vunpack.c.l.b16 %v12106
    %v12867 = vunpack.c.h.b16 %v12106
    %v12868 = vunpack.c.l.b16 %v12107
    %v12869 = vunpack.c.h.b16 %v12107
    %v12870 = vunpack.c.l.b16 %v12108
    %v12871 = vunpack.c.h.b16 %v12108
    %v12872 = vunpack.c.l.b16 %v12109
    %v12873 = vunpack.c.h.b16 %v12109
    %v12874 = vunpack.c.l.b16 %v12110
    %v12875 = vunpack.c.h.b16 %v12110
    %v12876 = vunpack.c.l.b16 %v12111
    %v12877 = vunpack.c.h.b16 %v12111
    %v12878 = vunpack.c.l.b16 %v12112
    %v12879 = vunpack.c.h.b16 %v12112
    %v12880 = vunpack.c.l.b16 %v12113
    %v12881 = vunpack.c.h.b16 %v12113
    %v12882 = vunpack.c.l.b16 %v12114
    %v12883 = vunpack.c.h.b16 %v12114
    %v12884 = vunpack.c.l.b16 %v12115
    %v12885 = vunpack.c.h.b16 %v12115
    %v12886 = vunpack.c.l.b16 %v12116
    %v12887 = vunpack.c.h.b16 %v12116
    %v12888 = vunpack.c.l.b16 %v12117
    %v12889 = vunpack.c.h.b16 %v12117
    %v12890 = vunpack.c.l.b16 %v12118
    %v12891 = vunpack.c.h.b16 %v12118
    %v12892 = vunpack.c.l.b16 %v12119
    %v12893 = vunpack.c.h.b16 %v12119
    %v12894 = vunpack.c.l.b16 %v12120
    %v12895 = vunpack.c.h.b16 %v12120
    %v12896 = vunpack.c.l.b16 %v12121
    %v12897 = vunpack.c.h.b16 %v12121
    %v12898 = vunpack.c.l.b16 %v12122
    %v12899 = vunpack.c.h.b16 %v12122
    %v12900 = vunpack.c.l.b16 %v12123
    %v12901 = vunpack.c.h.b16 %v12123
    %v12902 = vunpack.c.l.b16 %v12124
    %v12903 = vunpack.c.h.b16 %v12124
    %v12904 = vunpack.c.l.b16 %v12125
    %v12905 = vunpack.c.h.b16 %v12125
    %v12906 = vunpack.c.l.b16 %v12126
    %v12907 = vunpack.c.h.b16 %v12126
    %v12908 = vunpack.c.l.b16 %v12127
    %v12909 = vunpack.c.h.b16 %v12127
    %v12910 = vunpack.c.l.b16 %v12128
    %v12911 = vunpack.c.h.b16 %v12128
    %v12912 = vunpack.c.l.b16 %v12129
    %v12913 = vunpack.c.h.b16 %v12129
    %v12914 = vunpack.c.l.b16 %v12130
    %v12915 = vunpack.c.h.b16 %v12130
    %v12916 = vunpack.c.l.b16 %v12131
    %v12917 = vunpack.c.h.b16 %v12131
    %v12918 = vunpack.c.l.b16 %v12132
    %v12919 = vunpack.c.h.b16 %v12132
    %v12920 = vunpack.c.l.b16 %v12133
    %v12921 = vunpack.c.h.b16 %v12133
    %v12922 = vunpack.c.l.b16 %v12134
    %v12923 = vunpack.c.h.b16 %v12134
    %v12924 = vunpack.c.l.b16 %v12135
    %v12925 = vunpack.c.h.b16 %v12135
    %v12926 = vunpack.c.l.b16 %v12136
    %v12927 = vunpack.c.h.b16 %v12136
    %v12928 = vunpack.c.l.b16 %v12137
    %v12929 = vunpack.c.h.b16 %v12137
    %v12930 = vunpack.c.l.b16 %v12138
    %v12931 = vunpack.c.h.b16 %v12138
    %v12932 = vunpack.c.l.b16 %v12139
    %v12933 = vunpack.c.h.b16 %v12139
    %v12934 = vunpack.c.l.b16 %v12140
    %v12935 = vunpack.c.h.b16 %v12140
    %v12936 = vunpack.c.l.b16 %v12141
    %v12937 = vunpack.c.h.b16 %v12141
    %v12938 = vunpack.c.l.b16 %v12142
    %v12939 = vunpack.c.h.b16 %v12142
    %v12940 = vunpack.c.l.b16 %v12143
    %v12941 = vunpack.c.h.b16 %v12143
    %v12942 = vunpack.c.l.b16 %v12144
    %v12943 = vunpack.c.h.b16 %v12144
    %v12944 = vunpack.c.l.b16 %v12145
    %v12945 = vunpack.c.h.b16 %v12145
    %v12946 = vunpack.c.l.b16 %v12146
    %v12947 = vunpack.c.h.b16 %v12146
    %v12948 = vunpack.c.l.b16 %v12147
    %v12949 = vunpack.c.h.b16 %v12147
    %v12950 = vunpack.c.l.b16 %v12148
    %v12951 = vunpack.c.h.b16 %v12148
    %v12952 = vunpack.c.l.b16 %v12149
    %v12953 = vunpack.c.h.b16 %v12149
    %v12954 = vunpack.c.l.b16 %v12150
    %v12955 = vunpack.c.h.b16 %v12150
    %v12956 = vunpack.c.l.b16 %v12151
    %v12957 = vunpack.c.h.b16 %v12151
    %v12958 = vunpack.c.l.b16 %v12152
    %v12959 = vunpack.c.h.b16 %v12152
    %v12960 = vunpack.c.l.b16 %v12153
    %v12961 = vunpack.c.h.b16 %v12153
    %v12962 = vunpack.c.l.b16 %v12154
    %v12963 = vunpack.c.h.b16 %v12154
    %v12964 = vunpack.c.l.b16 %v12155
    %v12965 = vunpack.c.h.b16 %v12155
    %v12966 = vunpack.c.l.b16 %v12156
    %v12967 = vunpack.c.h.b16 %v12156
    %v12968 = vunpack.c.l.b16 %v12157
    %v12969 = vunpack.c.h.b16 %v12157
    %v12970 = vunpack.c.l.b16 %v12158
    %v12971 = vunpack.c.h.b16 %v12158
    %v12972 = vunpack.c.l.b16 %v12159
    %v12973 = vunpack.c.h.b16 %v12159
    %v12974 = vunpack.c.l.b16 %v12160
    %v12975 = vunpack.c.h.b16 %v12160
    %v12976 = vunpack.c.l.b16 %v12161
    %v12977 = vunpack.c.h.b16 %v12161
    %v12978 = vunpack.c.l.b16 %v12162
    %v12979 = vunpack.c.h.b16 %v12162
    %v12980 = vunpack.c.l.b16 %v12163
    %v12981 = vunpack.c.h.b16 %v12163
    %v12982 = vunpack.c.l.b16 %v12164
    %v12983 = vunpack.c.h.b16 %v12164
    %v12984 = vunpack.c.l.b16 %v12165
    %v12985 = vunpack.c.h.b16 %v12165
    %v12986 = vunpack.c.l.b16 %v12166
    %v12987 = vunpack.c.h.b16 %v12166
    %v12988 = vunpack.c.l.b16 %v12167
    %v12989 = vunpack.c.h.b16 %v12167
    %v12990 = vunpack.c.l.b16 %v12168
    %v12991 = vunpack.c.h.b16 %v12168
    %v12992 = vunpack.c.l.b16 %v12169
    %v12993 = vunpack.c.h.b16 %v12169
    %v12994 = vunpack.c.l.b16 %v12170
    %v12995 = vunpack.c.h.b16 %v12170
    %v12996 = vunpack.c.l.b16 %v12171
    %v12997 = vunpack.c.h.b16 %v12171
    %v12998 = vunpack.c.l.b16 %v12172
    %v12999 = vunpack.c.h.b16 %v12172
    %v13000 = vunpack.c.l.b16 %v12173
    %v13001 = vunpack.c.h.b16 %v12173
    %v13002 = vunpack.c.l.b16 %v12174
    %v13003 = vunpack.c.h.b16 %v12174
    %v13004 = vunpack.c.l.b16 %v12175
    %v13005 = vunpack.c.h.b16 %v12175
    %v13006 = vunpack.c.l.b16 %v12176
    %v13007 = vunpack.c.h.b16 %v12176
    %v13008 = vunpack.c.l.b16 %v12177
    %v13009 = vunpack.c.h.b16 %v12177
    %v13010 = vunpack.c.l.b16 %v12178
    %v13011 = vunpack.c.h.b16 %v12178
    %v13012 = vunpack.c.l.b16 %v12179
    %v13013 = vunpack.c.h.b16 %v12179
    %v13014 = vunpack.c.l.b16 %v12180
    %v13015 = vunpack.c.h.b16 %v12180
    %v13016 = vunpack.c.l.b16 %v12181
    %v13017 = vunpack.c.h.b16 %v12181
    %v13018 = vunpack.c.l.b16 %v12182
    %v13019 = vunpack.c.h.b16 %v12182
    %v13020 = vunpack.c.l.b16 %v12183
    %v13021 = vunpack.c.h.b16 %v12183
    %v13022 = vunpack.c.l.b16 %v12184
    %v13023 = vunpack.c.h.b16 %v12184
    %v13024 = vunpack.c.l.b16 %v12185
    %v13025 = vunpack.c.h.b16 %v12185
    %v13026 = vunpack.c.l.b16 %v12186
    %v13027 = vunpack.c.h.b16 %v12186
    %v13028 = vunpack.c.l.b16 %v12187
    %v13029 = vunpack.c.h.b16 %v12187
    %v13030 = vunpack.c.l.b16 %v12188
    %v13031 = vunpack.c.h.b16 %v12188
    %v13032 = vunpack.c.l.b16 %v12189
    %v13033 = vunpack.c.h.b16 %v12189
    %v13034 = vunpack.c.l.b16 %v12190
    %v13035 = vunpack.c.h.b16 %v12190
    %v13036 = vunpack.c.l.b16 %v12191
    %v13037 = vunpack.c.h.b16 %v12191
    %v13038 = vunpack.c.l.b16 %v12192
    %v13039 = vunpack.c.h.b16 %v12192
    %v13040 = vunpack.c.l.b16 %v12193
    %v13041 = vunpack.c.h.b16 %v12193
    %v13042 = vunpack.c.l.b16 %v12194
    %v13043 = vunpack.c.h.b16 %v12194
    %v13044 = vunpack.c.l.b16 %v12195
    %v13045 = vunpack.c.h.b16 %v12195
    %v13046 = vunpack.c.l.b16 %v12196
    %v13047 = vunpack.c.h.b16 %v12196
    %v13048 = vunpack.c.l.b16 %v12197
    %v13049 = vunpack.c.h.b16 %v12197
    %v13050 = vunpack.c.l.b16 %v12198
    %v13051 = vunpack.c.h.b16 %v12198
    %v13052 = vunpack.c.l.b16 %v12199
    %v13053 = vunpack.c.h.b16 %v12199
    %v13054 = vunpack.c.l.b16 %v12200
    %v13055 = vunpack.c.h.b16 %v12200
    %v13056 = vunpack.c.l.b16 %v12201
    %v13057 = vunpack.c.h.b16 %v12201
    %v13058 = vunpack.c.l.b16 %v12202
    %v13059 = vunpack.c.h.b16 %v12202
    %v13060 = vunpack.c.l.b16 %v12203
    %v13061 = vunpack.c.h.b16 %v12203
    %v13062 = vunpack.c.l.b16 %v12204
    %v13063 = vunpack.c.h.b16 %v12204
    %v13064 = vunpack.c.l.b16 %v12205
    %v13065 = vunpack.c.h.b16 %v12205
    %v13066 = vunpack.c.l.b16 %v12206
    %v13067 = vunpack.c.h.b16 %v12206
    %v13068 = vunpack.c.l.b16 %v12207
    %v13069 = vunpack.c.h.b16 %v12207
    %v13070 = vunpack.c.l.b16 %v12208
    %v13071 = vunpack.c.h.b16 %v12208
    %v13072 = vunpack.c.l.b16 %v12209
    %v13073 = vunpack.c.h.b16 %v12209
    %v13074 = vpack.c.b16 %v12504, %v12498
    %v13075 = vpack.c.b16 %v12505, %v12499
    %v13076 = vpack.c.b16 %v12506, %v12500
    %v13077 = vpack.c.b16 %v12507, %v12501
    %v13078 = vpack.c.b16 %v12508, %v12502
    %v13079 = vpack.c.b16 %v12509, %v12503
    %v13080 = vpack.c.b16 %v12516, %v12510
    %v13081 = vpack.c.b16 %v12517, %v12511
    %v13082 = vpack.c.b16 %v12518, %v12512
    %v13083 = vpack.c.b16 %v12519, %v12513
    %v13084 = vpack.c.b16 %v12520, %v12514
    %v13085 = vpack.c.b16 %v12521, %v12515
    %v13086 = vpack.c.b16 %v12528, %v12522
    %v13087 = vpack.c.b16 %v12529, %v12523
    %v13088 = vpack.c.b16 %v12530, %v12524
    %v13089 = vpack.c.b16 %v12531, %v12525
    %v13090 = vpack.c.b16 %v12532, %v12526
    %v13091 = vpack.c.b16 %v12533, %v12527
    %v13092 = vpack.c.b16 %v12540, %v12534
    %v13093 = vpack.c.b16 %v12541, %v12535
    %v13094 = vpack.c.b16 %v12542, %v12536
    %v13095 = vpack.c.b16 %v12543, %v12537
    %v13096 = vpack.c.b16 %v12544, %v12538
    %v13097 = vpack.c.b16 %v12545, %v12539
    %v13098 = vpack.c.b16 %v12552, %v12546
    %v13099 = vpack.c.b16 %v12553, %v12547
    %v13100 = vpack.c.b16 %v12554, %v12548
    %v13101 = vpack.c.b16 %v12555, %v12549
    %v13102 = vpack.c.b16 %v12556, %v12550
    %v13103 = vpack.c.b16 %v12557, %v12551
    %v13104 = vpack.c.b16 %v12564, %v12558
    %v13105 = vpack.c.b16 %v12565, %v12559
    %v13106 = vpack.c.b16 %v12566, %v12560
    %v13107 = vpack.c.b16 %v12567, %v12561
    %v13108 = vpack.c.b16 %v12568, %v12562
    %v13109 = vpack.c.b16 %v12569, %v12563
    %v13110 = vpack.c.b16 %v12576, %v12570
    %v13111 = vpack.c.b16 %v12577, %v12571
    %v13112 = vpack.c.b16 %v12578, %v12572
    %v13113 = vpack.c.b16 %v12579, %v12573
    %v13114 = vpack.c.b16 %v12580, %v12574
    %v13115 = vpack.c.b16 %v12581, %v12575
    %v13116 = vpack.c.b16 %v12588, %v12582
    %v13117 = vpack.c.b16 %v12589, %v12583
    %v13118 = vpack.c.b16 %v12590, %v12584
    %v13119 = vpack.c.b16 %v12591, %v12585
    %v13120 = vpack.c.b16 %v12592, %v12586
    %v13121 = vpack.c.b16 %v12593, %v12587
    %v13122 = vpack.c.b16 %v12600, %v12594
    %v13123 = vpack.c.b16 %v12601, %v12595
    %v13124 = vpack.c.b16 %v12602, %v12596
    %v13125 = vpack.c.b16 %v12603, %v12597
    %v13126 = vpack.c.b16 %v12604, %v12598
    %v13127 = vpack.c.b16 %v12605, %v12599
    %v13128 = vpack.c.b16 %v12612, %v12606
    %v13129 = vpack.c.b16 %v12613, %v12607
    %v13130 = vpack.c.b16 %v12614, %v12608
    %v13131 = vpack.c.b16 %v12615, %v12609
    %v13132 = vpack.c.b16 %v12616, %v12610
    %v13133 = vpack.c.b16 %v12617, %v12611
    %v13134 = vpack.c.b16 %v12624, %v12618
    %v13135 = vpack.c.b16 %v12625, %v12619
    %v13136 = vpack.c.b16 %v12626, %v12620
    %v13137 = vpack.c.b16 %v12627, %v12621
    %v13138 = vpack.c.b16 %v12628, %v12622
    %v13139 = vpack.c.b16 %v12629, %v12623
    %v13140 = vpack.c.b16 %v12636, %v12630
    %v13141 = vpack.c.b16 %v12637, %v12631
    %v13142 = vpack.c.b16 %v12638, %v12632
    %v13143 = vpack.c.b16 %v12639, %v12633
    %v13144 = vpack.c.b16 %v12640, %v12634
    %v13145 = vpack.c.b16 %v12641, %v12635
    %v13146 = vpack.c.b16 %v12648, %v12642
    %v13147 = vpack.c.b16 %v12649, %v12643
    %v13148 = vpack.c.b16 %v12650, %v12644
    %v13149 = vpack.c.b16 %v12651, %v12645
    %v13150 = vpack.c.b16 %v12652, %v12646
    %v13151 = vpack.c.b16 %v12653, %v12647
    %v13152 = vpack.c.b16 %v12660, %v12654
    %v13153 = vpack.c.b16 %v12661, %v12655
    %v13154 = vpack.c.b16 %v12662, %v12656
    %v13155 = vpack.c.b16 %v12663, %v12657
    %v13156 = vpack.c.b16 %v12664, %v12658
    %v13157 = vpack.c.b16 %v12665, %v12659
    %v13158 = vpack.c.b16 %v12672, %v12666
    %v13159 = vpack.c.b16 %v12673, %v12667
    %v13160 = vpack.c.b16 %v12674, %v12668
    %v13161 = vpack.c.b16 %v12675, %v12669
    %v13162 = vpack.c.b16 %v12676, %v12670
    %v13163 = vpack.c.b16 %v12677, %v12671
    %v13164 = vpack.c.b16 %v12684, %v12678
    %v13165 = vpack.c.b16 %v12685, %v12679
    %v13166 = vpack.c.b16 %v12686, %v12680
    %v13167 = vpack.c.b16 %v12687, %v12681
    %v13168 = vpack.c.b16 %v12688, %v12682
    %v13169 = vpack.c.b16 %v12689, %v12683
    %v13170 = vpack.c.b16 %v12696, %v12690
    %v13171 = vpack.c.b16 %v12697, %v12691
    %v13172 = vpack.c.b16 %v12698, %v12692
    %v13173 = vpack.c.b16 %v12699, %v12693
    %v13174 = vpack.c.b16 %v12700, %v12694
    %v13175 = vpack.c.b16 %v12701, %v12695
    %v13176 = vpack.c.b16 %v12708, %v12702
    %v13177 = vpack.c.b16 %v12709, %v12703
    %v13178 = vpack.c.b16 %v12710, %v12704
    %v13179 = vpack.c.b16 %v12711, %v12705
    %v13180 = vpack.c.b16 %v12712, %v12706
    %v13181 = vpack.c.b16 %v12713, %v12707
    %v13182 = vpack.c.b16 %v12720, %v12714
    %v13183 = vpack.c.b16 %v12721, %v12715
    %v13184 = vpack.c.b16 %v12722, %v12716
    %v13185 = vpack.c.b16 %v12723, %v12717
    %v13186 = vpack.c.b16 %v12724, %v12718
    %v13187 = vpack.c.b16 %v12725, %v12719
    %v13188 = vpack.c.b16 %v12732, %v12726
    %v13189 = vpack.c.b16 %v12733, %v12727
    %v13190 = vpack.c.b16 %v12734, %v12728
    %v13191 = vpack.c.b16 %v12735, %v12729
    %v13192 = vpack.c.b16 %v12736, %v12730
    %v13193 = vpack.c.b16 %v12737, %v12731
    %v13194 = vpack.c.b16 %v12744, %v12738
    %v13195 = vpack.c.b16 %v12745, %v12739
    %v13196 = vpack.c.b16 %v12746, %v12740
    %v13197 = vpack.c.b16 %v12747, %v12741
    %v13198 = vpack.c.b16 %v12748, %v12742
    %v13199 = vpack.c.b16 %v12749, %v12743
    %v13200 = vpack.c.b16 %v12756, %v12750
    %v13201 = vpack.c.b16 %v12757, %v12751
    %v13202 = vpack.c.b16 %v12758, %v12752
    %v13203 = vpack.c.b16 %v12759, %v12753
    %v13204 = vpack.c.b16 %v12760, %v12754
    %v13205 = vpack.c.b16 %v12761, %v12755
    %v13206 = vpack.c.b16 %v12768, %v12762
    %v13207 = vpack.c.b16 %v12769, %v12763
    %v13208 = vpack.c.b16 %v12770, %v12764
    %v13209 = vpack.c.b16 %v12771, %v12765
    %v13210 = vpack.c.b16 %v12772, %v12766
    %v13211 = vpack.c.b16 %v12773, %v12767
    %v13212 = vpack.c.b16 %v12780, %v12774
    %v13213 = vpack.c.b16 %v12781, %v12775
    %v13214 = vpack.c.b16 %v12782, %v12776
    %v13215 = vpack.c.b16 %v12783, %v12777
    %v13216 = vpack.c.b16 %v12784, %v12778
    %v13217 = vpack.c.b16 %v12785, %v12779
    %v13218 = vpack.c.b16 %v12792, %v12786
    %v13219 = vpack.c.b16 %v12793, %v12787
    %v13220 = vpack.c.b16 %v12794, %v12788
    %v13221 = vpack.c.b16 %v12795, %v12789
    %v13222 = vpack.c.b16 %v12796, %v12790
    %v13223 = vpack.c.b16 %v12797, %v12791
    %v13224 = vpack.c.b16 %v12804, %v12798
    %v13225 = vpack.c.b16 %v12805, %v12799
    %v13226 = vpack.c.b16 %v12806, %v12800
    %v13227 = vpack.c.b16 %v12807, %v12801
    %v13228 = vpack.c.b16 %v12808, %v12802
    %v13229 = vpack.c.b16 %v12809, %v12803
    %v13230 = vpack.c.b16 %v12816, %v12810
    %v13231 = vpack.c.b16 %v12817, %v12811
    %v13232 = vpack.c.b16 %v12818, %v12812
    %v13233 = vpack.c.b16 %v12819, %v12813
    %v13234 = vpack.c.b16 %v12820, %v12814
    %v13235 = vpack.c.b16 %v12821, %v12815
    %v13236 = vpack.c.b16 %v12828, %v12822
    %v13237 = vpack.c.b16 %v12829, %v12823
    %v13238 = vpack.c.b16 %v12830, %v12824
    %v13239 = vpack.c.b16 %v12831, %v12825
    %v13240 = vpack.c.b16 %v12832, %v12826
    %v13241 = vpack.c.b16 %v12833, %v12827
    %v13242 = vpack.c.b16 %v12840, %v12834
    %v13243 = vpack.c.b16 %v12841, %v12835
    %v13244 = vpack.c.b16 %v12842, %v12836
    %v13245 = vpack.c.b16 %v12843, %v12837
    %v13246 = vpack.c.b16 %v12844, %v12838
    %v13247 = vpack.c.b16 %v12845, %v12839
    %v13248 = vpack.c.b16 %v12852, %v12846
    %v13249 = vpack.c.b16 %v12853, %v12847
    %v13250 = vpack.c.b16 %v12854, %v12848
    %v13251 = vpack.c.b16 %v12855, %v12849
    %v13252 = vpack.c.b16 %v12856, %v12850
    %v13253 = vpack.c.b16 %v12857, %v12851
    %v13254 = vpack.c.b16 %v12864, %v12858
    %v13255 = vpack.c.b16 %v12865, %v12859
    %v13256 = vpack.c.b16 %v12866, %v12860
    %v13257 = vpack.c.b16 %v12867, %v12861
    %v13258 = vpack.c.b16 %v12868, %v12862
    %v13259 = vpack.c.b16 %v12869, %v12863
    %v13260 = vpack.c.b16 %v12876, %v12870
    %v13261 = vpack.c.b16 %v12877, %v12871
    %v13262 = vpack.c.b16 %v12878, %v12872
    %v13263 = vpack.c.b16 %v12879, %v12873
    %v13264 = vpack.c.b16 %v12880, %v12874
    %v13265 = vpack.c.b16 %v12881, %v12875
    %v13266 = vpack.c.b16 %v12888, %v12882
    %v13267 = vpack.c.b16 %v12889, %v12883
    %v13268 = vpack.c.b16 %v12890, %v12884
    %v13269 = vpack.c.b16 %v12891, %v12885
    %v13270 = vpack.c.b16 %v12892, %v12886
    %v13271 = vpack.c.b16 %v12893, %v12887
    %v13272 = vpack.c.b16 %v12900, %v12894
    %v13273 = vpack.c.b16 %v12901, %v12895
    %v13274 = vpack.c.b16 %v12902, %v12896
    %v13275 = vpack.c.b16 %v12903, %v12897
    %v13276 = vpack.c.b16 %v12904, %v12898
    %v13277 = vpack.c.b16 %v12905, %v12899
    %v13278 = vpack.c.b16 %v12912, %v12906
    %v13279 = vpack.c.b16 %v12913, %v12907
    %v13280 = vpack.c.b16 %v12914, %v12908
    %v13281 = vpack.c.b16 %v12915, %v12909
    %v13282 = vpack.c.b16 %v12916, %v12910
    %v13283 = vpack.c.b16 %v12917, %v12911
    %v13284 = vpack.c.b16 %v12924, %v12918
    %v13285 = vpack.c.b16 %v12925, %v12919
    %v13286 = vpack.c.b16 %v12926, %v12920
    %v13287 = vpack.c.b16 %v12927, %v12921
    %v13288 = vpack.c.b16 %v12928, %v12922
    %v13289 = vpack.c.b16 %v12929, %v12923
    %v13290 = vpack.c.b16 %v12936, %v12930
    %v13291 = vpack.c.b16 %v12937, %v12931
    %v13292 = vpack.c.b16 %v12938, %v12932
    %v13293 = vpack.c.b16 %v12939, %v12933
    %v13294 = vpack.c.b16 %v12940, %v12934
    %v13295 = vpack.c.b16 %v12941, %v12935
    %v13296 = vpack.c.b16 %v12948, %v12942
    %v13297 = vpack.c.b16 %v12949, %v12943
    %v13298 = vpack.c.b16 %v12950, %v12944
    %v13299 = vpack.c.b16 %v12951, %v12945
    %v13300 = vpack.c.b16 %v12952, %v12946
    %v13301 = vpack.c.b16 %v12953, %v12947
    %v13302 = vpack.c.b16 %v12960, %v12954
    %v13303 = vpack.c.b16 %v12961, %v12955
    %v13304 = vpack.c.b16 %v12962, %v12956
    %v13305 = vpack.c.b16 %v12963, %v12957
    %v13306 = vpack.c.b16 %v12964, %v12958
    %v13307 = vpack.c.b16 %v12965, %v12959
    %v13308 = vpack.c.b16 %v12972, %v12966
    %v13309 = vpack.c.b16 %v12973, %v12967
    %v13310 = vpack.c.b16 %v12974, %v12968
    %v13311 = vpack.c.b16 %v12975, %v12969
    %v13312 = vpack.c.b16 %v12976, %v12970
    %v13313 = vpack.c.b16 %v12977, %v12971
    %v13314 = vpack.c.b16 %v12984, %v12978
    %v13315 = vpack.c.b16 %v12985, %v12979
    %v13316 = vpack.c.b16 %v12986, %v12980
    %v13317 = vpack.c.b16 %v12987, %v12981
    %v13318 = vpack.c.b16 %v12988, %v12982
    %v13319 = vpack.c.b16 %v12989, %v12983
    %v13320 = vpack.c.b16 %v12996, %v12990
    %v13321 = vpack.c.b16 %v12997, %v12991
    %v13322 = vpack.c.b16 %v12998, %v12992
    %v13323 = vpack.c.b16 %v12999, %v12993
    %v13324 = vpack.c.b16 %v13000, %v12994
    %v13325 = vpack.c.b16 %v13001, %v12995
    %v13326 = vpack.c.b16 %v13008, %v13002
    %v13327 = vpack.c.b16 %v13009, %v13003
    %v13328 = vpack.c.b16 %v13010, %v13004
    %v13329 = vpack.c.b16 %v13011, %v13005
    %v13330 = vpack.c.b16 %v13012, %v13006
    %v13331 = vpack.c.b16 %v13013, %v13007
    %v13332 = vpack.c.b16 %v13020, %v13014
    %v13333 = vpack.c.b16 %v13021, %v13015
    %v13334 = vpack.c.b16 %v13022, %v13016
    %v13335 = vpack.c.b16 %v13023, %v13017
    %v13336 = vpack.c.b16 %v13024, %v13018
    %v13337 = vpack.c.b16 %v13025, %v13019
    %v13338 = vpack.c.b16 %v13032, %v13026
    %v13339 = vpack.c.b16 %v13033, %v13027
    %v13340 = vpack.c.b16 %v13034, %v13028
    %v13341 = vpack.c.b16 %v13035, %v13029
    %v13342 = vpack.c.b16 %v13036, %v13030
    %v13343 = vpack.c.b16 %v13037, %v13031
    %v13344 = vpack.c.b16 %v13044, %v13038
    %v13345 = vpack.c.b16 %v13045, %v13039
    %v13346 = vpack.c.b16 %v13046, %v13040
    %v13347 = vpack.c.b16 %v13047, %v13041
    %v13348 = vpack.c.b16 %v13048, %v13042
    %v13349 = vpack.c.b16 %v13049, %v13043
    %v13350 = vpack.c.b16 %v13056, %v13050
    %v13351 = vpack.c.b16 %v13057, %v13051
    %v13352 = vpack.c.b16 %v13058, %v13052
    %v13353 = vpack.c.b16 %v13059, %v13053
    %v13354 = vpack.c.b16 %v13060, %v13054
    %v13355 = vpack.c.b16 %v13061, %v13055
    %v13356 = vpack.c.b16 %v13068, %v13062
    %v13357 = vpack.c.b16 %v13069, %v13063
    %v13358 = vpack.c.b16 %v13070, %v13064
    %v13359 = vpack.c.b16 %v13071, %v13065
    %v13360 = vpack.c.b16 %v13072, %v13066
    %v13361 = vpack.c.b16 %v13073, %v13067
    %13650 = vmatprep.subr.bf16.mxu0 %v13075
    %13651 = vmatpush1.bf16.msra.mxu0 %v13074
    %13652 = vmatprep.subr.bf16.mxu0 %v13081
    %13653 = vmatpush1.bf16.msra.mxu0 %v13080
    %13654 = vmatprep.subr.bf16.mxu0 %v13087
    %13655 = vmatpush1.bf16.msra.mxu0 %v13086
    %13656 = vmatprep.subr.bf16.mxu0 %v13093
    %13657 = vmatpush1.bf16.msra.mxu0 %v13092
    %13658 = vmatprep.subr.bf16.mxu0 %v13099
    %13659 = vmatpush1.bf16.msra.mxu0 %v13098
    %13660 = vmatprep.subr.bf16.mxu0 %v13105
    %13661 = vmatpush1.bf16.msra.mxu0 %v13104
    %13662 = vmatprep.subr.bf16.mxu0 %v13111
    %13663 = vmatpush1.bf16.msra.mxu0 %v13110
    %13664 = vmatprep.subr.bf16.mxu0 %v13117
    %13665 = vmatpush1.bf16.msra.mxu0 %v13116
    %13666 = vmatprep.subr.bf16.mxu0 %v13123
    %13667 = vmatpush1.bf16.msra.mxu0 %v13122
    %13668 = vmatprep.subr.bf16.mxu0 %v13129
    %13669 = vmatpush1.bf16.msra.mxu0 %v13128
    %13670 = vmatprep.subr.bf16.mxu0 %v13135
    %13671 = vmatpush1.bf16.msra.mxu0 %v13134
    %13672 = vmatprep.subr.bf16.mxu0 %v13141
    %13673 = vmatpush1.bf16.msra.mxu0 %v13140
    %13674 = vmatprep.subr.bf16.mxu0 %v13147
    %13675 = vmatpush1.bf16.msra.mxu0 %v13146
    %13676 = vmatprep.subr.bf16.mxu0 %v13153
    %13677 = vmatpush1.bf16.msra.mxu0 %v13152
    %13678 = vmatprep.subr.bf16.mxu0 %v13159
    %13679 = vmatpush1.bf16.msra.mxu0 %v13158
    %13680 = vmatprep.subr.bf16.mxu0 %v13165
    %13681 = vmatpush1.bf16.msra.mxu0 %v13164
    %13682 = vmatprep.mubr.bf16.mxu0 %v11917
    %13683 = vmatmul.mubr.bf16.gmra.mrb[0].mxu0 %v11916
    %v13684 = vpop.f32.mrb[0].mxu0
    %v13685 = vadd.f32 0.0, %v13684
    %v13686 = vpop.f32.mrb[0].mxu0
    %v13687 = vadd.f32 0.0, %v13686
    %v13688 = vpop.f32.mrb[0].mxu0
    %v13689 = vpop.f32.mrb[0].mxu0
    %13690 = vdwg.mxu0
    %13691 = vmatprep.subr.bf16.mxu0 %v13171
    %13692 = vmatpush1.bf16.msra.mxu0 %v13170
    %13693 = vmatprep.subr.bf16.mxu0 %v13177
    %13694 = vmatpush1.bf16.msra.mxu0 %v13176
    %13695 = vmatprep.subr.bf16.mxu0 %v13183
    %13696 = vmatpush1.bf16.msra.mxu0 %v13182
    %13697 = vmatprep.subr.bf16.mxu0 %v13189
    %13698 = vmatpush1.bf16.msra.mxu0 %v13188
    %13699 = vmatprep.subr.bf16.mxu0 %v13195
    %13700 = vmatpush1.bf16.msra.mxu0 %v13194
    %13701 = vmatprep.subr.bf16.mxu0 %v13201
    %13702 = vmatpush1.bf16.msra.mxu0 %v13200
    %13703 = vmatprep.subr.bf16.mxu0 %v13207
    %13704 = vmatpush1.bf16.msra.mxu0 %v13206
    %13705 = vmatprep.subr.bf16.mxu0 %v13213
    %13706 = vmatpush1.bf16.msra.mxu0 %v13212
    %13707 = vmatprep.subr.bf16.mxu0 %v13219
    %13708 = vmatpush1.bf16.msra.mxu0 %v13218
    %13709 = vmatprep.subr.bf16.mxu0 %v13225
    %13710 = vmatpush1.bf16.msra.mxu0 %v13224
    %13711 = vmatprep.subr.bf16.mxu0 %v13231
    %13712 = vmatpush1.bf16.msra.mxu0 %v13230
    %13713 = vmatprep.subr.bf16.mxu0 %v13237
    %13714 = vmatpush1.bf16.msra.mxu0 %v13236
    %13715 = vmatprep.subr.bf16.mxu0 %v13243
    %13716 = vmatpush1.bf16.msra.mxu0 %v13242
    %13717 = vmatprep.subr.bf16.mxu0 %v13249
    %13718 = vmatpush1.bf16.msra.mxu0 %v13248
    %13719 = vmatprep.subr.bf16.mxu0 %v13255
    %13720 = vmatpush1.bf16.msra.mxu0 %v13254
    %13721 = vmatprep.subr.bf16.mxu0 %v13261
    %13722 = vmatpush1.bf16.msra.mxu0 %v13260
    %13723 = vmatprep.mubr.bf16.mxu0 %v11919
    %13724 = vmatmul.mubr.bf16.gmra.mrb[0].mxu0 %v11918
    %v13725 = vpop.f32.mrb[0].mxu0
    %v13726 = vadd.f32 %v13685, %v13725
    %v13727 = vpop.f32.mrb[0].mxu0
    %v13728 = vadd.f32 %v13687, %v13727
    %v13729 = vpop.f32.mrb[0].mxu0
    %v13730 = vpop.f32.mrb[0].mxu0
    %13731 = vdwg.mxu0
    %13732 = vmatprep.subr.bf16.mxu0 %v13267
    %13733 = vmatpush1.bf16.msra.mxu0 %v13266
    %13734 = vmatprep.subr.bf16.mxu0 %v13273
    %13735 = vmatpush1.bf16.msra.mxu0 %v13272
    %13736 = vmatprep.subr.bf16.mxu0 %v13279
    %13737 = vmatpush1.bf16.msra.mxu0 %v13278
    %13738 = vmatprep.subr.bf16.mxu0 %v13285
    %13739 = vmatpush1.bf16.msra.mxu0 %v13284
    %13740 = vmatprep.subr.bf16.mxu0 %v13291
    %13741 = vmatpush1.bf16.msra.mxu0 %v13290
    %13742 = vmatprep.subr.bf16.mxu0 %v13297
    %13743 = vmatpush1.bf16.msra.mxu0 %v13296
    %13744 = vmatprep.subr.bf16.mxu0 %v13303
    %13745 = vmatpush1.bf16.msra.mxu0 %v13302
    %13746 = vmatprep.subr.bf16.mxu0 %v13309
    %13747 = vmatpush1.bf16.msra.mxu0 %v13308
    %13748 = vmatprep.subr.bf16.mxu0 %v13315
    %13749 = vmatpush1.bf16.msra.mxu0 %v13314
    %13750 = vmatprep.subr.bf16.mxu0 %v13321
    %13751 = vmatpush1.bf16.msra.mxu0 %v13320
    %13752 = vmatprep.subr.bf16.mxu0 %v13327
    %13753 = vmatpush1.bf16.msra.mxu0 %v13326
    %13754 = vmatprep.subr.bf16.mxu0 %v13333
    %13755 = vmatpush1.bf16.msra.mxu0 %v13332
    %13756 = vmatprep.subr.bf16.mxu0 %v13339
    %13757 = vmatpush1.bf16.msra.mxu0 %v13338
    %13758 = vmatprep.subr.bf16.mxu0 %v13345
    %13759 = vmatpush1.bf16.msra.mxu0 %v13344
    %13760 = vmatprep.subr.bf16.mxu0 %v13351
    %13761 = vmatpush1.bf16.msra.mxu0 %v13350
    %13762 = vmatprep.subr.bf16.mxu0 %v13357
    %13763 = vmatpush1.bf16.msra.mxu0 %v13356
    %13764 = vmatprep.mubr.bf16.mxu0 %v11921
    %13765 = vmatmul.mubr.bf16.gmra.mrb[0].mxu0 %v11920
    %v13766 = vpop.f32.mrb[0].mxu0
    %v13767 = vadd.f32 %v13726, %v13766
    %v13768 = vpop.f32.mrb[0].mxu0
    %v13769 = vadd.f32 %v13728, %v13768
    %v13770 = vpop.f32.mrb[0].mxu0
    %v13771 = vpop.f32.mrb[0].mxu0
    %13772 = vdwg.mxu0
    %13773 = vmatprep.subr.bf16.mxu0 %v13077
    %13774 = vmatpush1.bf16.msra.mxu0 %v13076
    %13775 = vmatprep.subr.bf16.mxu0 %v13083
    %13776 = vmatpush1.bf16.msra.mxu0 %v13082
    %13777 = vmatprep.subr.bf16.mxu0 %v13089
    %13778 = vmatpush1.bf16.msra.mxu0 %v13088
    %13779 = vmatprep.subr.bf16.mxu0 %v13095
    %13780 = vmatpush1.bf16.msra.mxu0 %v13094
    %13781 = vmatprep.subr.bf16.mxu0 %v13101
    %13782 = vmatpush1.bf16.msra.mxu0 %v13100
    %13783 = vmatprep.subr.bf16.mxu0 %v13107
    %13784 = vmatpush1.bf16.msra.mxu0 %v13106
    %13785 = vmatprep.subr.bf16.mxu0 %v13113
    %13786 = vmatpush1.bf16.msra.mxu0 %v13112
    %13787 = vmatprep.subr.bf16.mxu0 %v13119
    %13788 = vmatpush1.bf16.msra.mxu0 %v13118
    %13789 = vmatprep.subr.bf16.mxu0 %v13125
    %13790 = vmatpush1.bf16.msra.mxu0 %v13124
    %13791 = vmatprep.subr.bf16.mxu0 %v13131
    %13792 = vmatpush1.bf16.msra.mxu0 %v13130
    %13793 = vmatprep.subr.bf16.mxu0 %v13137
    %13794 = vmatpush1.bf16.msra.mxu0 %v13136
    %13795 = vmatprep.subr.bf16.mxu0 %v13143
    %13796 = vmatpush1.bf16.msra.mxu0 %v13142
    %13797 = vmatprep.subr.bf16.mxu0 %v13149
    %13798 = vmatpush1.bf16.msra.mxu0 %v13148
    %13799 = vmatprep.subr.bf16.mxu0 %v13155
    %13800 = vmatpush1.bf16.msra.mxu0 %v13154
    %13801 = vmatprep.subr.bf16.mxu0 %v13161
    %13802 = vmatpush1.bf16.msra.mxu0 %v13160
    %13803 = vmatprep.subr.bf16.mxu0 %v13167
    %13804 = vmatpush1.bf16.msra.mxu0 %v13166
    %13805 = vmatprep.mubr.bf16.mxu0 %v11917
    %13806 = vmatmul.mubr.bf16.gmra.mrb[0].mxu0 %v11916
    %v13807 = vpop.f32.mrb[0].mxu0
    %v13808 = vadd.f32 0.0, %v13807
    %v13809 = vpop.f32.mrb[0].mxu0
    %v13810 = vadd.f32 0.0, %v13809
    %v13811 = vpop.f32.mrb[0].mxu0
    %v13812 = vpop.f32.mrb[0].mxu0
    %13813 = vdwg.mxu0
    %13814 = vmatprep.subr.bf16.mxu0 %v13173
    %13815 = vmatpush1.bf16.msra.mxu0 %v13172
    %13816 = vmatprep.subr.bf16.mxu0 %v13179
    %13817 = vmatpush1.bf16.msra.mxu0 %v13178
    %13818 = vmatprep.subr.bf16.mxu0 %v13185
    %13819 = vmatpush1.bf16.msra.mxu0 %v13184
    %13820 = vmatprep.subr.bf16.mxu0 %v13191
    %13821 = vmatpush1.bf16.msra.mxu0 %v13190
    %13822 = vmatprep.subr.bf16.mxu0 %v13197
    %13823 = vmatpush1.bf16.msra.mxu0 %v13196
    %13824 = vmatprep.subr.bf16.mxu0 %v13203
    %13825 = vmatpush1.bf16.msra.mxu0 %v13202
    %13826 = vmatprep.subr.bf16.mxu0 %v13209
    %13827 = vmatpush1.bf16.msra.mxu0 %v13208
    %13828 = vmatprep.subr.bf16.mxu0 %v13215
    %13829 = vmatpush1.bf16.msra.mxu0 %v13214
    %13830 = vmatprep.subr.bf16.mxu0 %v13221
    %13831 = vmatpush1.bf16.msra.mxu0 %v13220
    %13832 = vmatprep.subr.bf16.mxu0 %v13227
    %13833 = vmatpush1.bf16.msra.mxu0 %v13226
    %13834 = vmatprep.subr.bf16.mxu0 %v13233
    %13835 = vmatpush1.bf16.msra.mxu0 %v13232
    %13836 = vmatprep.subr.bf16.mxu0 %v13239
    %13837 = vmatpush1.bf16.msra.mxu0 %v13238
    %13838 = vmatprep.subr.bf16.mxu0 %v13245
    %13839 = vmatpush1.bf16.msra.mxu0 %v13244
    %13840 = vmatprep.subr.bf16.mxu0 %v13251
    %13841 = vmatpush1.bf16.msra.mxu0 %v13250
    %13842 = vmatprep.subr.bf16.mxu0 %v13257
    %13843 = vmatpush1.bf16.msra.mxu0 %v13256
    %13844 = vmatprep.subr.bf16.mxu0 %v13263
    %13845 = vmatpush1.bf16.msra.mxu0 %v13262
    %13846 = vmatprep.mubr.bf16.mxu0 %v11919
    %13847 = vmatmul.mubr.bf16.gmra.mrb[0].mxu0 %v11918
    %v13848 = vpop.f32.mrb[0].mxu0
    %v13849 = vadd.f32 %v13808, %v13848
    %v13850 = vpop.f32.mrb[0].mxu0
    %v13851 = vadd.f32 %v13810, %v13850
    %v13852 = vpop.f32.mrb[0].mxu0
    %v13853 = vpop.f32.mrb[0].mxu0
    %13854 = vdwg.mxu0
    %13855 = vmatprep.subr.bf16.mxu0 %v13269
    %13856 = vmatpush1.bf16.msra.mxu0 %v13268
    %13857 = vmatprep.subr.bf16.mxu0 %v13275
    %13858 = vmatpush1.bf16.msra.mxu0 %v13274
    %13859 = vmatprep.subr.bf16.mxu0 %v13281
    %13860 = vmatpush1.bf16.msra.mxu0 %v13280
    %13861 = vmatprep.subr.bf16.mxu0 %v13287
    %13862 = vmatpush1.bf16.msra.mxu0 %v13286
    %13863 = vmatprep.subr.bf16.mxu0 %v13293
    %13864 = vmatpush1.bf16.msra.mxu0 %v13292
    %13865 = vmatprep.subr.bf16.mxu0 %v13299
    %13866 = vmatpush1.bf16.msra.mxu0 %v13298
    %13867 = vmatprep.subr.bf16.mxu0 %v13305
    %13868 = vmatpush1.bf16.msra.mxu0 %v13304
    %13869 = vmatprep.subr.bf16.mxu0 %v13311
    %13870 = vmatpush1.bf16.msra.mxu0 %v13310
    %13871 = vmatprep.subr.bf16.mxu0 %v13317
    %13872 = vmatpush1.bf16.msra.mxu0 %v13316
    %13873 = vmatprep.subr.bf16.mxu0 %v13323
    %13874 = vmatpush1.bf16.msra.mxu0 %v13322
    %13875 = vmatprep.subr.bf16.mxu0 %v13329
    %13876 = vmatpush1.bf16.msra.mxu0 %v13328
    %13877 = vmatprep.subr.bf16.mxu0 %v13335
    %13878 = vmatpush1.bf16.msra.mxu0 %v13334
    %13879 = vmatprep.subr.bf16.mxu0 %v13341
    %13880 = vmatpush1.bf16.msra.mxu0 %v13340
    %13881 = vmatprep.subr.bf16.mxu0 %v13347
    %13882 = vmatpush1.bf16.msra.mxu0 %v13346
    %13883 = vmatprep.subr.bf16.mxu0 %v13353
    %13884 = vmatpush1.bf16.msra.mxu0 %v13352
    %13885 = vmatprep.subr.bf16.mxu0 %v13359
    %13886 = vmatpush1.bf16.msra.mxu0 %v13358
    %13887 = vmatprep.mubr.bf16.mxu0 %v11921
    %13888 = vmatmul.mubr.bf16.gmra.mrb[0].mxu0 %v11920
    %v13889 = vpop.f32.mrb[0].mxu0
    %v13890 = vadd.f32 %v13849, %v13889
    %v13891 = vpop.f32.mrb[0].mxu0
    %v13892 = vadd.f32 %v13851, %v13891
    %v13893 = vpop.f32.mrb[0].mxu0
    %v13894 = vpop.f32.mrb[0].mxu0
    %13895 = vdwg.mxu0
    %13896 = vmatprep.subr.bf16.mxu0 %v13079
    %13897 = vmatpush1.bf16.msra.mxu0 %v13078
    %13898 = vmatprep.subr.bf16.mxu0 %v13085
    %13899 = vmatpush1.bf16.msra.mxu0 %v13084
    %13900 = vmatprep.subr.bf16.mxu0 %v13091
    %13901 = vmatpush1.bf16.msra.mxu0 %v13090
    %13902 = vmatprep.subr.bf16.mxu0 %v13097
    %13903 = vmatpush1.bf16.msra.mxu0 %v13096
    %13904 = vmatprep.subr.bf16.mxu0 %v13103
    %13905 = vmatpush1.bf16.msra.mxu0 %v13102
    %13906 = vmatprep.subr.bf16.mxu0 %v13109
    %13907 = vmatpush1.bf16.msra.mxu0 %v13108
    %13908 = vmatprep.subr.bf16.mxu0 %v13115
    %13909 = vmatpush1.bf16.msra.mxu0 %v13114
    %13910 = vmatprep.subr.bf16.mxu0 %v13121
    %13911 = vmatpush1.bf16.msra.mxu0 %v13120
    %13912 = vmatprep.subr.bf16.mxu0 %v13127
    %13913 = vmatpush1.bf16.msra.mxu0 %v13126
    %13914 = vmatprep.subr.bf16.mxu0 %v13133
    %13915 = vmatpush1.bf16.msra.mxu0 %v13132
    %13916 = vmatprep.subr.bf16.mxu0 %v13139
    %13917 = vmatpush1.bf16.msra.mxu0 %v13138
    %13918 = vmatprep.subr.bf16.mxu0 %v13145
    %13919 = vmatpush1.bf16.msra.mxu0 %v13144
    %13920 = vmatprep.subr.bf16.mxu0 %v13151
    %13921 = vmatpush1.bf16.msra.mxu0 %v13150
    %13922 = vmatprep.subr.bf16.mxu0 %v13157
    %13923 = vmatpush1.bf16.msra.mxu0 %v13156
    %13924 = vmatprep.subr.bf16.mxu0 %v13163
    %13925 = vmatpush1.bf16.msra.mxu0 %v13162
    %13926 = vmatprep.subr.bf16.mxu0 %v13169
    %13927 = vmatpush1.bf16.msra.mxu0 %v13168
    %13928 = vmatprep.mubr.bf16.mxu0 %v11917
    %13929 = vmatmul.mubr.bf16.gmra.mrb[0].mxu0 %v11916
    %v13930 = vpop.f32.mrb[0].mxu0
    %v13931 = vadd.f32 0.0, %v13930
    %v13932 = vpop.f32.mrb[0].mxu0
    %v13933 = vadd.f32 0.0, %v13932
    %v13934 = vpop.f32.mrb[0].mxu0
    %v13935 = vpop.f32.mrb[0].mxu0
    %13936 = vdwg.mxu0
    %13937 = vmatprep.subr.bf16.mxu0 %v13175
    %13938 = vmatpush1.bf16.msra.mxu0 %v13174
    %13939 = vmatprep.subr.bf16.mxu0 %v13181
    %13940 = vmatpush1.bf16.msra.mxu0 %v13180
    %13941 = vmatprep.subr.bf16.mxu0 %v13187
    %13942 = vmatpush1.bf16.msra.mxu0 %v13186
    %13943 = vmatprep.subr.bf16.mxu0 %v13193
    %13944 = vmatpush1.bf16.msra.mxu0 %v13192
    %13945 = vmatprep.subr.bf16.mxu0 %v13199
    %13946 = vmatpush1.bf16.msra.mxu0 %v13198
    %13947 = vmatprep.subr.bf16.mxu0 %v13205
    %13948 = vmatpush1.bf16.msra.mxu0 %v13204
    %13949 = vmatprep.subr.bf16.mxu0 %v13211
    %13950 = vmatpush1.bf16.msra.mxu0 %v13210
    %13951 = vmatprep.subr.bf16.mxu0 %v13217
    %13952 = vmatpush1.bf16.msra.mxu0 %v13216
    %13953 = vmatprep.subr.bf16.mxu0 %v13223
    %13954 = vmatpush1.bf16.msra.mxu0 %v13222
    %13955 = vmatprep.subr.bf16.mxu0 %v13229
    %13956 = vmatpush1.bf16.msra.mxu0 %v13228
    %13957 = vmatprep.subr.bf16.mxu0 %v13235
    %13958 = vmatpush1.bf16.msra.mxu0 %v13234
    %13959 = vmatprep.subr.bf16.mxu0 %v13241
    %13960 = vmatpush1.bf16.msra.mxu0 %v13240
    %13961 = vmatprep.subr.bf16.mxu0 %v13247
    %13962 = vmatpush1.bf16.msra.mxu0 %v13246
    %13963 = vmatprep.subr.bf16.mxu0 %v13253
    %13964 = vmatpush1.bf16.msra.mxu0 %v13252
    %13965 = vmatprep.subr.bf16.mxu0 %v13259
    %13966 = vmatpush1.bf16.msra.mxu0 %v13258
    %13967 = vmatprep.subr.bf16.mxu0 %v13265
    %13968 = vmatpush1.bf16.msra.mxu0 %v13264
    %13969 = vmatprep.mubr.bf16.mxu0 %v11919
    %13970 = vmatmul.mubr.bf16.gmra.mrb[0].mxu0 %v11918
    %v13971 = vpop.f32.mrb[0].mxu0
    %v13972 = vadd.f32 %v13931, %v13971
    %v13973 = vpop.f32.mrb[0].mxu0
    %v13974 = vadd.f32 %v13933, %v13973
    %v13975 = vpop.f32.mrb[0].mxu0
    %v13976 = vpop.f32.mrb[0].mxu0
    %13977 = vdwg.mxu0
    %13978 = vmatprep.subr.bf16.mxu0 %v13271
    %13979 = vmatpush1.bf16.msra.mxu0 %v13270
    %13980 = vmatprep.subr.bf16.mxu0 %v13277
    %13981 = vmatpush1.bf16.msra.mxu0 %v13276
    %13982 = vmatprep.subr.bf16.mxu0 %v13283
    %13983 = vmatpush1.bf16.msra.mxu0 %v13282
    %13984 = vmatprep.subr.bf16.mxu0 %v13289
    %13985 = vmatpush1.bf16.msra.mxu0 %v13288
    %13986 = vmatprep.subr.bf16.mxu0 %v13295
    %13987 = vmatpush1.bf16.msra.mxu0 %v13294
    %13988 = vmatprep.subr.bf16.mxu0 %v13301
    %13989 = vmatpush1.bf16.msra.mxu0 %v13300
    %13990 = vmatprep.subr.bf16.mxu0 %v13307
    %13991 = vmatpush1.bf16.msra.mxu0 %v13306
    %13992 = vmatprep.subr.bf16.mxu0 %v13313
    %13993 = vmatpush1.bf16.msra.mxu0 %v13312
    %13994 = vmatprep.subr.bf16.mxu0 %v13319
    %13995 = vmatpush1.bf16.msra.mxu0 %v13318
    %13996 = vmatprep.subr.bf16.mxu0 %v13325
    %13997 = vmatpush1.bf16.msra.mxu0 %v13324
    %13998 = vmatprep.subr.bf16.mxu0 %v13331
    %13999 = vmatpush1.bf16.msra.mxu0 %v13330
    %14000 = vmatprep.subr.bf16.mxu0 %v13337
    %14001 = vmatpush1.bf16.msra.mxu0 %v13336
    %14002 = vmatprep.subr.bf16.mxu0 %v13343
    %14003 = vmatpush1.bf16.msra.mxu0 %v13342
    %14004 = vmatprep.subr.bf16.mxu0 %v13349
    %14005 = vmatpush1.bf16.msra.mxu0 %v13348
    %14006 = vmatprep.subr.bf16.mxu0 %v13355
    %14007 = vmatpush1.bf16.msra.mxu0 %v13354
    %14008 = vmatprep.subr.bf16.mxu0 %v13361
    %14009 = vmatpush1.bf16.msra.mxu0 %v13360
    %14010 = vmatprep.mubr.bf16.mxu0 %v11921
    %14011 = vmatmul.mubr.bf16.gmra.mrb[0].mxu0 %v11920
    %v14012 = vpop.f32.mrb[0].mxu0
    %v14013 = vadd.f32 %v13972, %v14012
    %v14014 = vpop.f32.mrb[0].mxu0
    %v14015 = vadd.f32 %v13974, %v14014
    %v14016 = vpop.f32.mrb[0].mxu0
    %v14017 = vpop.f32.mrb[0].mxu0
    %14018 = vdwg.mxu0
    %v14019 = vadd.f32 %v9480, %v13767
    %v14020 = vadd.f32 %v9481, %v13769
    %v14021 = vadd.f32 %v9482, %v13890
    %v14022 = vadd.f32 %v9483, %v13892
    %v14023 = vadd.f32 %v9484, %v14013
    %v14024 = vadd.f32 %v9485, %v14015
    %v14031 = vcombine.low %v14019, %v14020
    %v14032 = vcombine.low %v14021, %v14022
    %v14034 = vunpack.c.l.s4 1983009808
    %v14035 = vunpack.c.0.s8 %v14034
    %v14036 = vlaneseq
    %v14037 = vshrl.u32 %v14036, 7
    %v14038 = vsub.s32 %v14035, %v14037
    %v14039 = vrot.slane %v14031, %v14038
    %v14041 = vunpack.c.l.s4 1983009808
    %v14042 = vunpack.c.0.s8 %v14041
    %v14043 = vlaneseq
    %v14044 = vshrl.u32 %v14043, 7
    %v14045 = vsub.s32 %v14042, %v14044
    %v14046 = vrot.slane %v14032, %v14045
    %v14047 = vcombine.low %v14039, %v14046
    %v14048 = vcombine.low %v14023, %v14024
    %v14050 = vunpack.c.l.s4 1983009808
    %v14051 = vunpack.c.0.s8 %v14050
    %v14052 = vlaneseq
    %v14053 = vshrl.u32 %v14052, 7
    %v14054 = vsub.s32 %v14051, %v14053
    %v14055 = vrot.slane %v14048, %v14054
    %14058 = vst [vmem:[#allocation28] sm:$0xff] %v14047
    %14059 = vst [vmem:[#allocation28 + $0x8] sm:$0xf] %v14055
    // Predicated region
    $region134: #{tpu_custom_call.1} parent=1 // pred_check
      _
    $region135: #{tpu_custom_call.1} parent=1 // pred_check_branch
      %14061 = sbr.rel (0) target = $region137
    $region136: #{tpu_custom_call.1} parent=1 // pred_region
      %s14063 = ssub.s32 192, 192
      %14064 = vsyncadd [#allocation4], %s14063
      %s14066 = sshll.u32 [#allocation28], 4
      %s14067 = int_to_ptr.vmem [resolvable:$true] %s14066
      %14069 = dma.vmem_to_hbm [thread:$0]  %s14067, 192, %s17, [#allocation4]
    $region137: #{tpu_custom_call.1} parent=1 // pred_fallthru
      _
    // Predicated region
    $region138: #{tpu_custom_call.1} parent=1 // pred_check
      _
    $region139: #{tpu_custom_call.1} parent=1 // pred_check_branch
      %14071 = sbr.rel (0) target = $region141
    $region140: #{tpu_custom_call.1} parent=1 // pred_region
      %14072 = dma.done [#allocation4], 192
    $region141: #{tpu_custom_call.1} parent=1 // pred_fallthru
      _
    %14073 = vsyncpa [#allocation3], 1
    %14074 = vsyncpa [#allocation6], 1
    %14075 = vsyncpa [#allocation9], 1
    %14076 = vsyncpa [#allocation12], 1
    %14077 = vsyncpa [#allocation15], 1
    %14078 = vsyncpa [#allocation18], 1
    %14079 = vsyncpa [#allocation21], 1
    %14080 = vsyncpa [#allocation24], 1
    %14081 = vsyncpa [#allocation27], 1
    %14082 = vsyncpa [#allocation4], 1

</llo_original>
